<compile_context>
chip_gen: v6e
topology: v6e:2x2x1
jax: 0.10.0
libtpu: 0.0.40
codegen_flags: <defaults>
</compile_context>

<pallas_src>
import functools

import jax
import jax.numpy as jnp
from jax import lax
from jax.experimental import pallas as pl
from jax.experimental.pallas import tpu as pltpu

EPS = 1e-5
LANE = 128                      # TPU lane width
MATMUL_DTYPE = jnp.bfloat16     # matmul operands / staging scratch; accumulation is f32


def _round_up(x, m):
    return ((x + m - 1) // m) * m


def _pick_row_tile(H, W, target_m=256):
    """Smallest divisor Hc of H with Hc*W >= target_m (M per matmul stays >=256)."""
    for hc in range(1, H + 1):
        if H % hc == 0 and hc * W >= target_m:
            return hc
    return H


def _dense_block_kernel(num_layers, H, W, Hc, C0, x_ref, *rest):
    """Fused DenseBlock for one batch element (NHWC, channels on lanes).

    x_ref           : (H, W, C0)        input features
    per layer (6)   : s1 (1,Cpad), h1 (1,Cpad)  folded BN1 scale/shift (K-padded)
                      w1 (Cpad,C4) bf16, c1 (1,C4)  1x1 conv w/ bias+BN2 folded
                      w2 (9*C4, G) bf16, b2 (1,G)   3x3 conv as im2col weight
    out_ref         : (H, W, C_total)   resident feature map (input + all new feats)
    pad_ref         : (H+2, W+2, C4)    bf16 VMEM scratch, zero-padded activations
    """
    out_ref = rest[6 * num_layers]
    pad_ref = rest[6 * num_layers + 1]
    layers = [rest[6 * i: 6 * (i + 1)] for i in range(num_layers)]

    C_total = out_ref.shape[-1]
    C4 = pad_ref.shape[-1]
    nrt = H // Hc
    HcW = Hc * W
    small_trip = nrt <= 4

    # Seed the resident feature map with the input channels; zero the not-yet-written
    # tail once so lane-padded K reads never touch garbage (their weights are zero).
    out_ref[:, :, pl.ds(0, C0)] = x_ref[...]
    if C_total > C0:
        out_ref[:, :, pl.ds(C0, C_total - C0)] = jnp.zeros(
            (H, W, C_total - C0), out_ref.dtype)

    # Zero only the 1-pixel border of the bf16 padded scratch, once per image;
    # the (H, W) interior is fully overwritten by every layer before it is read.
    zrow = jnp.zeros((1, W + 2, C4), pad_ref.dtype)
    zcol = jnp.zeros((H, 1, C4), pad_ref.dtype)
    pad_ref[pl.ds(0, 1), :, :] = zrow
    pad_ref[pl.ds(H + 1, 1), :, :] = zrow
    pad_ref[pl.ds(1, H), pl.ds(0, 1), :] = zcol
    pad_ref[pl.ds(1, H), pl.ds(W + 1, 1), :] = zcol

    cin = C0
    for (s1_ref, h1_ref, w1_ref, c1_ref, w2_ref, b2_ref) in layers:
        cpad = w1_ref.shape[0]          # lane-padded K of the 1x1 conv (>= cin)
        G = w2_ref.shape[1]

        # Hoist per-layer parameter loads out of the row-tile loops.
        s1 = s1_ref[...]
        h1 = h1_ref[...]
        w1 = w1_ref[...]                # bf16
        c1 = c1_ref[...]
        w2 = w2_ref[...]                # bf16
        b2 = b2_ref[...]

        # ---- pass 1 (row-tiled): relu(bn1(x)) -> 1x1 conv (+folded bias/BN2) -> relu
        #      staged into the bf16 padded scratch.
        def stage_v(i, carry):
            r0 = pl.multiple_of(i * Hc, Hc)
            xc = out_ref[pl.ds(r0, Hc), :, pl.ds(0, cpad)].reshape(HcW, cpad)
            t = jnp.maximum(xc * s1 + h1, 0.0)                       # f32 elementwise
            u = jnp.dot(t.astype(MATMUL_DTYPE), w1,
                        preferred_element_type=jnp.float32)          # (HcW, C4) f32
            v = jnp.maximum(u + c1, 0.0)
            pad_ref[pl.ds(r0 + 1, Hc), pl.ds(1, W), :] = (
                v.reshape(Hc, W, C4).astype(pad_ref.dtype))
            return carry

        lax.fori_loop(0, nrt, stage_v, 0, unroll=small_trip)

        # ---- pass 2 (row-tiled): 3x3 conv, padding=1, as one im2col matmul (K=9*C4)
        def conv2(i, carry):
            r0 = pl.multiple_of(i * Hc, Hc)
            taps = []
            for di in range(3):
                for dj in range(3):
                    taps.append(
                        pad_ref[pl.ds(r0 + di, Hc), pl.ds(dj, W), :]
                        .reshape(HcW, C4))
            slab = jnp.concatenate(taps, axis=1)                     # (HcW, 9*C4) bf16
            newf = jnp.dot(slab, w2, preferred_element_type=jnp.float32) + b2
            # torch.cat([x, out], dim=channels): append this layer's G new channels.
            out_ref[pl.ds(r0, Hc), :, pl.ds(cin, G)] = (
                newf.reshape(Hc, W, G).astype(out_ref.dtype))
            return carry

        lax.fori_loop(0, nrt, conv2, 0, unroll=small_trip)

        cin += G


def _fold_layer_params(params, cpad):
    """Fold conv1 bias + BN2 into the 1x1 weight + a single shift; K-pad; cast bf16.

    relu(bn2(conv1(t))) == relu(t @ (w1 * s2) + (b1 * s2 + h2))   (exact algebra)
    The 3x3 HWIO weight is reshaped to (9*C4, G) tap-major in (di, dj, c) order,
    which matches the taps list order built in the kernel.
    """
    s1, h1, w1, b1, s2, h2, w2, b2 = params
    cin = w1.shape[0]
    w1_eff = w1 * s2                       # (cin, C4)
    c1 = b1 * s2 + h2                      # (1, C4)
    if cpad > cin:                         # lane-dense K read: pad with zeros
        p = cpad - cin
        w1_eff = jnp.pad(w1_eff, ((0, p), (0, 0)))
        s1 = jnp.pad(s1, ((0, 0), (0, p)))
        h1 = jnp.pad(h1, ((0, 0), (0, p)))
    kh, kw, c4, g = w2.shape
    w2_flat = w2.reshape(kh * kw * c4, g)  # (di, dj, c) tap-major
    return (s1, h1, w1_eff.astype(MATMUL_DTYPE), c1,
            w2_flat.astype(MATMUL_DTYPE), b2)


def _vmem_limit_bytes(H, W, C0, C_total, C4, G, Hc, weights):
    """Explicit scoped-VMEM budget from the actual buffer list (clamped for v7x)."""
    f32 = 4
    in_blk = H * W * C0 * f32
    out_blk = H * W * C_total * f32
    w_bytes = sum(int(w.size) * jnp.dtype(w.dtype).itemsize for w in weights)
    pad_scr = (H + 2) * (W + 2) * C4 * jnp.dtype(MATMUL_DTYPE).itemsize
    HcW = Hc * W
    tile_work = HcW * (9 * C4 * 2 + C_total * f32 + 3 * C4 * f32 + G * f32)
    total = 2 * (in_blk + out_blk) + 2 * w_bytes + pad_scr + tile_work
    return int(min(max(int(total * 1.5) + (4 << 20), 32 << 20), 64 << 20))


@jax.jit
def dense_block_pallas(x_nchw, layer_params):
    """DenseBlock forward. x_nchw: (N, Cin, H, W) float32. Returns NCHW."""
    x = jnp.transpose(x_nchw, (0, 2, 3, 1)).astype(jnp.float32)      # -> NHWC
    N, H, W, C0 = x.shape
    num_layers = len(layer_params)
    C4 = layer_params[0][6].shape[2]
    G = layer_params[0][6].shape[3]
    C_total = C0 + num_layers * G
    Hc = _pick_row_tile(H, W)

    def _full(shape):
        nd = len(shape)
        return pl.BlockSpec(shape, lambda n, _nd=nd: (0,) * _nd)

    kernel_args = []
    in_specs = [pl.BlockSpec((None, H, W, C0), lambda n: (n, 0, 0, 0))]
    cin = C0
    for params in layer_params:
        cpad = min(_round_up(cin, LANE), C_total)
        folded = _fold_layer_params(params, cpad)
        kernel_args.extend(folded)
        in_specs.extend(_full(p.shape) for p in folded)
        cin += G

    kernel = functools.partial(_dense_block_kernel, num_layers, H, W, Hc, C0)
    vmem_limit = _vmem_limit_bytes(H, W, C0, C_total, C4, G, Hc, kernel_args)

    out_nhwc = pl.pallas_call(
        kernel,
        out_shape=jax.ShapeDtypeStruct((N, H, W, C_total), jnp.float32),
        grid_spec=pltpu.PrefetchScalarGridSpec(
            num_scalar_prefetch=0,
            grid=(N,),
            in_specs=in_specs,
            out_specs=pl.BlockSpec((None, H, W, C_total), lambda n: (n, 0, 0, 0)),
            scratch_shapes=[pltpu.VMEM((H + 2, W + 2, C4), MATMUL_DTYPE)],
        ),
        compiler_params=pltpu.CompilerParams(
            dimension_semantics=("parallel",),    # batch images are independent
            vmem_limit_bytes=vmem_limit,
        ),
    )(x, *kernel_args)

    return jnp.transpose(out_nhwc, (0, 3, 1, 2))                     # -> NCHW


def init_bottleneck_params(key, in_channels, growth_rate):
    """Deterministic parameter init mirroring BottleNeck.__init__ shapes."""
    c4 = 4 * growth_rate
    ks = jax.random.split(key, 10)

    # BN1 (gamma, beta, running_mean, running_var) folded to scale/shift.
    g1 = jax.random.uniform(ks[0], (in_channels,), jnp.float32, 0.5, 1.5)
    be1 = 0.1 * jax.random.normal(ks[1], (in_channels,), jnp.float32)
    rm1 = 0.1 * jax.random.normal(ks[2], (in_channels,), jnp.float32)
    rv1 = jax.random.uniform(ks[3], (in_channels,), jnp.float32, 0.5, 1.5)
    s1 = g1 / jnp.sqrt(rv1 + EPS)
    h1 = be1 - rm1 * s1

    # conv1: 1x1, in_channels -> 4*growth_rate (stored as (Cin, C4) matmul weight)
    w1 = 0.1 * jax.random.normal(ks[4], (in_channels, c4), jnp.float32)
    b1 = 0.05 * jax.random.normal(ks[5], (c4,), jnp.float32)

    # BN2
    g2 = jax.random.uniform(ks[6], (c4,), jnp.float32, 0.5, 1.5)
    be2 = 0.1 * jax.random.normal(ks[7], (c4,), jnp.float32)
    rm2 = jnp.zeros((c4,), jnp.float32)
    rv2 = jnp.ones((c4,), jnp.float32)
    s2 = g2 / jnp.sqrt(rv2 + EPS)
    h2 = be2 - rm2 * s2

    # conv2: 3x3, 4*growth_rate -> growth_rate, padding=1 (HWIO layout)
    w2 = 0.1 * jax.random.normal(ks[8], (3, 3, c4, growth_rate), jnp.float32)
    b2 = 0.05 * jax.random.normal(ks[9], (growth_rate,), jnp.float32)

    return (s1.reshape(1, -1), h1.reshape(1, -1),
            w1, b1.reshape(1, -1),
            s2.reshape(1, -1), h2.reshape(1, -1),
            w2, b2.reshape(1, -1))


# ---------------- pure-JAX reference (for verification, full f32) ----------------
def _bottleneck_ref(x_nhwc, params):
    s1, h1, w1, b1, s2, h2, w2, b2 = params
    t = jnp.maximum(x_nhwc * s1[0] + h1[0], 0.0)
    u = jnp.einsum("nhwc,cd->nhwd", t, w1) + b1[0]
    v = jnp.maximum(u * s2[0] + h2[0], 0.0)
    out = jax.lax.conv_general_dilated(
        v, w2, window_strides=(1, 1), padding="SAME",
        dimension_numbers=("NHWC", "HWIO", "NHWC")) + b2[0]
    return out


def dense_block_ref(x_nchw, layer_params):
    x = jnp.transpose(x_nchw, (0, 2, 3, 1)).astype(jnp.float32)
    for params in layer_params:
        x = jnp.concatenate([x, _bottleneck_ref(x, params)], axis=-1)
    return jnp.transpose(x, (0, 3, 1, 2))


if __name__ == "__main__":
    # Small shapes consistent with the module: NCHW input (2, 4, 16, 16).
    N, C_IN, H, W = 2, 4, 16, 16
    NUM_LAYERS, GROWTH = 3, 4

    key = jax.random.PRNGKey(0)
    key, xkey = jax.random.split(key)
    x = jax.random.normal(xkey, (N, C_IN, H, W), jnp.float32)

    layer_params = []
    for i in range(NUM_LAYERS):
        key, pkey = jax.random.split(key)
        layer_params.append(
            init_bottleneck_params(pkey, C_IN + i * GROWTH, GROWTH))

    out = dense_block_pallas(x, layer_params)
    out = jax.block_until_ready(out)

    ref = dense_block_ref(x, layer_params)
    assert out.shape == (N, C_IN + NUM_LAYERS * GROWTH, H, W), out.shape
    max_err = float(jnp.max(jnp.abs(out - ref)))
    mean_err = float(jnp.mean(jnp.abs(out - ref)))
    # bf16 matmul operands (f32 accumulation) vs. f32 reference -> loosened tolerance.
    assert jnp.allclose(out, ref, atol=1e-1, rtol=1e-1), (max_err, mean_err)
    assert mean_err < 2e-2, (max_err, mean_err)

    print("KERNEL_OK")
</pallas_src>

<mosaic_0001>
module attributes {stable_mosaic.version = 11 : i64} {
  func.func @_dense_block_kernel(%arg0: i32, %arg1: memref<1x16x16x4xf32, #tpu.memory_space<vmem>>, %arg2: memref<1x16xf32, #tpu.memory_space<vmem>>, %arg3: memref<1x16xf32, #tpu.memory_space<vmem>>, %arg4: memref<16x16xbf16, #tpu.memory_space<vmem>>, %arg5: memref<1x16xf32, #tpu.memory_space<vmem>>, %arg6: memref<144x4xbf16, #tpu.memory_space<vmem>>, %arg7: memref<1x4xf32, #tpu.memory_space<vmem>>, %arg8: memref<1x16xf32, #tpu.memory_space<vmem>>, %arg9: memref<1x16xf32, #tpu.memory_space<vmem>>, %arg10: memref<16x16xbf16, #tpu.memory_space<vmem>>, %arg11: memref<1x16xf32, #tpu.memory_space<vmem>>, %arg12: memref<144x4xbf16, #tpu.memory_space<vmem>>, %arg13: memref<1x4xf32, #tpu.memory_space<vmem>>, %arg14: memref<1x16xf32, #tpu.memory_space<vmem>>, %arg15: memref<1x16xf32, #tpu.memory_space<vmem>>, %arg16: memref<16x16xbf16, #tpu.memory_space<vmem>>, %arg17: memref<1x16xf32, #tpu.memory_space<vmem>>, %arg18: memref<144x4xbf16, #tpu.memory_space<vmem>>, %arg19: memref<1x4xf32, #tpu.memory_space<vmem>>, %arg20: memref<1x16x16x16xf32, #tpu.memory_space<vmem>>, %arg21: memref<18x18x16xbf16, #tpu.memory_space<vmem>>) attributes {dimension_semantics = [#tpu.dimension_semantics<parallel>], iteration_bounds = array<i64: 2>, scalar_prefetch = 0 : i64, scratch_operands = 1 : i64, tpu.core_type = #tpu.core_type<tc>, window_params = [{transform_indices = @transform_0, window_bounds = array<i64: 1, 16, 16, 4>}, {pipeline_mode = #tpu.pipeline_mode<synchronous>, transform_indices = @transform_1, window_bounds = array<i64: 1, 16>}, {pipeline_mode = #tpu.pipeline_mode<synchronous>, transform_indices = @transform_2, window_bounds = array<i64: 1, 16>}, {pipeline_mode = #tpu.pipeline_mode<synchronous>, transform_indices = @transform_3, window_bounds = array<i64: 16, 16>}, {pipeline_mode = #tpu.pipeline_mode<synchronous>, transform_indices = @transform_4, window_bounds = array<i64: 1, 16>}, {pipeline_mode = #tpu.pipeline_mode<synchronous>, transform_indices = @transform_5, window_bounds = array<i64: 144, 4>}, {pipeline_mode = #tpu.pipeline_mode<synchronous>, transform_indices = @transform_6, window_bounds = array<i64: 1, 4>}, {pipeline_mode = #tpu.pipeline_mode<synchronous>, transform_indices = @transform_7, window_bounds = array<i64: 1, 16>}, {pipeline_mode = #tpu.pipeline_mode<synchronous>, transform_indices = @transform_8, window_bounds = array<i64: 1, 16>}, {pipeline_mode = #tpu.pipeline_mode<synchronous>, transform_indices = @transform_9, window_bounds = array<i64: 16, 16>}, {pipeline_mode = #tpu.pipeline_mode<synchronous>, transform_indices = @transform_10, window_bounds = array<i64: 1, 16>}, {pipeline_mode = #tpu.pipeline_mode<synchronous>, transform_indices = @transform_11, window_bounds = array<i64: 144, 4>}, {pipeline_mode = #tpu.pipeline_mode<synchronous>, transform_indices = @transform_12, window_bounds = array<i64: 1, 4>}, {pipeline_mode = #tpu.pipeline_mode<synchronous>, transform_indices = @transform_13, window_bounds = array<i64: 1, 16>}, {pipeline_mode = #tpu.pipeline_mode<synchronous>, transform_indices = @transform_14, window_bounds = array<i64: 1, 16>}, {pipeline_mode = #tpu.pipeline_mode<synchronous>, transform_indices = @transform_15, window_bounds = array<i64: 16, 16>}, {pipeline_mode = #tpu.pipeline_mode<synchronous>, transform_indices = @transform_16, window_bounds = array<i64: 1, 16>}, {pipeline_mode = #tpu.pipeline_mode<synchronous>, transform_indices = @transform_17, window_bounds = array<i64: 144, 4>}, {pipeline_mode = #tpu.pipeline_mode<synchronous>, transform_indices = @transform_18, window_bounds = array<i64: 1, 4>}, {transform_indices = @transform_19, window_bounds = array<i64: 1, 16, 16, 16>}]} {
    %c0 = arith.constant 0 : index
    %c0_0 = arith.constant 0 : index
    %c0_1 = arith.constant 0 : index
    %c0_2 = arith.constant 0 : index
    %0 = vector.load %arg1[%c0, %c0_0, %c0_1, %c0_2] : memref<1x16x16x4xf32, #tpu.memory_space<vmem>>, vector<1x16x16x4xf32>
    %1 = vector.shape_cast %0 : vector<1x16x16x4xf32> to vector<16x16x4xf32>
    %c0_3 = arith.constant 0 : index
    %c0_4 = arith.constant 0 : index
    %c0_5 = arith.constant 0 : index
    %c0_6 = arith.constant 0 : index
    %2 = vector.load %arg20[%c0_3, %c0_4, %c0_5, %c0_6] : memref<1x16x16x16xf32, #tpu.memory_space<vmem>>, vector<1x16x16x4xf32>
    %3 = vector.shape_cast %2 : vector<1x16x16x4xf32> to vector<16x16x4xf32>
    %4 = vector.shape_cast %1 : vector<16x16x4xf32> to vector<1x16x16x4xf32>
    tpu.vector_store %arg20[%c0_3, %c0_4, %c0_5, %c0_6], %4 {strides = array<i32>} : memref<1x16x16x16xf32, #tpu.memory_space<vmem>>, vector<1x16x16x4xf32>,
    %cst = arith.constant 0.000000e+00 : f32
    %5 = vector.broadcast %cst : f32 to vector<16x16x12xf32>
    %c0_7 = arith.constant 0 : index
    %c0_8 = arith.constant 0 : index
    %c0_9 = arith.constant 0 : index
    %c4 = arith.constant 4 : index
    %6 = vector.load %arg20[%c0_7, %c0_8, %c0_9, %c4] : memref<1x16x16x16xf32, #tpu.memory_space<vmem>>, vector<1x16x16x12xf32>
    %7 = vector.shape_cast %6 : vector<1x16x16x12xf32> to vector<16x16x12xf32>
    %8 = vector.shape_cast %5 : vector<16x16x12xf32> to vector<1x16x16x12xf32>
    tpu.vector_store %arg20[%c0_7, %c0_8, %c0_9, %c4], %8 {strides = array<i32>} : memref<1x16x16x16xf32, #tpu.memory_space<vmem>>, vector<1x16x16x12xf32>,
    %cst_10 = arith.constant 0.000000e+00 : bf16
    %9 = vector.broadcast %cst_10 : bf16 to vector<1x18x16xbf16>
    %cst_11 = arith.constant 0.000000e+00 : bf16
    %10 = vector.broadcast %cst_11 : bf16 to vector<16x1x16xbf16>
    %c0_12 = arith.constant 0 : index
    %c0_13 = arith.constant 0 : index
    %c0_14 = arith.constant 0 : index
    %11 = vector.load %arg21[%c0_12, %c0_13, %c0_14] : memref<18x18x16xbf16, #tpu.memory_space<vmem>>, vector<1x18x16xbf16>
    tpu.vector_store %arg21[%c0_12, %c0_13, %c0_14], %9 {strides = array<i32>} : memref<18x18x16xbf16, #tpu.memory_space<vmem>>, vector<1x18x16xbf16>,
    %c17 = arith.constant 17 : index
    %c0_15 = arith.constant 0 : index
    %c0_16 = arith.constant 0 : index
    %12 = vector.load %arg21[%c17, %c0_15, %c0_16] : memref<18x18x16xbf16, #tpu.memory_space<vmem>>, vector<1x18x16xbf16>
    tpu.vector_store %arg21[%c17, %c0_15, %c0_16], %9 {strides = array<i32>} : memref<18x18x16xbf16, #tpu.memory_space<vmem>>, vector<1x18x16xbf16>,
    %c1 = arith.constant 1 : index
    %c0_17 = arith.constant 0 : index
    %c0_18 = arith.constant 0 : index
    %13 = vector.load %arg21[%c1, %c0_17, %c0_18] : memref<18x18x16xbf16, #tpu.memory_space<vmem>>, vector<16x1x16xbf16>
    tpu.vector_store %arg21[%c1, %c0_17, %c0_18], %10 {strides = array<i32>} : memref<18x18x16xbf16, #tpu.memory_space<vmem>>, vector<16x1x16xbf16>,
    %c1_19 = arith.constant 1 : index
    %c17_20 = arith.constant 17 : index
    %c0_21 = arith.constant 0 : index
    %14 = vector.load %arg21[%c1_19, %c17_20, %c0_21] : memref<18x18x16xbf16, #tpu.memory_space<vmem>>, vector<16x1x16xbf16>
    tpu.vector_store %arg21[%c1_19, %c17_20, %c0_21], %10 {strides = array<i32>} : memref<18x18x16xbf16, #tpu.memory_space<vmem>>, vector<16x1x16xbf16>,
    %c0_22 = arith.constant 0 : index
    %c0_23 = arith.constant 0 : index
    %15 = vector.load %arg2[%c0_22, %c0_23] : memref<1x16xf32, #tpu.memory_space<vmem>>, vector<1x16xf32>
    %c0_24 = arith.constant 0 : index
    %c0_25 = arith.constant 0 : index
    %16 = vector.load %arg3[%c0_24, %c0_25] : memref<1x16xf32, #tpu.memory_space<vmem>>, vector<1x16xf32>
    %c0_26 = arith.constant 0 : index
    %c0_27 = arith.constant 0 : index
    %17 = vector.load %arg4[%c0_26, %c0_27] : memref<16x16xbf16, #tpu.memory_space<vmem>>, vector<16x16xbf16>
    %c0_28 = arith.constant 0 : index
    %c0_29 = arith.constant 0 : index
    %18 = vector.load %arg5[%c0_28, %c0_29] : memref<1x16xf32, #tpu.memory_space<vmem>>, vector<1x16xf32>
    %c0_30 = arith.constant 0 : index
    %c0_31 = arith.constant 0 : index
    %19 = vector.load %arg6[%c0_30, %c0_31] : memref<144x4xbf16, #tpu.memory_space<vmem>>, vector<144x4xbf16>
    %c0_32 = arith.constant 0 : index
    %c0_33 = arith.constant 0 : index
    %20 = vector.load %arg7[%c0_32, %c0_33] : memref<1x4xf32, #tpu.memory_space<vmem>>, vector<1x4xf32>
    %c0_i32 = arith.constant 0 : i32
    %c16_i32 = arith.constant 16 : i32
    %21 = arith.muli %c0_i32, %c16_i32 : i32
    %22 = tpu.assume_multiple %21, 16 : i32
    %c0_34 = arith.constant 0 : index
    %23 = arith.index_cast %22 : i32 to index
    %c0_35 = arith.constant 0 : index
    %c0_36 = arith.constant 0 : index
    %24 = vector.load %arg20[%c0_34, %23, %c0_35, %c0_36] : memref<1x16x16x16xf32, #tpu.memory_space<vmem>>, vector<1x16x16x16xf32>
    %25 = vector.shape_cast %24 : vector<1x16x16x16xf32> to vector<16x16x16xf32>
    %26 = vector.shape_cast %25 : vector<16x16x16xf32> to vector<256x16xf32>
    %27 = vector.broadcast %15 : vector<1x16xf32> to vector<256x16xf32>
    %28 = arith.mulf %26, %27 : vector<256x16xf32>
    %29 = vector.broadcast %16 : vector<1x16xf32> to vector<256x16xf32>
    %30 = arith.addf %28, %29 : vector<256x16xf32>
    %cst_37 = arith.constant 0.000000e+00 : f32
    %31 = vector.broadcast %cst_37 : f32 to vector<256x16xf32>
    %32 = arith.maximumf %30, %31 : vector<256x16xf32>
    %33 = arith.truncf %32 : vector<256x16xf32> to vector<256x16xbf16>
    %cst_38 = arith.constant dense<0.000000e+00> : vector<256x16xf32>
    %34 = tpu.matmul %33, %17, %cst_38 {dimension_numbers = #tpu.dot_dimension_numbers<[1], [0], [0], [1], [0, 0, 1, 1], [], []>} : vector<256x16xbf16>, vector<16x16xbf16>, vector<256x16xf32> -> vector<256x16xf32>
    %35 = vector.broadcast %18 : vector<1x16xf32> to vector<256x16xf32>
    %36 = arith.addf %34, %35 : vector<256x16xf32>
    %cst_39 = arith.constant 0.000000e+00 : f32
    %37 = vector.broadcast %cst_39 : f32 to vector<256x16xf32>
    %38 = arith.maximumf %36, %37 : vector<256x16xf32>
    %39 = vector.shape_cast %38 : vector<256x16xf32> to vector<16x16x16xf32>
    %40 = arith.truncf %39 : vector<16x16x16xf32> to vector<16x16x16xbf16>
    %c1_i32 = arith.constant 1 : i32
    %41 = arith.addi %22, %c1_i32 : i32
    %42 = arith.index_cast %41 : i32 to index
    %c1_40 = arith.constant 1 : index
    %c0_41 = arith.constant 0 : index
    %43 = vector.load %arg21[%42, %c1_40, %c0_41] : memref<18x18x16xbf16, #tpu.memory_space<vmem>>, vector<16x16x16xbf16>
    tpu.vector_store %arg21[%42, %c1_40, %c0_41], %40 {strides = array<i32>} : memref<18x18x16xbf16, #tpu.memory_space<vmem>>, vector<16x16x16xbf16>,
    %c1_i32_42 = arith.constant 1 : i32
    %c0_i32_43 = arith.constant 0 : i32
    %c16_i32_44 = arith.constant 16 : i32
    %44 = arith.muli %c0_i32_43, %c16_i32_44 : i32
    %45 = tpu.assume_multiple %44, 16 : i32
    %c0_i32_45 = arith.constant 0 : i32
    %46 = arith.addi %45, %c0_i32_45 : i32
    %47 = arith.index_cast %46 : i32 to index
    %c0_46 = arith.constant 0 : index
    %c0_47 = arith.constant 0 : index
    %48 = vector.load %arg21[%47, %c0_46, %c0_47] : memref<18x18x16xbf16, #tpu.memory_space<vmem>>, vector<16x16x16xbf16>
    %49 = vector.shape_cast %48 : vector<16x16x16xbf16> to vector<256x16xbf16>
    %c0_i32_48 = arith.constant 0 : i32
    %50 = arith.addi %45, %c0_i32_48 : i32
    %51 = arith.index_cast %50 : i32 to index
    %c1_49 = arith.constant 1 : index
    %c0_50 = arith.constant 0 : index
    %52 = vector.load %arg21[%51, %c1_49, %c0_50] : memref<18x18x16xbf16, #tpu.memory_space<vmem>>, vector<16x16x16xbf16>
    %53 = vector.shape_cast %52 : vector<16x16x16xbf16> to vector<256x16xbf16>
    %c0_i32_51 = arith.constant 0 : i32
    %54 = arith.addi %45, %c0_i32_51 : i32
    %55 = arith.index_cast %54 : i32 to index
    %c2 = arith.constant 2 : index
    %c0_52 = arith.constant 0 : index
    %56 = vector.load %arg21[%55, %c2, %c0_52] : memref<18x18x16xbf16, #tpu.memory_space<vmem>>, vector<16x16x16xbf16>
    %57 = vector.shape_cast %56 : vector<16x16x16xbf16> to vector<256x16xbf16>
    %c1_i32_53 = arith.constant 1 : i32
    %58 = arith.addi %45, %c1_i32_53 : i32
    %59 = arith.index_cast %58 : i32 to index
    %c0_54 = arith.constant 0 : index
    %c0_55 = arith.constant 0 : index
    %60 = vector.load %arg21[%59, %c0_54, %c0_55] : memref<18x18x16xbf16, #tpu.memory_space<vmem>>, vector<16x16x16xbf16>
    %61 = vector.shape_cast %60 : vector<16x16x16xbf16> to vector<256x16xbf16>
    %c1_i32_56 = arith.constant 1 : i32
    %62 = arith.addi %45, %c1_i32_56 : i32
    %63 = arith.index_cast %62 : i32 to index
    %c1_57 = arith.constant 1 : index
    %c0_58 = arith.constant 0 : index
    %64 = vector.load %arg21[%63, %c1_57, %c0_58] : memref<18x18x16xbf16, #tpu.memory_space<vmem>>, vector<16x16x16xbf16>
    %65 = vector.shape_cast %64 : vector<16x16x16xbf16> to vector<256x16xbf16>
    %c1_i32_59 = arith.constant 1 : i32
    %66 = arith.addi %45, %c1_i32_59 : i32
    %67 = arith.index_cast %66 : i32 to index
    %c2_60 = arith.constant 2 : index
    %c0_61 = arith.constant 0 : index
    %68 = vector.load %arg21[%67, %c2_60, %c0_61] : memref<18x18x16xbf16, #tpu.memory_space<vmem>>, vector<16x16x16xbf16>
    %69 = vector.shape_cast %68 : vector<16x16x16xbf16> to vector<256x16xbf16>
    %c2_i32 = arith.constant 2 : i32
    %70 = arith.addi %45, %c2_i32 : i32
    %71 = arith.index_cast %70 : i32 to index
    %c0_62 = arith.constant 0 : index
    %c0_63 = arith.constant 0 : index
    %72 = vector.load %arg21[%71, %c0_62, %c0_63] : memref<18x18x16xbf16, #tpu.memory_space<vmem>>, vector<16x16x16xbf16>
    %73 = vector.shape_cast %72 : vector<16x16x16xbf16> to vector<256x16xbf16>
    %c2_i32_64 = arith.constant 2 : i32
    %74 = arith.addi %45, %c2_i32_64 : i32
    %75 = arith.index_cast %74 : i32 to index
    %c1_65 = arith.constant 1 : index
    %c0_66 = arith.constant 0 : index
    %76 = vector.load %arg21[%75, %c1_65, %c0_66] : memref<18x18x16xbf16, #tpu.memory_space<vmem>>, vector<16x16x16xbf16>
    %77 = vector.shape_cast %76 : vector<16x16x16xbf16> to vector<256x16xbf16>
    %c2_i32_67 = arith.constant 2 : i32
    %78 = arith.addi %45, %c2_i32_67 : i32
    %79 = arith.index_cast %78 : i32 to index
    %c2_68 = arith.constant 2 : index
    %c0_69 = arith.constant 0 : index
    %80 = vector.load %arg21[%79, %c2_68, %c0_69] : memref<18x18x16xbf16, #tpu.memory_space<vmem>>, vector<16x16x16xbf16>
    %81 = vector.shape_cast %80 : vector<16x16x16xbf16> to vector<256x16xbf16>
    %82 = tpu.concatenate %49, %53, %57, %61, %65, %69, %73, %77, %81 in 1 : vector<256x16xbf16>, vector<256x16xbf16>, vector<256x16xbf16>, vector<256x16xbf16>, vector<256x16xbf16>, vector<256x16xbf16>, vector<256x16xbf16>, vector<256x16xbf16>, vector<256x16xbf16> -> vector<256x144xbf16>
    %cst_70 = arith.constant dense<0.000000e+00> : vector<256x4xf32>
    %83 = tpu.matmul %82, %19, %cst_70 {dimension_numbers = #tpu.dot_dimension_numbers<[1], [0], [0], [1], [0, 0, 1, 1], [], []>} : vector<256x144xbf16>, vector<144x4xbf16>, vector<256x4xf32> -> vector<256x4xf32>
    %84 = vector.broadcast %20 : vector<1x4xf32> to vector<256x4xf32>
    %85 = arith.addf %83, %84 : vector<256x4xf32>
    %86 = vector.shape_cast %85 : vector<256x4xf32> to vector<16x16x4xf32>
    %c0_71 = arith.constant 0 : index
    %87 = arith.index_cast %45 : i32 to index
    %c0_72 = arith.constant 0 : index
    %c4_73 = arith.constant 4 : index
    %88 = vector.load %arg20[%c0_71, %87, %c0_72, %c4_73] : memref<1x16x16x16xf32, #tpu.memory_space<vmem>>, vector<1x16x16x4xf32>
    %89 = vector.shape_cast %88 : vector<1x16x16x4xf32> to vector<16x16x4xf32>
    %90 = vector.shape_cast %86 : vector<16x16x4xf32> to vector<1x16x16x4xf32>
    tpu.vector_store %arg20[%c0_71, %87, %c0_72, %c4_73], %90 {strides = array<i32>} : memref<1x16x16x16xf32, #tpu.memory_space<vmem>>, vector<1x16x16x4xf32>,
    %c1_i32_74 = arith.constant 1 : i32
    %c0_75 = arith.constant 0 : index
    %c0_76 = arith.constant 0 : index
    %91 = vector.load %arg8[%c0_75, %c0_76] : memref<1x16xf32, #tpu.memory_space<vmem>>, vector<1x16xf32>
    %c0_77 = arith.constant 0 : index
    %c0_78 = arith.constant 0 : index
    %92 = vector.load %arg9[%c0_77, %c0_78] : memref<1x16xf32, #tpu.memory_space<vmem>>, vector<1x16xf32>
    %c0_79 = arith.constant 0 : index
    %c0_80 = arith.constant 0 : index
    %93 = vector.load %arg10[%c0_79, %c0_80] : memref<16x16xbf16, #tpu.memory_space<vmem>>, vector<16x16xbf16>
    %c0_81 = arith.constant 0 : index
    %c0_82 = arith.constant 0 : index
    %94 = vector.load %arg11[%c0_81, %c0_82] : memref<1x16xf32, #tpu.memory_space<vmem>>, vector<1x16xf32>
    %c0_83 = arith.constant 0 : index
    %c0_84 = arith.constant 0 : index
    %95 = vector.load %arg12[%c0_83, %c0_84] : memref<144x4xbf16, #tpu.memory_space<vmem>>, vector<144x4xbf16>
    %c0_85 = arith.constant 0 : index
    %c0_86 = arith.constant 0 : index
    %96 = vector.load %arg13[%c0_85, %c0_86] : memref<1x4xf32, #tpu.memory_space<vmem>>, vector<1x4xf32>
    %c0_i32_87 = arith.constant 0 : i32
    %c16_i32_88 = arith.constant 16 : i32
    %97 = arith.muli %c0_i32_87, %c16_i32_88 : i32
    %98 = tpu.assume_multiple %97, 16 : i32
    %c0_89 = arith.constant 0 : index
    %99 = arith.index_cast %98 : i32 to index
    %c0_90 = arith.constant 0 : index
    %c0_91 = arith.constant 0 : index
    %100 = vector.load %arg20[%c0_89, %99, %c0_90, %c0_91] : memref<1x16x16x16xf32, #tpu.memory_space<vmem>>, vector<1x16x16x16xf32>
    %101 = vector.shape_cast %100 : vector<1x16x16x16xf32> to vector<16x16x16xf32>
    %102 = vector.shape_cast %101 : vector<16x16x16xf32> to vector<256x16xf32>
    %103 = vector.broadcast %91 : vector<1x16xf32> to vector<256x16xf32>
    %104 = arith.mulf %102, %103 : vector<256x16xf32>
    %105 = vector.broadcast %92 : vector<1x16xf32> to vector<256x16xf32>
    %106 = arith.addf %104, %105 : vector<256x16xf32>
    %cst_92 = arith.constant 0.000000e+00 : f32
    %107 = vector.broadcast %cst_92 : f32 to vector<256x16xf32>
    %108 = arith.maximumf %106, %107 : vector<256x16xf32>
    %109 = arith.truncf %108 : vector<256x16xf32> to vector<256x16xbf16>
    %cst_93 = arith.constant dense<0.000000e+00> : vector<256x16xf32>
    %110 = tpu.matmul %109, %93, %cst_93 {dimension_numbers = #tpu.dot_dimension_numbers<[1], [0], [0], [1], [0, 0, 1, 1], [], []>} : vector<256x16xbf16>, vector<16x16xbf16>, vector<256x16xf32> -> vector<256x16xf32>
    %111 = vector.broadcast %94 : vector<1x16xf32> to vector<256x16xf32>
    %112 = arith.addf %110, %111 : vector<256x16xf32>
    %cst_94 = arith.constant 0.000000e+00 : f32
    %113 = vector.broadcast %cst_94 : f32 to vector<256x16xf32>
    %114 = arith.maximumf %112, %113 : vector<256x16xf32>
    %115 = vector.shape_cast %114 : vector<256x16xf32> to vector<16x16x16xf32>
    %116 = arith.truncf %115 : vector<16x16x16xf32> to vector<16x16x16xbf16>
    %c1_i32_95 = arith.constant 1 : i32
    %117 = arith.addi %98, %c1_i32_95 : i32
    %118 = arith.index_cast %117 : i32 to index
    %c1_96 = arith.constant 1 : index
    %c0_97 = arith.constant 0 : index
    %119 = vector.load %arg21[%118, %c1_96, %c0_97] : memref<18x18x16xbf16, #tpu.memory_space<vmem>>, vector<16x16x16xbf16>
    tpu.vector_store %arg21[%118, %c1_96, %c0_97], %116 {strides = array<i32>} : memref<18x18x16xbf16, #tpu.memory_space<vmem>>, vector<16x16x16xbf16>,
    %c1_i32_98 = arith.constant 1 : i32
    %c0_i32_99 = arith.constant 0 : i32
    %c16_i32_100 = arith.constant 16 : i32
    %120 = arith.muli %c0_i32_99, %c16_i32_100 : i32
    %121 = tpu.assume_multiple %120, 16 : i32
    %c0_i32_101 = arith.constant 0 : i32
    %122 = arith.addi %121, %c0_i32_101 : i32
    %123 = arith.index_cast %122 : i32 to index
    %c0_102 = arith.constant 0 : index
    %c0_103 = arith.constant 0 : index
    %124 = vector.load %arg21[%123, %c0_102, %c0_103] : memref<18x18x16xbf16, #tpu.memory_space<vmem>>, vector<16x16x16xbf16>
    %125 = vector.shape_cast %124 : vector<16x16x16xbf16> to vector<256x16xbf16>
    %c0_i32_104 = arith.constant 0 : i32
    %126 = arith.addi %121, %c0_i32_104 : i32
    %127 = arith.index_cast %126 : i32 to index
    %c1_105 = arith.constant 1 : index
    %c0_106 = arith.constant 0 : index
    %128 = vector.load %arg21[%127, %c1_105, %c0_106] : memref<18x18x16xbf16, #tpu.memory_space<vmem>>, vector<16x16x16xbf16>
    %129 = vector.shape_cast %128 : vector<16x16x16xbf16> to vector<256x16xbf16>
    %c0_i32_107 = arith.constant 0 : i32
    %130 = arith.addi %121, %c0_i32_107 : i32
    %131 = arith.index_cast %130 : i32 to index
    %c2_108 = arith.constant 2 : index
    %c0_109 = arith.constant 0 : index
    %132 = vector.load %arg21[%131, %c2_108, %c0_109] : memref<18x18x16xbf16, #tpu.memory_space<vmem>>, vector<16x16x16xbf16>
    %133 = vector.shape_cast %132 : vector<16x16x16xbf16> to vector<256x16xbf16>
    %c1_i32_110 = arith.constant 1 : i32
    %134 = arith.addi %121, %c1_i32_110 : i32
    %135 = arith.index_cast %134 : i32 to index
    %c0_111 = arith.constant 0 : index
    %c0_112 = arith.constant 0 : index
    %136 = vector.load %arg21[%135, %c0_111, %c0_112] : memref<18x18x16xbf16, #tpu.memory_space<vmem>>, vector<16x16x16xbf16>
    %137 = vector.shape_cast %136 : vector<16x16x16xbf16> to vector<256x16xbf16>
    %c1_i32_113 = arith.constant 1 : i32
    %138 = arith.addi %121, %c1_i32_113 : i32
    %139 = arith.index_cast %138 : i32 to index
    %c1_114 = arith.constant 1 : index
    %c0_115 = arith.constant 0 : index
    %140 = vector.load %arg21[%139, %c1_114, %c0_115] : memref<18x18x16xbf16, #tpu.memory_space<vmem>>, vector<16x16x16xbf16>
    %141 = vector.shape_cast %140 : vector<16x16x16xbf16> to vector<256x16xbf16>
    %c1_i32_116 = arith.constant 1 : i32
    %142 = arith.addi %121, %c1_i32_116 : i32
    %143 = arith.index_cast %142 : i32 to index
    %c2_117 = arith.constant 2 : index
    %c0_118 = arith.constant 0 : index
    %144 = vector.load %arg21[%143, %c2_117, %c0_118] : memref<18x18x16xbf16, #tpu.memory_space<vmem>>, vector<16x16x16xbf16>
    %145 = vector.shape_cast %144 : vector<16x16x16xbf16> to vector<256x16xbf16>
    %c2_i32_119 = arith.constant 2 : i32
    %146 = arith.addi %121, %c2_i32_119 : i32
    %147 = arith.index_cast %146 : i32 to index
    %c0_120 = arith.constant 0 : index
    %c0_121 = arith.constant 0 : index
    %148 = vector.load %arg21[%147, %c0_120, %c0_121] : memref<18x18x16xbf16, #tpu.memory_space<vmem>>, vector<16x16x16xbf16>
    %149 = vector.shape_cast %148 : vector<16x16x16xbf16> to vector<256x16xbf16>
    %c2_i32_122 = arith.constant 2 : i32
    %150 = arith.addi %121, %c2_i32_122 : i32
    %151 = arith.index_cast %150 : i32 to index
    %c1_123 = arith.constant 1 : index
    %c0_124 = arith.constant 0 : index
    %152 = vector.load %arg21[%151, %c1_123, %c0_124] : memref<18x18x16xbf16, #tpu.memory_space<vmem>>, vector<16x16x16xbf16>
    %153 = vector.shape_cast %152 : vector<16x16x16xbf16> to vector<256x16xbf16>
    %c2_i32_125 = arith.constant 2 : i32
    %154 = arith.addi %121, %c2_i32_125 : i32
    %155 = arith.index_cast %154 : i32 to index
    %c2_126 = arith.constant 2 : index
    %c0_127 = arith.constant 0 : index
    %156 = vector.load %arg21[%155, %c2_126, %c0_127] : memref<18x18x16xbf16, #tpu.memory_space<vmem>>, vector<16x16x16xbf16>
    %157 = vector.shape_cast %156 : vector<16x16x16xbf16> to vector<256x16xbf16>
    %158 = tpu.concatenate %125, %129, %133, %137, %141, %145, %149, %153, %157 in 1 : vector<256x16xbf16>, vector<256x16xbf16>, vector<256x16xbf16>, vector<256x16xbf16>, vector<256x16xbf16>, vector<256x16xbf16>, vector<256x16xbf16>, vector<256x16xbf16>, vector<256x16xbf16> -> vector<256x144xbf16>
    %cst_128 = arith.constant dense<0.000000e+00> : vector<256x4xf32>
    %159 = tpu.matmul %158, %95, %cst_128 {dimension_numbers = #tpu.dot_dimension_numbers<[1], [0], [0], [1], [0, 0, 1, 1], [], []>} : vector<256x144xbf16>, vector<144x4xbf16>, vector<256x4xf32> -> vector<256x4xf32>
    %160 = vector.broadcast %96 : vector<1x4xf32> to vector<256x4xf32>
    %161 = arith.addf %159, %160 : vector<256x4xf32>
    %162 = vector.shape_cast %161 : vector<256x4xf32> to vector<16x16x4xf32>
    %c0_129 = arith.constant 0 : index
    %163 = arith.index_cast %121 : i32 to index
    %c0_130 = arith.constant 0 : index
    %c8 = arith.constant 8 : index
    %164 = vector.load %arg20[%c0_129, %163, %c0_130, %c8] : memref<1x16x16x16xf32, #tpu.memory_space<vmem>>, vector<1x16x16x4xf32>
    %165 = vector.shape_cast %164 : vector<1x16x16x4xf32> to vector<16x16x4xf32>
    %166 = vector.shape_cast %162 : vector<16x16x4xf32> to vector<1x16x16x4xf32>
    tpu.vector_store %arg20[%c0_129, %163, %c0_130, %c8], %166 {strides = array<i32>} : memref<1x16x16x16xf32, #tpu.memory_space<vmem>>, vector<1x16x16x4xf32>,
    %c1_i32_131 = arith.constant 1 : i32
    %c0_132 = arith.constant 0 : index
    %c0_133 = arith.constant 0 : index
    %167 = vector.load %arg14[%c0_132, %c0_133] : memref<1x16xf32, #tpu.memory_space<vmem>>, vector<1x16xf32>
    %c0_134 = arith.constant 0 : index
    %c0_135 = arith.constant 0 : index
    %168 = vector.load %arg15[%c0_134, %c0_135] : memref<1x16xf32, #tpu.memory_space<vmem>>, vector<1x16xf32>
    %c0_136 = arith.constant 0 : index
    %c0_137 = arith.constant 0 : index
    %169 = vector.load %arg16[%c0_136, %c0_137] : memref<16x16xbf16, #tpu.memory_space<vmem>>, vector<16x16xbf16>
    %c0_138 = arith.constant 0 : index
    %c0_139 = arith.constant 0 : index
    %170 = vector.load %arg17[%c0_138, %c0_139] : memref<1x16xf32, #tpu.memory_space<vmem>>, vector<1x16xf32>
    %c0_140 = arith.constant 0 : index
    %c0_141 = arith.constant 0 : index
    %171 = vector.load %arg18[%c0_140, %c0_141] : memref<144x4xbf16, #tpu.memory_space<vmem>>, vector<144x4xbf16>
    %c0_142 = arith.constant 0 : index
    %c0_143 = arith.constant 0 : index
    %172 = vector.load %arg19[%c0_142, %c0_143] : memref<1x4xf32, #tpu.memory_space<vmem>>, vector<1x4xf32>
    %c0_i32_144 = arith.constant 0 : i32
    %c16_i32_145 = arith.constant 16 : i32
    %173 = arith.muli %c0_i32_144, %c16_i32_145 : i32
    %174 = tpu.assume_multiple %173, 16 : i32
    %c0_146 = arith.constant 0 : index
    %175 = arith.index_cast %174 : i32 to index
    %c0_147 = arith.constant 0 : index
    %c0_148 = arith.constant 0 : index
    %176 = vector.load %arg20[%c0_146, %175, %c0_147, %c0_148] : memref<1x16x16x16xf32, #tpu.memory_space<vmem>>, vector<1x16x16x16xf32>
    %177 = vector.shape_cast %176 : vector<1x16x16x16xf32> to vector<16x16x16xf32>
    %178 = vector.shape_cast %177 : vector<16x16x16xf32> to vector<256x16xf32>
    %179 = vector.broadcast %167 : vector<1x16xf32> to vector<256x16xf32>
    %180 = arith.mulf %178, %179 : vector<256x16xf32>
    %181 = vector.broadcast %168 : vector<1x16xf32> to vector<256x16xf32>
    %182 = arith.addf %180, %181 : vector<256x16xf32>
    %cst_149 = arith.constant 0.000000e+00 : f32
    %183 = vector.broadcast %cst_149 : f32 to vector<256x16xf32>
    %184 = arith.maximumf %182, %183 : vector<256x16xf32>
    %185 = arith.truncf %184 : vector<256x16xf32> to vector<256x16xbf16>
    %cst_150 = arith.constant dense<0.000000e+00> : vector<256x16xf32>
    %186 = tpu.matmul %185, %169, %cst_150 {dimension_numbers = #tpu.dot_dimension_numbers<[1], [0], [0], [1], [0, 0, 1, 1], [], []>} : vector<256x16xbf16>, vector<16x16xbf16>, vector<256x16xf32> -> vector<256x16xf32>
    %187 = vector.broadcast %170 : vector<1x16xf32> to vector<256x16xf32>
    %188 = arith.addf %186, %187 : vector<256x16xf32>
    %cst_151 = arith.constant 0.000000e+00 : f32
    %189 = vector.broadcast %cst_151 : f32 to vector<256x16xf32>
    %190 = arith.maximumf %188, %189 : vector<256x16xf32>
    %191 = vector.shape_cast %190 : vector<256x16xf32> to vector<16x16x16xf32>
    %192 = arith.truncf %191 : vector<16x16x16xf32> to vector<16x16x16xbf16>
    %c1_i32_152 = arith.constant 1 : i32
    %193 = arith.addi %174, %c1_i32_152 : i32
    %194 = arith.index_cast %193 : i32 to index
    %c1_153 = arith.constant 1 : index
    %c0_154 = arith.constant 0 : index
    %195 = vector.load %arg21[%194, %c1_153, %c0_154] : memref<18x18x16xbf16, #tpu.memory_space<vmem>>, vector<16x16x16xbf16>
    tpu.vector_store %arg21[%194, %c1_153, %c0_154], %192 {strides = array<i32>} : memref<18x18x16xbf16, #tpu.memory_space<vmem>>, vector<16x16x16xbf16>,
    %c1_i32_155 = arith.constant 1 : i32
    %c0_i32_156 = arith.constant 0 : i32
    %c16_i32_157 = arith.constant 16 : i32
    %196 = arith.muli %c0_i32_156, %c16_i32_157 : i32
    %197 = tpu.assume_multiple %196, 16 : i32
    %c0_i32_158 = arith.constant 0 : i32
    %198 = arith.addi %197, %c0_i32_158 : i32
    %199 = arith.index_cast %198 : i32 to index
    %c0_159 = arith.constant 0 : index
    %c0_160 = arith.constant 0 : index
    %200 = vector.load %arg21[%199, %c0_159, %c0_160] : memref<18x18x16xbf16, #tpu.memory_space<vmem>>, vector<16x16x16xbf16>
    %201 = vector.shape_cast %200 : vector<16x16x16xbf16> to vector<256x16xbf16>
    %c0_i32_161 = arith.constant 0 : i32
    %202 = arith.addi %197, %c0_i32_161 : i32
    %203 = arith.index_cast %202 : i32 to index
    %c1_162 = arith.constant 1 : index
    %c0_163 = arith.constant 0 : index
    %204 = vector.load %arg21[%203, %c1_162, %c0_163] : memref<18x18x16xbf16, #tpu.memory_space<vmem>>, vector<16x16x16xbf16>
    %205 = vector.shape_cast %204 : vector<16x16x16xbf16> to vector<256x16xbf16>
    %c0_i32_164 = arith.constant 0 : i32
    %206 = arith.addi %197, %c0_i32_164 : i32
    %207 = arith.index_cast %206 : i32 to index
    %c2_165 = arith.constant 2 : index
    %c0_166 = arith.constant 0 : index
    %208 = vector.load %arg21[%207, %c2_165, %c0_166] : memref<18x18x16xbf16, #tpu.memory_space<vmem>>, vector<16x16x16xbf16>
    %209 = vector.shape_cast %208 : vector<16x16x16xbf16> to vector<256x16xbf16>
    %c1_i32_167 = arith.constant 1 : i32
    %210 = arith.addi %197, %c1_i32_167 : i32
    %211 = arith.index_cast %210 : i32 to index
    %c0_168 = arith.constant 0 : index
    %c0_169 = arith.constant 0 : index
    %212 = vector.load %arg21[%211, %c0_168, %c0_169] : memref<18x18x16xbf16, #tpu.memory_space<vmem>>, vector<16x16x16xbf16>
    %213 = vector.shape_cast %212 : vector<16x16x16xbf16> to vector<256x16xbf16>
    %c1_i32_170 = arith.constant 1 : i32
    %214 = arith.addi %197, %c1_i32_170 : i32
    %215 = arith.index_cast %214 : i32 to index
    %c1_171 = arith.constant 1 : index
    %c0_172 = arith.constant 0 : index
    %216 = vector.load %arg21[%215, %c1_171, %c0_172] : memref<18x18x16xbf16, #tpu.memory_space<vmem>>, vector<16x16x16xbf16>
    %217 = vector.shape_cast %216 : vector<16x16x16xbf16> to vector<256x16xbf16>
    %c1_i32_173 = arith.constant 1 : i32
    %218 = arith.addi %197, %c1_i32_173 : i32
    %219 = arith.index_cast %218 : i32 to index
    %c2_174 = arith.constant 2 : index
    %c0_175 = arith.constant 0 : index
    %220 = vector.load %arg21[%219, %c2_174, %c0_175] : memref<18x18x16xbf16, #tpu.memory_space<vmem>>, vector<16x16x16xbf16>
    %221 = vector.shape_cast %220 : vector<16x16x16xbf16> to vector<256x16xbf16>
    %c2_i32_176 = arith.constant 2 : i32
    %222 = arith.addi %197, %c2_i32_176 : i32
    %223 = arith.index_cast %222 : i32 to index
    %c0_177 = arith.constant 0 : index
    %c0_178 = arith.constant 0 : index
    %224 = vector.load %arg21[%223, %c0_177, %c0_178] : memref<18x18x16xbf16, #tpu.memory_space<vmem>>, vector<16x16x16xbf16>
    %225 = vector.shape_cast %224 : vector<16x16x16xbf16> to vector<256x16xbf16>
    %c2_i32_179 = arith.constant 2 : i32
    %226 = arith.addi %197, %c2_i32_179 : i32
    %227 = arith.index_cast %226 : i32 to index
    %c1_180 = arith.constant 1 : index
    %c0_181 = arith.constant 0 : index
    %228 = vector.load %arg21[%227, %c1_180, %c0_181] : memref<18x18x16xbf16, #tpu.memory_space<vmem>>, vector<16x16x16xbf16>
    %229 = vector.shape_cast %228 : vector<16x16x16xbf16> to vector<256x16xbf16>
    %c2_i32_182 = arith.constant 2 : i32
    %230 = arith.addi %197, %c2_i32_182 : i32
    %231 = arith.index_cast %230 : i32 to index
    %c2_183 = arith.constant 2 : index
    %c0_184 = arith.constant 0 : index
    %232 = vector.load %arg21[%231, %c2_183, %c0_184] : memref<18x18x16xbf16, #tpu.memory_space<vmem>>, vector<16x16x16xbf16>
    %233 = vector.shape_cast %232 : vector<16x16x16xbf16> to vector<256x16xbf16>
    %234 = tpu.concatenate %201, %205, %209, %213, %217, %221, %225, %229, %233 in 1 : vector<256x16xbf16>, vector<256x16xbf16>, vector<256x16xbf16>, vector<256x16xbf16>, vector<256x16xbf16>, vector<256x16xbf16>, vector<256x16xbf16>, vector<256x16xbf16>, vector<256x16xbf16> -> vector<256x144xbf16>
    %cst_185 = arith.constant dense<0.000000e+00> : vector<256x4xf32>
    %235 = tpu.matmul %234, %171, %cst_185 {dimension_numbers = #tpu.dot_dimension_numbers<[1], [0], [0], [1], [0, 0, 1, 1], [], []>} : vector<256x144xbf16>, vector<144x4xbf16>, vector<256x4xf32> -> vector<256x4xf32>
    %236 = vector.broadcast %172 : vector<1x4xf32> to vector<256x4xf32>
    %237 = arith.addf %235, %236 : vector<256x4xf32>
    %238 = vector.shape_cast %237 : vector<256x4xf32> to vector<16x16x4xf32>
    %c0_186 = arith.constant 0 : index
    %239 = arith.index_cast %197 : i32 to index
    %c0_187 = arith.constant 0 : index
    %c12 = arith.constant 12 : index
    %240 = vector.load %arg20[%c0_186, %239, %c0_187, %c12] : memref<1x16x16x16xf32, #tpu.memory_space<vmem>>, vector<1x16x16x4xf32>
    %241 = vector.shape_cast %240 : vector<1x16x16x4xf32> to vector<16x16x4xf32>
    %242 = vector.shape_cast %238 : vector<16x16x4xf32> to vector<1x16x16x4xf32>
    tpu.vector_store %arg20[%c0_186, %239, %c0_187, %c12], %242 {strides = array<i32>} : memref<1x16x16x16xf32, #tpu.memory_space<vmem>>, vector<1x16x16x4xf32>,
    %c1_i32_188 = arith.constant 1 : i32
    return
  }
  func.func @transform_0(%arg0: i32) -> (i32, i32, i32, i32) {
    %c0_i32 = arith.constant 0 : i32
    %c0_i32_0 = arith.constant 0 : i32
    %c0_i32_1 = arith.constant 0 : i32
    %c0_i32_2 = arith.constant 0 : i32
    return %arg0, %c0_i32, %c0_i32_0, %c0_i32_1 : i32, i32, i32, i32
  }
  func.func @transform_1(%arg0: i32) -> (i32, i32) {
    %c0_i32 = arith.constant 0 : i32
    %c0_i32_0 = arith.constant 0 : i32
    %c0_i32_1 = arith.constant 0 : i32
    return %c0_i32, %c0_i32_0 : i32, i32
  }
  func.func @transform_2(%arg0: i32) -> (i32, i32) {
    %c0_i32 = arith.constant 0 : i32
    %c0_i32_0 = arith.constant 0 : i32
    %c0_i32_1 = arith.constant 0 : i32
    return %c0_i32, %c0_i32_0 : i32, i32
  }
  func.func @transform_3(%arg0: i32) -> (i32, i32) {
    %c0_i32 = arith.constant 0 : i32
    %c0_i32_0 = arith.constant 0 : i32
    %c0_i32_1 = arith.constant 0 : i32
    return %c0_i32, %c0_i32_0 : i32, i32
  }
  func.func @transform_4(%arg0: i32) -> (i32, i32) {
    %c0_i32 = arith.constant 0 : i32
    %c0_i32_0 = arith.constant 0 : i32
    %c0_i32_1 = arith.constant 0 : i32
    return %c0_i32, %c0_i32_0 : i32, i32
  }
  func.func @transform_5(%arg0: i32) -> (i32, i32) {
    %c0_i32 = arith.constant 0 : i32
    %c0_i32_0 = arith.constant 0 : i32
    %c0_i32_1 = arith.constant 0 : i32
    return %c0_i32, %c0_i32_0 : i32, i32
  }
  func.func @transform_6(%arg0: i32) -> (i32, i32) {
    %c0_i32 = arith.constant 0 : i32
    %c0_i32_0 = arith.constant 0 : i32
    %c0_i32_1 = arith.constant 0 : i32
    return %c0_i32, %c0_i32_0 : i32, i32
  }
  func.func @transform_7(%arg0: i32) -> (i32, i32) {
    %c0_i32 = arith.constant 0 : i32
    %c0_i32_0 = arith.constant 0 : i32
    %c0_i32_1 = arith.constant 0 : i32
    return %c0_i32, %c0_i32_0 : i32, i32
  }
  func.func @transform_8(%arg0: i32) -> (i32, i32) {
    %c0_i32 = arith.constant 0 : i32
    %c0_i32_0 = arith.constant 0 : i32
    %c0_i32_1 = arith.constant 0 : i32
    return %c0_i32, %c0_i32_0 : i32, i32
  }
  func.func @transform_9(%arg0: i32) -> (i32, i32) {
    %c0_i32 = arith.constant 0 : i32
    %c0_i32_0 = arith.constant 0 : i32
    %c0_i32_1 = arith.constant 0 : i32
    return %c0_i32, %c0_i32_0 : i32, i32
  }
  func.func @transform_10(%arg0: i32) -> (i32, i32) {
    %c0_i32 = arith.constant 0 : i32
    %c0_i32_0 = arith.constant 0 : i32
    %c0_i32_1 = arith.constant 0 : i32
    return %c0_i32, %c0_i32_0 : i32, i32
  }
  func.func @transform_11(%arg0: i32) -> (i32, i32) {
    %c0_i32 = arith.constant 0 : i32
    %c0_i32_0 = arith.constant 0 : i32
    %c0_i32_1 = arith.constant 0 : i32
    return %c0_i32, %c0_i32_0 : i32, i32
  }
  func.func @transform_12(%arg0: i32) -> (i32, i32) {
    %c0_i32 = arith.constant 0 : i32
    %c0_i32_0 = arith.constant 0 : i32
    %c0_i32_1 = arith.constant 0 : i32
    return %c0_i32, %c0_i32_0 : i32, i32
  }
  func.func @transform_13(%arg0: i32) -> (i32, i32) {
    %c0_i32 = arith.constant 0 : i32
    %c0_i32_0 = arith.constant 0 : i32
    %c0_i32_1 = arith.constant 0 : i32
    return %c0_i32, %c0_i32_0 : i32, i32
  }
  func.func @transform_14(%arg0: i32) -> (i32, i32) {
    %c0_i32 = arith.constant 0 : i32
    %c0_i32_0 = arith.constant 0 : i32
    %c0_i32_1 = arith.constant 0 : i32
    return %c0_i32, %c0_i32_0 : i32, i32
  }
  func.func @transform_15(%arg0: i32) -> (i32, i32) {
    %c0_i32 = arith.constant 0 : i32
    %c0_i32_0 = arith.constant 0 : i32
    %c0_i32_1 = arith.constant 0 : i32
    return %c0_i32, %c0_i32_0 : i32, i32
  }
  func.func @transform_16(%arg0: i32) -> (i32, i32) {
    %c0_i32 = arith.constant 0 : i32
    %c0_i32_0 = arith.constant 0 : i32
    %c0_i32_1 = arith.constant 0 : i32
    return %c0_i32, %c0_i32_0 : i32, i32
  }
  func.func @transform_17(%arg0: i32) -> (i32, i32) {
    %c0_i32 = arith.constant 0 : i32
    %c0_i32_0 = arith.constant 0 : i32
    %c0_i32_1 = arith.constant 0 : i32
    return %c0_i32, %c0_i32_0 : i32, i32
  }
  func.func @transform_18(%arg0: i32) -> (i32, i32) {
    %c0_i32 = arith.constant 0 : i32
    %c0_i32_0 = arith.constant 0 : i32
    %c0_i32_1 = arith.constant 0 : i32
    return %c0_i32, %c0_i32_0 : i32, i32
  }
  func.func @transform_19(%arg0: i32) -> (i32, i32, i32, i32) {
    %c0_i32 = arith.constant 0 : i32
    %c0_i32_0 = arith.constant 0 : i32
    %c0_i32_1 = arith.constant 0 : i32
    %c0_i32_2 = arith.constant 0 : i32
    return %arg0, %c0_i32, %c0_i32_0, %c0_i32_1 : i32, i32, i32, i32
  }
}

</mosaic_0001>

<llo_original>
// kernel: dense_block_pallas.1
$region0: #{dense_block_pallas.1}
  #allocation0 [shape = 'u32[]', space=smem, size = 0x4, offset = 0x4, fixed_abs, tag = 'smem constant byte address 0x4 - core index']
  #allocation1 [shape = 'u32[144,128]{1,0:T(1,128)}', space=vmem, size = 0x12000, scoped, tag = 'internal scratch']
  #allocation2 [shape = 'bf16[18,18,16]{2,1,0:T(8,128)(2,1)}', space=vmem, size = 0x1b000, scoped, tag = 'scratch operand']
  %s0 = inlined_call_operand.vmem [shape: f32[2,16,16,4], index: 0, kind: input, shape index: {}]
  %s1 = inlined_call_operand.vmem [shape: f32[1,16], index: 1, kind: input, shape index: {}]
  %s2 = inlined_call_operand.vmem [shape: f32[1,16], index: 2, kind: input, shape index: {}]
  %s3 = inlined_call_operand.vmem [shape: bf16[16,16], index: 3, kind: input, shape index: {}]
  %s4 = inlined_call_operand.vmem [shape: f32[1,16], index: 4, kind: input, shape index: {}]
  %s5 = inlined_call_operand.vmem [shape: bf16[144,4], index: 5, kind: input, shape index: {}]
  %s6 = inlined_call_operand.vmem [shape: f32[1,4], index: 6, kind: input, shape index: {}]
  %s7 = inlined_call_operand.vmem [shape: f32[1,16], index: 7, kind: input, shape index: {}]
  %s8 = inlined_call_operand.vmem [shape: f32[1,16], index: 8, kind: input, shape index: {}]
  %s9 = inlined_call_operand.vmem [shape: bf16[16,16], index: 9, kind: input, shape index: {}]
  %s10 = inlined_call_operand.vmem [shape: f32[1,16], index: 10, kind: input, shape index: {}]
  %s11 = inlined_call_operand.vmem [shape: bf16[144,4], index: 11, kind: input, shape index: {}]
  %s12 = inlined_call_operand.vmem [shape: f32[1,4], index: 12, kind: input, shape index: {}]
  %s13 = inlined_call_operand.vmem [shape: f32[1,16], index: 13, kind: input, shape index: {}]
  %s14 = inlined_call_operand.vmem [shape: f32[1,16], index: 14, kind: input, shape index: {}]
  %s15 = inlined_call_operand.vmem [shape: bf16[16,16], index: 15, kind: input, shape index: {}]
  %s16 = inlined_call_operand.vmem [shape: f32[1,16], index: 16, kind: input, shape index: {}]
  %s17 = inlined_call_operand.vmem [shape: bf16[144,4], index: 17, kind: input, shape index: {}]
  %s18 = inlined_call_operand.vmem [shape: f32[1,4], index: 18, kind: input, shape index: {}]
  %s19 = inlined_call_operand.vmem [shape: f32[2,16,16,16], index: 19, kind: output, shape index: {}]
  %s20 = sld [smem:[#allocation0]]
  $region109: #{dense_block_pallas.1} parent=0
    _
  %s22 = ssub.s32 1, %s20
  %s23 = scalar_select 0, %s22, %s20
  loop: start=0, step=1, limit=4
  $region2: #{dense_block_pallas.1} parent=0 // loop_pre_header
    _
  $region3: #{dense_block_pallas.1} parent=0 // loop_header
    %s25 = sphi 0, %s29
    %p26 = scmp.ge.s32.totalorder %s25, 4
    %s35 = sphi 0, %s37
    %s38 = sphi 0, %s35
    %s39 = sphi 0, %s38
    %s55 = sphi 0, %s39
    %s59 = sphi 0, %s59
    %s61 = sphi 0, %s59
    %s62 = sphi 0, %s61
    %s76 = sphi 0, %s62
    %s80 = sphi 0, %s80
    %s82 = sphi 0, %s80
    %s83 = sphi 0, %s82
    %s97 = sphi 0, %s83
    %s101 = sphi 0, %s101
    %s103 = sphi 0, %s101
    %s104 = sphi 0, %s103
    %s118 = sphi 0, %s104
    %s122 = sphi 0, %s122
    %s124 = sphi 0, %s122
    %s125 = sphi 0, %s124
    %s139 = sphi 0, %s125
    %s143 = sphi 0, %s143
    %s145 = sphi 0, %s143
    %s146 = sphi 0, %s145
    %s160 = sphi 0, %s146
    %s164 = sphi 0, %s164
    %s166 = sphi 0, %s164
    %s167 = sphi 0, %s166
    %s181 = sphi 0, %s167
    %s185 = sphi 0, %s185
    %s187 = sphi 0, %s185
    %s188 = sphi 0, %s187
    %s202 = sphi 0, %s188
    %s206 = sphi 0, %s206
    %s208 = sphi 0, %s206
    %s209 = sphi 0, %s208
    %s223 = sphi 0, %s209
    %s227 = sphi 0, %s227
    %s229 = sphi 0, %s227
    %s230 = sphi 0, %s229
    %s244 = sphi 0, %s230
    %s248 = sphi 0, %s248
    %s250 = sphi 0, %s248
    %s251 = sphi 0, %s250
    %s265 = sphi 0, %s251
    %s269 = sphi 0, %s269
    %s271 = sphi 0, %s269
    %s272 = sphi 0, %s271
    %s286 = sphi 0, %s272
    %s290 = sphi 0, %s290
    %s292 = sphi 0, %s290
    %s293 = sphi 0, %s292
    %s307 = sphi 0, %s293
    %s311 = sphi 0, %s311
    %s313 = sphi 0, %s311
    %s314 = sphi 0, %s313
    %s328 = sphi 0, %s314
    %s332 = sphi 0, %s332
    %s334 = sphi 0, %s332
    %s335 = sphi 0, %s334
    %s349 = sphi 0, %s335
    %s353 = sphi 0, %s353
    %s355 = sphi 0, %s353
    %s356 = sphi 0, %s355
    %s370 = sphi 0, %s356
    %s374 = sphi 0, %s374
    %s376 = sphi 0, %s374
    %s377 = sphi 0, %s376
    %s391 = sphi 0, %s377
    %s395 = sphi 0, %s395
    %s397 = sphi 0, %s395
    %s398 = sphi 0, %s397
    %s412 = sphi 0, %s398
    %s416 = sphi 0, %s416
    %s418 = sphi 0, %s416
    %s419 = sphi 0, %s418
    %s433 = sphi 0, %s419
    %s439 = sphi 0, %s441
    %s442 = sphi 0, %s439
    %s443 = sphi 0, %s442
    %s459 = sphi 0, %s443
  $region4: #{dense_block_pallas.1} parent=0 // loop_header_branch
    %28 = sbr.rel (%p26) target = $region8
  $region5: #{dense_block_pallas.1} parent=0 // loop_body
    %s30 = ssub.s32 %s25, 1
    %s31 = ssub.s32 %s25, 2
    %s32 = sadd.s32 %s25, 1
    %s33 = ssub.s32 %s25, %s32
    %p34 = scmp.eq.s32.totalorder %s33, 0
    %s36 = sadd.s32 %s35, 1
    %s37 = scalar_select %p34, %s35, %s36
    %p40 = pneg %p34
    %p41 = scmp.eq.s32.totalorder %s25, 1
    %p42 = por %p40, %p41
    %p43 = scmp.ne.s32.totalorder %s35, %s38
    %p44 = scmp.eq.s32.totalorder %s25, 0
    %p45 = por %p43, %p44
    %p46 = scmp.ne.s32.totalorder %s35, %s38
    %p47 = scmp.eq.s32.totalorder %s30, 1
    %p48 = por %p46, %p47
    %p49 = scmp.ne.s32.totalorder %s38, %s39
    %p50 = scmp.eq.s32.totalorder %s30, 0
    %p51 = por %p49, %p50
    %p52 = scmp.ne.s32.totalorder %s38, %s39
    %p53 = scmp.eq.s32.totalorder %s31, 1
    %p54 = por %p52, %p53
    %p56 = scmp.ne.s32.totalorder %s39, %s55
    %p57 = scmp.eq.s32.totalorder %s31, 0
    %p58 = por %p56, %p57
    %s60 = sadd.s32 %s59, 1
    %p63 = scmp.eq.s32.totalorder %s25, 1
    %p64 = scmp.ne.s32.totalorder %s59, %s61
    %p65 = scmp.eq.s32.totalorder %s25, 0
    %p66 = por %p64, %p65
    %p67 = scmp.ne.s32.totalorder %s59, %s61
    %p68 = scmp.eq.s32.totalorder %s30, 1
    %p69 = por %p67, %p68
    %p70 = scmp.ne.s32.totalorder %s61, %s62
    %p71 = scmp.eq.s32.totalorder %s30, 0
    %p72 = por %p70, %p71
    %p73 = scmp.ne.s32.totalorder %s61, %s62
    %p74 = scmp.eq.s32.totalorder %s31, 1
    %p75 = por %p73, %p74
    %p77 = scmp.ne.s32.totalorder %s62, %s76
    %p78 = scmp.eq.s32.totalorder %s31, 0
    %p79 = por %p77, %p78
    %s81 = sadd.s32 %s80, 1
    %p84 = scmp.eq.s32.totalorder %s25, 1
    %p85 = scmp.ne.s32.totalorder %s80, %s82
    %p86 = scmp.eq.s32.totalorder %s25, 0
    %p87 = por %p85, %p86
    %p88 = scmp.ne.s32.totalorder %s80, %s82
    %p89 = scmp.eq.s32.totalorder %s30, 1
    %p90 = por %p88, %p89
    %p91 = scmp.ne.s32.totalorder %s82, %s83
    %p92 = scmp.eq.s32.totalorder %s30, 0
    %p93 = por %p91, %p92
    %p94 = scmp.ne.s32.totalorder %s82, %s83
    %p95 = scmp.eq.s32.totalorder %s31, 1
    %p96 = por %p94, %p95
    %p98 = scmp.ne.s32.totalorder %s83, %s97
    %p99 = scmp.eq.s32.totalorder %s31, 0
    %p100 = por %p98, %p99
    %s102 = sadd.s32 %s101, 1
    %p105 = scmp.eq.s32.totalorder %s25, 1
    %p106 = scmp.ne.s32.totalorder %s101, %s103
    %p107 = scmp.eq.s32.totalorder %s25, 0
    %p108 = por %p106, %p107
    %p109 = scmp.ne.s32.totalorder %s101, %s103
    %p110 = scmp.eq.s32.totalorder %s30, 1
    %p111 = por %p109, %p110
    %p112 = scmp.ne.s32.totalorder %s103, %s104
    %p113 = scmp.eq.s32.totalorder %s30, 0
    %p114 = por %p112, %p113
    %p115 = scmp.ne.s32.totalorder %s103, %s104
    %p116 = scmp.eq.s32.totalorder %s31, 1
    %p117 = por %p115, %p116
    %p119 = scmp.ne.s32.totalorder %s104, %s118
    %p120 = scmp.eq.s32.totalorder %s31, 0
    %p121 = por %p119, %p120
    %s123 = sadd.s32 %s122, 1
    %p126 = scmp.eq.s32.totalorder %s25, 1
    %p127 = scmp.ne.s32.totalorder %s122, %s124
    %p128 = scmp.eq.s32.totalorder %s25, 0
    %p129 = por %p127, %p128
    %p130 = scmp.ne.s32.totalorder %s122, %s124
    %p131 = scmp.eq.s32.totalorder %s30, 1
    %p132 = por %p130, %p131
    %p133 = scmp.ne.s32.totalorder %s124, %s125
    %p134 = scmp.eq.s32.totalorder %s30, 0
    %p135 = por %p133, %p134
    %p136 = scmp.ne.s32.totalorder %s124, %s125
    %p137 = scmp.eq.s32.totalorder %s31, 1
    %p138 = por %p136, %p137
    %p140 = scmp.ne.s32.totalorder %s125, %s139
    %p141 = scmp.eq.s32.totalorder %s31, 0
    %p142 = por %p140, %p141
    %s144 = sadd.s32 %s143, 1
    %p147 = scmp.eq.s32.totalorder %s25, 1
    %p148 = scmp.ne.s32.totalorder %s143, %s145
    %p149 = scmp.eq.s32.totalorder %s25, 0
    %p150 = por %p148, %p149
    %p151 = scmp.ne.s32.totalorder %s143, %s145
    %p152 = scmp.eq.s32.totalorder %s30, 1
    %p153 = por %p151, %p152
    %p154 = scmp.ne.s32.totalorder %s145, %s146
    %p155 = scmp.eq.s32.totalorder %s30, 0
    %p156 = por %p154, %p155
    %p157 = scmp.ne.s32.totalorder %s145, %s146
    %p158 = scmp.eq.s32.totalorder %s31, 1
    %p159 = por %p157, %p158
    %p161 = scmp.ne.s32.totalorder %s146, %s160
    %p162 = scmp.eq.s32.totalorder %s31, 0
    %p163 = por %p161, %p162
    %s165 = sadd.s32 %s164, 1
    %p168 = scmp.eq.s32.totalorder %s25, 1
    %p169 = scmp.ne.s32.totalorder %s164, %s166
    %p170 = scmp.eq.s32.totalorder %s25, 0
    %p171 = por %p169, %p170
    %p172 = scmp.ne.s32.totalorder %s164, %s166
    %p173 = scmp.eq.s32.totalorder %s30, 1
    %p174 = por %p172, %p173
    %p175 = scmp.ne.s32.totalorder %s166, %s167
    %p176 = scmp.eq.s32.totalorder %s30, 0
    %p177 = por %p175, %p176
    %p178 = scmp.ne.s32.totalorder %s166, %s167
    %p179 = scmp.eq.s32.totalorder %s31, 1
    %p180 = por %p178, %p179
    %p182 = scmp.ne.s32.totalorder %s167, %s181
    %p183 = scmp.eq.s32.totalorder %s31, 0
    %p184 = por %p182, %p183
    %s186 = sadd.s32 %s185, 1
    %p189 = scmp.eq.s32.totalorder %s25, 1
    %p190 = scmp.ne.s32.totalorder %s185, %s187
    %p191 = scmp.eq.s32.totalorder %s25, 0
    %p192 = por %p190, %p191
    %p193 = scmp.ne.s32.totalorder %s185, %s187
    %p194 = scmp.eq.s32.totalorder %s30, 1
    %p195 = por %p193, %p194
    %p196 = scmp.ne.s32.totalorder %s187, %s188
    %p197 = scmp.eq.s32.totalorder %s30, 0
    %p198 = por %p196, %p197
    %p199 = scmp.ne.s32.totalorder %s187, %s188
    %p200 = scmp.eq.s32.totalorder %s31, 1
    %p201 = por %p199, %p200
    %p203 = scmp.ne.s32.totalorder %s188, %s202
    %p204 = scmp.eq.s32.totalorder %s31, 0
    %p205 = por %p203, %p204
    %s207 = sadd.s32 %s206, 1
    %p210 = scmp.eq.s32.totalorder %s25, 1
    %p211 = scmp.ne.s32.totalorder %s206, %s208
    %p212 = scmp.eq.s32.totalorder %s25, 0
    %p213 = por %p211, %p212
    %p214 = scmp.ne.s32.totalorder %s206, %s208
    %p215 = scmp.eq.s32.totalorder %s30, 1
    %p216 = por %p214, %p215
    %p217 = scmp.ne.s32.totalorder %s208, %s209
    %p218 = scmp.eq.s32.totalorder %s30, 0
    %p219 = por %p217, %p218
    %p220 = scmp.ne.s32.totalorder %s208, %s209
    %p221 = scmp.eq.s32.totalorder %s31, 1
    %p222 = por %p220, %p221
    %p224 = scmp.ne.s32.totalorder %s209, %s223
    %p225 = scmp.eq.s32.totalorder %s31, 0
    %p226 = por %p224, %p225
    %s228 = sadd.s32 %s227, 1
    %p231 = scmp.eq.s32.totalorder %s25, 1
    %p232 = scmp.ne.s32.totalorder %s227, %s229
    %p233 = scmp.eq.s32.totalorder %s25, 0
    %p234 = por %p232, %p233
    %p235 = scmp.ne.s32.totalorder %s227, %s229
    %p236 = scmp.eq.s32.totalorder %s30, 1
    %p237 = por %p235, %p236
    %p238 = scmp.ne.s32.totalorder %s229, %s230
    %p239 = scmp.eq.s32.totalorder %s30, 0
    %p240 = por %p238, %p239
    %p241 = scmp.ne.s32.totalorder %s229, %s230
    %p242 = scmp.eq.s32.totalorder %s31, 1
    %p243 = por %p241, %p242
    %p245 = scmp.ne.s32.totalorder %s230, %s244
    %p246 = scmp.eq.s32.totalorder %s31, 0
    %p247 = por %p245, %p246
    %s249 = sadd.s32 %s248, 1
    %p252 = scmp.eq.s32.totalorder %s25, 1
    %p253 = scmp.ne.s32.totalorder %s248, %s250
    %p254 = scmp.eq.s32.totalorder %s25, 0
    %p255 = por %p253, %p254
    %p256 = scmp.ne.s32.totalorder %s248, %s250
    %p257 = scmp.eq.s32.totalorder %s30, 1
    %p258 = por %p256, %p257
    %p259 = scmp.ne.s32.totalorder %s250, %s251
    %p260 = scmp.eq.s32.totalorder %s30, 0
    %p261 = por %p259, %p260
    %p262 = scmp.ne.s32.totalorder %s250, %s251
    %p263 = scmp.eq.s32.totalorder %s31, 1
    %p264 = por %p262, %p263
    %p266 = scmp.ne.s32.totalorder %s251, %s265
    %p267 = scmp.eq.s32.totalorder %s31, 0
    %p268 = por %p266, %p267
    %s270 = sadd.s32 %s269, 1
    %p273 = scmp.eq.s32.totalorder %s25, 1
    %p274 = scmp.ne.s32.totalorder %s269, %s271
    %p275 = scmp.eq.s32.totalorder %s25, 0
    %p276 = por %p274, %p275
    %p277 = scmp.ne.s32.totalorder %s269, %s271
    %p278 = scmp.eq.s32.totalorder %s30, 1
    %p279 = por %p277, %p278
    %p280 = scmp.ne.s32.totalorder %s271, %s272
    %p281 = scmp.eq.s32.totalorder %s30, 0
    %p282 = por %p280, %p281
    %p283 = scmp.ne.s32.totalorder %s271, %s272
    %p284 = scmp.eq.s32.totalorder %s31, 1
    %p285 = por %p283, %p284
    %p287 = scmp.ne.s32.totalorder %s272, %s286
    %p288 = scmp.eq.s32.totalorder %s31, 0
    %p289 = por %p287, %p288
    %s291 = sadd.s32 %s290, 1
    %p294 = scmp.eq.s32.totalorder %s25, 1
    %p295 = scmp.ne.s32.totalorder %s290, %s292
    %p296 = scmp.eq.s32.totalorder %s25, 0
    %p297 = por %p295, %p296
    %p298 = scmp.ne.s32.totalorder %s290, %s292
    %p299 = scmp.eq.s32.totalorder %s30, 1
    %p300 = por %p298, %p299
    %p301 = scmp.ne.s32.totalorder %s292, %s293
    %p302 = scmp.eq.s32.totalorder %s30, 0
    %p303 = por %p301, %p302
    %p304 = scmp.ne.s32.totalorder %s292, %s293
    %p305 = scmp.eq.s32.totalorder %s31, 1
    %p306 = por %p304, %p305
    %p308 = scmp.ne.s32.totalorder %s293, %s307
    %p309 = scmp.eq.s32.totalorder %s31, 0
    %p310 = por %p308, %p309
    %s312 = sadd.s32 %s311, 1
    %p315 = scmp.eq.s32.totalorder %s25, 1
    %p316 = scmp.ne.s32.totalorder %s311, %s313
    %p317 = scmp.eq.s32.totalorder %s25, 0
    %p318 = por %p316, %p317
    %p319 = scmp.ne.s32.totalorder %s311, %s313
    %p320 = scmp.eq.s32.totalorder %s30, 1
    %p321 = por %p319, %p320
    %p322 = scmp.ne.s32.totalorder %s313, %s314
    %p323 = scmp.eq.s32.totalorder %s30, 0
    %p324 = por %p322, %p323
    %p325 = scmp.ne.s32.totalorder %s313, %s314
    %p326 = scmp.eq.s32.totalorder %s31, 1
    %p327 = por %p325, %p326
    %p329 = scmp.ne.s32.totalorder %s314, %s328
    %p330 = scmp.eq.s32.totalorder %s31, 0
    %p331 = por %p329, %p330
    %s333 = sadd.s32 %s332, 1
    %p336 = scmp.eq.s32.totalorder %s25, 1
    %p337 = scmp.ne.s32.totalorder %s332, %s334
    %p338 = scmp.eq.s32.totalorder %s25, 0
    %p339 = por %p337, %p338
    %p340 = scmp.ne.s32.totalorder %s332, %s334
    %p341 = scmp.eq.s32.totalorder %s30, 1
    %p342 = por %p340, %p341
    %p343 = scmp.ne.s32.totalorder %s334, %s335
    %p344 = scmp.eq.s32.totalorder %s30, 0
    %p345 = por %p343, %p344
    %p346 = scmp.ne.s32.totalorder %s334, %s335
    %p347 = scmp.eq.s32.totalorder %s31, 1
    %p348 = por %p346, %p347
    %p350 = scmp.ne.s32.totalorder %s335, %s349
    %p351 = scmp.eq.s32.totalorder %s31, 0
    %p352 = por %p350, %p351
    %s354 = sadd.s32 %s353, 1
    %p357 = scmp.eq.s32.totalorder %s25, 1
    %p358 = scmp.ne.s32.totalorder %s353, %s355
    %p359 = scmp.eq.s32.totalorder %s25, 0
    %p360 = por %p358, %p359
    %p361 = scmp.ne.s32.totalorder %s353, %s355
    %p362 = scmp.eq.s32.totalorder %s30, 1
    %p363 = por %p361, %p362
    %p364 = scmp.ne.s32.totalorder %s355, %s356
    %p365 = scmp.eq.s32.totalorder %s30, 0
    %p366 = por %p364, %p365
    %p367 = scmp.ne.s32.totalorder %s355, %s356
    %p368 = scmp.eq.s32.totalorder %s31, 1
    %p369 = por %p367, %p368
    %p371 = scmp.ne.s32.totalorder %s356, %s370
    %p372 = scmp.eq.s32.totalorder %s31, 0
    %p373 = por %p371, %p372
    %s375 = sadd.s32 %s374, 1
    %p378 = scmp.eq.s32.totalorder %s25, 1
    %p379 = scmp.ne.s32.totalorder %s374, %s376
    %p380 = scmp.eq.s32.totalorder %s25, 0
    %p381 = por %p379, %p380
    %p382 = scmp.ne.s32.totalorder %s374, %s376
    %p383 = scmp.eq.s32.totalorder %s30, 1
    %p384 = por %p382, %p383
    %p385 = scmp.ne.s32.totalorder %s376, %s377
    %p386 = scmp.eq.s32.totalorder %s30, 0
    %p387 = por %p385, %p386
    %p388 = scmp.ne.s32.totalorder %s376, %s377
    %p389 = scmp.eq.s32.totalorder %s31, 1
    %p390 = por %p388, %p389
    %p392 = scmp.ne.s32.totalorder %s377, %s391
    %p393 = scmp.eq.s32.totalorder %s31, 0
    %p394 = por %p392, %p393
    %s396 = sadd.s32 %s395, 1
    %p399 = scmp.eq.s32.totalorder %s25, 1
    %p400 = scmp.ne.s32.totalorder %s395, %s397
    %p401 = scmp.eq.s32.totalorder %s25, 0
    %p402 = por %p400, %p401
    %p403 = scmp.ne.s32.totalorder %s395, %s397
    %p404 = scmp.eq.s32.totalorder %s30, 1
    %p405 = por %p403, %p404
    %p406 = scmp.ne.s32.totalorder %s397, %s398
    %p407 = scmp.eq.s32.totalorder %s30, 0
    %p408 = por %p406, %p407
    %p409 = scmp.ne.s32.totalorder %s397, %s398
    %p410 = scmp.eq.s32.totalorder %s31, 1
    %p411 = por %p409, %p410
    %p413 = scmp.ne.s32.totalorder %s398, %s412
    %p414 = scmp.eq.s32.totalorder %s31, 0
    %p415 = por %p413, %p414
    %s417 = sadd.s32 %s416, 1
    %p420 = scmp.eq.s32.totalorder %s25, 1
    %p421 = scmp.ne.s32.totalorder %s416, %s418
    %p422 = scmp.eq.s32.totalorder %s25, 0
    %p423 = por %p421, %p422
    %p424 = scmp.ne.s32.totalorder %s416, %s418
    %p425 = scmp.eq.s32.totalorder %s30, 1
    %p426 = por %p424, %p425
    %p427 = scmp.ne.s32.totalorder %s418, %s419
    %p428 = scmp.eq.s32.totalorder %s30, 0
    %p429 = por %p427, %p428
    %p430 = scmp.ne.s32.totalorder %s418, %s419
    %p431 = scmp.eq.s32.totalorder %s31, 1
    %p432 = por %p430, %p431
    %p434 = scmp.ne.s32.totalorder %s419, %s433
    %p435 = scmp.eq.s32.totalorder %s31, 0
    %p436 = por %p434, %p435
    %s437 = ssub.s32 %s25, %s32
    %p438 = scmp.eq.s32.totalorder %s437, 0
    %s440 = sadd.s32 %s439, 1
    %s441 = scalar_select %p438, %s439, %s440
    %p444 = pneg %p438
    %p445 = scmp.eq.s32.totalorder %s25, 1
    %p446 = por %p444, %p445
    %p447 = scmp.ne.s32.totalorder %s439, %s442
    %p448 = scmp.eq.s32.totalorder %s25, 0
    %p449 = por %p447, %p448
    %p450 = scmp.ne.s32.totalorder %s439, %s442
    %p451 = scmp.eq.s32.totalorder %s30, 1
    %p452 = por %p450, %p451
    %p453 = scmp.ne.s32.totalorder %s442, %s443
    %p454 = scmp.eq.s32.totalorder %s30, 0
    %p455 = por %p453, %p454
    %p456 = scmp.ne.s32.totalorder %s442, %s443
    %p457 = scmp.eq.s32.totalorder %s31, 1
    %p458 = por %p456, %p457
    %p460 = scmp.ne.s32.totalorder %s443, %s459
    %p461 = scmp.eq.s32.totalorder %s31, 0
    %p462 = por %p460, %p461
    %p463 = scmp.le.s32.totalorder 1, %s25
    %p464 = scmp.lt.s32.totalorder %s25, 3
    %p465 = pnand %p463, %p464
    %p466 = pneg %p465
    // Predicated region
    $region9: #{dense_block_pallas.1} parent=5 // pred_check
      _
    $region10: #{dense_block_pallas.1} parent=5 // pred_check_branch
      %468 = sbr.rel (%p465) target = $region12
    $region11: #{dense_block_pallas.1} parent=5 // pred_region
      %s469 = ssub.s32 %s25, 1
      // Predicated region
      $region13: #{dense_block_pallas.1} parent=11 // pred_check
        %p470 = pneg %p72
      $region14: #{dense_block_pallas.1} parent=11 // pred_check_branch
        %472 = sbr.rel (%p470) target = $region16
      $region15: #{dense_block_pallas.1} parent=11 // pred_region
        _
      $region16: #{dense_block_pallas.1} parent=11 // pred_fallthru
        _
      // Predicated region
      $region17: #{dense_block_pallas.1} parent=11 // pred_check
        %p473 = pneg %p93
      $region18: #{dense_block_pallas.1} parent=11 // pred_check_branch
        %475 = sbr.rel (%p473) target = $region20
      $region19: #{dense_block_pallas.1} parent=11 // pred_region
        _
      $region20: #{dense_block_pallas.1} parent=11 // pred_fallthru
        _
      // Predicated region
      $region21: #{dense_block_pallas.1} parent=11 // pred_check
        %p476 = pneg %p114
      $region22: #{dense_block_pallas.1} parent=11 // pred_check_branch
        %478 = sbr.rel (%p476) target = $region24
      $region23: #{dense_block_pallas.1} parent=11 // pred_region
        _
      $region24: #{dense_block_pallas.1} parent=11 // pred_fallthru
        _
      // Predicated region
      $region25: #{dense_block_pallas.1} parent=11 // pred_check
        %p479 = pneg %p135
      $region26: #{dense_block_pallas.1} parent=11 // pred_check_branch
        %481 = sbr.rel (%p479) target = $region28
      $region27: #{dense_block_pallas.1} parent=11 // pred_region
        _
      $region28: #{dense_block_pallas.1} parent=11 // pred_fallthru
        _
      // Predicated region
      $region29: #{dense_block_pallas.1} parent=11 // pred_check
        %p482 = pneg %p156
      $region30: #{dense_block_pallas.1} parent=11 // pred_check_branch
        %484 = sbr.rel (%p482) target = $region32
      $region31: #{dense_block_pallas.1} parent=11 // pred_region
        _
      $region32: #{dense_block_pallas.1} parent=11 // pred_fallthru
        _
      // Predicated region
      $region33: #{dense_block_pallas.1} parent=11 // pred_check
        %p485 = pneg %p177
      $region34: #{dense_block_pallas.1} parent=11 // pred_check_branch
        %487 = sbr.rel (%p485) target = $region36
      $region35: #{dense_block_pallas.1} parent=11 // pred_region
        _
      $region36: #{dense_block_pallas.1} parent=11 // pred_fallthru
        _
      // Predicated region
      $region37: #{dense_block_pallas.1} parent=11 // pred_check
        %p488 = pneg %p198
      $region38: #{dense_block_pallas.1} parent=11 // pred_check_branch
        %490 = sbr.rel (%p488) target = $region40
      $region39: #{dense_block_pallas.1} parent=11 // pred_region
        _
      $region40: #{dense_block_pallas.1} parent=11 // pred_fallthru
        _
      // Predicated region
      $region41: #{dense_block_pallas.1} parent=11 // pred_check
        %p491 = pneg %p219
      $region42: #{dense_block_pallas.1} parent=11 // pred_check_branch
        %493 = sbr.rel (%p491) target = $region44
      $region43: #{dense_block_pallas.1} parent=11 // pred_region
        _
      $region44: #{dense_block_pallas.1} parent=11 // pred_fallthru
        _
      // Predicated region
      $region45: #{dense_block_pallas.1} parent=11 // pred_check
        %p494 = pneg %p240
      $region46: #{dense_block_pallas.1} parent=11 // pred_check_branch
        %496 = sbr.rel (%p494) target = $region48
      $region47: #{dense_block_pallas.1} parent=11 // pred_region
        _
      $region48: #{dense_block_pallas.1} parent=11 // pred_fallthru
        _
      // Predicated region
      $region49: #{dense_block_pallas.1} parent=11 // pred_check
        %p497 = pneg %p261
      $region50: #{dense_block_pallas.1} parent=11 // pred_check_branch
        %499 = sbr.rel (%p497) target = $region52
      $region51: #{dense_block_pallas.1} parent=11 // pred_region
        _
      $region52: #{dense_block_pallas.1} parent=11 // pred_fallthru
        _
      // Predicated region
      $region53: #{dense_block_pallas.1} parent=11 // pred_check
        %p500 = pneg %p282
      $region54: #{dense_block_pallas.1} parent=11 // pred_check_branch
        %502 = sbr.rel (%p500) target = $region56
      $region55: #{dense_block_pallas.1} parent=11 // pred_region
        _
      $region56: #{dense_block_pallas.1} parent=11 // pred_fallthru
        _
      // Predicated region
      $region57: #{dense_block_pallas.1} parent=11 // pred_check
        %p503 = pneg %p303
      $region58: #{dense_block_pallas.1} parent=11 // pred_check_branch
        %505 = sbr.rel (%p503) target = $region60
      $region59: #{dense_block_pallas.1} parent=11 // pred_region
        _
      $region60: #{dense_block_pallas.1} parent=11 // pred_fallthru
        _
      // Predicated region
      $region61: #{dense_block_pallas.1} parent=11 // pred_check
        %p506 = pneg %p324
      $region62: #{dense_block_pallas.1} parent=11 // pred_check_branch
        %508 = sbr.rel (%p506) target = $region64
      $region63: #{dense_block_pallas.1} parent=11 // pred_region
        _
      $region64: #{dense_block_pallas.1} parent=11 // pred_fallthru
        _
      // Predicated region
      $region65: #{dense_block_pallas.1} parent=11 // pred_check
        %p509 = pneg %p345
      $region66: #{dense_block_pallas.1} parent=11 // pred_check_branch
        %511 = sbr.rel (%p509) target = $region68
      $region67: #{dense_block_pallas.1} parent=11 // pred_region
        _
      $region68: #{dense_block_pallas.1} parent=11 // pred_fallthru
        _
      // Predicated region
      $region69: #{dense_block_pallas.1} parent=11 // pred_check
        %p512 = pneg %p366
      $region70: #{dense_block_pallas.1} parent=11 // pred_check_branch
        %514 = sbr.rel (%p512) target = $region72
      $region71: #{dense_block_pallas.1} parent=11 // pred_region
        _
      $region72: #{dense_block_pallas.1} parent=11 // pred_fallthru
        _
      // Predicated region
      $region73: #{dense_block_pallas.1} parent=11 // pred_check
        %p515 = pneg %p387
      $region74: #{dense_block_pallas.1} parent=11 // pred_check_branch
        %517 = sbr.rel (%p515) target = $region76
      $region75: #{dense_block_pallas.1} parent=11 // pred_region
        _
      $region76: #{dense_block_pallas.1} parent=11 // pred_fallthru
        _
      // Predicated region
      $region77: #{dense_block_pallas.1} parent=11 // pred_check
        %p518 = pneg %p408
      $region78: #{dense_block_pallas.1} parent=11 // pred_check_branch
        %520 = sbr.rel (%p518) target = $region80
      $region79: #{dense_block_pallas.1} parent=11 // pred_region
        _
      $region80: #{dense_block_pallas.1} parent=11 // pred_fallthru
        _
      // Predicated region
      $region81: #{dense_block_pallas.1} parent=11 // pred_check
        %p521 = pneg %p429
      $region82: #{dense_block_pallas.1} parent=11 // pred_check_branch
        %523 = sbr.rel (%p521) target = $region84
      $region83: #{dense_block_pallas.1} parent=11 // pred_region
        _
      $region84: #{dense_block_pallas.1} parent=11 // pred_fallthru
        _
    $region12: #{dense_block_pallas.1} parent=5 // pred_fallthru
      _
    %p524 = scmp.lt.s32.totalorder %s25, 2
    // Predicated region
    $region85: #{dense_block_pallas.1} parent=5 // pred_check
      %p525 = pneg %p524
    $region86: #{dense_block_pallas.1} parent=5 // pred_check_branch
      %527 = sbr.rel (%p525) target = $region88
    $region87: #{dense_block_pallas.1} parent=5 // pred_region
      // Predicated region
      $region89: #{dense_block_pallas.1} parent=87 // pred_check
        %p528 = pneg %p45
      $region90: #{dense_block_pallas.1} parent=87 // pred_check_branch
        %530 = sbr.rel (%p528) target = $region92
      $region91: #{dense_block_pallas.1} parent=87 // pred_region
        %p531 = scmp.lt.s32.totalorder %s25, 1
        %s532 = scalar_select %p531, %s25, 1
        %s533 = smul.addr %s532, 32
        %s534 = smul.addr %s533, 8
        %s535 = scalar_lea.vmem %s0, %s534
      $region92: #{dense_block_pallas.1} parent=87 // pred_fallthru
        _
    $region88: #{dense_block_pallas.1} parent=5 // pred_fallthru
      _
    %p536 = scmp.le.s32.totalorder 1, %s25
    %p537 = scmp.lt.s32.totalorder %s25, 3
    %p538 = pnand %p536, %p537
    %p539 = pneg %p538
    // Predicated region
    $region93: #{dense_block_pallas.1} parent=5 // pred_check
      _
    $region94: #{dense_block_pallas.1} parent=5 // pred_check_branch
      %541 = sbr.rel (%p538) target = $region96
    $region95: #{dense_block_pallas.1} parent=5 // pred_region
      %s542 = ssub.s32 %s25, 1
      %p543 = scmp.lt.s32.totalorder %s30, 1
      %s544 = scalar_select %p543, %s30, 1
      %s545 = smul.addr %s544, 32
      %s546 = smul.addr %s545, 8
      %s547 = scalar_lea.vmem %s0, %s546
      %p548 = pneg %p51
      %p549 = pneg %p48
      %p550 = pneg %p72
      %p551 = pneg %p69
      %p552 = pneg %p93
      %p553 = pneg %p90
      %p554 = pneg %p114
      %p555 = pneg %p111
      %p556 = pneg %p135
      %p557 = pneg %p132
      %p558 = pneg %p156
      %p559 = pneg %p153
      %p560 = pneg %p177
      %p561 = pneg %p174
      %p562 = pneg %p198
      %p563 = pneg %p195
      %p564 = pneg %p219
      %p565 = pneg %p216
      %p566 = pneg %p240
      %p567 = pneg %p237
      %p568 = pneg %p261
      %p569 = pneg %p258
      %p570 = pneg %p282
      %p571 = pneg %p279
      %p572 = pneg %p303
      %p573 = pneg %p300
      %p574 = pneg %p324
      %p575 = pneg %p321
      %p576 = pneg %p345
      %p577 = pneg %p342
      %p578 = pneg %p366
      %p579 = pneg %p363
      %p580 = pneg %p387
      %p581 = pneg %p384
      %p582 = pneg %p408
      %p583 = pneg %p405
      %p584 = pneg %p429
      %p585 = pneg %p426
      %p586 = pneg %p455
      %p587 = pneg %p452
      %p588 = scmp.lt.s32.totalorder %s30, 1
      %s589 = scalar_select %p588, %s30, 1
      %s590 = smul.addr %s589, 32
      %s591 = smul.addr %s590, 8
      %s592 = scalar_lea.vmem %s19, %s591
      %p593 = scmp.lt.s32.totalorder %s30, 1
      %s594 = scalar_select %p593, %s30, 1
      %s595 = smul.addr %s594, 32
      %s596 = smul.addr %s595, 8
      %s597 = scalar_lea.vmem %s0, %s596
      %p598 = scmp.lt.s32.totalorder %s30, 1
      %s599 = scalar_select %p598, %s30, 1
      %s600 = smul.addr %s599, 32
      %s601 = smul.addr %s600, 8
      %s602 = scalar_lea.vmem %s19, %s601
      %v604 = vld [vmem:[%s597] sm:$0xff]
      %v605 = vld [vmem:[%s597 + $0x8] sm:$0xff]
      %v606 = vld [vmem:[%s597 + $0x10] sm:$0xff]
      %v607 = vld [vmem:[%s597 + $0x18] sm:$0xff]
      %v608 = vld [vmem:[%s597 + $0x20] sm:$0xff]
      %v609 = vld [vmem:[%s597 + $0x28] sm:$0xff]
      %v610 = vld [vmem:[%s597 + $0x30] sm:$0xff]
      %v611 = vld [vmem:[%s597 + $0x38] sm:$0xff]
      %v612 = vld [vmem:[%s597 + $0x40] sm:$0xff]
      %v613 = vld [vmem:[%s597 + $0x48] sm:$0xff]
      %v614 = vld [vmem:[%s597 + $0x50] sm:$0xff]
      %v615 = vld [vmem:[%s597 + $0x58] sm:$0xff]
      %v616 = vld [vmem:[%s597 + $0x60] sm:$0xff]
      %v617 = vld [vmem:[%s597 + $0x68] sm:$0xff]
      %v618 = vld [vmem:[%s597 + $0x70] sm:$0xff]
      %v619 = vld [vmem:[%s597 + $0x78] sm:$0xff]
      %v620 = vld [vmem:[%s597 + $0x80] sm:$0xff]
      %v621 = vld [vmem:[%s597 + $0x88] sm:$0xff]
      %v622 = vld [vmem:[%s597 + $0x90] sm:$0xff]
      %v623 = vld [vmem:[%s597 + $0x98] sm:$0xff]
      %v624 = vld [vmem:[%s597 + $0xa0] sm:$0xff]
      %v625 = vld [vmem:[%s597 + $0xa8] sm:$0xff]
      %v626 = vld [vmem:[%s597 + $0xb0] sm:$0xff]
      %v627 = vld [vmem:[%s597 + $0xb8] sm:$0xff]
      %v628 = vld [vmem:[%s597 + $0xc0] sm:$0xff]
      %v629 = vld [vmem:[%s597 + $0xc8] sm:$0xff]
      %v630 = vld [vmem:[%s597 + $0xd0] sm:$0xff]
      %v631 = vld [vmem:[%s597 + $0xd8] sm:$0xff]
      %v632 = vld [vmem:[%s597 + $0xe0] sm:$0xff]
      %v633 = vld [vmem:[%s597 + $0xe8] sm:$0xff]
      %v634 = vld [vmem:[%s597 + $0xf0] sm:$0xff]
      %v635 = vld [vmem:[%s597 + $0xf8] sm:$0xff]
      %vm636 = vcmask 31744
      %637 = vst.msk [vmem:[%s602] sm:$0xff] %vm636, %v604
      %638 = vst.msk [vmem:[%s602 + $0x8] sm:$0xff] %vm636, %v605
      %639 = vst.msk [vmem:[%s602 + $0x10] sm:$0xff] %vm636, %v606
      %640 = vst.msk [vmem:[%s602 + $0x18] sm:$0xff] %vm636, %v607
      %641 = vst.msk [vmem:[%s602 + $0x20] sm:$0xff] %vm636, %v608
      %642 = vst.msk [vmem:[%s602 + $0x28] sm:$0xff] %vm636, %v609
      %643 = vst.msk [vmem:[%s602 + $0x30] sm:$0xff] %vm636, %v610
      %644 = vst.msk [vmem:[%s602 + $0x38] sm:$0xff] %vm636, %v611
      %645 = vst.msk [vmem:[%s602 + $0x40] sm:$0xff] %vm636, %v612
      %646 = vst.msk [vmem:[%s602 + $0x48] sm:$0xff] %vm636, %v613
      %647 = vst.msk [vmem:[%s602 + $0x50] sm:$0xff] %vm636, %v614
      %648 = vst.msk [vmem:[%s602 + $0x58] sm:$0xff] %vm636, %v615
      %649 = vst.msk [vmem:[%s602 + $0x60] sm:$0xff] %vm636, %v616
      %650 = vst.msk [vmem:[%s602 + $0x68] sm:$0xff] %vm636, %v617
      %651 = vst.msk [vmem:[%s602 + $0x70] sm:$0xff] %vm636, %v618
      %652 = vst.msk [vmem:[%s602 + $0x78] sm:$0xff] %vm636, %v619
      %653 = vst.msk [vmem:[%s602 + $0x80] sm:$0xff] %vm636, %v620
      %654 = vst.msk [vmem:[%s602 + $0x88] sm:$0xff] %vm636, %v621
      %655 = vst.msk [vmem:[%s602 + $0x90] sm:$0xff] %vm636, %v622
      %656 = vst.msk [vmem:[%s602 + $0x98] sm:$0xff] %vm636, %v623
      %657 = vst.msk [vmem:[%s602 + $0xa0] sm:$0xff] %vm636, %v624
      %658 = vst.msk [vmem:[%s602 + $0xa8] sm:$0xff] %vm636, %v625
      %659 = vst.msk [vmem:[%s602 + $0xb0] sm:$0xff] %vm636, %v626
      %660 = vst.msk [vmem:[%s602 + $0xb8] sm:$0xff] %vm636, %v627
      %661 = vst.msk [vmem:[%s602 + $0xc0] sm:$0xff] %vm636, %v628
      %662 = vst.msk [vmem:[%s602 + $0xc8] sm:$0xff] %vm636, %v629
      %663 = vst.msk [vmem:[%s602 + $0xd0] sm:$0xff] %vm636, %v630
      %664 = vst.msk [vmem:[%s602 + $0xd8] sm:$0xff] %vm636, %v631
      %665 = vst.msk [vmem:[%s602 + $0xe0] sm:$0xff] %vm636, %v632
      %666 = vst.msk [vmem:[%s602 + $0xe8] sm:$0xff] %vm636, %v633
      %667 = vst.msk [vmem:[%s602 + $0xf0] sm:$0xff] %vm636, %v634
      %668 = vst.msk [vmem:[%s602 + $0xf8] sm:$0xff] %vm636, %v635
      %vm669 = vcmask 130080
      %670 = vst.msk [vmem:[%s602] sm:$0xff] %vm669, 0.0
      %671 = vst.msk [vmem:[%s602 + $0x8] sm:$0xff] %vm669, 0.0
      %672 = vst.msk [vmem:[%s602 + $0x10] sm:$0xff] %vm669, 0.0
      %673 = vst.msk [vmem:[%s602 + $0x18] sm:$0xff] %vm669, 0.0
      %674 = vst.msk [vmem:[%s602 + $0x20] sm:$0xff] %vm669, 0.0
      %675 = vst.msk [vmem:[%s602 + $0x28] sm:$0xff] %vm669, 0.0
      %676 = vst.msk [vmem:[%s602 + $0x30] sm:$0xff] %vm669, 0.0
      %677 = vst.msk [vmem:[%s602 + $0x38] sm:$0xff] %vm669, 0.0
      %678 = vst.msk [vmem:[%s602 + $0x40] sm:$0xff] %vm669, 0.0
      %679 = vst.msk [vmem:[%s602 + $0x48] sm:$0xff] %vm669, 0.0
      %680 = vst.msk [vmem:[%s602 + $0x50] sm:$0xff] %vm669, 0.0
      %681 = vst.msk [vmem:[%s602 + $0x58] sm:$0xff] %vm669, 0.0
      %682 = vst.msk [vmem:[%s602 + $0x60] sm:$0xff] %vm669, 0.0
      %683 = vst.msk [vmem:[%s602 + $0x68] sm:$0xff] %vm669, 0.0
      %684 = vst.msk [vmem:[%s602 + $0x70] sm:$0xff] %vm669, 0.0
      %685 = vst.msk [vmem:[%s602 + $0x78] sm:$0xff] %vm669, 0.0
      %686 = vst.msk [vmem:[%s602 + $0x80] sm:$0xff] %vm669, 0.0
      %687 = vst.msk [vmem:[%s602 + $0x88] sm:$0xff] %vm669, 0.0
      %688 = vst.msk [vmem:[%s602 + $0x90] sm:$0xff] %vm669, 0.0
      %689 = vst.msk [vmem:[%s602 + $0x98] sm:$0xff] %vm669, 0.0
      %690 = vst.msk [vmem:[%s602 + $0xa0] sm:$0xff] %vm669, 0.0
      %691 = vst.msk [vmem:[%s602 + $0xa8] sm:$0xff] %vm669, 0.0
      %692 = vst.msk [vmem:[%s602 + $0xb0] sm:$0xff] %vm669, 0.0
      %693 = vst.msk [vmem:[%s602 + $0xb8] sm:$0xff] %vm669, 0.0
      %694 = vst.msk [vmem:[%s602 + $0xc0] sm:$0xff] %vm669, 0.0
      %695 = vst.msk [vmem:[%s602 + $0xc8] sm:$0xff] %vm669, 0.0
      %696 = vst.msk [vmem:[%s602 + $0xd0] sm:$0xff] %vm669, 0.0
      %697 = vst.msk [vmem:[%s602 + $0xd8] sm:$0xff] %vm669, 0.0
      %698 = vst.msk [vmem:[%s602 + $0xe0] sm:$0xff] %vm669, 0.0
      %699 = vst.msk [vmem:[%s602 + $0xe8] sm:$0xff] %vm669, 0.0
      %700 = vst.msk [vmem:[%s602 + $0xf0] sm:$0xff] %vm669, 0.0
      %701 = vst.msk [vmem:[%s602 + $0xf8] sm:$0xff] %vm669, 0.0
      %vm702 = vcmask 125952
      %703 = vst.msk [vmem:[#allocation2] sm:$0xf] %vm702, 0
      %704 = vst.msk [vmem:[#allocation2 + $0x4] sm:$0xf] %vm702, 0
      %vm705 = vcmask 122880
      %706 = vst.msk [vmem:[#allocation2 + $0x8] sm:$0x1] %vm705, 0
      %s707 = scalar_lea.vmem [#allocation2], 204
      %708 = vst.msk [vmem:[%s707] sm:$0xf] %vm702, 0
      %709 = vst.msk [vmem:[%s707 + $0x4] sm:$0xf] %vm702, 0
      %710 = vst.msk [vmem:[%s707 + $0x8] sm:$0x1] %vm705, 0
      %s711 = scalar_lea.vmem [#allocation2], 12
      %vm712 = vcmask 122880
      %vm713 = vsmask.f32 256
      %vm714 = vmand %vm712, %vm713
      %v715 = vld [vmem:[%s711] sm:$0x1]
      %v716 = vsel %vm714, 0, %v715
      %717 = vst [vmem:[%s711] sm:$0x1] %v716
      %v718 = vld [vmem:[%s711 + $0xc] sm:$0x1]
      %v719 = vsel %vm714, 0, %v718
      %720 = vst [vmem:[%s711 + $0xc] sm:$0x1] %v719
      %v721 = vld [vmem:[%s711 + $0x18] sm:$0x1]
      %v722 = vsel %vm714, 0, %v721
      %723 = vst [vmem:[%s711 + $0x18] sm:$0x1] %v722
      %v724 = vld [vmem:[%s711 + $0x24] sm:$0x1]
      %v725 = vsel %vm714, 0, %v724
      %726 = vst [vmem:[%s711 + $0x24] sm:$0x1] %v725
      %v727 = vld [vmem:[%s711 + $0x30] sm:$0x1]
      %v728 = vsel %vm714, 0, %v727
      %729 = vst [vmem:[%s711 + $0x30] sm:$0x1] %v728
      %v730 = vld [vmem:[%s711 + $0x3c] sm:$0x1]
      %v731 = vsel %vm714, 0, %v730
      %732 = vst [vmem:[%s711 + $0x3c] sm:$0x1] %v731
      %v733 = vld [vmem:[%s711 + $0x48] sm:$0x1]
      %v734 = vsel %vm714, 0, %v733
      %735 = vst [vmem:[%s711 + $0x48] sm:$0x1] %v734
      %v736 = vld [vmem:[%s711 + $0x54] sm:$0x1]
      %v737 = vsel %vm714, 0, %v736
      %738 = vst [vmem:[%s711 + $0x54] sm:$0x1] %v737
      %v739 = vld [vmem:[%s711 + $0x60] sm:$0x1]
      %v740 = vsel %vm714, 0, %v739
      %741 = vst [vmem:[%s711 + $0x60] sm:$0x1] %v740
      %v742 = vld [vmem:[%s711 + $0x6c] sm:$0x1]
      %v743 = vsel %vm714, 0, %v742
      %744 = vst [vmem:[%s711 + $0x6c] sm:$0x1] %v743
      %v745 = vld [vmem:[%s711 + $0x78] sm:$0x1]
      %v746 = vsel %vm714, 0, %v745
      %747 = vst [vmem:[%s711 + $0x78] sm:$0x1] %v746
      %v748 = vld [vmem:[%s711 + $0x84] sm:$0x1]
      %v749 = vsel %vm714, 0, %v748
      %750 = vst [vmem:[%s711 + $0x84] sm:$0x1] %v749
      %v751 = vld [vmem:[%s711 + $0x90] sm:$0x1]
      %v752 = vsel %vm714, 0, %v751
      %753 = vst [vmem:[%s711 + $0x90] sm:$0x1] %v752
      %v754 = vld [vmem:[%s711 + $0x9c] sm:$0x1]
      %v755 = vsel %vm714, 0, %v754
      %756 = vst [vmem:[%s711 + $0x9c] sm:$0x1] %v755
      %v757 = vld [vmem:[%s711 + $0xa8] sm:$0x1]
      %v758 = vsel %vm714, 0, %v757
      %759 = vst [vmem:[%s711 + $0xa8] sm:$0x1] %v758
      %v760 = vld [vmem:[%s711 + $0xb4] sm:$0x1]
      %v761 = vsel %vm714, 0, %v760
      %762 = vst [vmem:[%s711 + $0xb4] sm:$0x1] %v761
      %vm763 = vsmask.f32 7938
      %vm764 = vmand %vm712, %vm763
      %v765 = vld [vmem:[%s711 + $0x8] sm:$0x1]
      %v766 = vsel %vm764, 0, %v765
      %767 = vst [vmem:[%s711 + $0x8] sm:$0x1] %v766
      %v768 = vld [vmem:[%s711 + $0x14] sm:$0x1]
      %v769 = vsel %vm764, 0, %v768
      %770 = vst [vmem:[%s711 + $0x14] sm:$0x1] %v769
      %v771 = vld [vmem:[%s711 + $0x20] sm:$0x1]
      %v772 = vsel %vm764, 0, %v771
      %773 = vst [vmem:[%s711 + $0x20] sm:$0x1] %v772
      %v774 = vld [vmem:[%s711 + $0x2c] sm:$0x1]
      %v775 = vsel %vm764, 0, %v774
      %776 = vst [vmem:[%s711 + $0x2c] sm:$0x1] %v775
      %v777 = vld [vmem:[%s711 + $0x38] sm:$0x1]
      %v778 = vsel %vm764, 0, %v777
      %779 = vst [vmem:[%s711 + $0x38] sm:$0x1] %v778
      %v780 = vld [vmem:[%s711 + $0x44] sm:$0x1]
      %v781 = vsel %vm764, 0, %v780
      %782 = vst [vmem:[%s711 + $0x44] sm:$0x1] %v781
      %v783 = vld [vmem:[%s711 + $0x50] sm:$0x1]
      %v784 = vsel %vm764, 0, %v783
      %785 = vst [vmem:[%s711 + $0x50] sm:$0x1] %v784
      %v786 = vld [vmem:[%s711 + $0x5c] sm:$0x1]
      %v787 = vsel %vm764, 0, %v786
      %788 = vst [vmem:[%s711 + $0x5c] sm:$0x1] %v787
      %v789 = vld [vmem:[%s711 + $0x68] sm:$0x1]
      %v790 = vsel %vm764, 0, %v789
      %791 = vst [vmem:[%s711 + $0x68] sm:$0x1] %v790
      %v792 = vld [vmem:[%s711 + $0x74] sm:$0x1]
      %v793 = vsel %vm764, 0, %v792
      %794 = vst [vmem:[%s711 + $0x74] sm:$0x1] %v793
      %v795 = vld [vmem:[%s711 + $0x80] sm:$0x1]
      %v796 = vsel %vm764, 0, %v795
      %797 = vst [vmem:[%s711 + $0x80] sm:$0x1] %v796
      %v798 = vld [vmem:[%s711 + $0x8c] sm:$0x1]
      %v799 = vsel %vm764, 0, %v798
      %800 = vst [vmem:[%s711 + $0x8c] sm:$0x1] %v799
      %v801 = vld [vmem:[%s711 + $0x98] sm:$0x1]
      %v802 = vsel %vm764, 0, %v801
      %803 = vst [vmem:[%s711 + $0x98] sm:$0x1] %v802
      %v804 = vld [vmem:[%s711 + $0xa4] sm:$0x1]
      %v805 = vsel %vm764, 0, %v804
      %806 = vst [vmem:[%s711 + $0xa4] sm:$0x1] %v805
      %v807 = vld [vmem:[%s711 + $0xb0] sm:$0x1]
      %v808 = vsel %vm764, 0, %v807
      %809 = vst [vmem:[%s711 + $0xb0] sm:$0x1] %v808
      %v810 = vld [vmem:[%s711 + $0xbc] sm:$0x1]
      %v811 = vsel %vm764, 0, %v810
      %812 = vst [vmem:[%s711 + $0xbc] sm:$0x1] %v811
      %v813 = vld [vmem:[%s1] sm:$0x1]
      %v814 = vld [vmem:[%s2] sm:$0x1]
      %v815 = vld [vmem:[%s3] sm:$0xf]
      %v816 = vld [vmem:[%s3 + $0x4] sm:$0xf]
      %v817 = vld [vmem:[%s4] sm:$0x1]
      %v818 = vld [vmem:[%s5] sm:$0xf]
      %v819 = vld [vmem:[%s5 + $0x4] sm:$0xf]
      %v820 = vld [vmem:[%s5 + $0x8] sm:$0xf]
      %v821 = vld [vmem:[%s5 + $0xc] sm:$0xf]
      %v822 = vld [vmem:[%s5 + $0x10] sm:$0xf]
      %v823 = vld [vmem:[%s5 + $0x14] sm:$0xf]
      %v824 = vld [vmem:[%s5 + $0x18] sm:$0xf]
      %v825 = vld [vmem:[%s5 + $0x1c] sm:$0xf]
      %v826 = vld [vmem:[%s5 + $0x20] sm:$0xf]
      %v827 = vld [vmem:[%s5 + $0x24] sm:$0xf]
      %v828 = vld [vmem:[%s5 + $0x28] sm:$0xf]
      %v829 = vld [vmem:[%s5 + $0x2c] sm:$0xf]
      %v830 = vld [vmem:[%s5 + $0x30] sm:$0xf]
      %v831 = vld [vmem:[%s5 + $0x34] sm:$0xf]
      %v832 = vld [vmem:[%s5 + $0x38] sm:$0xf]
      %v833 = vld [vmem:[%s5 + $0x3c] sm:$0xf]
      %v834 = vld [vmem:[%s5 + $0x40] sm:$0xf]
      %v835 = vld [vmem:[%s5 + $0x44] sm:$0xf]
      %v836 = vld [vmem:[%s6] sm:$0x1]
      %s837 = smul.u32 0, 16
      %s838 = scalar_lea.vmem %s602, %s837
      %v839 = vld [vmem:[%s838] sm:$0xff]
      %v840 = vld [vmem:[%s838 + $0x8] sm:$0xff]
      %v841 = vld [vmem:[%s838 + $0x10] sm:$0xff]
      %v842 = vld [vmem:[%s838 + $0x18] sm:$0xff]
      %v843 = vld [vmem:[%s838 + $0x20] sm:$0xff]
      %v844 = vld [vmem:[%s838 + $0x28] sm:$0xff]
      %v845 = vld [vmem:[%s838 + $0x30] sm:$0xff]
      %v846 = vld [vmem:[%s838 + $0x38] sm:$0xff]
      %v847 = vld [vmem:[%s838 + $0x40] sm:$0xff]
      %v848 = vld [vmem:[%s838 + $0x48] sm:$0xff]
      %v849 = vld [vmem:[%s838 + $0x50] sm:$0xff]
      %v850 = vld [vmem:[%s838 + $0x58] sm:$0xff]
      %v851 = vld [vmem:[%s838 + $0x60] sm:$0xff]
      %v852 = vld [vmem:[%s838 + $0x68] sm:$0xff]
      %v853 = vld [vmem:[%s838 + $0x70] sm:$0xff]
      %v854 = vld [vmem:[%s838 + $0x78] sm:$0xff]
      %v855 = vld [vmem:[%s838 + $0x80] sm:$0xff]
      %v856 = vld [vmem:[%s838 + $0x88] sm:$0xff]
      %v857 = vld [vmem:[%s838 + $0x90] sm:$0xff]
      %v858 = vld [vmem:[%s838 + $0x98] sm:$0xff]
      %v859 = vld [vmem:[%s838 + $0xa0] sm:$0xff]
      %v860 = vld [vmem:[%s838 + $0xa8] sm:$0xff]
      %v861 = vld [vmem:[%s838 + $0xb0] sm:$0xff]
      %v862 = vld [vmem:[%s838 + $0xb8] sm:$0xff]
      %v863 = vld [vmem:[%s838 + $0xc0] sm:$0xff]
      %v864 = vld [vmem:[%s838 + $0xc8] sm:$0xff]
      %v865 = vld [vmem:[%s838 + $0xd0] sm:$0xff]
      %v866 = vld [vmem:[%s838 + $0xd8] sm:$0xff]
      %v867 = vld [vmem:[%s838 + $0xe0] sm:$0xff]
      %v868 = vld [vmem:[%s838 + $0xe8] sm:$0xff]
      %v869 = vld [vmem:[%s838 + $0xf0] sm:$0xff]
      %v870 = vld [vmem:[%s838 + $0xf8] sm:$0xff]
      %v872 = vlaneseq
      %v873 = vshrl.u32 %v872, 7
      %v874 = vsub.s32 0, %v873
      %v875 = vrot.slane %v813, %v874
      %v877 = vmul.f32 %v839, %v875
      %v878 = vmul.f32 %v840, %v875
      %v879 = vmul.f32 %v841, %v875
      %v880 = vmul.f32 %v842, %v875
      %v881 = vmul.f32 %v843, %v875
      %v882 = vmul.f32 %v844, %v875
      %v883 = vmul.f32 %v845, %v875
      %v884 = vmul.f32 %v846, %v875
      %v885 = vmul.f32 %v847, %v875
      %v886 = vmul.f32 %v848, %v875
      %v887 = vmul.f32 %v849, %v875
      %v888 = vmul.f32 %v850, %v875
      %v889 = vmul.f32 %v851, %v875
      %v890 = vmul.f32 %v852, %v875
      %v891 = vmul.f32 %v853, %v875
      %v892 = vmul.f32 %v854, %v875
      %v893 = vmul.f32 %v855, %v875
      %v894 = vmul.f32 %v856, %v875
      %v895 = vmul.f32 %v857, %v875
      %v896 = vmul.f32 %v858, %v875
      %v897 = vmul.f32 %v859, %v875
      %v898 = vmul.f32 %v860, %v875
      %v899 = vmul.f32 %v861, %v875
      %v900 = vmul.f32 %v862, %v875
      %v901 = vmul.f32 %v863, %v875
      %v902 = vmul.f32 %v864, %v875
      %v903 = vmul.f32 %v865, %v875
      %v904 = vmul.f32 %v866, %v875
      %v905 = vmul.f32 %v867, %v875
      %v906 = vmul.f32 %v868, %v875
      %v907 = vmul.f32 %v869, %v875
      %v908 = vmul.f32 %v870, %v875
      %v910 = vlaneseq
      %v911 = vshrl.u32 %v910, 7
      %v912 = vsub.s32 0, %v911
      %v913 = vrot.slane %v814, %v912
      %v915 = vadd.f32 %v877, %v913
      %v916 = vadd.f32 %v878, %v913
      %v917 = vadd.f32 %v879, %v913
      %v918 = vadd.f32 %v880, %v913
      %v919 = vadd.f32 %v881, %v913
      %v920 = vadd.f32 %v882, %v913
      %v921 = vadd.f32 %v883, %v913
      %v922 = vadd.f32 %v884, %v913
      %v923 = vadd.f32 %v885, %v913
      %v924 = vadd.f32 %v886, %v913
      %v925 = vadd.f32 %v887, %v913
      %v926 = vadd.f32 %v888, %v913
      %v927 = vadd.f32 %v889, %v913
      %v928 = vadd.f32 %v890, %v913
      %v929 = vadd.f32 %v891, %v913
      %v930 = vadd.f32 %v892, %v913
      %v931 = vadd.f32 %v893, %v913
      %v932 = vadd.f32 %v894, %v913
      %v933 = vadd.f32 %v895, %v913
      %v934 = vadd.f32 %v896, %v913
      %v935 = vadd.f32 %v897, %v913
      %v936 = vadd.f32 %v898, %v913
      %v937 = vadd.f32 %v899, %v913
      %v938 = vadd.f32 %v900, %v913
      %v939 = vadd.f32 %v901, %v913
      %v940 = vadd.f32 %v902, %v913
      %v941 = vadd.f32 %v903, %v913
      %v942 = vadd.f32 %v904, %v913
      %v943 = vadd.f32 %v905, %v913
      %v944 = vadd.f32 %v906, %v913
      %v945 = vadd.f32 %v907, %v913
      %v946 = vadd.f32 %v908, %v913
      %v947 = vmax.f32 %v915, 0.0
      %v948 = vmax.f32 %v916, 0.0
      %v949 = vmax.f32 %v917, 0.0
      %v950 = vmax.f32 %v918, 0.0
      %v951 = vmax.f32 %v919, 0.0
      %v952 = vmax.f32 %v920, 0.0
      %v953 = vmax.f32 %v921, 0.0
      %v954 = vmax.f32 %v922, 0.0
      %v955 = vmax.f32 %v923, 0.0
      %v956 = vmax.f32 %v924, 0.0
      %v957 = vmax.f32 %v925, 0.0
      %v958 = vmax.f32 %v926, 0.0
      %v959 = vmax.f32 %v927, 0.0
      %v960 = vmax.f32 %v928, 0.0
      %v961 = vmax.f32 %v929, 0.0
      %v962 = vmax.f32 %v930, 0.0
      %v963 = vmax.f32 %v931, 0.0
      %v964 = vmax.f32 %v932, 0.0
      %v965 = vmax.f32 %v933, 0.0
      %v966 = vmax.f32 %v934, 0.0
      %v967 = vmax.f32 %v935, 0.0
      %v968 = vmax.f32 %v936, 0.0
      %v969 = vmax.f32 %v937, 0.0
      %v970 = vmax.f32 %v938, 0.0
      %v971 = vmax.f32 %v939, 0.0
      %v972 = vmax.f32 %v940, 0.0
      %v973 = vmax.f32 %v941, 0.0
      %v974 = vmax.f32 %v942, 0.0
      %v975 = vmax.f32 %v943, 0.0
      %v976 = vmax.f32 %v944, 0.0
      %v977 = vmax.f32 %v945, 0.0
      %v978 = vmax.f32 %v946, 0.0
      %v979 = vpack.c.bf16 %v948, %v947
      %v980 = vpack.c.bf16 %v950, %v949
      %v981 = vpack.c.bf16 %v952, %v951
      %v982 = vpack.c.bf16 %v954, %v953
      %v983 = vpack.c.bf16 %v956, %v955
      %v984 = vpack.c.bf16 %v958, %v957
      %v985 = vpack.c.bf16 %v960, %v959
      %v986 = vpack.c.bf16 %v962, %v961
      %v987 = vpack.c.bf16 %v964, %v963
      %v988 = vpack.c.bf16 %v966, %v965
      %v989 = vpack.c.bf16 %v968, %v967
      %v990 = vpack.c.bf16 %v970, %v969
      %v991 = vpack.c.bf16 %v972, %v971
      %v992 = vpack.c.bf16 %v974, %v973
      %v993 = vpack.c.bf16 %v976, %v975
      %v994 = vpack.c.bf16 %v978, %v977
      %v996 = vlaneseq
      %v997 = vshrl.u32 %v996, 7
      %v998 = vsub.s32 0, %v997
      %v999 = vrot.slane %v817, %v998
      %v1003 = vunpack.c.l.b16 %v815
      %v1004 = vunpack.c.l.b16 %v816
      %v1005 = vpack.c.b16 %v1004, %v1003
      %vm1007 = vcmask 130048
      %v1009 = vsel %vm1007, %v979, 0
      %v1012 = vsel %vm1007, %v980, 0
      %v1015 = vsel %vm1007, %v981, 0
      %v1018 = vsel %vm1007, %v982, 0
      %v1021 = vsel %vm1007, %v983, 0
      %v1024 = vsel %vm1007, %v984, 0
      %v1027 = vsel %vm1007, %v985, 0
      %v1030 = vsel %vm1007, %v986, 0
      %v1033 = vsel %vm1007, %v987, 0
      %v1036 = vsel %vm1007, %v988, 0
      %v1039 = vsel %vm1007, %v989, 0
      %v1042 = vsel %vm1007, %v990, 0
      %v1045 = vsel %vm1007, %v991, 0
      %v1048 = vsel %vm1007, %v992, 0
      %v1051 = vsel %vm1007, %v993, 0
      %v1054 = vsel %vm1007, %v994, 0
      %1056 = vmatprep.subr.bf16.mxu0 0
      %1057 = vmatpush1.bf16.msra.mxu0 0
      %1058 = vmatprep.subr.bf16.mxu0 0
      %1059 = vmatpush1.bf16.msra.mxu0 0
      %1060 = vmatprep.subr.bf16.mxu0 0
      %1061 = vmatpush1.bf16.msra.mxu0 0
      %1062 = vmatprep.subr.bf16.mxu0 0
      %1063 = vmatpush1.bf16.msra.mxu0 0
      %1064 = vmatprep.subr.bf16.mxu0 0
      %1065 = vmatpush1.bf16.msra.mxu0 0
      %1066 = vmatprep.subr.bf16.mxu0 0
      %1067 = vmatpush1.bf16.msra.mxu0 0
      %1068 = vmatprep.subr.bf16.mxu0 0
      %1069 = vmatpush1.bf16.msra.mxu0 0
      %1070 = vmatprep.subr.bf16.mxu0 0
      %1071 = vmatpush1.bf16.msra.mxu0 %v1005
      %1072 = vmatprep.subr.bf16.mxu0 0
      %1073 = vmatpush2.bf16.msra.mxu0 0
      %1074 = vmatprep.subr.bf16.mxu0 0
      %1075 = vmatpush2.bf16.msra.mxu0 0
      %1076 = vmatprep.subr.bf16.mxu0 0
      %1077 = vmatpush2.bf16.msra.mxu0 0
      %1078 = vmatprep.subr.bf16.mxu0 0
      %1079 = vmatpush2.bf16.msra.mxu0 0
      %1080 = vmatprep.subr.bf16.mxu0 0
      %1081 = vmatpush2.bf16.msra.mxu0 0
      %1082 = vmatprep.subr.bf16.mxu0 0
      %1083 = vmatpush2.bf16.msra.mxu0 0
      %1084 = vmatprep.subr.bf16.mxu0 0
      %1085 = vmatpush2.bf16.msra.mxu0 0
      %1086 = vmatprep.subr.bf16.mxu0 0
      %1087 = vmatpush2.bf16.msra.mxu0 0
      %1088 = vmatprep.mubr.bf16.mxu0 0
      %1089 = vmatmul.mubr.bf16.gmra.mxu0 %v1009
      %v1090 = vpop.f32.mrf.mxu0
      %v1091 = vadd.f32 %v999, %v1090
      %v1092 = vpop.f32.mrf.mxu0
      %v1093 = vpop.f32.mrf.mxu0
      %v1094 = vadd.f32 %v999, %v1093
      %v1095 = vpop.f32.mrf.mxu0
      %1096 = vmatprep.mubr.bf16.mxu0 0
      %1097 = vmatmul.mubr.bf16.gmra.mxu0 %v1012
      %v1098 = vpop.f32.mrf.mxu0
      %v1099 = vadd.f32 %v999, %v1098
      %v1100 = vpop.f32.mrf.mxu0
      %v1101 = vpop.f32.mrf.mxu0
      %v1102 = vadd.f32 %v999, %v1101
      %v1103 = vpop.f32.mrf.mxu0
      %1104 = vmatprep.mubr.bf16.mxu0 0
      %1105 = vmatmul.mubr.bf16.gmra.mxu0 %v1015
      %v1106 = vpop.f32.mrf.mxu0
      %v1107 = vadd.f32 %v999, %v1106
      %v1108 = vpop.f32.mrf.mxu0
      %v1109 = vpop.f32.mrf.mxu0
      %v1110 = vadd.f32 %v999, %v1109
      %v1111 = vpop.f32.mrf.mxu0
      %1112 = vmatprep.mubr.bf16.mxu0 0
      %1113 = vmatmul.mubr.bf16.gmra.mxu0 %v1018
      %v1114 = vpop.f32.mrf.mxu0
      %v1115 = vadd.f32 %v999, %v1114
      %v1116 = vpop.f32.mrf.mxu0
      %v1117 = vpop.f32.mrf.mxu0
      %v1118 = vadd.f32 %v999, %v1117
      %v1119 = vpop.f32.mrf.mxu0
      %1120 = vmatprep.mubr.bf16.mxu0 0
      %1121 = vmatmul.mubr.bf16.gmra.mxu0 %v1021
      %v1122 = vpop.f32.mrf.mxu0
      %v1123 = vadd.f32 %v999, %v1122
      %v1124 = vpop.f32.mrf.mxu0
      %v1125 = vpop.f32.mrf.mxu0
      %v1126 = vadd.f32 %v999, %v1125
      %v1127 = vpop.f32.mrf.mxu0
      %1128 = vmatprep.mubr.bf16.mxu0 0
      %1129 = vmatmul.mubr.bf16.gmra.mxu0 %v1024
      %v1130 = vpop.f32.mrf.mxu0
      %v1131 = vadd.f32 %v999, %v1130
      %v1132 = vpop.f32.mrf.mxu0
      %v1133 = vpop.f32.mrf.mxu0
      %v1134 = vadd.f32 %v999, %v1133
      %v1135 = vpop.f32.mrf.mxu0
      %1136 = vmatprep.mubr.bf16.mxu0 0
      %1137 = vmatmul.mubr.bf16.gmra.mxu0 %v1027
      %v1138 = vpop.f32.mrf.mxu0
      %v1139 = vadd.f32 %v999, %v1138
      %v1140 = vpop.f32.mrf.mxu0
      %v1141 = vpop.f32.mrf.mxu0
      %v1142 = vadd.f32 %v999, %v1141
      %v1143 = vpop.f32.mrf.mxu0
      %1144 = vmatprep.mubr.bf16.mxu0 0
      %1145 = vmatmul.mubr.bf16.gmra.mxu0 %v1030
      %v1146 = vpop.f32.mrf.mxu0
      %v1147 = vadd.f32 %v999, %v1146
      %v1148 = vpop.f32.mrf.mxu0
      %v1149 = vpop.f32.mrf.mxu0
      %v1150 = vadd.f32 %v999, %v1149
      %v1151 = vpop.f32.mrf.mxu0
      %1152 = vmatprep.mubr.bf16.mxu0 0
      %1153 = vmatmul.mubr.bf16.gmra.mxu0 %v1033
      %v1154 = vpop.f32.mrf.mxu0
      %v1155 = vadd.f32 %v999, %v1154
      %v1156 = vpop.f32.mrf.mxu0
      %v1157 = vpop.f32.mrf.mxu0
      %v1158 = vadd.f32 %v999, %v1157
      %v1159 = vpop.f32.mrf.mxu0
      %1160 = vmatprep.mubr.bf16.mxu0 0
      %1161 = vmatmul.mubr.bf16.gmra.mxu0 %v1036
      %v1162 = vpop.f32.mrf.mxu0
      %v1163 = vadd.f32 %v999, %v1162
      %v1164 = vpop.f32.mrf.mxu0
      %v1165 = vpop.f32.mrf.mxu0
      %v1166 = vadd.f32 %v999, %v1165
      %v1167 = vpop.f32.mrf.mxu0
      %1168 = vmatprep.mubr.bf16.mxu0 0
      %1169 = vmatmul.mubr.bf16.gmra.mxu0 %v1039
      %v1170 = vpop.f32.mrf.mxu0
      %v1171 = vadd.f32 %v999, %v1170
      %v1172 = vpop.f32.mrf.mxu0
      %v1173 = vpop.f32.mrf.mxu0
      %v1174 = vadd.f32 %v999, %v1173
      %v1175 = vpop.f32.mrf.mxu0
      %1176 = vmatprep.mubr.bf16.mxu0 0
      %1177 = vmatmul.mubr.bf16.gmra.mxu0 %v1042
      %v1178 = vpop.f32.mrf.mxu0
      %v1179 = vadd.f32 %v999, %v1178
      %v1180 = vpop.f32.mrf.mxu0
      %v1181 = vpop.f32.mrf.mxu0
      %v1182 = vadd.f32 %v999, %v1181
      %v1183 = vpop.f32.mrf.mxu0
      %1184 = vmatprep.mubr.bf16.mxu0 0
      %1185 = vmatmul.mubr.bf16.gmra.mxu0 %v1045
      %v1186 = vpop.f32.mrf.mxu0
      %v1187 = vadd.f32 %v999, %v1186
      %v1188 = vpop.f32.mrf.mxu0
      %v1189 = vpop.f32.mrf.mxu0
      %v1190 = vadd.f32 %v999, %v1189
      %v1191 = vpop.f32.mrf.mxu0
      %1192 = vmatprep.mubr.bf16.mxu0 0
      %1193 = vmatmul.mubr.bf16.gmra.mxu0 %v1048
      %v1194 = vpop.f32.mrf.mxu0
      %v1195 = vadd.f32 %v999, %v1194
      %v1196 = vpop.f32.mrf.mxu0
      %v1197 = vpop.f32.mrf.mxu0
      %v1198 = vadd.f32 %v999, %v1197
      %v1199 = vpop.f32.mrf.mxu0
      %1200 = vmatprep.mubr.bf16.mxu0 0
      %1201 = vmatmul.mubr.bf16.gmra.mxu0 %v1051
      %v1202 = vpop.f32.mrf.mxu0
      %v1203 = vadd.f32 %v999, %v1202
      %v1204 = vpop.f32.mrf.mxu0
      %v1205 = vpop.f32.mrf.mxu0
      %v1206 = vadd.f32 %v999, %v1205
      %v1207 = vpop.f32.mrf.mxu0
      %1208 = vmatprep.mubr.bf16.mxu0 0
      %1209 = vmatmul.mubr.bf16.gmra.mxu0 %v1054
      %v1210 = vpop.f32.mrf.mxu0
      %v1211 = vadd.f32 %v999, %v1210
      %v1212 = vpop.f32.mrf.mxu0
      %v1213 = vpop.f32.mrf.mxu0
      %v1214 = vadd.f32 %v999, %v1213
      %v1215 = vpop.f32.mrf.mxu0
      %1216 = vdwg.mxu0
      %v1217 = vmax.f32 %v1091, 0.0
      %v1218 = vmax.f32 %v1094, 0.0
      %v1219 = vmax.f32 %v1099, 0.0
      %v1220 = vmax.f32 %v1102, 0.0
      %v1221 = vmax.f32 %v1107, 0.0
      %v1222 = vmax.f32 %v1110, 0.0
      %v1223 = vmax.f32 %v1115, 0.0
      %v1224 = vmax.f32 %v1118, 0.0
      %v1225 = vmax.f32 %v1123, 0.0
      %v1226 = vmax.f32 %v1126, 0.0
      %v1227 = vmax.f32 %v1131, 0.0
      %v1228 = vmax.f32 %v1134, 0.0
      %v1229 = vmax.f32 %v1139, 0.0
      %v1230 = vmax.f32 %v1142, 0.0
      %v1231 = vmax.f32 %v1147, 0.0
      %v1232 = vmax.f32 %v1150, 0.0
      %v1233 = vmax.f32 %v1155, 0.0
      %v1234 = vmax.f32 %v1158, 0.0
      %v1235 = vmax.f32 %v1163, 0.0
      %v1236 = vmax.f32 %v1166, 0.0
      %v1237 = vmax.f32 %v1171, 0.0
      %v1238 = vmax.f32 %v1174, 0.0
      %v1239 = vmax.f32 %v1179, 0.0
      %v1240 = vmax.f32 %v1182, 0.0
      %v1241 = vmax.f32 %v1187, 0.0
      %v1242 = vmax.f32 %v1190, 0.0
      %v1243 = vmax.f32 %v1195, 0.0
      %v1244 = vmax.f32 %v1198, 0.0
      %v1245 = vmax.f32 %v1203, 0.0
      %v1246 = vmax.f32 %v1206, 0.0
      %v1247 = vmax.f32 %v1211, 0.0
      %v1248 = vmax.f32 %v1214, 0.0
      %v1249 = vpack.c.bf16 %v1218, %v1217
      %v1250 = vpack.c.bf16 %v1220, %v1219
      %v1251 = vpack.c.bf16 %v1222, %v1221
      %v1252 = vpack.c.bf16 %v1224, %v1223
      %v1253 = vpack.c.bf16 %v1226, %v1225
      %v1254 = vpack.c.bf16 %v1228, %v1227
      %v1255 = vpack.c.bf16 %v1230, %v1229
      %v1256 = vpack.c.bf16 %v1232, %v1231
      %v1257 = vpack.c.bf16 %v1234, %v1233
      %v1258 = vpack.c.bf16 %v1236, %v1235
      %v1259 = vpack.c.bf16 %v1238, %v1237
      %v1260 = vpack.c.bf16 %v1240, %v1239
      %v1261 = vpack.c.bf16 %v1242, %v1241
      %v1262 = vpack.c.bf16 %v1244, %v1243
      %v1263 = vpack.c.bf16 %v1246, %v1245
      %v1264 = vpack.c.bf16 %v1248, %v1247
      %s1265 = sadd.s32 0, 1
      %v1282 = vunpack.c.l.b16 %v1249
      %v1283 = vunpack.c.h.b16 %v1249
      %v1284 = vunpack.c.l.b16 %v1250
      %v1285 = vunpack.c.h.b16 %v1250
      %v1286 = vunpack.c.l.b16 %v1251
      %v1287 = vunpack.c.h.b16 %v1251
      %v1288 = vunpack.c.l.b16 %v1252
      %v1289 = vunpack.c.h.b16 %v1252
      %v1290 = vunpack.c.l.b16 %v1253
      %v1291 = vunpack.c.h.b16 %v1253
      %v1292 = vunpack.c.l.b16 %v1254
      %v1293 = vunpack.c.h.b16 %v1254
      %v1294 = vunpack.c.l.b16 %v1255
      %v1295 = vunpack.c.h.b16 %v1255
      %v1296 = vunpack.c.l.b16 %v1256
      %v1297 = vunpack.c.h.b16 %v1256
      %v1298 = vunpack.c.l.b16 %v1257
      %v1299 = vunpack.c.h.b16 %v1257
      %v1300 = vunpack.c.l.b16 %v1258
      %v1301 = vunpack.c.h.b16 %v1258
      %v1302 = vunpack.c.l.b16 %v1259
      %v1303 = vunpack.c.h.b16 %v1259
      %v1304 = vunpack.c.l.b16 %v1260
      %v1305 = vunpack.c.h.b16 %v1260
      %v1306 = vunpack.c.l.b16 %v1261
      %v1307 = vunpack.c.h.b16 %v1261
      %v1308 = vunpack.c.l.b16 %v1262
      %v1309 = vunpack.c.h.b16 %v1262
      %v1310 = vunpack.c.l.b16 %v1263
      %v1311 = vunpack.c.h.b16 %v1263
      %v1312 = vunpack.c.l.b16 %v1264
      %v1313 = vunpack.c.h.b16 %v1264
      %v1314 = vpack.c.b16 %v1282, %v1282
      %v1315 = vpack.c.b16 %v1283, %v1283
      %v1316 = vpack.c.b16 %v1284, %v1284
      %v1317 = vpack.c.b16 %v1285, %v1285
      %v1318 = vpack.c.b16 %v1286, %v1286
      %v1319 = vpack.c.b16 %v1287, %v1287
      %v1320 = vpack.c.b16 %v1288, %v1288
      %v1321 = vpack.c.b16 %v1289, %v1289
      %v1322 = vpack.c.b16 %v1290, %v1290
      %v1323 = vpack.c.b16 %v1291, %v1291
      %v1324 = vpack.c.b16 %v1292, %v1292
      %v1325 = vpack.c.b16 %v1293, %v1293
      %v1326 = vpack.c.b16 %v1294, %v1294
      %v1327 = vpack.c.b16 %v1295, %v1295
      %v1328 = vpack.c.b16 %v1296, %v1296
      %v1329 = vpack.c.b16 %v1297, %v1297
      %v1330 = vpack.c.b16 %v1298, %v1298
      %v1331 = vpack.c.b16 %v1299, %v1299
      %v1332 = vpack.c.b16 %v1300, %v1300
      %v1333 = vpack.c.b16 %v1301, %v1301
      %v1334 = vpack.c.b16 %v1302, %v1302
      %v1335 = vpack.c.b16 %v1303, %v1303
      %v1336 = vpack.c.b16 %v1304, %v1304
      %v1337 = vpack.c.b16 %v1305, %v1305
      %v1338 = vpack.c.b16 %v1306, %v1306
      %v1339 = vpack.c.b16 %v1307, %v1307
      %v1340 = vpack.c.b16 %v1308, %v1308
      %v1341 = vpack.c.b16 %v1309, %v1309
      %v1342 = vpack.c.b16 %v1310, %v1310
      %v1343 = vpack.c.b16 %v1311, %v1311
      %v1344 = vpack.c.b16 %v1312, %v1312
      %v1345 = vpack.c.b16 %v1313, %v1313
      %vm1346 = vsmask.f32 4368
      %vm1347 = vmor %vm713, %vm1346
      %v1349 = vshrl.u32 %v1314, 16
      %v1351 = vrot.slane %v1349, 7
      %v1352 = vshll.u32 %v1314, 16
      %v1354 = vor.u32 %v1351, %v1352
      %v1355 = vrot.slane %v1351, 4
      %v1357 = vshrl.u32 %v1315, 16
      %v1359 = vrot.slane %v1357, 7
      %v1360 = vshll.u32 %v1315, 16
      %v1362 = vor.u32 %v1359, %v1360
      %v1363 = vsel %vm1347, %v1355, %v1362
      %v1364 = vrot.slane %v1359, 4
      %v1366 = vshrl.u32 %v1316, 16
      %v1368 = vrot.slane %v1366, 7
      %v1369 = vshll.u32 %v1316, 16
      %v1371 = vor.u32 %v1368, %v1369
      %v1372 = vrot.slane %v1368, 4
      %v1374 = vshrl.u32 %v1317, 16
      %v1376 = vrot.slane %v1374, 7
      %v1377 = vshll.u32 %v1317, 16
      %v1379 = vor.u32 %v1376, %v1377
      %v1380 = vsel %vm1347, %v1372, %v1379
      %v1381 = vrot.slane %v1376, 4
      %v1383 = vshrl.u32 %v1318, 16
      %v1385 = vrot.slane %v1383, 7
      %v1386 = vshll.u32 %v1318, 16
      %v1388 = vor.u32 %v1385, %v1386
      %v1389 = vrot.slane %v1385, 4
      %v1391 = vshrl.u32 %v1319, 16
      %v1393 = vrot.slane %v1391, 7
      %v1394 = vshll.u32 %v1319, 16
      %v1396 = vor.u32 %v1393, %v1394
      %v1397 = vsel %vm1347, %v1389, %v1396
      %v1398 = vrot.slane %v1393, 4
      %v1400 = vshrl.u32 %v1320, 16
      %v1402 = vrot.slane %v1400, 7
      %v1403 = vshll.u32 %v1320, 16
      %v1405 = vor.u32 %v1402, %v1403
      %v1406 = vrot.slane %v1402, 4
      %v1408 = vshrl.u32 %v1321, 16
      %v1410 = vrot.slane %v1408, 7
      %v1411 = vshll.u32 %v1321, 16
      %v1413 = vor.u32 %v1410, %v1411
      %v1414 = vsel %vm1347, %v1406, %v1413
      %v1415 = vrot.slane %v1410, 4
      %v1417 = vshrl.u32 %v1322, 16
      %v1419 = vrot.slane %v1417, 7
      %v1420 = vshll.u32 %v1322, 16
      %v1422 = vor.u32 %v1419, %v1420
      %v1423 = vrot.slane %v1419, 4
      %v1425 = vshrl.u32 %v1323, 16
      %v1427 = vrot.slane %v1425, 7
      %v1428 = vshll.u32 %v1323, 16
      %v1430 = vor.u32 %v1427, %v1428
      %v1431 = vsel %vm1347, %v1423, %v1430
      %v1432 = vrot.slane %v1427, 4
      %v1434 = vshrl.u32 %v1324, 16
      %v1436 = vrot.slane %v1434, 7
      %v1437 = vshll.u32 %v1324, 16
      %v1439 = vor.u32 %v1436, %v1437
      %v1440 = vrot.slane %v1436, 4
      %v1442 = vshrl.u32 %v1325, 16
      %v1444 = vrot.slane %v1442, 7
      %v1445 = vshll.u32 %v1325, 16
      %v1447 = vor.u32 %v1444, %v1445
      %v1448 = vsel %vm1347, %v1440, %v1447
      %v1449 = vrot.slane %v1444, 4
      %v1451 = vshrl.u32 %v1326, 16
      %v1453 = vrot.slane %v1451, 7
      %v1454 = vshll.u32 %v1326, 16
      %v1456 = vor.u32 %v1453, %v1454
      %v1457 = vrot.slane %v1453, 4
      %v1459 = vshrl.u32 %v1327, 16
      %v1461 = vrot.slane %v1459, 7
      %v1462 = vshll.u32 %v1327, 16
      %v1464 = vor.u32 %v1461, %v1462
      %v1465 = vsel %vm1347, %v1457, %v1464
      %v1466 = vrot.slane %v1461, 4
      %v1468 = vshrl.u32 %v1328, 16
      %v1470 = vrot.slane %v1468, 7
      %v1471 = vshll.u32 %v1328, 16
      %v1473 = vor.u32 %v1470, %v1471
      %v1474 = vrot.slane %v1470, 4
      %v1476 = vshrl.u32 %v1329, 16
      %v1478 = vrot.slane %v1476, 7
      %v1479 = vshll.u32 %v1329, 16
      %v1481 = vor.u32 %v1478, %v1479
      %v1482 = vsel %vm1347, %v1474, %v1481
      %v1483 = vrot.slane %v1478, 4
      %v1485 = vshrl.u32 %v1330, 16
      %v1487 = vrot.slane %v1485, 7
      %v1488 = vshll.u32 %v1330, 16
      %v1490 = vor.u32 %v1487, %v1488
      %v1491 = vrot.slane %v1487, 4
      %v1493 = vshrl.u32 %v1331, 16
      %v1495 = vrot.slane %v1493, 7
      %v1496 = vshll.u32 %v1331, 16
      %v1498 = vor.u32 %v1495, %v1496
      %v1499 = vsel %vm1347, %v1491, %v1498
      %v1500 = vrot.slane %v1495, 4
      %v1502 = vshrl.u32 %v1332, 16
      %v1504 = vrot.slane %v1502, 7
      %v1505 = vshll.u32 %v1332, 16
      %v1507 = vor.u32 %v1504, %v1505
      %v1508 = vrot.slane %v1504, 4
      %v1510 = vshrl.u32 %v1333, 16
      %v1512 = vrot.slane %v1510, 7
      %v1513 = vshll.u32 %v1333, 16
      %v1515 = vor.u32 %v1512, %v1513
      %v1516 = vsel %vm1347, %v1508, %v1515
      %v1517 = vrot.slane %v1512, 4
      %v1519 = vshrl.u32 %v1334, 16
      %v1521 = vrot.slane %v1519, 7
      %v1522 = vshll.u32 %v1334, 16
      %v1524 = vor.u32 %v1521, %v1522
      %v1525 = vrot.slane %v1521, 4
      %v1527 = vshrl.u32 %v1335, 16
      %v1529 = vrot.slane %v1527, 7
      %v1530 = vshll.u32 %v1335, 16
      %v1532 = vor.u32 %v1529, %v1530
      %v1533 = vsel %vm1347, %v1525, %v1532
      %v1534 = vrot.slane %v1529, 4
      %v1536 = vshrl.u32 %v1336, 16
      %v1538 = vrot.slane %v1536, 7
      %v1539 = vshll.u32 %v1336, 16
      %v1541 = vor.u32 %v1538, %v1539
      %v1542 = vrot.slane %v1538, 4
      %v1544 = vshrl.u32 %v1337, 16
      %v1546 = vrot.slane %v1544, 7
      %v1547 = vshll.u32 %v1337, 16
      %v1549 = vor.u32 %v1546, %v1547
      %v1550 = vsel %vm1347, %v1542, %v1549
      %v1551 = vrot.slane %v1546, 4
      %v1553 = vshrl.u32 %v1338, 16
      %v1555 = vrot.slane %v1553, 7
      %v1556 = vshll.u32 %v1338, 16
      %v1558 = vor.u32 %v1555, %v1556
      %v1559 = vrot.slane %v1555, 4
      %v1561 = vshrl.u32 %v1339, 16
      %v1563 = vrot.slane %v1561, 7
      %v1564 = vshll.u32 %v1339, 16
      %v1566 = vor.u32 %v1563, %v1564
      %v1567 = vsel %vm1347, %v1559, %v1566
      %v1568 = vrot.slane %v1563, 4
      %v1570 = vshrl.u32 %v1340, 16
      %v1572 = vrot.slane %v1570, 7
      %v1573 = vshll.u32 %v1340, 16
      %v1575 = vor.u32 %v1572, %v1573
      %v1576 = vrot.slane %v1572, 4
      %v1578 = vshrl.u32 %v1341, 16
      %v1580 = vrot.slane %v1578, 7
      %v1581 = vshll.u32 %v1341, 16
      %v1583 = vor.u32 %v1580, %v1581
      %v1584 = vsel %vm1347, %v1576, %v1583
      %v1585 = vrot.slane %v1580, 4
      %v1587 = vshrl.u32 %v1342, 16
      %v1589 = vrot.slane %v1587, 7
      %v1590 = vshll.u32 %v1342, 16
      %v1592 = vor.u32 %v1589, %v1590
      %v1593 = vrot.slane %v1589, 4
      %v1595 = vshrl.u32 %v1343, 16
      %v1597 = vrot.slane %v1595, 7
      %v1598 = vshll.u32 %v1343, 16
      %v1600 = vor.u32 %v1597, %v1598
      %v1601 = vsel %vm1347, %v1593, %v1600
      %v1602 = vrot.slane %v1597, 4
      %v1604 = vshrl.u32 %v1344, 16
      %v1606 = vrot.slane %v1604, 7
      %v1607 = vshll.u32 %v1344, 16
      %v1609 = vor.u32 %v1606, %v1607
      %v1610 = vrot.slane %v1606, 4
      %v1612 = vshrl.u32 %v1345, 16
      %v1614 = vrot.slane %v1612, 7
      %v1615 = vshll.u32 %v1345, 16
      %v1617 = vor.u32 %v1614, %v1615
      %v1618 = vsel %vm1347, %v1610, %v1617
      %v1619 = vrot.slane %v1614, 4
      %s1668 = smul.u32 %s1265, 3
      %s1669 = smul.addr %s1668, 4
      %s1670 = scalar_lea.vmem [#allocation2], %s1669
      %vm1671 = vcmask 125952
      %vm1672 = vmand %vm1671, %vm763
      %v1673 = vld [vmem:[%s1670] sm:$0xf]
      %v1674 = vsel %vm1672, %v1354, %v1673
      %1675 = vst [vmem:[%s1670] sm:$0xf] %v1674
      %1676 = vst.msk [vmem:[%s1670 + $0x4] sm:$0xf] %vm702, %v1363
      %v1677 = vld [vmem:[%s1670 + $0x8] sm:$0x1]
      %v1678 = vsel %vm714, %v1364, %v1677
      %1679 = vst [vmem:[%s1670 + $0x8] sm:$0x1] %v1678
      %v1680 = vld [vmem:[%s1670 + $0xc] sm:$0xf]
      %v1681 = vsel %vm1672, %v1371, %v1680
      %1682 = vst [vmem:[%s1670 + $0xc] sm:$0xf] %v1681
      %1683 = vst.msk [vmem:[%s1670 + $0x10] sm:$0xf] %vm702, %v1380
      %v1684 = vld [vmem:[%s1670 + $0x14] sm:$0x1]
      %v1685 = vsel %vm714, %v1381, %v1684
      %1686 = vst [vmem:[%s1670 + $0x14] sm:$0x1] %v1685
      %v1687 = vld [vmem:[%s1670 + $0x18] sm:$0xf]
      %v1688 = vsel %vm1672, %v1388, %v1687
      %1689 = vst [vmem:[%s1670 + $0x18] sm:$0xf] %v1688
      %1690 = vst.msk [vmem:[%s1670 + $0x1c] sm:$0xf] %vm702, %v1397
      %v1691 = vld [vmem:[%s1670 + $0x20] sm:$0x1]
      %v1692 = vsel %vm714, %v1398, %v1691
      %1693 = vst [vmem:[%s1670 + $0x20] sm:$0x1] %v1692
      %v1694 = vld [vmem:[%s1670 + $0x24] sm:$0xf]
      %v1695 = vsel %vm1672, %v1405, %v1694
      %1696 = vst [vmem:[%s1670 + $0x24] sm:$0xf] %v1695
      %1697 = vst.msk [vmem:[%s1670 + $0x28] sm:$0xf] %vm702, %v1414
      %v1698 = vld [vmem:[%s1670 + $0x2c] sm:$0x1]
      %v1699 = vsel %vm714, %v1415, %v1698
      %1700 = vst [vmem:[%s1670 + $0x2c] sm:$0x1] %v1699
      %v1701 = vld [vmem:[%s1670 + $0x30] sm:$0xf]
      %v1702 = vsel %vm1672, %v1422, %v1701
      %1703 = vst [vmem:[%s1670 + $0x30] sm:$0xf] %v1702
      %1704 = vst.msk [vmem:[%s1670 + $0x34] sm:$0xf] %vm702, %v1431
      %v1705 = vld [vmem:[%s1670 + $0x38] sm:$0x1]
      %v1706 = vsel %vm714, %v1432, %v1705
      %1707 = vst [vmem:[%s1670 + $0x38] sm:$0x1] %v1706
      %v1708 = vld [vmem:[%s1670 + $0x3c] sm:$0xf]
      %v1709 = vsel %vm1672, %v1439, %v1708
      %1710 = vst [vmem:[%s1670 + $0x3c] sm:$0xf] %v1709
      %1711 = vst.msk [vmem:[%s1670 + $0x40] sm:$0xf] %vm702, %v1448
      %v1712 = vld [vmem:[%s1670 + $0x44] sm:$0x1]
      %v1713 = vsel %vm714, %v1449, %v1712
      %1714 = vst [vmem:[%s1670 + $0x44] sm:$0x1] %v1713
      %v1715 = vld [vmem:[%s1670 + $0x48] sm:$0xf]
      %v1716 = vsel %vm1672, %v1456, %v1715
      %1717 = vst [vmem:[%s1670 + $0x48] sm:$0xf] %v1716
      %1718 = vst.msk [vmem:[%s1670 + $0x4c] sm:$0xf] %vm702, %v1465
      %v1719 = vld [vmem:[%s1670 + $0x50] sm:$0x1]
      %v1720 = vsel %vm714, %v1466, %v1719
      %1721 = vst [vmem:[%s1670 + $0x50] sm:$0x1] %v1720
      %v1722 = vld [vmem:[%s1670 + $0x54] sm:$0xf]
      %v1723 = vsel %vm1672, %v1473, %v1722
      %1724 = vst [vmem:[%s1670 + $0x54] sm:$0xf] %v1723
      %1725 = vst.msk [vmem:[%s1670 + $0x58] sm:$0xf] %vm702, %v1482
      %v1726 = vld [vmem:[%s1670 + $0x5c] sm:$0x1]
      %v1727 = vsel %vm714, %v1483, %v1726
      %1728 = vst [vmem:[%s1670 + $0x5c] sm:$0x1] %v1727
      %v1729 = vld [vmem:[%s1670 + $0x60] sm:$0xf]
      %v1730 = vsel %vm1672, %v1490, %v1729
      %1731 = vst [vmem:[%s1670 + $0x60] sm:$0xf] %v1730
      %1732 = vst.msk [vmem:[%s1670 + $0x64] sm:$0xf] %vm702, %v1499
      %v1733 = vld [vmem:[%s1670 + $0x68] sm:$0x1]
      %v1734 = vsel %vm714, %v1500, %v1733
      %1735 = vst [vmem:[%s1670 + $0x68] sm:$0x1] %v1734
      %v1736 = vld [vmem:[%s1670 + $0x6c] sm:$0xf]
      %v1737 = vsel %vm1672, %v1507, %v1736
      %1738 = vst [vmem:[%s1670 + $0x6c] sm:$0xf] %v1737
      %1739 = vst.msk [vmem:[%s1670 + $0x70] sm:$0xf] %vm702, %v1516
      %v1740 = vld [vmem:[%s1670 + $0x74] sm:$0x1]
      %v1741 = vsel %vm714, %v1517, %v1740
      %1742 = vst [vmem:[%s1670 + $0x74] sm:$0x1] %v1741
      %v1743 = vld [vmem:[%s1670 + $0x78] sm:$0xf]
      %v1744 = vsel %vm1672, %v1524, %v1743
      %1745 = vst [vmem:[%s1670 + $0x78] sm:$0xf] %v1744
      %1746 = vst.msk [vmem:[%s1670 + $0x7c] sm:$0xf] %vm702, %v1533
      %v1747 = vld [vmem:[%s1670 + $0x80] sm:$0x1]
      %v1748 = vsel %vm714, %v1534, %v1747
      %1749 = vst [vmem:[%s1670 + $0x80] sm:$0x1] %v1748
      %v1750 = vld [vmem:[%s1670 + $0x84] sm:$0xf]
      %v1751 = vsel %vm1672, %v1541, %v1750
      %1752 = vst [vmem:[%s1670 + $0x84] sm:$0xf] %v1751
      %1753 = vst.msk [vmem:[%s1670 + $0x88] sm:$0xf] %vm702, %v1550
      %v1754 = vld [vmem:[%s1670 + $0x8c] sm:$0x1]
      %v1755 = vsel %vm714, %v1551, %v1754
      %1756 = vst [vmem:[%s1670 + $0x8c] sm:$0x1] %v1755
      %v1757 = vld [vmem:[%s1670 + $0x90] sm:$0xf]
      %v1758 = vsel %vm1672, %v1558, %v1757
      %1759 = vst [vmem:[%s1670 + $0x90] sm:$0xf] %v1758
      %1760 = vst.msk [vmem:[%s1670 + $0x94] sm:$0xf] %vm702, %v1567
      %v1761 = vld [vmem:[%s1670 + $0x98] sm:$0x1]
      %v1762 = vsel %vm714, %v1568, %v1761
      %1763 = vst [vmem:[%s1670 + $0x98] sm:$0x1] %v1762
      %v1764 = vld [vmem:[%s1670 + $0x9c] sm:$0xf]
      %v1765 = vsel %vm1672, %v1575, %v1764
      %1766 = vst [vmem:[%s1670 + $0x9c] sm:$0xf] %v1765
      %1767 = vst.msk [vmem:[%s1670 + $0xa0] sm:$0xf] %vm702, %v1584
      %v1768 = vld [vmem:[%s1670 + $0xa4] sm:$0x1]
      %v1769 = vsel %vm714, %v1585, %v1768
      %1770 = vst [vmem:[%s1670 + $0xa4] sm:$0x1] %v1769
      %v1771 = vld [vmem:[%s1670 + $0xa8] sm:$0xf]
      %v1772 = vsel %vm1672, %v1592, %v1771
      %1773 = vst [vmem:[%s1670 + $0xa8] sm:$0xf] %v1772
      %1774 = vst.msk [vmem:[%s1670 + $0xac] sm:$0xf] %vm702, %v1601
      %v1775 = vld [vmem:[%s1670 + $0xb0] sm:$0x1]
      %v1776 = vsel %vm714, %v1602, %v1775
      %1777 = vst [vmem:[%s1670 + $0xb0] sm:$0x1] %v1776
      %v1778 = vld [vmem:[%s1670 + $0xb4] sm:$0xf]
      %v1779 = vsel %vm1672, %v1609, %v1778
      %1780 = vst [vmem:[%s1670 + $0xb4] sm:$0xf] %v1779
      %1781 = vst.msk [vmem:[%s1670 + $0xb8] sm:$0xf] %vm702, %v1618
      %v1782 = vld [vmem:[%s1670 + $0xbc] sm:$0x1]
      %v1783 = vsel %vm714, %v1619, %v1782
      %1784 = vst [vmem:[%s1670 + $0xbc] sm:$0x1] %v1783
      %s1785 = smul.u32 0, 3
      %s1786 = smul.addr %s1785, 4
      %s1787 = scalar_lea.vmem [#allocation2], %s1786
      %v1788 = vld [vmem:[%s1787] sm:$0xf]
      %v1789 = vld [vmem:[%s1787 + $0x4] sm:$0xf]
      %v1790 = vld [vmem:[%s1787 + $0xc] sm:$0xf]
      %v1791 = vld [vmem:[%s1787 + $0x10] sm:$0xf]
      %v1792 = vld [vmem:[%s1787 + $0x18] sm:$0xf]
      %v1793 = vld [vmem:[%s1787 + $0x1c] sm:$0xf]
      %v1794 = vld [vmem:[%s1787 + $0x24] sm:$0xf]
      %v1795 = vld [vmem:[%s1787 + $0x28] sm:$0xf]
      %v1796 = vld [vmem:[%s1787 + $0x30] sm:$0xf]
      %v1797 = vld [vmem:[%s1787 + $0x34] sm:$0xf]
      %v1798 = vld [vmem:[%s1787 + $0x3c] sm:$0xf]
      %v1799 = vld [vmem:[%s1787 + $0x40] sm:$0xf]
      %v1800 = vld [vmem:[%s1787 + $0x48] sm:$0xf]
      %v1801 = vld [vmem:[%s1787 + $0x4c] sm:$0xf]
      %v1802 = vld [vmem:[%s1787 + $0x54] sm:$0xf]
      %v1803 = vld [vmem:[%s1787 + $0x58] sm:$0xf]
      %v1804 = vld [vmem:[%s1787 + $0x60] sm:$0xf]
      %v1805 = vld [vmem:[%s1787 + $0x64] sm:$0xf]
      %v1806 = vld [vmem:[%s1787 + $0x6c] sm:$0xf]
      %v1807 = vld [vmem:[%s1787 + $0x70] sm:$0xf]
      %v1808 = vld [vmem:[%s1787 + $0x78] sm:$0xf]
      %v1809 = vld [vmem:[%s1787 + $0x7c] sm:$0xf]
      %v1810 = vld [vmem:[%s1787 + $0x84] sm:$0xf]
      %v1811 = vld [vmem:[%s1787 + $0x88] sm:$0xf]
      %v1812 = vld [vmem:[%s1787 + $0x90] sm:$0xf]
      %v1813 = vld [vmem:[%s1787 + $0x94] sm:$0xf]
      %v1814 = vld [vmem:[%s1787 + $0x9c] sm:$0xf]
      %v1815 = vld [vmem:[%s1787 + $0xa0] sm:$0xf]
      %v1816 = vld [vmem:[%s1787 + $0xa8] sm:$0xf]
      %v1817 = vld [vmem:[%s1787 + $0xac] sm:$0xf]
      %v1818 = vld [vmem:[%s1787 + $0xb4] sm:$0xf]
      %v1819 = vld [vmem:[%s1787 + $0xb8] sm:$0xf]
      %v1820 = vld [vmem:[%s1787 + $0x8] sm:$0x1]
      %v1821 = vld [vmem:[%s1787 + $0x14] sm:$0x1]
      %v1822 = vld [vmem:[%s1787 + $0x20] sm:$0x1]
      %v1823 = vld [vmem:[%s1787 + $0x2c] sm:$0x1]
      %v1824 = vld [vmem:[%s1787 + $0x38] sm:$0x1]
      %v1825 = vld [vmem:[%s1787 + $0x44] sm:$0x1]
      %v1826 = vld [vmem:[%s1787 + $0x50] sm:$0x1]
      %v1827 = vld [vmem:[%s1787 + $0x5c] sm:$0x1]
      %v1828 = vld [vmem:[%s1787 + $0x68] sm:$0x1]
      %v1829 = vld [vmem:[%s1787 + $0x74] sm:$0x1]
      %v1830 = vld [vmem:[%s1787 + $0x80] sm:$0x1]
      %v1831 = vld [vmem:[%s1787 + $0x8c] sm:$0x1]
      %v1832 = vld [vmem:[%s1787 + $0x98] sm:$0x1]
      %v1833 = vld [vmem:[%s1787 + $0xa4] sm:$0x1]
      %v1834 = vld [vmem:[%s1787 + $0xb0] sm:$0x1]
      %v1835 = vld [vmem:[%s1787 + $0xbc] sm:$0x1]
      %vm1836 = vsmask.f32 3328
      %vm1837 = vsmask.f32 7440
      %vm1838 = vmor %vm1836, %vm1837
      %v1840 = vshrl.u32 %v1788, 16
      %v1842 = vrot.slane %v1840, 4
      %v1843 = vshll.u32 %v1788, 16
      %v1845 = vrot.slane %v1843, 5
      %v1846 = vor.u32 %v1842, %v1845
      %v1847 = vrot.slane %v1846, 4
      %v1849 = vshll.u32 %v1789, 16
      %v1851 = vrot.slane %v1849, 5
      %v1852 = vsel %vm1838, %v1847, %v1851
      %v1853 = vshrl.u32 %v1789, 16
      %v1855 = vrot.slane %v1853, 4
      %v1856 = vor.u32 %v1855, %v1851
      %v1857 = vrot.slane %v1856, 4
      %v1859 = vshll.u32 %v1820, 16
      %v1861 = vrot.slane %v1859, 5
      %v1862 = vsel %vm1838, %v1857, %v1861
      %v1864 = vshrl.u32 %v1790, 16
      %v1866 = vrot.slane %v1864, 4
      %v1867 = vshll.u32 %v1790, 16
      %v1869 = vrot.slane %v1867, 5
      %v1870 = vor.u32 %v1866, %v1869
      %v1871 = vrot.slane %v1870, 4
      %v1873 = vshll.u32 %v1791, 16
      %v1875 = vrot.slane %v1873, 5
      %v1876 = vsel %vm1838, %v1871, %v1875
      %v1877 = vshrl.u32 %v1791, 16
      %v1879 = vrot.slane %v1877, 4
      %v1880 = vor.u32 %v1879, %v1875
      %v1881 = vrot.slane %v1880, 4
      %v1883 = vshll.u32 %v1821, 16
      %v1885 = vrot.slane %v1883, 5
      %v1886 = vsel %vm1838, %v1881, %v1885
      %v1888 = vshrl.u32 %v1792, 16
      %v1890 = vrot.slane %v1888, 4
      %v1891 = vshll.u32 %v1792, 16
      %v1893 = vrot.slane %v1891, 5
      %v1894 = vor.u32 %v1890, %v1893
      %v1895 = vrot.slane %v1894, 4
      %v1897 = vshll.u32 %v1793, 16
      %v1899 = vrot.slane %v1897, 5
      %v1900 = vsel %vm1838, %v1895, %v1899
      %v1901 = vshrl.u32 %v1793, 16
      %v1903 = vrot.slane %v1901, 4
      %v1904 = vor.u32 %v1903, %v1899
      %v1905 = vrot.slane %v1904, 4
      %v1907 = vshll.u32 %v1822, 16
      %v1909 = vrot.slane %v1907, 5
      %v1910 = vsel %vm1838, %v1905, %v1909
      %v1912 = vshrl.u32 %v1794, 16
      %v1914 = vrot.slane %v1912, 4
      %v1915 = vshll.u32 %v1794, 16
      %v1917 = vrot.slane %v1915, 5
      %v1918 = vor.u32 %v1914, %v1917
      %v1919 = vrot.slane %v1918, 4
      %v1921 = vshll.u32 %v1795, 16
      %v1923 = vrot.slane %v1921, 5
      %v1924 = vsel %vm1838, %v1919, %v1923
      %v1925 = vshrl.u32 %v1795, 16
      %v1927 = vrot.slane %v1925, 4
      %v1928 = vor.u32 %v1927, %v1923
      %v1929 = vrot.slane %v1928, 4
      %v1931 = vshll.u32 %v1823, 16
      %v1933 = vrot.slane %v1931, 5
      %v1934 = vsel %vm1838, %v1929, %v1933
      %v1936 = vshrl.u32 %v1796, 16
      %v1938 = vrot.slane %v1936, 4
      %v1939 = vshll.u32 %v1796, 16
      %v1941 = vrot.slane %v1939, 5
      %v1942 = vor.u32 %v1938, %v1941
      %v1943 = vrot.slane %v1942, 4
      %v1945 = vshll.u32 %v1797, 16
      %v1947 = vrot.slane %v1945, 5
      %v1948 = vsel %vm1838, %v1943, %v1947
      %v1949 = vshrl.u32 %v1797, 16
      %v1951 = vrot.slane %v1949, 4
      %v1952 = vor.u32 %v1951, %v1947
      %v1953 = vrot.slane %v1952, 4
      %v1955 = vshll.u32 %v1824, 16
      %v1957 = vrot.slane %v1955, 5
      %v1958 = vsel %vm1838, %v1953, %v1957
      %v1960 = vshrl.u32 %v1798, 16
      %v1962 = vrot.slane %v1960, 4
      %v1963 = vshll.u32 %v1798, 16
      %v1965 = vrot.slane %v1963, 5
      %v1966 = vor.u32 %v1962, %v1965
      %v1967 = vrot.slane %v1966, 4
      %v1969 = vshll.u32 %v1799, 16
      %v1971 = vrot.slane %v1969, 5
      %v1972 = vsel %vm1838, %v1967, %v1971
      %v1973 = vshrl.u32 %v1799, 16
      %v1975 = vrot.slane %v1973, 4
      %v1976 = vor.u32 %v1975, %v1971
      %v1977 = vrot.slane %v1976, 4
      %v1979 = vshll.u32 %v1825, 16
      %v1981 = vrot.slane %v1979, 5
      %v1982 = vsel %vm1838, %v1977, %v1981
      %v1984 = vshrl.u32 %v1800, 16
      %v1986 = vrot.slane %v1984, 4
      %v1987 = vshll.u32 %v1800, 16
      %v1989 = vrot.slane %v1987, 5
      %v1990 = vor.u32 %v1986, %v1989
      %v1991 = vrot.slane %v1990, 4
      %v1993 = vshll.u32 %v1801, 16
      %v1995 = vrot.slane %v1993, 5
      %v1996 = vsel %vm1838, %v1991, %v1995
      %v1997 = vshrl.u32 %v1801, 16
      %v1999 = vrot.slane %v1997, 4
      %v2000 = vor.u32 %v1999, %v1995
      %v2001 = vrot.slane %v2000, 4
      %v2003 = vshll.u32 %v1826, 16
      %v2005 = vrot.slane %v2003, 5
      %v2006 = vsel %vm1838, %v2001, %v2005
      %v2008 = vshrl.u32 %v1802, 16
      %v2010 = vrot.slane %v2008, 4
      %v2011 = vshll.u32 %v1802, 16
      %v2013 = vrot.slane %v2011, 5
      %v2014 = vor.u32 %v2010, %v2013
      %v2015 = vrot.slane %v2014, 4
      %v2017 = vshll.u32 %v1803, 16
      %v2019 = vrot.slane %v2017, 5
      %v2020 = vsel %vm1838, %v2015, %v2019
      %v2021 = vshrl.u32 %v1803, 16
      %v2023 = vrot.slane %v2021, 4
      %v2024 = vor.u32 %v2023, %v2019
      %v2025 = vrot.slane %v2024, 4
      %v2027 = vshll.u32 %v1827, 16
      %v2029 = vrot.slane %v2027, 5
      %v2030 = vsel %vm1838, %v2025, %v2029
      %v2032 = vshrl.u32 %v1804, 16
      %v2034 = vrot.slane %v2032, 4
      %v2035 = vshll.u32 %v1804, 16
      %v2037 = vrot.slane %v2035, 5
      %v2038 = vor.u32 %v2034, %v2037
      %v2039 = vrot.slane %v2038, 4
      %v2041 = vshll.u32 %v1805, 16
      %v2043 = vrot.slane %v2041, 5
      %v2044 = vsel %vm1838, %v2039, %v2043
      %v2045 = vshrl.u32 %v1805, 16
      %v2047 = vrot.slane %v2045, 4
      %v2048 = vor.u32 %v2047, %v2043
      %v2049 = vrot.slane %v2048, 4
      %v2051 = vshll.u32 %v1828, 16
      %v2053 = vrot.slane %v2051, 5
      %v2054 = vsel %vm1838, %v2049, %v2053
      %v2056 = vshrl.u32 %v1806, 16
      %v2058 = vrot.slane %v2056, 4
      %v2059 = vshll.u32 %v1806, 16
      %v2061 = vrot.slane %v2059, 5
      %v2062 = vor.u32 %v2058, %v2061
      %v2063 = vrot.slane %v2062, 4
      %v2065 = vshll.u32 %v1807, 16
      %v2067 = vrot.slane %v2065, 5
      %v2068 = vsel %vm1838, %v2063, %v2067
      %v2069 = vshrl.u32 %v1807, 16
      %v2071 = vrot.slane %v2069, 4
      %v2072 = vor.u32 %v2071, %v2067
      %v2073 = vrot.slane %v2072, 4
      %v2075 = vshll.u32 %v1829, 16
      %v2077 = vrot.slane %v2075, 5
      %v2078 = vsel %vm1838, %v2073, %v2077
      %v2080 = vshrl.u32 %v1808, 16
      %v2082 = vrot.slane %v2080, 4
      %v2083 = vshll.u32 %v1808, 16
      %v2085 = vrot.slane %v2083, 5
      %v2086 = vor.u32 %v2082, %v2085
      %v2087 = vrot.slane %v2086, 4
      %v2089 = vshll.u32 %v1809, 16
      %v2091 = vrot.slane %v2089, 5
      %v2092 = vsel %vm1838, %v2087, %v2091
      %v2093 = vshrl.u32 %v1809, 16
      %v2095 = vrot.slane %v2093, 4
      %v2096 = vor.u32 %v2095, %v2091
      %v2097 = vrot.slane %v2096, 4
      %v2099 = vshll.u32 %v1830, 16
      %v2101 = vrot.slane %v2099, 5
      %v2102 = vsel %vm1838, %v2097, %v2101
      %v2104 = vshrl.u32 %v1810, 16
      %v2106 = vrot.slane %v2104, 4
      %v2107 = vshll.u32 %v1810, 16
      %v2109 = vrot.slane %v2107, 5
      %v2110 = vor.u32 %v2106, %v2109
      %v2111 = vrot.slane %v2110, 4
      %v2113 = vshll.u32 %v1811, 16
      %v2115 = vrot.slane %v2113, 5
      %v2116 = vsel %vm1838, %v2111, %v2115
      %v2117 = vshrl.u32 %v1811, 16
      %v2119 = vrot.slane %v2117, 4
      %v2120 = vor.u32 %v2119, %v2115
      %v2121 = vrot.slane %v2120, 4
      %v2123 = vshll.u32 %v1831, 16
      %v2125 = vrot.slane %v2123, 5
      %v2126 = vsel %vm1838, %v2121, %v2125
      %v2128 = vshrl.u32 %v1812, 16
      %v2130 = vrot.slane %v2128, 4
      %v2131 = vshll.u32 %v1812, 16
      %v2133 = vrot.slane %v2131, 5
      %v2134 = vor.u32 %v2130, %v2133
      %v2135 = vrot.slane %v2134, 4
      %v2137 = vshll.u32 %v1813, 16
      %v2139 = vrot.slane %v2137, 5
      %v2140 = vsel %vm1838, %v2135, %v2139
      %v2141 = vshrl.u32 %v1813, 16
      %v2143 = vrot.slane %v2141, 4
      %v2144 = vor.u32 %v2143, %v2139
      %v2145 = vrot.slane %v2144, 4
      %v2147 = vshll.u32 %v1832, 16
      %v2149 = vrot.slane %v2147, 5
      %v2150 = vsel %vm1838, %v2145, %v2149
      %v2152 = vshrl.u32 %v1814, 16
      %v2154 = vrot.slane %v2152, 4
      %v2155 = vshll.u32 %v1814, 16
      %v2157 = vrot.slane %v2155, 5
      %v2158 = vor.u32 %v2154, %v2157
      %v2159 = vrot.slane %v2158, 4
      %v2161 = vshll.u32 %v1815, 16
      %v2163 = vrot.slane %v2161, 5
      %v2164 = vsel %vm1838, %v2159, %v2163
      %v2165 = vshrl.u32 %v1815, 16
      %v2167 = vrot.slane %v2165, 4
      %v2168 = vor.u32 %v2167, %v2163
      %v2169 = vrot.slane %v2168, 4
      %v2171 = vshll.u32 %v1833, 16
      %v2173 = vrot.slane %v2171, 5
      %v2174 = vsel %vm1838, %v2169, %v2173
      %v2176 = vshrl.u32 %v1816, 16
      %v2178 = vrot.slane %v2176, 4
      %v2179 = vshll.u32 %v1816, 16
      %v2181 = vrot.slane %v2179, 5
      %v2182 = vor.u32 %v2178, %v2181
      %v2183 = vrot.slane %v2182, 4
      %v2185 = vshll.u32 %v1817, 16
      %v2187 = vrot.slane %v2185, 5
      %v2188 = vsel %vm1838, %v2183, %v2187
      %v2189 = vshrl.u32 %v1817, 16
      %v2191 = vrot.slane %v2189, 4
      %v2192 = vor.u32 %v2191, %v2187
      %v2193 = vrot.slane %v2192, 4
      %v2195 = vshll.u32 %v1834, 16
      %v2197 = vrot.slane %v2195, 5
      %v2198 = vsel %vm1838, %v2193, %v2197
      %v2200 = vshrl.u32 %v1818, 16
      %v2202 = vrot.slane %v2200, 4
      %v2203 = vshll.u32 %v1818, 16
      %v2205 = vrot.slane %v2203, 5
      %v2206 = vor.u32 %v2202, %v2205
      %v2207 = vrot.slane %v2206, 4
      %v2209 = vshll.u32 %v1819, 16
      %v2211 = vrot.slane %v2209, 5
      %v2212 = vsel %vm1838, %v2207, %v2211
      %v2213 = vshrl.u32 %v1819, 16
      %v2215 = vrot.slane %v2213, 4
      %v2216 = vor.u32 %v2215, %v2211
      %v2217 = vrot.slane %v2216, 4
      %v2219 = vshll.u32 %v1835, 16
      %v2221 = vrot.slane %v2219, 5
      %v2222 = vsel %vm1838, %v2217, %v2221
      %v2223 = vld [vmem:[%s1787] sm:$0xe]
      %v2224 = vld [vmem:[%s1787 + $0xc] sm:$0xe]
      %v2225 = vld [vmem:[%s1787 + $0x18] sm:$0xe]
      %v2226 = vld [vmem:[%s1787 + $0x24] sm:$0xe]
      %v2227 = vld [vmem:[%s1787 + $0x30] sm:$0xe]
      %v2228 = vld [vmem:[%s1787 + $0x3c] sm:$0xe]
      %v2229 = vld [vmem:[%s1787 + $0x48] sm:$0xe]
      %v2230 = vld [vmem:[%s1787 + $0x54] sm:$0xe]
      %v2231 = vld [vmem:[%s1787 + $0x60] sm:$0xe]
      %v2232 = vld [vmem:[%s1787 + $0x6c] sm:$0xe]
      %v2233 = vld [vmem:[%s1787 + $0x78] sm:$0xe]
      %v2234 = vld [vmem:[%s1787 + $0x84] sm:$0xe]
      %v2235 = vld [vmem:[%s1787 + $0x90] sm:$0xe]
      %v2236 = vld [vmem:[%s1787 + $0x9c] sm:$0xe]
      %v2237 = vld [vmem:[%s1787 + $0xa8] sm:$0xe]
      %v2238 = vld [vmem:[%s1787 + $0xb4] sm:$0xe]
      %vm2287 = vcmask 1042432
      %vm2288 = vcmask 1046532
      %vm2289 = vmor %vm2287, %vm2288
      %v2290 = vrot.slane %v2223, 5
      %v2291 = vrot.slane %v2290, 4
      %v2292 = vrot.slane %v1789, 5
      %v2293 = vsel %vm2289, %v2291, %v2292
      %v2294 = vrot.slane %v2292, 4
      %v2295 = vrot.slane %v1820, 5
      %v2296 = vsel %vm2289, %v2294, %v2295
      %v2297 = vrot.slane %v2224, 5
      %v2298 = vrot.slane %v2297, 4
      %v2299 = vrot.slane %v1791, 5
      %v2300 = vsel %vm2289, %v2298, %v2299
      %v2301 = vrot.slane %v2299, 4
      %v2302 = vrot.slane %v1821, 5
      %v2303 = vsel %vm2289, %v2301, %v2302
      %v2304 = vrot.slane %v2225, 5
      %v2305 = vrot.slane %v2304, 4
      %v2306 = vrot.slane %v1793, 5
      %v2307 = vsel %vm2289, %v2305, %v2306
      %v2308 = vrot.slane %v2306, 4
      %v2309 = vrot.slane %v1822, 5
      %v2310 = vsel %vm2289, %v2308, %v2309
      %v2311 = vrot.slane %v2226, 5
      %v2312 = vrot.slane %v2311, 4
      %v2313 = vrot.slane %v1795, 5
      %v2314 = vsel %vm2289, %v2312, %v2313
      %v2315 = vrot.slane %v2313, 4
      %v2316 = vrot.slane %v1823, 5
      %v2317 = vsel %vm2289, %v2315, %v2316
      %v2318 = vrot.slane %v2227, 5
      %v2319 = vrot.slane %v2318, 4
      %v2320 = vrot.slane %v1797, 5
      %v2321 = vsel %vm2289, %v2319, %v2320
      %v2322 = vrot.slane %v2320, 4
      %v2323 = vrot.slane %v1824, 5
      %v2324 = vsel %vm2289, %v2322, %v2323
      %v2325 = vrot.slane %v2228, 5
      %v2326 = vrot.slane %v2325, 4
      %v2327 = vrot.slane %v1799, 5
      %v2328 = vsel %vm2289, %v2326, %v2327
      %v2329 = vrot.slane %v2327, 4
      %v2330 = vrot.slane %v1825, 5
      %v2331 = vsel %vm2289, %v2329, %v2330
      %v2332 = vrot.slane %v2229, 5
      %v2333 = vrot.slane %v2332, 4
      %v2334 = vrot.slane %v1801, 5
      %v2335 = vsel %vm2289, %v2333, %v2334
      %v2336 = vrot.slane %v2334, 4
      %v2337 = vrot.slane %v1826, 5
      %v2338 = vsel %vm2289, %v2336, %v2337
      %v2339 = vrot.slane %v2230, 5
      %v2340 = vrot.slane %v2339, 4
      %v2341 = vrot.slane %v1803, 5
      %v2342 = vsel %vm2289, %v2340, %v2341
      %v2343 = vrot.slane %v2341, 4
      %v2344 = vrot.slane %v1827, 5
      %v2345 = vsel %vm2289, %v2343, %v2344
      %v2346 = vrot.slane %v2231, 5
      %v2347 = vrot.slane %v2346, 4
      %v2348 = vrot.slane %v1805, 5
      %v2349 = vsel %vm2289, %v2347, %v2348
      %v2350 = vrot.slane %v2348, 4
      %v2351 = vrot.slane %v1828, 5
      %v2352 = vsel %vm2289, %v2350, %v2351
      %v2353 = vrot.slane %v2232, 5
      %v2354 = vrot.slane %v2353, 4
      %v2355 = vrot.slane %v1807, 5
      %v2356 = vsel %vm2289, %v2354, %v2355
      %v2357 = vrot.slane %v2355, 4
      %v2358 = vrot.slane %v1829, 5
      %v2359 = vsel %vm2289, %v2357, %v2358
      %v2360 = vrot.slane %v2233, 5
      %v2361 = vrot.slane %v2360, 4
      %v2362 = vrot.slane %v1809, 5
      %v2363 = vsel %vm2289, %v2361, %v2362
      %v2364 = vrot.slane %v2362, 4
      %v2365 = vrot.slane %v1830, 5
      %v2366 = vsel %vm2289, %v2364, %v2365
      %v2367 = vrot.slane %v2234, 5
      %v2368 = vrot.slane %v2367, 4
      %v2369 = vrot.slane %v1811, 5
      %v2370 = vsel %vm2289, %v2368, %v2369
      %v2371 = vrot.slane %v2369, 4
      %v2372 = vrot.slane %v1831, 5
      %v2373 = vsel %vm2289, %v2371, %v2372
      %v2374 = vrot.slane %v2235, 5
      %v2375 = vrot.slane %v2374, 4
      %v2376 = vrot.slane %v1813, 5
      %v2377 = vsel %vm2289, %v2375, %v2376
      %v2378 = vrot.slane %v2376, 4
      %v2379 = vrot.slane %v1832, 5
      %v2380 = vsel %vm2289, %v2378, %v2379
      %v2381 = vrot.slane %v2236, 5
      %v2382 = vrot.slane %v2381, 4
      %v2383 = vrot.slane %v1815, 5
      %v2384 = vsel %vm2289, %v2382, %v2383
      %v2385 = vrot.slane %v2383, 4
      %v2386 = vrot.slane %v1833, 5
      %v2387 = vsel %vm2289, %v2385, %v2386
      %v2388 = vrot.slane %v2237, 5
      %v2389 = vrot.slane %v2388, 4
      %v2390 = vrot.slane %v1817, 5
      %v2391 = vsel %vm2289, %v2389, %v2390
      %v2392 = vrot.slane %v2390, 4
      %v2393 = vrot.slane %v1834, 5
      %v2394 = vsel %vm2289, %v2392, %v2393
      %v2395 = vrot.slane %v2238, 5
      %v2396 = vrot.slane %v2395, 4
      %v2397 = vrot.slane %v1819, 5
      %v2398 = vsel %vm2289, %v2396, %v2397
      %v2399 = vrot.slane %v2397, 4
      %v2400 = vrot.slane %v1835, 5
      %v2401 = vsel %vm2289, %v2399, %v2400
      %v2402 = vld [vmem:[%s1670] sm:$0xf]
      %v2403 = vld [vmem:[%s1670 + $0x4] sm:$0xf]
      %v2404 = vld [vmem:[%s1670 + $0xc] sm:$0xf]
      %v2405 = vld [vmem:[%s1670 + $0x10] sm:$0xf]
      %v2406 = vld [vmem:[%s1670 + $0x18] sm:$0xf]
      %v2407 = vld [vmem:[%s1670 + $0x1c] sm:$0xf]
      %v2408 = vld [vmem:[%s1670 + $0x24] sm:$0xf]
      %v2409 = vld [vmem:[%s1670 + $0x28] sm:$0xf]
      %v2410 = vld [vmem:[%s1670 + $0x30] sm:$0xf]
      %v2411 = vld [vmem:[%s1670 + $0x34] sm:$0xf]
      %v2412 = vld [vmem:[%s1670 + $0x3c] sm:$0xf]
      %v2413 = vld [vmem:[%s1670 + $0x40] sm:$0xf]
      %v2414 = vld [vmem:[%s1670 + $0x48] sm:$0xf]
      %v2415 = vld [vmem:[%s1670 + $0x4c] sm:$0xf]
      %v2416 = vld [vmem:[%s1670 + $0x54] sm:$0xf]
      %v2417 = vld [vmem:[%s1670 + $0x58] sm:$0xf]
      %v2418 = vld [vmem:[%s1670 + $0x60] sm:$0xf]
      %v2419 = vld [vmem:[%s1670 + $0x64] sm:$0xf]
      %v2420 = vld [vmem:[%s1670 + $0x6c] sm:$0xf]
      %v2421 = vld [vmem:[%s1670 + $0x70] sm:$0xf]
      %v2422 = vld [vmem:[%s1670 + $0x78] sm:$0xf]
      %v2423 = vld [vmem:[%s1670 + $0x7c] sm:$0xf]
      %v2424 = vld [vmem:[%s1670 + $0x84] sm:$0xf]
      %v2425 = vld [vmem:[%s1670 + $0x88] sm:$0xf]
      %v2426 = vld [vmem:[%s1670 + $0x90] sm:$0xf]
      %v2427 = vld [vmem:[%s1670 + $0x94] sm:$0xf]
      %v2428 = vld [vmem:[%s1670 + $0x9c] sm:$0xf]
      %v2429 = vld [vmem:[%s1670 + $0xa0] sm:$0xf]
      %v2430 = vld [vmem:[%s1670 + $0xa8] sm:$0xf]
      %v2431 = vld [vmem:[%s1670 + $0xac] sm:$0xf]
      %v2432 = vld [vmem:[%s1670 + $0xb4] sm:$0xf]
      %v2433 = vld [vmem:[%s1670 + $0xb8] sm:$0xf]
      %v2434 = vld [vmem:[%s1670 + $0x8] sm:$0x1]
      %v2435 = vld [vmem:[%s1670 + $0x14] sm:$0x1]
      %v2436 = vld [vmem:[%s1670 + $0x20] sm:$0x1]
      %v2437 = vld [vmem:[%s1670 + $0x2c] sm:$0x1]
      %v2438 = vld [vmem:[%s1670 + $0x38] sm:$0x1]
      %v2439 = vld [vmem:[%s1670 + $0x44] sm:$0x1]
      %v2440 = vld [vmem:[%s1670 + $0x50] sm:$0x1]
      %v2441 = vld [vmem:[%s1670 + $0x5c] sm:$0x1]
      %v2442 = vld [vmem:[%s1670 + $0x68] sm:$0x1]
      %v2443 = vld [vmem:[%s1670 + $0x74] sm:$0x1]
      %v2444 = vld [vmem:[%s1670 + $0x80] sm:$0x1]
      %v2445 = vld [vmem:[%s1670 + $0x8c] sm:$0x1]
      %v2446 = vld [vmem:[%s1670 + $0x98] sm:$0x1]
      %v2447 = vld [vmem:[%s1670 + $0xa4] sm:$0x1]
      %v2448 = vld [vmem:[%s1670 + $0xb0] sm:$0x1]
      %v2449 = vld [vmem:[%s1670 + $0xbc] sm:$0x1]
      %v2451 = vshrl.u32 %v2402, 16
      %v2453 = vrot.slane %v2451, 4
      %v2454 = vshll.u32 %v2402, 16
      %v2456 = vrot.slane %v2454, 5
      %v2457 = vor.u32 %v2453, %v2456
      %v2458 = vrot.slane %v2457, 4
      %v2460 = vshll.u32 %v2403, 16
      %v2462 = vrot.slane %v2460, 5
      %v2463 = vsel %vm1838, %v2458, %v2462
      %v2464 = vshrl.u32 %v2403, 16
      %v2466 = vrot.slane %v2464, 4
      %v2467 = vor.u32 %v2466, %v2462
      %v2468 = vrot.slane %v2467, 4
      %v2470 = vshll.u32 %v2434, 16
      %v2472 = vrot.slane %v2470, 5
      %v2473 = vsel %vm1838, %v2468, %v2472
      %v2475 = vshrl.u32 %v2404, 16
      %v2477 = vrot.slane %v2475, 4
      %v2478 = vshll.u32 %v2404, 16
      %v2480 = vrot.slane %v2478, 5
      %v2481 = vor.u32 %v2477, %v2480
      %v2482 = vrot.slane %v2481, 4
      %v2484 = vshll.u32 %v2405, 16
      %v2486 = vrot.slane %v2484, 5
      %v2487 = vsel %vm1838, %v2482, %v2486
      %v2488 = vshrl.u32 %v2405, 16
      %v2490 = vrot.slane %v2488, 4
      %v2491 = vor.u32 %v2490, %v2486
      %v2492 = vrot.slane %v2491, 4
      %v2494 = vshll.u32 %v2435, 16
      %v2496 = vrot.slane %v2494, 5
      %v2497 = vsel %vm1838, %v2492, %v2496
      %v2499 = vshrl.u32 %v2406, 16
      %v2501 = vrot.slane %v2499, 4
      %v2502 = vshll.u32 %v2406, 16
      %v2504 = vrot.slane %v2502, 5
      %v2505 = vor.u32 %v2501, %v2504
      %v2506 = vrot.slane %v2505, 4
      %v2508 = vshll.u32 %v2407, 16
      %v2510 = vrot.slane %v2508, 5
      %v2511 = vsel %vm1838, %v2506, %v2510
      %v2512 = vshrl.u32 %v2407, 16
      %v2514 = vrot.slane %v2512, 4
      %v2515 = vor.u32 %v2514, %v2510
      %v2516 = vrot.slane %v2515, 4
      %v2518 = vshll.u32 %v2436, 16
      %v2520 = vrot.slane %v2518, 5
      %v2521 = vsel %vm1838, %v2516, %v2520
      %v2523 = vshrl.u32 %v2408, 16
      %v2525 = vrot.slane %v2523, 4
      %v2526 = vshll.u32 %v2408, 16
      %v2528 = vrot.slane %v2526, 5
      %v2529 = vor.u32 %v2525, %v2528
      %v2530 = vrot.slane %v2529, 4
      %v2532 = vshll.u32 %v2409, 16
      %v2534 = vrot.slane %v2532, 5
      %v2535 = vsel %vm1838, %v2530, %v2534
      %v2536 = vshrl.u32 %v2409, 16
      %v2538 = vrot.slane %v2536, 4
      %v2539 = vor.u32 %v2538, %v2534
      %v2540 = vrot.slane %v2539, 4
      %v2542 = vshll.u32 %v2437, 16
      %v2544 = vrot.slane %v2542, 5
      %v2545 = vsel %vm1838, %v2540, %v2544
      %v2547 = vshrl.u32 %v2410, 16
      %v2549 = vrot.slane %v2547, 4
      %v2550 = vshll.u32 %v2410, 16
      %v2552 = vrot.slane %v2550, 5
      %v2553 = vor.u32 %v2549, %v2552
      %v2554 = vrot.slane %v2553, 4
      %v2556 = vshll.u32 %v2411, 16
      %v2558 = vrot.slane %v2556, 5
      %v2559 = vsel %vm1838, %v2554, %v2558
      %v2560 = vshrl.u32 %v2411, 16
      %v2562 = vrot.slane %v2560, 4
      %v2563 = vor.u32 %v2562, %v2558
      %v2564 = vrot.slane %v2563, 4
      %v2566 = vshll.u32 %v2438, 16
      %v2568 = vrot.slane %v2566, 5
      %v2569 = vsel %vm1838, %v2564, %v2568
      %v2571 = vshrl.u32 %v2412, 16
      %v2573 = vrot.slane %v2571, 4
      %v2574 = vshll.u32 %v2412, 16
      %v2576 = vrot.slane %v2574, 5
      %v2577 = vor.u32 %v2573, %v2576
      %v2578 = vrot.slane %v2577, 4
      %v2580 = vshll.u32 %v2413, 16
      %v2582 = vrot.slane %v2580, 5
      %v2583 = vsel %vm1838, %v2578, %v2582
      %v2584 = vshrl.u32 %v2413, 16
      %v2586 = vrot.slane %v2584, 4
      %v2587 = vor.u32 %v2586, %v2582
      %v2588 = vrot.slane %v2587, 4
      %v2590 = vshll.u32 %v2439, 16
      %v2592 = vrot.slane %v2590, 5
      %v2593 = vsel %vm1838, %v2588, %v2592
      %v2595 = vshrl.u32 %v2414, 16
      %v2597 = vrot.slane %v2595, 4
      %v2598 = vshll.u32 %v2414, 16
      %v2600 = vrot.slane %v2598, 5
      %v2601 = vor.u32 %v2597, %v2600
      %v2602 = vrot.slane %v2601, 4
      %v2604 = vshll.u32 %v2415, 16
      %v2606 = vrot.slane %v2604, 5
      %v2607 = vsel %vm1838, %v2602, %v2606
      %v2608 = vshrl.u32 %v2415, 16
      %v2610 = vrot.slane %v2608, 4
      %v2611 = vor.u32 %v2610, %v2606
      %v2612 = vrot.slane %v2611, 4
      %v2614 = vshll.u32 %v2440, 16
      %v2616 = vrot.slane %v2614, 5
      %v2617 = vsel %vm1838, %v2612, %v2616
      %v2619 = vshrl.u32 %v2416, 16
      %v2621 = vrot.slane %v2619, 4
      %v2622 = vshll.u32 %v2416, 16
      %v2624 = vrot.slane %v2622, 5
      %v2625 = vor.u32 %v2621, %v2624
      %v2626 = vrot.slane %v2625, 4
      %v2628 = vshll.u32 %v2417, 16
      %v2630 = vrot.slane %v2628, 5
      %v2631 = vsel %vm1838, %v2626, %v2630
      %v2632 = vshrl.u32 %v2417, 16
      %v2634 = vrot.slane %v2632, 4
      %v2635 = vor.u32 %v2634, %v2630
      %v2636 = vrot.slane %v2635, 4
      %v2638 = vshll.u32 %v2441, 16
      %v2640 = vrot.slane %v2638, 5
      %v2641 = vsel %vm1838, %v2636, %v2640
      %v2643 = vshrl.u32 %v2418, 16
      %v2645 = vrot.slane %v2643, 4
      %v2646 = vshll.u32 %v2418, 16
      %v2648 = vrot.slane %v2646, 5
      %v2649 = vor.u32 %v2645, %v2648
      %v2650 = vrot.slane %v2649, 4
      %v2652 = vshll.u32 %v2419, 16
      %v2654 = vrot.slane %v2652, 5
      %v2655 = vsel %vm1838, %v2650, %v2654
      %v2656 = vshrl.u32 %v2419, 16
      %v2658 = vrot.slane %v2656, 4
      %v2659 = vor.u32 %v2658, %v2654
      %v2660 = vrot.slane %v2659, 4
      %v2662 = vshll.u32 %v2442, 16
      %v2664 = vrot.slane %v2662, 5
      %v2665 = vsel %vm1838, %v2660, %v2664
      %v2667 = vshrl.u32 %v2420, 16
      %v2669 = vrot.slane %v2667, 4
      %v2670 = vshll.u32 %v2420, 16
      %v2672 = vrot.slane %v2670, 5
      %v2673 = vor.u32 %v2669, %v2672
      %v2674 = vrot.slane %v2673, 4
      %v2676 = vshll.u32 %v2421, 16
      %v2678 = vrot.slane %v2676, 5
      %v2679 = vsel %vm1838, %v2674, %v2678
      %v2680 = vshrl.u32 %v2421, 16
      %v2682 = vrot.slane %v2680, 4
      %v2683 = vor.u32 %v2682, %v2678
      %v2684 = vrot.slane %v2683, 4
      %v2686 = vshll.u32 %v2443, 16
      %v2688 = vrot.slane %v2686, 5
      %v2689 = vsel %vm1838, %v2684, %v2688
      %v2691 = vshrl.u32 %v2422, 16
      %v2693 = vrot.slane %v2691, 4
      %v2694 = vshll.u32 %v2422, 16
      %v2696 = vrot.slane %v2694, 5
      %v2697 = vor.u32 %v2693, %v2696
      %v2698 = vrot.slane %v2697, 4
      %v2700 = vshll.u32 %v2423, 16
      %v2702 = vrot.slane %v2700, 5
      %v2703 = vsel %vm1838, %v2698, %v2702
      %v2704 = vshrl.u32 %v2423, 16
      %v2706 = vrot.slane %v2704, 4
      %v2707 = vor.u32 %v2706, %v2702
      %v2708 = vrot.slane %v2707, 4
      %v2710 = vshll.u32 %v2444, 16
      %v2712 = vrot.slane %v2710, 5
      %v2713 = vsel %vm1838, %v2708, %v2712
      %v2715 = vshrl.u32 %v2424, 16
      %v2717 = vrot.slane %v2715, 4
      %v2718 = vshll.u32 %v2424, 16
      %v2720 = vrot.slane %v2718, 5
      %v2721 = vor.u32 %v2717, %v2720
      %v2722 = vrot.slane %v2721, 4
      %v2724 = vshll.u32 %v2425, 16
      %v2726 = vrot.slane %v2724, 5
      %v2727 = vsel %vm1838, %v2722, %v2726
      %v2728 = vshrl.u32 %v2425, 16
      %v2730 = vrot.slane %v2728, 4
      %v2731 = vor.u32 %v2730, %v2726
      %v2732 = vrot.slane %v2731, 4
      %v2734 = vshll.u32 %v2445, 16
      %v2736 = vrot.slane %v2734, 5
      %v2737 = vsel %vm1838, %v2732, %v2736
      %v2739 = vshrl.u32 %v2426, 16
      %v2741 = vrot.slane %v2739, 4
      %v2742 = vshll.u32 %v2426, 16
      %v2744 = vrot.slane %v2742, 5
      %v2745 = vor.u32 %v2741, %v2744
      %v2746 = vrot.slane %v2745, 4
      %v2748 = vshll.u32 %v2427, 16
      %v2750 = vrot.slane %v2748, 5
      %v2751 = vsel %vm1838, %v2746, %v2750
      %v2752 = vshrl.u32 %v2427, 16
      %v2754 = vrot.slane %v2752, 4
      %v2755 = vor.u32 %v2754, %v2750
      %v2756 = vrot.slane %v2755, 4
      %v2758 = vshll.u32 %v2446, 16
      %v2760 = vrot.slane %v2758, 5
      %v2761 = vsel %vm1838, %v2756, %v2760
      %v2763 = vshrl.u32 %v2428, 16
      %v2765 = vrot.slane %v2763, 4
      %v2766 = vshll.u32 %v2428, 16
      %v2768 = vrot.slane %v2766, 5
      %v2769 = vor.u32 %v2765, %v2768
      %v2770 = vrot.slane %v2769, 4
      %v2772 = vshll.u32 %v2429, 16
      %v2774 = vrot.slane %v2772, 5
      %v2775 = vsel %vm1838, %v2770, %v2774
      %v2776 = vshrl.u32 %v2429, 16
      %v2778 = vrot.slane %v2776, 4
      %v2779 = vor.u32 %v2778, %v2774
      %v2780 = vrot.slane %v2779, 4
      %v2782 = vshll.u32 %v2447, 16
      %v2784 = vrot.slane %v2782, 5
      %v2785 = vsel %vm1838, %v2780, %v2784
      %v2787 = vshrl.u32 %v2430, 16
      %v2789 = vrot.slane %v2787, 4
      %v2790 = vshll.u32 %v2430, 16
      %v2792 = vrot.slane %v2790, 5
      %v2793 = vor.u32 %v2789, %v2792
      %v2794 = vrot.slane %v2793, 4
      %v2796 = vshll.u32 %v2431, 16
      %v2798 = vrot.slane %v2796, 5
      %v2799 = vsel %vm1838, %v2794, %v2798
      %v2800 = vshrl.u32 %v2431, 16
      %v2802 = vrot.slane %v2800, 4
      %v2803 = vor.u32 %v2802, %v2798
      %v2804 = vrot.slane %v2803, 4
      %v2806 = vshll.u32 %v2448, 16
      %v2808 = vrot.slane %v2806, 5
      %v2809 = vsel %vm1838, %v2804, %v2808
      %v2811 = vshrl.u32 %v2432, 16
      %v2813 = vrot.slane %v2811, 4
      %v2814 = vshll.u32 %v2432, 16
      %v2816 = vrot.slane %v2814, 5
      %v2817 = vor.u32 %v2813, %v2816
      %v2818 = vrot.slane %v2817, 4
      %v2820 = vshll.u32 %v2433, 16
      %v2822 = vrot.slane %v2820, 5
      %v2823 = vsel %vm1838, %v2818, %v2822
      %v2824 = vshrl.u32 %v2433, 16
      %v2826 = vrot.slane %v2824, 4
      %v2827 = vor.u32 %v2826, %v2822
      %v2828 = vrot.slane %v2827, 4
      %v2830 = vshll.u32 %v2449, 16
      %v2832 = vrot.slane %v2830, 5
      %v2833 = vsel %vm1838, %v2828, %v2832
      %v2834 = vld [vmem:[%s1670] sm:$0xe]
      %v2835 = vld [vmem:[%s1670 + $0xc] sm:$0xe]
      %v2836 = vld [vmem:[%s1670 + $0x18] sm:$0xe]
      %v2837 = vld [vmem:[%s1670 + $0x24] sm:$0xe]
      %v2838 = vld [vmem:[%s1670 + $0x30] sm:$0xe]
      %v2839 = vld [vmem:[%s1670 + $0x3c] sm:$0xe]
      %v2840 = vld [vmem:[%s1670 + $0x48] sm:$0xe]
      %v2841 = vld [vmem:[%s1670 + $0x54] sm:$0xe]
      %v2842 = vld [vmem:[%s1670 + $0x60] sm:$0xe]
      %v2843 = vld [vmem:[%s1670 + $0x6c] sm:$0xe]
      %v2844 = vld [vmem:[%s1670 + $0x78] sm:$0xe]
      %v2845 = vld [vmem:[%s1670 + $0x84] sm:$0xe]
      %v2846 = vld [vmem:[%s1670 + $0x90] sm:$0xe]
      %v2847 = vld [vmem:[%s1670 + $0x9c] sm:$0xe]
      %v2848 = vld [vmem:[%s1670 + $0xa8] sm:$0xe]
      %v2849 = vld [vmem:[%s1670 + $0xb4] sm:$0xe]
      %v2898 = vrot.slane %v2834, 5
      %v2899 = vrot.slane %v2898, 4
      %v2900 = vrot.slane %v2403, 5
      %v2901 = vsel %vm2289, %v2899, %v2900
      %v2902 = vrot.slane %v2900, 4
      %v2903 = vrot.slane %v2434, 5
      %v2904 = vsel %vm2289, %v2902, %v2903
      %v2905 = vrot.slane %v2835, 5
      %v2906 = vrot.slane %v2905, 4
      %v2907 = vrot.slane %v2405, 5
      %v2908 = vsel %vm2289, %v2906, %v2907
      %v2909 = vrot.slane %v2907, 4
      %v2910 = vrot.slane %v2435, 5
      %v2911 = vsel %vm2289, %v2909, %v2910
      %v2912 = vrot.slane %v2836, 5
      %v2913 = vrot.slane %v2912, 4
      %v2914 = vrot.slane %v2407, 5
      %v2915 = vsel %vm2289, %v2913, %v2914
      %v2916 = vrot.slane %v2914, 4
      %v2917 = vrot.slane %v2436, 5
      %v2918 = vsel %vm2289, %v2916, %v2917
      %v2919 = vrot.slane %v2837, 5
      %v2920 = vrot.slane %v2919, 4
      %v2921 = vrot.slane %v2409, 5
      %v2922 = vsel %vm2289, %v2920, %v2921
      %v2923 = vrot.slane %v2921, 4
      %v2924 = vrot.slane %v2437, 5
      %v2925 = vsel %vm2289, %v2923, %v2924
      %v2926 = vrot.slane %v2838, 5
      %v2927 = vrot.slane %v2926, 4
      %v2928 = vrot.slane %v2411, 5
      %v2929 = vsel %vm2289, %v2927, %v2928
      %v2930 = vrot.slane %v2928, 4
      %v2931 = vrot.slane %v2438, 5
      %v2932 = vsel %vm2289, %v2930, %v2931
      %v2933 = vrot.slane %v2839, 5
      %v2934 = vrot.slane %v2933, 4
      %v2935 = vrot.slane %v2413, 5
      %v2936 = vsel %vm2289, %v2934, %v2935
      %v2937 = vrot.slane %v2935, 4
      %v2938 = vrot.slane %v2439, 5
      %v2939 = vsel %vm2289, %v2937, %v2938
      %v2940 = vrot.slane %v2840, 5
      %v2941 = vrot.slane %v2940, 4
      %v2942 = vrot.slane %v2415, 5
      %v2943 = vsel %vm2289, %v2941, %v2942
      %v2944 = vrot.slane %v2942, 4
      %v2945 = vrot.slane %v2440, 5
      %v2946 = vsel %vm2289, %v2944, %v2945
      %v2947 = vrot.slane %v2841, 5
      %v2948 = vrot.slane %v2947, 4
      %v2949 = vrot.slane %v2417, 5
      %v2950 = vsel %vm2289, %v2948, %v2949
      %v2951 = vrot.slane %v2949, 4
      %v2952 = vrot.slane %v2441, 5
      %v2953 = vsel %vm2289, %v2951, %v2952
      %v2954 = vrot.slane %v2842, 5
      %v2955 = vrot.slane %v2954, 4
      %v2956 = vrot.slane %v2419, 5
      %v2957 = vsel %vm2289, %v2955, %v2956
      %v2958 = vrot.slane %v2956, 4
      %v2959 = vrot.slane %v2442, 5
      %v2960 = vsel %vm2289, %v2958, %v2959
      %v2961 = vrot.slane %v2843, 5
      %v2962 = vrot.slane %v2961, 4
      %v2963 = vrot.slane %v2421, 5
      %v2964 = vsel %vm2289, %v2962, %v2963
      %v2965 = vrot.slane %v2963, 4
      %v2966 = vrot.slane %v2443, 5
      %v2967 = vsel %vm2289, %v2965, %v2966
      %v2968 = vrot.slane %v2844, 5
      %v2969 = vrot.slane %v2968, 4
      %v2970 = vrot.slane %v2423, 5
      %v2971 = vsel %vm2289, %v2969, %v2970
      %v2972 = vrot.slane %v2970, 4
      %v2973 = vrot.slane %v2444, 5
      %v2974 = vsel %vm2289, %v2972, %v2973
      %v2975 = vrot.slane %v2845, 5
      %v2976 = vrot.slane %v2975, 4
      %v2977 = vrot.slane %v2425, 5
      %v2978 = vsel %vm2289, %v2976, %v2977
      %v2979 = vrot.slane %v2977, 4
      %v2980 = vrot.slane %v2445, 5
      %v2981 = vsel %vm2289, %v2979, %v2980
      %v2982 = vrot.slane %v2846, 5
      %v2983 = vrot.slane %v2982, 4
      %v2984 = vrot.slane %v2427, 5
      %v2985 = vsel %vm2289, %v2983, %v2984
      %v2986 = vrot.slane %v2984, 4
      %v2987 = vrot.slane %v2446, 5
      %v2988 = vsel %vm2289, %v2986, %v2987
      %v2989 = vrot.slane %v2847, 5
      %v2990 = vrot.slane %v2989, 4
      %v2991 = vrot.slane %v2429, 5
      %v2992 = vsel %vm2289, %v2990, %v2991
      %v2993 = vrot.slane %v2991, 4
      %v2994 = vrot.slane %v2447, 5
      %v2995 = vsel %vm2289, %v2993, %v2994
      %v2996 = vrot.slane %v2848, 5
      %v2997 = vrot.slane %v2996, 4
      %v2998 = vrot.slane %v2431, 5
      %v2999 = vsel %vm2289, %v2997, %v2998
      %v3000 = vrot.slane %v2998, 4
      %v3001 = vrot.slane %v2448, 5
      %v3002 = vsel %vm2289, %v3000, %v3001
      %v3003 = vrot.slane %v2849, 5
      %v3004 = vrot.slane %v3003, 4
      %v3005 = vrot.slane %v2433, 5
      %v3006 = vsel %vm2289, %v3004, %v3005
      %v3007 = vrot.slane %v3005, 4
      %v3008 = vrot.slane %v2449, 5
      %v3009 = vsel %vm2289, %v3007, %v3008
      %s3010 = sadd.s32 0, 2
      %s3011 = smul.u32 %s3010, 3
      %s3012 = smul.addr %s3011, 4
      %s3013 = scalar_lea.vmem [#allocation2], %s3012
      %v3014 = vld [vmem:[%s3013] sm:$0xf]
      %v3015 = vld [vmem:[%s3013 + $0x4] sm:$0xf]
      %v3016 = vld [vmem:[%s3013 + $0xc] sm:$0xf]
      %v3017 = vld [vmem:[%s3013 + $0x10] sm:$0xf]
      %v3018 = vld [vmem:[%s3013 + $0x18] sm:$0xf]
      %v3019 = vld [vmem:[%s3013 + $0x1c] sm:$0xf]
      %v3020 = vld [vmem:[%s3013 + $0x24] sm:$0xf]
      %v3021 = vld [vmem:[%s3013 + $0x28] sm:$0xf]
      %v3022 = vld [vmem:[%s3013 + $0x30] sm:$0xf]
      %v3023 = vld [vmem:[%s3013 + $0x34] sm:$0xf]
      %v3024 = vld [vmem:[%s3013 + $0x3c] sm:$0xf]
      %v3025 = vld [vmem:[%s3013 + $0x40] sm:$0xf]
      %v3026 = vld [vmem:[%s3013 + $0x48] sm:$0xf]
      %v3027 = vld [vmem:[%s3013 + $0x4c] sm:$0xf]
      %v3028 = vld [vmem:[%s3013 + $0x54] sm:$0xf]
      %v3029 = vld [vmem:[%s3013 + $0x58] sm:$0xf]
      %v3030 = vld [vmem:[%s3013 + $0x60] sm:$0xf]
      %v3031 = vld [vmem:[%s3013 + $0x64] sm:$0xf]
      %v3032 = vld [vmem:[%s3013 + $0x6c] sm:$0xf]
      %v3033 = vld [vmem:[%s3013 + $0x70] sm:$0xf]
      %v3034 = vld [vmem:[%s3013 + $0x78] sm:$0xf]
      %v3035 = vld [vmem:[%s3013 + $0x7c] sm:$0xf]
      %v3036 = vld [vmem:[%s3013 + $0x84] sm:$0xf]
      %v3037 = vld [vmem:[%s3013 + $0x88] sm:$0xf]
      %v3038 = vld [vmem:[%s3013 + $0x90] sm:$0xf]
      %v3039 = vld [vmem:[%s3013 + $0x94] sm:$0xf]
      %v3040 = vld [vmem:[%s3013 + $0x9c] sm:$0xf]
      %v3041 = vld [vmem:[%s3013 + $0xa0] sm:$0xf]
      %v3042 = vld [vmem:[%s3013 + $0xa8] sm:$0xf]
      %v3043 = vld [vmem:[%s3013 + $0xac] sm:$0xf]
      %v3044 = vld [vmem:[%s3013 + $0xb4] sm:$0xf]
      %v3045 = vld [vmem:[%s3013 + $0xb8] sm:$0xf]
      %v3046 = vld [vmem:[%s3013 + $0x8] sm:$0x1]
      %v3047 = vld [vmem:[%s3013 + $0x14] sm:$0x1]
      %v3048 = vld [vmem:[%s3013 + $0x20] sm:$0x1]
      %v3049 = vld [vmem:[%s3013 + $0x2c] sm:$0x1]
      %v3050 = vld [vmem:[%s3013 + $0x38] sm:$0x1]
      %v3051 = vld [vmem:[%s3013 + $0x44] sm:$0x1]
      %v3052 = vld [vmem:[%s3013 + $0x50] sm:$0x1]
      %v3053 = vld [vmem:[%s3013 + $0x5c] sm:$0x1]
      %v3054 = vld [vmem:[%s3013 + $0x68] sm:$0x1]
      %v3055 = vld [vmem:[%s3013 + $0x74] sm:$0x1]
      %v3056 = vld [vmem:[%s3013 + $0x80] sm:$0x1]
      %v3057 = vld [vmem:[%s3013 + $0x8c] sm:$0x1]
      %v3058 = vld [vmem:[%s3013 + $0x98] sm:$0x1]
      %v3059 = vld [vmem:[%s3013 + $0xa4] sm:$0x1]
      %v3060 = vld [vmem:[%s3013 + $0xb0] sm:$0x1]
      %v3061 = vld [vmem:[%s3013 + $0xbc] sm:$0x1]
      %v3063 = vshrl.u32 %v3014, 16
      %v3065 = vrot.slane %v3063, 4
      %v3066 = vshll.u32 %v3014, 16
      %v3068 = vrot.slane %v3066, 5
      %v3069 = vor.u32 %v3065, %v3068
      %v3070 = vrot.slane %v3069, 4
      %v3072 = vshll.u32 %v3015, 16
      %v3074 = vrot.slane %v3072, 5
      %v3075 = vsel %vm1838, %v3070, %v3074
      %v3076 = vshrl.u32 %v3015, 16
      %v3078 = vrot.slane %v3076, 4
      %v3079 = vor.u32 %v3078, %v3074
      %v3080 = vrot.slane %v3079, 4
      %v3082 = vshll.u32 %v3046, 16
      %v3084 = vrot.slane %v3082, 5
      %v3085 = vsel %vm1838, %v3080, %v3084
      %v3087 = vshrl.u32 %v3016, 16
      %v3089 = vrot.slane %v3087, 4
      %v3090 = vshll.u32 %v3016, 16
      %v3092 = vrot.slane %v3090, 5
      %v3093 = vor.u32 %v3089, %v3092
      %v3094 = vrot.slane %v3093, 4
      %v3096 = vshll.u32 %v3017, 16
      %v3098 = vrot.slane %v3096, 5
      %v3099 = vsel %vm1838, %v3094, %v3098
      %v3100 = vshrl.u32 %v3017, 16
      %v3102 = vrot.slane %v3100, 4
      %v3103 = vor.u32 %v3102, %v3098
      %v3104 = vrot.slane %v3103, 4
      %v3106 = vshll.u32 %v3047, 16
      %v3108 = vrot.slane %v3106, 5
      %v3109 = vsel %vm1838, %v3104, %v3108
      %v3111 = vshrl.u32 %v3018, 16
      %v3113 = vrot.slane %v3111, 4
      %v3114 = vshll.u32 %v3018, 16
      %v3116 = vrot.slane %v3114, 5
      %v3117 = vor.u32 %v3113, %v3116
      %v3118 = vrot.slane %v3117, 4
      %v3120 = vshll.u32 %v3019, 16
      %v3122 = vrot.slane %v3120, 5
      %v3123 = vsel %vm1838, %v3118, %v3122
      %v3124 = vshrl.u32 %v3019, 16
      %v3126 = vrot.slane %v3124, 4
      %v3127 = vor.u32 %v3126, %v3122
      %v3128 = vrot.slane %v3127, 4
      %v3130 = vshll.u32 %v3048, 16
      %v3132 = vrot.slane %v3130, 5
      %v3133 = vsel %vm1838, %v3128, %v3132
      %v3135 = vshrl.u32 %v3020, 16
      %v3137 = vrot.slane %v3135, 4
      %v3138 = vshll.u32 %v3020, 16
      %v3140 = vrot.slane %v3138, 5
      %v3141 = vor.u32 %v3137, %v3140
      %v3142 = vrot.slane %v3141, 4
      %v3144 = vshll.u32 %v3021, 16
      %v3146 = vrot.slane %v3144, 5
      %v3147 = vsel %vm1838, %v3142, %v3146
      %v3148 = vshrl.u32 %v3021, 16
      %v3150 = vrot.slane %v3148, 4
      %v3151 = vor.u32 %v3150, %v3146
      %v3152 = vrot.slane %v3151, 4
      %v3154 = vshll.u32 %v3049, 16
      %v3156 = vrot.slane %v3154, 5
      %v3157 = vsel %vm1838, %v3152, %v3156
      %v3159 = vshrl.u32 %v3022, 16
      %v3161 = vrot.slane %v3159, 4
      %v3162 = vshll.u32 %v3022, 16
      %v3164 = vrot.slane %v3162, 5
      %v3165 = vor.u32 %v3161, %v3164
      %v3166 = vrot.slane %v3165, 4
      %v3168 = vshll.u32 %v3023, 16
      %v3170 = vrot.slane %v3168, 5
      %v3171 = vsel %vm1838, %v3166, %v3170
      %v3172 = vshrl.u32 %v3023, 16
      %v3174 = vrot.slane %v3172, 4
      %v3175 = vor.u32 %v3174, %v3170
      %v3176 = vrot.slane %v3175, 4
      %v3178 = vshll.u32 %v3050, 16
      %v3180 = vrot.slane %v3178, 5
      %v3181 = vsel %vm1838, %v3176, %v3180
      %v3183 = vshrl.u32 %v3024, 16
      %v3185 = vrot.slane %v3183, 4
      %v3186 = vshll.u32 %v3024, 16
      %v3188 = vrot.slane %v3186, 5
      %v3189 = vor.u32 %v3185, %v3188
      %v3190 = vrot.slane %v3189, 4
      %v3192 = vshll.u32 %v3025, 16
      %v3194 = vrot.slane %v3192, 5
      %v3195 = vsel %vm1838, %v3190, %v3194
      %v3196 = vshrl.u32 %v3025, 16
      %v3198 = vrot.slane %v3196, 4
      %v3199 = vor.u32 %v3198, %v3194
      %v3200 = vrot.slane %v3199, 4
      %v3202 = vshll.u32 %v3051, 16
      %v3204 = vrot.slane %v3202, 5
      %v3205 = vsel %vm1838, %v3200, %v3204
      %v3207 = vshrl.u32 %v3026, 16
      %v3209 = vrot.slane %v3207, 4
      %v3210 = vshll.u32 %v3026, 16
      %v3212 = vrot.slane %v3210, 5
      %v3213 = vor.u32 %v3209, %v3212
      %v3214 = vrot.slane %v3213, 4
      %v3216 = vshll.u32 %v3027, 16
      %v3218 = vrot.slane %v3216, 5
      %v3219 = vsel %vm1838, %v3214, %v3218
      %v3220 = vshrl.u32 %v3027, 16
      %v3222 = vrot.slane %v3220, 4
      %v3223 = vor.u32 %v3222, %v3218
      %v3224 = vrot.slane %v3223, 4
      %v3226 = vshll.u32 %v3052, 16
      %v3228 = vrot.slane %v3226, 5
      %v3229 = vsel %vm1838, %v3224, %v3228
      %v3231 = vshrl.u32 %v3028, 16
      %v3233 = vrot.slane %v3231, 4
      %v3234 = vshll.u32 %v3028, 16
      %v3236 = vrot.slane %v3234, 5
      %v3237 = vor.u32 %v3233, %v3236
      %v3238 = vrot.slane %v3237, 4
      %v3240 = vshll.u32 %v3029, 16
      %v3242 = vrot.slane %v3240, 5
      %v3243 = vsel %vm1838, %v3238, %v3242
      %v3244 = vshrl.u32 %v3029, 16
      %v3246 = vrot.slane %v3244, 4
      %v3247 = vor.u32 %v3246, %v3242
      %v3248 = vrot.slane %v3247, 4
      %v3250 = vshll.u32 %v3053, 16
      %v3252 = vrot.slane %v3250, 5
      %v3253 = vsel %vm1838, %v3248, %v3252
      %v3255 = vshrl.u32 %v3030, 16
      %v3257 = vrot.slane %v3255, 4
      %v3258 = vshll.u32 %v3030, 16
      %v3260 = vrot.slane %v3258, 5
      %v3261 = vor.u32 %v3257, %v3260
      %v3262 = vrot.slane %v3261, 4
      %v3264 = vshll.u32 %v3031, 16
      %v3266 = vrot.slane %v3264, 5
      %v3267 = vsel %vm1838, %v3262, %v3266
      %v3268 = vshrl.u32 %v3031, 16
      %v3270 = vrot.slane %v3268, 4
      %v3271 = vor.u32 %v3270, %v3266
      %v3272 = vrot.slane %v3271, 4
      %v3274 = vshll.u32 %v3054, 16
      %v3276 = vrot.slane %v3274, 5
      %v3277 = vsel %vm1838, %v3272, %v3276
      %v3279 = vshrl.u32 %v3032, 16
      %v3281 = vrot.slane %v3279, 4
      %v3282 = vshll.u32 %v3032, 16
      %v3284 = vrot.slane %v3282, 5
      %v3285 = vor.u32 %v3281, %v3284
      %v3286 = vrot.slane %v3285, 4
      %v3288 = vshll.u32 %v3033, 16
      %v3290 = vrot.slane %v3288, 5
      %v3291 = vsel %vm1838, %v3286, %v3290
      %v3292 = vshrl.u32 %v3033, 16
      %v3294 = vrot.slane %v3292, 4
      %v3295 = vor.u32 %v3294, %v3290
      %v3296 = vrot.slane %v3295, 4
      %v3298 = vshll.u32 %v3055, 16
      %v3300 = vrot.slane %v3298, 5
      %v3301 = vsel %vm1838, %v3296, %v3300
      %v3303 = vshrl.u32 %v3034, 16
      %v3305 = vrot.slane %v3303, 4
      %v3306 = vshll.u32 %v3034, 16
      %v3308 = vrot.slane %v3306, 5
      %v3309 = vor.u32 %v3305, %v3308
      %v3310 = vrot.slane %v3309, 4
      %v3312 = vshll.u32 %v3035, 16
      %v3314 = vrot.slane %v3312, 5
      %v3315 = vsel %vm1838, %v3310, %v3314
      %v3316 = vshrl.u32 %v3035, 16
      %v3318 = vrot.slane %v3316, 4
      %v3319 = vor.u32 %v3318, %v3314
      %v3320 = vrot.slane %v3319, 4
      %v3322 = vshll.u32 %v3056, 16
      %v3324 = vrot.slane %v3322, 5
      %v3325 = vsel %vm1838, %v3320, %v3324
      %v3327 = vshrl.u32 %v3036, 16
      %v3329 = vrot.slane %v3327, 4
      %v3330 = vshll.u32 %v3036, 16
      %v3332 = vrot.slane %v3330, 5
      %v3333 = vor.u32 %v3329, %v3332
      %v3334 = vrot.slane %v3333, 4
      %v3336 = vshll.u32 %v3037, 16
      %v3338 = vrot.slane %v3336, 5
      %v3339 = vsel %vm1838, %v3334, %v3338
      %v3340 = vshrl.u32 %v3037, 16
      %v3342 = vrot.slane %v3340, 4
      %v3343 = vor.u32 %v3342, %v3338
      %v3344 = vrot.slane %v3343, 4
      %v3346 = vshll.u32 %v3057, 16
      %v3348 = vrot.slane %v3346, 5
      %v3349 = vsel %vm1838, %v3344, %v3348
      %v3351 = vshrl.u32 %v3038, 16
      %v3353 = vrot.slane %v3351, 4
      %v3354 = vshll.u32 %v3038, 16
      %v3356 = vrot.slane %v3354, 5
      %v3357 = vor.u32 %v3353, %v3356
      %v3358 = vrot.slane %v3357, 4
      %v3360 = vshll.u32 %v3039, 16
      %v3362 = vrot.slane %v3360, 5
      %v3363 = vsel %vm1838, %v3358, %v3362
      %v3364 = vshrl.u32 %v3039, 16
      %v3366 = vrot.slane %v3364, 4
      %v3367 = vor.u32 %v3366, %v3362
      %v3368 = vrot.slane %v3367, 4
      %v3370 = vshll.u32 %v3058, 16
      %v3372 = vrot.slane %v3370, 5
      %v3373 = vsel %vm1838, %v3368, %v3372
      %v3375 = vshrl.u32 %v3040, 16
      %v3377 = vrot.slane %v3375, 4
      %v3378 = vshll.u32 %v3040, 16
      %v3380 = vrot.slane %v3378, 5
      %v3381 = vor.u32 %v3377, %v3380
      %v3382 = vrot.slane %v3381, 4
      %v3384 = vshll.u32 %v3041, 16
      %v3386 = vrot.slane %v3384, 5
      %v3387 = vsel %vm1838, %v3382, %v3386
      %v3388 = vshrl.u32 %v3041, 16
      %v3390 = vrot.slane %v3388, 4
      %v3391 = vor.u32 %v3390, %v3386
      %v3392 = vrot.slane %v3391, 4
      %v3394 = vshll.u32 %v3059, 16
      %v3396 = vrot.slane %v3394, 5
      %v3397 = vsel %vm1838, %v3392, %v3396
      %v3399 = vshrl.u32 %v3042, 16
      %v3401 = vrot.slane %v3399, 4
      %v3402 = vshll.u32 %v3042, 16
      %v3404 = vrot.slane %v3402, 5
      %v3405 = vor.u32 %v3401, %v3404
      %v3406 = vrot.slane %v3405, 4
      %v3408 = vshll.u32 %v3043, 16
      %v3410 = vrot.slane %v3408, 5
      %v3411 = vsel %vm1838, %v3406, %v3410
      %v3412 = vshrl.u32 %v3043, 16
      %v3414 = vrot.slane %v3412, 4
      %v3415 = vor.u32 %v3414, %v3410
      %v3416 = vrot.slane %v3415, 4
      %v3418 = vshll.u32 %v3060, 16
      %v3420 = vrot.slane %v3418, 5
      %v3421 = vsel %vm1838, %v3416, %v3420
      %v3423 = vshrl.u32 %v3044, 16
      %v3425 = vrot.slane %v3423, 4
      %v3426 = vshll.u32 %v3044, 16
      %v3428 = vrot.slane %v3426, 5
      %v3429 = vor.u32 %v3425, %v3428
      %v3430 = vrot.slane %v3429, 4
      %v3432 = vshll.u32 %v3045, 16
      %v3434 = vrot.slane %v3432, 5
      %v3435 = vsel %vm1838, %v3430, %v3434
      %v3436 = vshrl.u32 %v3045, 16
      %v3438 = vrot.slane %v3436, 4
      %v3439 = vor.u32 %v3438, %v3434
      %v3440 = vrot.slane %v3439, 4
      %v3442 = vshll.u32 %v3061, 16
      %v3444 = vrot.slane %v3442, 5
      %v3445 = vsel %vm1838, %v3440, %v3444
      %v3446 = vld [vmem:[%s3013] sm:$0xe]
      %v3447 = vld [vmem:[%s3013 + $0xc] sm:$0xe]
      %v3448 = vld [vmem:[%s3013 + $0x18] sm:$0xe]
      %v3449 = vld [vmem:[%s3013 + $0x24] sm:$0xe]
      %v3450 = vld [vmem:[%s3013 + $0x30] sm:$0xe]
      %v3451 = vld [vmem:[%s3013 + $0x3c] sm:$0xe]
      %v3452 = vld [vmem:[%s3013 + $0x48] sm:$0xe]
      %v3453 = vld [vmem:[%s3013 + $0x54] sm:$0xe]
      %v3454 = vld [vmem:[%s3013 + $0x60] sm:$0xe]
      %v3455 = vld [vmem:[%s3013 + $0x6c] sm:$0xe]
      %v3456 = vld [vmem:[%s3013 + $0x78] sm:$0xe]
      %v3457 = vld [vmem:[%s3013 + $0x84] sm:$0xe]
      %v3458 = vld [vmem:[%s3013 + $0x90] sm:$0xe]
      %v3459 = vld [vmem:[%s3013 + $0x9c] sm:$0xe]
      %v3460 = vld [vmem:[%s3013 + $0xa8] sm:$0xe]
      %v3461 = vld [vmem:[%s3013 + $0xb4] sm:$0xe]
      %v3510 = vrot.slane %v3446, 5
      %v3511 = vrot.slane %v3510, 4
      %v3512 = vrot.slane %v3015, 5
      %v3513 = vsel %vm2289, %v3511, %v3512
      %v3514 = vrot.slane %v3512, 4
      %v3515 = vrot.slane %v3046, 5
      %v3516 = vsel %vm2289, %v3514, %v3515
      %v3517 = vrot.slane %v3447, 5
      %v3518 = vrot.slane %v3517, 4
      %v3519 = vrot.slane %v3017, 5
      %v3520 = vsel %vm2289, %v3518, %v3519
      %v3521 = vrot.slane %v3519, 4
      %v3522 = vrot.slane %v3047, 5
      %v3523 = vsel %vm2289, %v3521, %v3522
      %v3524 = vrot.slane %v3448, 5
      %v3525 = vrot.slane %v3524, 4
      %v3526 = vrot.slane %v3019, 5
      %v3527 = vsel %vm2289, %v3525, %v3526
      %v3528 = vrot.slane %v3526, 4
      %v3529 = vrot.slane %v3048, 5
      %v3530 = vsel %vm2289, %v3528, %v3529
      %v3531 = vrot.slane %v3449, 5
      %v3532 = vrot.slane %v3531, 4
      %v3533 = vrot.slane %v3021, 5
      %v3534 = vsel %vm2289, %v3532, %v3533
      %v3535 = vrot.slane %v3533, 4
      %v3536 = vrot.slane %v3049, 5
      %v3537 = vsel %vm2289, %v3535, %v3536
      %v3538 = vrot.slane %v3450, 5
      %v3539 = vrot.slane %v3538, 4
      %v3540 = vrot.slane %v3023, 5
      %v3541 = vsel %vm2289, %v3539, %v3540
      %v3542 = vrot.slane %v3540, 4
      %v3543 = vrot.slane %v3050, 5
      %v3544 = vsel %vm2289, %v3542, %v3543
      %v3545 = vrot.slane %v3451, 5
      %v3546 = vrot.slane %v3545, 4
      %v3547 = vrot.slane %v3025, 5
      %v3548 = vsel %vm2289, %v3546, %v3547
      %v3549 = vrot.slane %v3547, 4
      %v3550 = vrot.slane %v3051, 5
      %v3551 = vsel %vm2289, %v3549, %v3550
      %v3552 = vrot.slane %v3452, 5
      %v3553 = vrot.slane %v3552, 4
      %v3554 = vrot.slane %v3027, 5
      %v3555 = vsel %vm2289, %v3553, %v3554
      %v3556 = vrot.slane %v3554, 4
      %v3557 = vrot.slane %v3052, 5
      %v3558 = vsel %vm2289, %v3556, %v3557
      %v3559 = vrot.slane %v3453, 5
      %v3560 = vrot.slane %v3559, 4
      %v3561 = vrot.slane %v3029, 5
      %v3562 = vsel %vm2289, %v3560, %v3561
      %v3563 = vrot.slane %v3561, 4
      %v3564 = vrot.slane %v3053, 5
      %v3565 = vsel %vm2289, %v3563, %v3564
      %v3566 = vrot.slane %v3454, 5
      %v3567 = vrot.slane %v3566, 4
      %v3568 = vrot.slane %v3031, 5
      %v3569 = vsel %vm2289, %v3567, %v3568
      %v3570 = vrot.slane %v3568, 4
      %v3571 = vrot.slane %v3054, 5
      %v3572 = vsel %vm2289, %v3570, %v3571
      %v3573 = vrot.slane %v3455, 5
      %v3574 = vrot.slane %v3573, 4
      %v3575 = vrot.slane %v3033, 5
      %v3576 = vsel %vm2289, %v3574, %v3575
      %v3577 = vrot.slane %v3575, 4
      %v3578 = vrot.slane %v3055, 5
      %v3579 = vsel %vm2289, %v3577, %v3578
      %v3580 = vrot.slane %v3456, 5
      %v3581 = vrot.slane %v3580, 4
      %v3582 = vrot.slane %v3035, 5
      %v3583 = vsel %vm2289, %v3581, %v3582
      %v3584 = vrot.slane %v3582, 4
      %v3585 = vrot.slane %v3056, 5
      %v3586 = vsel %vm2289, %v3584, %v3585
      %v3587 = vrot.slane %v3457, 5
      %v3588 = vrot.slane %v3587, 4
      %v3589 = vrot.slane %v3037, 5
      %v3590 = vsel %vm2289, %v3588, %v3589
      %v3591 = vrot.slane %v3589, 4
      %v3592 = vrot.slane %v3057, 5
      %v3593 = vsel %vm2289, %v3591, %v3592
      %v3594 = vrot.slane %v3458, 5
      %v3595 = vrot.slane %v3594, 4
      %v3596 = vrot.slane %v3039, 5
      %v3597 = vsel %vm2289, %v3595, %v3596
      %v3598 = vrot.slane %v3596, 4
      %v3599 = vrot.slane %v3058, 5
      %v3600 = vsel %vm2289, %v3598, %v3599
      %v3601 = vrot.slane %v3459, 5
      %v3602 = vrot.slane %v3601, 4
      %v3603 = vrot.slane %v3041, 5
      %v3604 = vsel %vm2289, %v3602, %v3603
      %v3605 = vrot.slane %v3603, 4
      %v3606 = vrot.slane %v3059, 5
      %v3607 = vsel %vm2289, %v3605, %v3606
      %v3608 = vrot.slane %v3460, 5
      %v3609 = vrot.slane %v3608, 4
      %v3610 = vrot.slane %v3043, 5
      %v3611 = vsel %vm2289, %v3609, %v3610
      %v3612 = vrot.slane %v3610, 4
      %v3613 = vrot.slane %v3060, 5
      %v3614 = vsel %vm2289, %v3612, %v3613
      %v3615 = vrot.slane %v3461, 5
      %v3616 = vrot.slane %v3615, 4
      %v3617 = vrot.slane %v3045, 5
      %v3618 = vsel %vm2289, %v3616, %v3617
      %v3619 = vrot.slane %v3617, 4
      %v3620 = vrot.slane %v3061, 5
      %v3621 = vsel %vm2289, %v3619, %v3620
      %v3638 = vunpack.c.l.b16 %v1788
      %v3639 = vunpack.c.l.b16 %v1789
      %v3640 = vunpack.c.l.b16 %v1790
      %v3641 = vunpack.c.l.b16 %v1791
      %v3642 = vunpack.c.l.b16 %v1792
      %v3643 = vunpack.c.l.b16 %v1793
      %v3644 = vunpack.c.l.b16 %v1794
      %v3645 = vunpack.c.l.b16 %v1795
      %v3646 = vunpack.c.l.b16 %v1796
      %v3647 = vunpack.c.l.b16 %v1797
      %v3648 = vunpack.c.l.b16 %v1798
      %v3649 = vunpack.c.l.b16 %v1799
      %v3650 = vunpack.c.l.b16 %v1800
      %v3651 = vunpack.c.l.b16 %v1801
      %v3652 = vunpack.c.l.b16 %v1802
      %v3653 = vunpack.c.l.b16 %v1803
      %v3654 = vunpack.c.l.b16 %v1804
      %v3655 = vunpack.c.l.b16 %v1805
      %v3656 = vunpack.c.l.b16 %v1806
      %v3657 = vunpack.c.l.b16 %v1807
      %v3658 = vunpack.c.l.b16 %v1808
      %v3659 = vunpack.c.l.b16 %v1809
      %v3660 = vunpack.c.l.b16 %v1810
      %v3661 = vunpack.c.l.b16 %v1811
      %v3662 = vunpack.c.l.b16 %v1812
      %v3663 = vunpack.c.l.b16 %v1813
      %v3664 = vunpack.c.l.b16 %v1814
      %v3665 = vunpack.c.l.b16 %v1815
      %v3666 = vunpack.c.l.b16 %v1816
      %v3667 = vunpack.c.l.b16 %v1817
      %v3668 = vunpack.c.l.b16 %v1818
      %v3669 = vunpack.c.l.b16 %v1819
      %v3670 = vpack.c.b16 %v3639, %v3638
      %v3671 = vpack.c.b16 %v3641, %v3640
      %v3672 = vpack.c.b16 %v3643, %v3642
      %v3673 = vpack.c.b16 %v3645, %v3644
      %v3674 = vpack.c.b16 %v3647, %v3646
      %v3675 = vpack.c.b16 %v3649, %v3648
      %v3676 = vpack.c.b16 %v3651, %v3650
      %v3677 = vpack.c.b16 %v3653, %v3652
      %v3678 = vpack.c.b16 %v3655, %v3654
      %v3679 = vpack.c.b16 %v3657, %v3656
      %v3680 = vpack.c.b16 %v3659, %v3658
      %v3681 = vpack.c.b16 %v3661, %v3660
      %v3682 = vpack.c.b16 %v3663, %v3662
      %v3683 = vpack.c.b16 %v3665, %v3664
      %v3684 = vpack.c.b16 %v3667, %v3666
      %v3685 = vpack.c.b16 %v3669, %v3668
      %v3686 = vunpack.c.l.b16 %v1852
      %v3687 = vunpack.c.l.b16 %v1862
      %v3688 = vunpack.c.l.b16 %v1876
      %v3689 = vunpack.c.l.b16 %v1886
      %v3690 = vunpack.c.l.b16 %v1900
      %v3691 = vunpack.c.l.b16 %v1910
      %v3692 = vunpack.c.l.b16 %v1924
      %v3693 = vunpack.c.l.b16 %v1934
      %v3694 = vunpack.c.l.b16 %v1948
      %v3695 = vunpack.c.l.b16 %v1958
      %v3696 = vunpack.c.l.b16 %v1972
      %v3697 = vunpack.c.l.b16 %v1982
      %v3698 = vunpack.c.l.b16 %v1996
      %v3699 = vunpack.c.l.b16 %v2006
      %v3700 = vunpack.c.l.b16 %v2020
      %v3701 = vunpack.c.l.b16 %v2030
      %v3702 = vunpack.c.l.b16 %v2044
      %v3703 = vunpack.c.l.b16 %v2054
      %v3704 = vunpack.c.l.b16 %v2068
      %v3705 = vunpack.c.l.b16 %v2078
      %v3706 = vunpack.c.l.b16 %v2092
      %v3707 = vunpack.c.l.b16 %v2102
      %v3708 = vunpack.c.l.b16 %v2116
      %v3709 = vunpack.c.l.b16 %v2126
      %v3710 = vunpack.c.l.b16 %v2140
      %v3711 = vunpack.c.l.b16 %v2150
      %v3712 = vunpack.c.l.b16 %v2164
      %v3713 = vunpack.c.l.b16 %v2174
      %v3714 = vunpack.c.l.b16 %v2188
      %v3715 = vunpack.c.l.b16 %v2198
      %v3716 = vunpack.c.l.b16 %v2212
      %v3717 = vunpack.c.l.b16 %v2222
      %v3718 = vpack.c.b16 %v3687, %v3686
      %v3719 = vpack.c.b16 %v3689, %v3688
      %v3720 = vpack.c.b16 %v3691, %v3690
      %v3721 = vpack.c.b16 %v3693, %v3692
      %v3722 = vpack.c.b16 %v3695, %v3694
      %v3723 = vpack.c.b16 %v3697, %v3696
      %v3724 = vpack.c.b16 %v3699, %v3698
      %v3725 = vpack.c.b16 %v3701, %v3700
      %v3726 = vpack.c.b16 %v3703, %v3702
      %v3727 = vpack.c.b16 %v3705, %v3704
      %v3728 = vpack.c.b16 %v3707, %v3706
      %v3729 = vpack.c.b16 %v3709, %v3708
      %v3730 = vpack.c.b16 %v3711, %v3710
      %v3731 = vpack.c.b16 %v3713, %v3712
      %v3732 = vpack.c.b16 %v3715, %v3714
      %v3733 = vpack.c.b16 %v3717, %v3716
      %3734 = vrot.lane.b32.xlu0 %v3718, 16
      %v3735 = vpop.permute.xlu0 %3734
      %3736 = vrot.lane.b32.xlu0 %v3719, 16
      %v3737 = vpop.permute.xlu0 %3736
      %3738 = vrot.lane.b32.xlu0 %v3720, 16
      %v3739 = vpop.permute.xlu0 %3738
      %3740 = vrot.lane.b32.xlu0 %v3721, 16
      %v3741 = vpop.permute.xlu0 %3740
      %3742 = vrot.lane.b32.xlu0 %v3722, 16
      %v3743 = vpop.permute.xlu0 %3742
      %3744 = vrot.lane.b32.xlu0 %v3723, 16
      %v3745 = vpop.permute.xlu0 %3744
      %3746 = vrot.lane.b32.xlu0 %v3724, 16
      %v3747 = vpop.permute.xlu0 %3746
      %3748 = vrot.lane.b32.xlu0 %v3725, 16
      %v3749 = vpop.permute.xlu0 %3748
      %3750 = vrot.lane.b32.xlu0 %v3726, 16
      %v3751 = vpop.permute.xlu0 %3750
      %3752 = vrot.lane.b32.xlu0 %v3727, 16
      %v3753 = vpop.permute.xlu0 %3752
      %3754 = vrot.lane.b32.xlu0 %v3728, 16
      %v3755 = vpop.permute.xlu0 %3754
      %3756 = vrot.lane.b32.xlu0 %v3729, 16
      %v3757 = vpop.permute.xlu0 %3756
      %3758 = vrot.lane.b32.xlu0 %v3730, 16
      %v3759 = vpop.permute.xlu0 %3758
      %3760 = vrot.lane.b32.xlu0 %v3731, 16
      %v3761 = vpop.permute.xlu0 %3760
      %3762 = vrot.lane.b32.xlu0 %v3732, 16
      %v3763 = vpop.permute.xlu0 %3762
      %3764 = vrot.lane.b32.xlu0 %v3733, 16
      %v3765 = vpop.permute.xlu0 %3764
      %v3766 = vunpack.c.l.b16 %v2293
      %v3767 = vunpack.c.l.b16 %v2296
      %v3768 = vunpack.c.l.b16 %v2300
      %v3769 = vunpack.c.l.b16 %v2303
      %v3770 = vunpack.c.l.b16 %v2307
      %v3771 = vunpack.c.l.b16 %v2310
      %v3772 = vunpack.c.l.b16 %v2314
      %v3773 = vunpack.c.l.b16 %v2317
      %v3774 = vunpack.c.l.b16 %v2321
      %v3775 = vunpack.c.l.b16 %v2324
      %v3776 = vunpack.c.l.b16 %v2328
      %v3777 = vunpack.c.l.b16 %v2331
      %v3778 = vunpack.c.l.b16 %v2335
      %v3779 = vunpack.c.l.b16 %v2338
      %v3780 = vunpack.c.l.b16 %v2342
      %v3781 = vunpack.c.l.b16 %v2345
      %v3782 = vunpack.c.l.b16 %v2349
      %v3783 = vunpack.c.l.b16 %v2352
      %v3784 = vunpack.c.l.b16 %v2356
      %v3785 = vunpack.c.l.b16 %v2359
      %v3786 = vunpack.c.l.b16 %v2363
      %v3787 = vunpack.c.l.b16 %v2366
      %v3788 = vunpack.c.l.b16 %v2370
      %v3789 = vunpack.c.l.b16 %v2373
      %v3790 = vunpack.c.l.b16 %v2377
      %v3791 = vunpack.c.l.b16 %v2380
      %v3792 = vunpack.c.l.b16 %v2384
      %v3793 = vunpack.c.l.b16 %v2387
      %v3794 = vunpack.c.l.b16 %v2391
      %v3795 = vunpack.c.l.b16 %v2394
      %v3796 = vunpack.c.l.b16 %v2398
      %v3797 = vunpack.c.l.b16 %v2401
      %v3798 = vpack.c.b16 %v3767, %v3766
      %v3799 = vpack.c.b16 %v3769, %v3768
      %v3800 = vpack.c.b16 %v3771, %v3770
      %v3801 = vpack.c.b16 %v3773, %v3772
      %v3802 = vpack.c.b16 %v3775, %v3774
      %v3803 = vpack.c.b16 %v3777, %v3776
      %v3804 = vpack.c.b16 %v3779, %v3778
      %v3805 = vpack.c.b16 %v3781, %v3780
      %v3806 = vpack.c.b16 %v3783, %v3782
      %v3807 = vpack.c.b16 %v3785, %v3784
      %v3808 = vpack.c.b16 %v3787, %v3786
      %v3809 = vpack.c.b16 %v3789, %v3788
      %v3810 = vpack.c.b16 %v3791, %v3790
      %v3811 = vpack.c.b16 %v3793, %v3792
      %v3812 = vpack.c.b16 %v3795, %v3794
      %v3813 = vpack.c.b16 %v3797, %v3796
      %3814 = vrot.lane.b32.xlu0 %v3798, 32
      %v3815 = vpop.permute.xlu0 %3814
      %3816 = vrot.lane.b32.xlu0 %v3799, 32
      %v3817 = vpop.permute.xlu0 %3816
      %3818 = vrot.lane.b32.xlu0 %v3800, 32
      %v3819 = vpop.permute.xlu0 %3818
      %3820 = vrot.lane.b32.xlu0 %v3801, 32
      %v3821 = vpop.permute.xlu0 %3820
      %3822 = vrot.lane.b32.xlu0 %v3802, 32
      %v3823 = vpop.permute.xlu0 %3822
      %3824 = vrot.lane.b32.xlu0 %v3803, 32
      %v3825 = vpop.permute.xlu0 %3824
      %3826 = vrot.lane.b32.xlu0 %v3804, 32
      %v3827 = vpop.permute.xlu0 %3826
      %3828 = vrot.lane.b32.xlu0 %v3805, 32
      %v3829 = vpop.permute.xlu0 %3828
      %3830 = vrot.lane.b32.xlu0 %v3806, 32
      %v3831 = vpop.permute.xlu0 %3830
      %3832 = vrot.lane.b32.xlu0 %v3807, 32
      %v3833 = vpop.permute.xlu0 %3832
      %3834 = vrot.lane.b32.xlu0 %v3808, 32
      %v3835 = vpop.permute.xlu0 %3834
      %3836 = vrot.lane.b32.xlu0 %v3809, 32
      %v3837 = vpop.permute.xlu0 %3836
      %3838 = vrot.lane.b32.xlu0 %v3810, 32
      %v3839 = vpop.permute.xlu0 %3838
      %3840 = vrot.lane.b32.xlu0 %v3811, 32
      %v3841 = vpop.permute.xlu0 %3840
      %3842 = vrot.lane.b32.xlu0 %v3812, 32
      %v3843 = vpop.permute.xlu0 %3842
      %3844 = vrot.lane.b32.xlu0 %v3813, 32
      %v3845 = vpop.permute.xlu0 %3844
      %v3862 = vunpack.c.l.b16 %v2402
      %v3863 = vunpack.c.l.b16 %v2403
      %v3864 = vunpack.c.l.b16 %v2404
      %v3865 = vunpack.c.l.b16 %v2405
      %v3866 = vunpack.c.l.b16 %v2406
      %v3867 = vunpack.c.l.b16 %v2407
      %v3868 = vunpack.c.l.b16 %v2408
      %v3869 = vunpack.c.l.b16 %v2409
      %v3870 = vunpack.c.l.b16 %v2410
      %v3871 = vunpack.c.l.b16 %v2411
      %v3872 = vunpack.c.l.b16 %v2412
      %v3873 = vunpack.c.l.b16 %v2413
      %v3874 = vunpack.c.l.b16 %v2414
      %v3875 = vunpack.c.l.b16 %v2415
      %v3876 = vunpack.c.l.b16 %v2416
      %v3877 = vunpack.c.l.b16 %v2417
      %v3878 = vunpack.c.l.b16 %v2418
      %v3879 = vunpack.c.l.b16 %v2419
      %v3880 = vunpack.c.l.b16 %v2420
      %v3881 = vunpack.c.l.b16 %v2421
      %v3882 = vunpack.c.l.b16 %v2422
      %v3883 = vunpack.c.l.b16 %v2423
      %v3884 = vunpack.c.l.b16 %v2424
      %v3885 = vunpack.c.l.b16 %v2425
      %v3886 = vunpack.c.l.b16 %v2426
      %v3887 = vunpack.c.l.b16 %v2427
      %v3888 = vunpack.c.l.b16 %v2428
      %v3889 = vunpack.c.l.b16 %v2429
      %v3890 = vunpack.c.l.b16 %v2430
      %v3891 = vunpack.c.l.b16 %v2431
      %v3892 = vunpack.c.l.b16 %v2432
      %v3893 = vunpack.c.l.b16 %v2433
      %v3894 = vpack.c.b16 %v3863, %v3862
      %v3895 = vpack.c.b16 %v3865, %v3864
      %v3896 = vpack.c.b16 %v3867, %v3866
      %v3897 = vpack.c.b16 %v3869, %v3868
      %v3898 = vpack.c.b16 %v3871, %v3870
      %v3899 = vpack.c.b16 %v3873, %v3872
      %v3900 = vpack.c.b16 %v3875, %v3874
      %v3901 = vpack.c.b16 %v3877, %v3876
      %v3902 = vpack.c.b16 %v3879, %v3878
      %v3903 = vpack.c.b16 %v3881, %v3880
      %v3904 = vpack.c.b16 %v3883, %v3882
      %v3905 = vpack.c.b16 %v3885, %v3884
      %v3906 = vpack.c.b16 %v3887, %v3886
      %v3907 = vpack.c.b16 %v3889, %v3888
      %v3908 = vpack.c.b16 %v3891, %v3890
      %v3909 = vpack.c.b16 %v3893, %v3892
      %3910 = vrot.lane.b32.xlu0 %v3894, 48
      %v3911 = vpop.permute.xlu0 %3910
      %3912 = vrot.lane.b32.xlu0 %v3895, 48
      %v3913 = vpop.permute.xlu0 %3912
      %3914 = vrot.lane.b32.xlu0 %v3896, 48
      %v3915 = vpop.permute.xlu0 %3914
      %3916 = vrot.lane.b32.xlu0 %v3897, 48
      %v3917 = vpop.permute.xlu0 %3916
      %3918 = vrot.lane.b32.xlu0 %v3898, 48
      %v3919 = vpop.permute.xlu0 %3918
      %3920 = vrot.lane.b32.xlu0 %v3899, 48
      %v3921 = vpop.permute.xlu0 %3920
      %3922 = vrot.lane.b32.xlu0 %v3900, 48
      %v3923 = vpop.permute.xlu0 %3922
      %3924 = vrot.lane.b32.xlu0 %v3901, 48
      %v3925 = vpop.permute.xlu0 %3924
      %3926 = vrot.lane.b32.xlu0 %v3902, 48
      %v3927 = vpop.permute.xlu0 %3926
      %3928 = vrot.lane.b32.xlu0 %v3903, 48
      %v3929 = vpop.permute.xlu0 %3928
      %3930 = vrot.lane.b32.xlu0 %v3904, 48
      %v3931 = vpop.permute.xlu0 %3930
      %3932 = vrot.lane.b32.xlu0 %v3905, 48
      %v3933 = vpop.permute.xlu0 %3932
      %3934 = vrot.lane.b32.xlu0 %v3906, 48
      %v3935 = vpop.permute.xlu0 %3934
      %3936 = vrot.lane.b32.xlu0 %v3907, 48
      %v3937 = vpop.permute.xlu0 %3936
      %3938 = vrot.lane.b32.xlu0 %v3908, 48
      %v3939 = vpop.permute.xlu0 %3938
      %3940 = vrot.lane.b32.xlu0 %v3909, 48
      %v3941 = vpop.permute.xlu0 %3940
      %v3942 = vunpack.c.l.b16 %v2463
      %v3943 = vunpack.c.l.b16 %v2473
      %v3944 = vunpack.c.l.b16 %v2487
      %v3945 = vunpack.c.l.b16 %v2497
      %v3946 = vunpack.c.l.b16 %v2511
      %v3947 = vunpack.c.l.b16 %v2521
      %v3948 = vunpack.c.l.b16 %v2535
      %v3949 = vunpack.c.l.b16 %v2545
      %v3950 = vunpack.c.l.b16 %v2559
      %v3951 = vunpack.c.l.b16 %v2569
      %v3952 = vunpack.c.l.b16 %v2583
      %v3953 = vunpack.c.l.b16 %v2593
      %v3954 = vunpack.c.l.b16 %v2607
      %v3955 = vunpack.c.l.b16 %v2617
      %v3956 = vunpack.c.l.b16 %v2631
      %v3957 = vunpack.c.l.b16 %v2641
      %v3958 = vunpack.c.l.b16 %v2655
      %v3959 = vunpack.c.l.b16 %v2665
      %v3960 = vunpack.c.l.b16 %v2679
      %v3961 = vunpack.c.l.b16 %v2689
      %v3962 = vunpack.c.l.b16 %v2703
      %v3963 = vunpack.c.l.b16 %v2713
      %v3964 = vunpack.c.l.b16 %v2727
      %v3965 = vunpack.c.l.b16 %v2737
      %v3966 = vunpack.c.l.b16 %v2751
      %v3967 = vunpack.c.l.b16 %v2761
      %v3968 = vunpack.c.l.b16 %v2775
      %v3969 = vunpack.c.l.b16 %v2785
      %v3970 = vunpack.c.l.b16 %v2799
      %v3971 = vunpack.c.l.b16 %v2809
      %v3972 = vunpack.c.l.b16 %v2823
      %v3973 = vunpack.c.l.b16 %v2833
      %v3974 = vpack.c.b16 %v3943, %v3942
      %v3975 = vpack.c.b16 %v3945, %v3944
      %v3976 = vpack.c.b16 %v3947, %v3946
      %v3977 = vpack.c.b16 %v3949, %v3948
      %v3978 = vpack.c.b16 %v3951, %v3950
      %v3979 = vpack.c.b16 %v3953, %v3952
      %v3980 = vpack.c.b16 %v3955, %v3954
      %v3981 = vpack.c.b16 %v3957, %v3956
      %v3982 = vpack.c.b16 %v3959, %v3958
      %v3983 = vpack.c.b16 %v3961, %v3960
      %v3984 = vpack.c.b16 %v3963, %v3962
      %v3985 = vpack.c.b16 %v3965, %v3964
      %v3986 = vpack.c.b16 %v3967, %v3966
      %v3987 = vpack.c.b16 %v3969, %v3968
      %v3988 = vpack.c.b16 %v3971, %v3970
      %v3989 = vpack.c.b16 %v3973, %v3972
      %3990 = vrot.lane.b32.xlu0 %v3974, 64
      %v3991 = vpop.permute.xlu0 %3990
      %3992 = vrot.lane.b32.xlu0 %v3975, 64
      %v3993 = vpop.permute.xlu0 %3992
      %3994 = vrot.lane.b32.xlu0 %v3976, 64
      %v3995 = vpop.permute.xlu0 %3994
      %3996 = vrot.lane.b32.xlu0 %v3977, 64
      %v3997 = vpop.permute.xlu0 %3996
      %3998 = vrot.lane.b32.xlu0 %v3978, 64
      %v3999 = vpop.permute.xlu0 %3998
      %4000 = vrot.lane.b32.xlu0 %v3979, 64
      %v4001 = vpop.permute.xlu0 %4000
      %4002 = vrot.lane.b32.xlu0 %v3980, 64
      %v4003 = vpop.permute.xlu0 %4002
      %4004 = vrot.lane.b32.xlu0 %v3981, 64
      %v4005 = vpop.permute.xlu0 %4004
      %4006 = vrot.lane.b32.xlu0 %v3982, 64
      %v4007 = vpop.permute.xlu0 %4006
      %4008 = vrot.lane.b32.xlu0 %v3983, 64
      %v4009 = vpop.permute.xlu0 %4008
      %4010 = vrot.lane.b32.xlu0 %v3984, 64
      %v4011 = vpop.permute.xlu0 %4010
      %4012 = vrot.lane.b32.xlu0 %v3985, 64
      %v4013 = vpop.permute.xlu0 %4012
      %4014 = vrot.lane.b32.xlu0 %v3986, 64
      %v4015 = vpop.permute.xlu0 %4014
      %4016 = vrot.lane.b32.xlu0 %v3987, 64
      %v4017 = vpop.permute.xlu0 %4016
      %4018 = vrot.lane.b32.xlu0 %v3988, 64
      %v4019 = vpop.permute.xlu0 %4018
      %4020 = vrot.lane.b32.xlu0 %v3989, 64
      %v4021 = vpop.permute.xlu0 %4020
      %v4022 = vunpack.c.l.b16 %v2901
      %v4023 = vunpack.c.l.b16 %v2904
      %v4024 = vunpack.c.l.b16 %v2908
      %v4025 = vunpack.c.l.b16 %v2911
      %v4026 = vunpack.c.l.b16 %v2915
      %v4027 = vunpack.c.l.b16 %v2918
      %v4028 = vunpack.c.l.b16 %v2922
      %v4029 = vunpack.c.l.b16 %v2925
      %v4030 = vunpack.c.l.b16 %v2929
      %v4031 = vunpack.c.l.b16 %v2932
      %v4032 = vunpack.c.l.b16 %v2936
      %v4033 = vunpack.c.l.b16 %v2939
      %v4034 = vunpack.c.l.b16 %v2943
      %v4035 = vunpack.c.l.b16 %v2946
      %v4036 = vunpack.c.l.b16 %v2950
      %v4037 = vunpack.c.l.b16 %v2953
      %v4038 = vunpack.c.l.b16 %v2957
      %v4039 = vunpack.c.l.b16 %v2960
      %v4040 = vunpack.c.l.b16 %v2964
      %v4041 = vunpack.c.l.b16 %v2967
      %v4042 = vunpack.c.l.b16 %v2971
      %v4043 = vunpack.c.l.b16 %v2974
      %v4044 = vunpack.c.l.b16 %v2978
      %v4045 = vunpack.c.l.b16 %v2981
      %v4046 = vunpack.c.l.b16 %v2985
      %v4047 = vunpack.c.l.b16 %v2988
      %v4048 = vunpack.c.l.b16 %v2992
      %v4049 = vunpack.c.l.b16 %v2995
      %v4050 = vunpack.c.l.b16 %v2999
      %v4051 = vunpack.c.l.b16 %v3002
      %v4052 = vunpack.c.l.b16 %v3006
      %v4053 = vunpack.c.l.b16 %v3009
      %v4054 = vpack.c.b16 %v4023, %v4022
      %v4055 = vpack.c.b16 %v4025, %v4024
      %v4056 = vpack.c.b16 %v4027, %v4026
      %v4057 = vpack.c.b16 %v4029, %v4028
      %v4058 = vpack.c.b16 %v4031, %v4030
      %v4059 = vpack.c.b16 %v4033, %v4032
      %v4060 = vpack.c.b16 %v4035, %v4034
      %v4061 = vpack.c.b16 %v4037, %v4036
      %v4062 = vpack.c.b16 %v4039, %v4038
      %v4063 = vpack.c.b16 %v4041, %v4040
      %v4064 = vpack.c.b16 %v4043, %v4042
      %v4065 = vpack.c.b16 %v4045, %v4044
      %v4066 = vpack.c.b16 %v4047, %v4046
      %v4067 = vpack.c.b16 %v4049, %v4048
      %v4068 = vpack.c.b16 %v4051, %v4050
      %v4069 = vpack.c.b16 %v4053, %v4052
      %4070 = vrot.lane.b32.xlu0 %v4054, 80
      %v4071 = vpop.permute.xlu0 %4070
      %4072 = vrot.lane.b32.xlu0 %v4055, 80
      %v4073 = vpop.permute.xlu0 %4072
      %4074 = vrot.lane.b32.xlu0 %v4056, 80
      %v4075 = vpop.permute.xlu0 %4074
      %4076 = vrot.lane.b32.xlu0 %v4057, 80
      %v4077 = vpop.permute.xlu0 %4076
      %4078 = vrot.lane.b32.xlu0 %v4058, 80
      %v4079 = vpop.permute.xlu0 %4078
      %4080 = vrot.lane.b32.xlu0 %v4059, 80
      %v4081 = vpop.permute.xlu0 %4080
      %4082 = vrot.lane.b32.xlu0 %v4060, 80
      %v4083 = vpop.permute.xlu0 %4082
      %4084 = vrot.lane.b32.xlu0 %v4061, 80
      %v4085 = vpop.permute.xlu0 %4084
      %4086 = vrot.lane.b32.xlu0 %v4062, 80
      %v4087 = vpop.permute.xlu0 %4086
      %4088 = vrot.lane.b32.xlu0 %v4063, 80
      %v4089 = vpop.permute.xlu0 %4088
      %4090 = vrot.lane.b32.xlu0 %v4064, 80
      %v4091 = vpop.permute.xlu0 %4090
      %4092 = vrot.lane.b32.xlu0 %v4065, 80
      %v4093 = vpop.permute.xlu0 %4092
      %4094 = vrot.lane.b32.xlu0 %v4066, 80
      %v4095 = vpop.permute.xlu0 %4094
      %4096 = vrot.lane.b32.xlu0 %v4067, 80
      %v4097 = vpop.permute.xlu0 %4096
      %4098 = vrot.lane.b32.xlu0 %v4068, 80
      %v4099 = vpop.permute.xlu0 %4098
      %4100 = vrot.lane.b32.xlu0 %v4069, 80
      %v4101 = vpop.permute.xlu0 %4100
      %v4118 = vunpack.c.l.b16 %v3014
      %v4119 = vunpack.c.l.b16 %v3015
      %v4120 = vunpack.c.l.b16 %v3016
      %v4121 = vunpack.c.l.b16 %v3017
      %v4122 = vunpack.c.l.b16 %v3018
      %v4123 = vunpack.c.l.b16 %v3019
      %v4124 = vunpack.c.l.b16 %v3020
      %v4125 = vunpack.c.l.b16 %v3021
      %v4126 = vunpack.c.l.b16 %v3022
      %v4127 = vunpack.c.l.b16 %v3023
      %v4128 = vunpack.c.l.b16 %v3024
      %v4129 = vunpack.c.l.b16 %v3025
      %v4130 = vunpack.c.l.b16 %v3026
      %v4131 = vunpack.c.l.b16 %v3027
      %v4132 = vunpack.c.l.b16 %v3028
      %v4133 = vunpack.c.l.b16 %v3029
      %v4134 = vunpack.c.l.b16 %v3030
      %v4135 = vunpack.c.l.b16 %v3031
      %v4136 = vunpack.c.l.b16 %v3032
      %v4137 = vunpack.c.l.b16 %v3033
      %v4138 = vunpack.c.l.b16 %v3034
      %v4139 = vunpack.c.l.b16 %v3035
      %v4140 = vunpack.c.l.b16 %v3036
      %v4141 = vunpack.c.l.b16 %v3037
      %v4142 = vunpack.c.l.b16 %v3038
      %v4143 = vunpack.c.l.b16 %v3039
      %v4144 = vunpack.c.l.b16 %v3040
      %v4145 = vunpack.c.l.b16 %v3041
      %v4146 = vunpack.c.l.b16 %v3042
      %v4147 = vunpack.c.l.b16 %v3043
      %v4148 = vunpack.c.l.b16 %v3044
      %v4149 = vunpack.c.l.b16 %v3045
      %v4150 = vpack.c.b16 %v4119, %v4118
      %v4151 = vpack.c.b16 %v4121, %v4120
      %v4152 = vpack.c.b16 %v4123, %v4122
      %v4153 = vpack.c.b16 %v4125, %v4124
      %v4154 = vpack.c.b16 %v4127, %v4126
      %v4155 = vpack.c.b16 %v4129, %v4128
      %v4156 = vpack.c.b16 %v4131, %v4130
      %v4157 = vpack.c.b16 %v4133, %v4132
      %v4158 = vpack.c.b16 %v4135, %v4134
      %v4159 = vpack.c.b16 %v4137, %v4136
      %v4160 = vpack.c.b16 %v4139, %v4138
      %v4161 = vpack.c.b16 %v4141, %v4140
      %v4162 = vpack.c.b16 %v4143, %v4142
      %v4163 = vpack.c.b16 %v4145, %v4144
      %v4164 = vpack.c.b16 %v4147, %v4146
      %v4165 = vpack.c.b16 %v4149, %v4148
      %4166 = vrot.lane.b32.xlu0 %v4150, 96
      %v4167 = vpop.permute.xlu0 %4166
      %4168 = vrot.lane.b32.xlu0 %v4151, 96
      %v4169 = vpop.permute.xlu0 %4168
      %4170 = vrot.lane.b32.xlu0 %v4152, 96
      %v4171 = vpop.permute.xlu0 %4170
      %4172 = vrot.lane.b32.xlu0 %v4153, 96
      %v4173 = vpop.permute.xlu0 %4172
      %4174 = vrot.lane.b32.xlu0 %v4154, 96
      %v4175 = vpop.permute.xlu0 %4174
      %4176 = vrot.lane.b32.xlu0 %v4155, 96
      %v4177 = vpop.permute.xlu0 %4176
      %4178 = vrot.lane.b32.xlu0 %v4156, 96
      %v4179 = vpop.permute.xlu0 %4178
      %4180 = vrot.lane.b32.xlu0 %v4157, 96
      %v4181 = vpop.permute.xlu0 %4180
      %4182 = vrot.lane.b32.xlu0 %v4158, 96
      %v4183 = vpop.permute.xlu0 %4182
      %4184 = vrot.lane.b32.xlu0 %v4159, 96
      %v4185 = vpop.permute.xlu0 %4184
      %4186 = vrot.lane.b32.xlu0 %v4160, 96
      %v4187 = vpop.permute.xlu0 %4186
      %4188 = vrot.lane.b32.xlu0 %v4161, 96
      %v4189 = vpop.permute.xlu0 %4188
      %4190 = vrot.lane.b32.xlu0 %v4162, 96
      %v4191 = vpop.permute.xlu0 %4190
      %4192 = vrot.lane.b32.xlu0 %v4163, 96
      %v4193 = vpop.permute.xlu0 %4192
      %4194 = vrot.lane.b32.xlu0 %v4164, 96
      %v4195 = vpop.permute.xlu0 %4194
      %4196 = vrot.lane.b32.xlu0 %v4165, 96
      %v4197 = vpop.permute.xlu0 %4196
      %v4198 = vunpack.c.l.b16 %v3075
      %v4199 = vunpack.c.l.b16 %v3085
      %v4200 = vunpack.c.l.b16 %v3099
      %v4201 = vunpack.c.l.b16 %v3109
      %v4202 = vunpack.c.l.b16 %v3123
      %v4203 = vunpack.c.l.b16 %v3133
      %v4204 = vunpack.c.l.b16 %v3147
      %v4205 = vunpack.c.l.b16 %v3157
      %v4206 = vunpack.c.l.b16 %v3171
      %v4207 = vunpack.c.l.b16 %v3181
      %v4208 = vunpack.c.l.b16 %v3195
      %v4209 = vunpack.c.l.b16 %v3205
      %v4210 = vunpack.c.l.b16 %v3219
      %v4211 = vunpack.c.l.b16 %v3229
      %v4212 = vunpack.c.l.b16 %v3243
      %v4213 = vunpack.c.l.b16 %v3253
      %v4214 = vunpack.c.l.b16 %v3267
      %v4215 = vunpack.c.l.b16 %v3277
      %v4216 = vunpack.c.l.b16 %v3291
      %v4217 = vunpack.c.l.b16 %v3301
      %v4218 = vunpack.c.l.b16 %v3315
      %v4219 = vunpack.c.l.b16 %v3325
      %v4220 = vunpack.c.l.b16 %v3339
      %v4221 = vunpack.c.l.b16 %v3349
      %v4222 = vunpack.c.l.b16 %v3363
      %v4223 = vunpack.c.l.b16 %v3373
      %v4224 = vunpack.c.l.b16 %v3387
      %v4225 = vunpack.c.l.b16 %v3397
      %v4226 = vunpack.c.l.b16 %v3411
      %v4227 = vunpack.c.l.b16 %v3421
      %v4228 = vunpack.c.l.b16 %v3435
      %v4229 = vunpack.c.l.b16 %v3445
      %v4230 = vpack.c.b16 %v4199, %v4198
      %v4231 = vpack.c.b16 %v4201, %v4200
      %v4232 = vpack.c.b16 %v4203, %v4202
      %v4233 = vpack.c.b16 %v4205, %v4204
      %v4234 = vpack.c.b16 %v4207, %v4206
      %v4235 = vpack.c.b16 %v4209, %v4208
      %v4236 = vpack.c.b16 %v4211, %v4210
      %v4237 = vpack.c.b16 %v4213, %v4212
      %v4238 = vpack.c.b16 %v4215, %v4214
      %v4239 = vpack.c.b16 %v4217, %v4216
      %v4240 = vpack.c.b16 %v4219, %v4218
      %v4241 = vpack.c.b16 %v4221, %v4220
      %v4242 = vpack.c.b16 %v4223, %v4222
      %v4243 = vpack.c.b16 %v4225, %v4224
      %v4244 = vpack.c.b16 %v4227, %v4226
      %v4245 = vpack.c.b16 %v4229, %v4228
      %4246 = vrot.lane.b32.xlu0 %v4230, 112
      %v4247 = vpop.permute.xlu0 %4246
      %4248 = vrot.lane.b32.xlu0 %v4231, 112
      %v4249 = vpop.permute.xlu0 %4248
      %4250 = vrot.lane.b32.xlu0 %v4232, 112
      %v4251 = vpop.permute.xlu0 %4250
      %4252 = vrot.lane.b32.xlu0 %v4233, 112
      %v4253 = vpop.permute.xlu0 %4252
      %4254 = vrot.lane.b32.xlu0 %v4234, 112
      %v4255 = vpop.permute.xlu0 %4254
      %4256 = vrot.lane.b32.xlu0 %v4235, 112
      %v4257 = vpop.permute.xlu0 %4256
      %4258 = vrot.lane.b32.xlu0 %v4236, 112
      %v4259 = vpop.permute.xlu0 %4258
      %4260 = vrot.lane.b32.xlu0 %v4237, 112
      %v4261 = vpop.permute.xlu0 %4260
      %4262 = vrot.lane.b32.xlu0 %v4238, 112
      %v4263 = vpop.permute.xlu0 %4262
      %4264 = vrot.lane.b32.xlu0 %v4239, 112
      %v4265 = vpop.permute.xlu0 %4264
      %4266 = vrot.lane.b32.xlu0 %v4240, 112
      %v4267 = vpop.permute.xlu0 %4266
      %4268 = vrot.lane.b32.xlu0 %v4241, 112
      %v4269 = vpop.permute.xlu0 %4268
      %4270 = vrot.lane.b32.xlu0 %v4242, 112
      %v4271 = vpop.permute.xlu0 %4270
      %4272 = vrot.lane.b32.xlu0 %v4243, 112
      %v4273 = vpop.permute.xlu0 %4272
      %4274 = vrot.lane.b32.xlu0 %v4244, 112
      %v4275 = vpop.permute.xlu0 %4274
      %4276 = vrot.lane.b32.xlu0 %v4245, 112
      %v4277 = vpop.permute.xlu0 %4276
      %v4278 = vunpack.c.l.b16 %v3513
      %v4279 = vunpack.c.l.b16 %v3516
      %v4280 = vunpack.c.l.b16 %v3520
      %v4281 = vunpack.c.l.b16 %v3523
      %v4282 = vunpack.c.l.b16 %v3527
      %v4283 = vunpack.c.l.b16 %v3530
      %v4284 = vunpack.c.l.b16 %v3534
      %v4285 = vunpack.c.l.b16 %v3537
      %v4286 = vunpack.c.l.b16 %v3541
      %v4287 = vunpack.c.l.b16 %v3544
      %v4288 = vunpack.c.l.b16 %v3548
      %v4289 = vunpack.c.l.b16 %v3551
      %v4290 = vunpack.c.l.b16 %v3555
      %v4291 = vunpack.c.l.b16 %v3558
      %v4292 = vunpack.c.l.b16 %v3562
      %v4293 = vunpack.c.l.b16 %v3565
      %v4294 = vunpack.c.l.b16 %v3569
      %v4295 = vunpack.c.l.b16 %v3572
      %v4296 = vunpack.c.l.b16 %v3576
      %v4297 = vunpack.c.l.b16 %v3579
      %v4298 = vunpack.c.l.b16 %v3583
      %v4299 = vunpack.c.l.b16 %v3586
      %v4300 = vunpack.c.l.b16 %v3590
      %v4301 = vunpack.c.l.b16 %v3593
      %v4302 = vunpack.c.l.b16 %v3597
      %v4303 = vunpack.c.l.b16 %v3600
      %v4304 = vunpack.c.l.b16 %v3604
      %v4305 = vunpack.c.l.b16 %v3607
      %v4306 = vunpack.c.l.b16 %v3611
      %v4307 = vunpack.c.l.b16 %v3614
      %v4308 = vunpack.c.l.b16 %v3618
      %v4309 = vunpack.c.l.b16 %v3621
      %v4310 = vpack.c.b16 %v4279, %v4278
      %v4311 = vpack.c.b16 %v4281, %v4280
      %v4312 = vpack.c.b16 %v4283, %v4282
      %v4313 = vpack.c.b16 %v4285, %v4284
      %v4314 = vpack.c.b16 %v4287, %v4286
      %v4315 = vpack.c.b16 %v4289, %v4288
      %v4316 = vpack.c.b16 %v4291, %v4290
      %v4317 = vpack.c.b16 %v4293, %v4292
      %v4318 = vpack.c.b16 %v4295, %v4294
      %v4319 = vpack.c.b16 %v4297, %v4296
      %v4320 = vpack.c.b16 %v4299, %v4298
      %v4321 = vpack.c.b16 %v4301, %v4300
      %v4322 = vpack.c.b16 %v4303, %v4302
      %v4323 = vpack.c.b16 %v4305, %v4304
      %v4324 = vpack.c.b16 %v4307, %v4306
      %v4325 = vpack.c.b16 %v4309, %v4308
      %v4328 = vsel %vm1007, %v3670, %v3735
      %v4331 = vsel %vm1007, %v3671, %v3737
      %v4334 = vsel %vm1007, %v3672, %v3739
      %v4337 = vsel %vm1007, %v3673, %v3741
      %v4340 = vsel %vm1007, %v3674, %v3743
      %v4343 = vsel %vm1007, %v3675, %v3745
      %v4346 = vsel %vm1007, %v3676, %v3747
      %v4349 = vsel %vm1007, %v3677, %v3749
      %v4352 = vsel %vm1007, %v3678, %v3751
      %v4355 = vsel %vm1007, %v3679, %v3753
      %v4358 = vsel %vm1007, %v3680, %v3755
      %v4361 = vsel %vm1007, %v3681, %v3757
      %v4364 = vsel %vm1007, %v3682, %v3759
      %v4367 = vsel %vm1007, %v3683, %v3761
      %v4370 = vsel %vm1007, %v3684, %v3763
      %v4373 = vsel %vm1007, %v3685, %v3765
      %vm4374 = vcmask 261120
      %v4376 = vsel %vm4374, %v4328, %v3815
      %v4378 = vsel %vm4374, %v4331, %v3817
      %v4380 = vsel %vm4374, %v4334, %v3819
      %v4382 = vsel %vm4374, %v4337, %v3821
      %v4384 = vsel %vm4374, %v4340, %v3823
      %v4386 = vsel %vm4374, %v4343, %v3825
      %v4388 = vsel %vm4374, %v4346, %v3827
      %v4390 = vsel %vm4374, %v4349, %v3829
      %v4392 = vsel %vm4374, %v4352, %v3831
      %v4394 = vsel %vm4374, %v4355, %v3833
      %v4396 = vsel %vm4374, %v4358, %v3835
      %v4398 = vsel %vm4374, %v4361, %v3837
      %v4400 = vsel %vm4374, %v4364, %v3839
      %v4402 = vsel %vm4374, %v4367, %v3841
      %v4404 = vsel %vm4374, %v4370, %v3843
      %v4406 = vsel %vm4374, %v4373, %v3845
      %vm4407 = vcmask 392192
      %v4409 = vsel %vm4407, %v4376, %v3911
      %v4411 = vsel %vm4407, %v4378, %v3913
      %v4413 = vsel %vm4407, %v4380, %v3915
      %v4415 = vsel %vm4407, %v4382, %v3917
      %v4417 = vsel %vm4407, %v4384, %v3919
      %v4419 = vsel %vm4407, %v4386, %v3921
      %v4421 = vsel %vm4407, %v4388, %v3923
      %v4423 = vsel %vm4407, %v4390, %v3925
      %v4425 = vsel %vm4407, %v4392, %v3927
      %v4427 = vsel %vm4407, %v4394, %v3929
      %v4429 = vsel %vm4407, %v4396, %v3931
      %v4431 = vsel %vm4407, %v4398, %v3933
      %v4433 = vsel %vm4407, %v4400, %v3935
      %v4435 = vsel %vm4407, %v4402, %v3937
      %v4437 = vsel %vm4407, %v4404, %v3939
      %v4439 = vsel %vm4407, %v4406, %v3941
      %vm4440 = vcmask 523264
      %v4442 = vsel %vm4440, %v4409, %v3991
      %v4444 = vsel %vm4440, %v4411, %v3993
      %v4446 = vsel %vm4440, %v4413, %v3995
      %v4448 = vsel %vm4440, %v4415, %v3997
      %v4450 = vsel %vm4440, %v4417, %v3999
      %v4452 = vsel %vm4440, %v4419, %v4001
      %v4454 = vsel %vm4440, %v4421, %v4003
      %v4456 = vsel %vm4440, %v4423, %v4005
      %v4458 = vsel %vm4440, %v4425, %v4007
      %v4460 = vsel %vm4440, %v4427, %v4009
      %v4462 = vsel %vm4440, %v4429, %v4011
      %v4464 = vsel %vm4440, %v4431, %v4013
      %v4466 = vsel %vm4440, %v4433, %v4015
      %v4468 = vsel %vm4440, %v4435, %v4017
      %v4470 = vsel %vm4440, %v4437, %v4019
      %v4472 = vsel %vm4440, %v4439, %v4021
      %vm4473 = vcmask 654336
      %v4475 = vsel %vm4473, %v4442, %v4071
      %v4477 = vsel %vm4473, %v4444, %v4073
      %v4479 = vsel %vm4473, %v4446, %v4075
      %v4481 = vsel %vm4473, %v4448, %v4077
      %v4483 = vsel %vm4473, %v4450, %v4079
      %v4485 = vsel %vm4473, %v4452, %v4081
      %v4487 = vsel %vm4473, %v4454, %v4083
      %v4489 = vsel %vm4473, %v4456, %v4085
      %v4491 = vsel %vm4473, %v4458, %v4087
      %v4493 = vsel %vm4473, %v4460, %v4089
      %v4495 = vsel %vm4473, %v4462, %v4091
      %v4497 = vsel %vm4473, %v4464, %v4093
      %v4499 = vsel %vm4473, %v4466, %v4095
      %v4501 = vsel %vm4473, %v4468, %v4097
      %v4503 = vsel %vm4473, %v4470, %v4099
      %v4505 = vsel %vm4473, %v4472, %v4101
      %vm4506 = vcmask 785408
      %v4508 = vsel %vm4506, %v4475, %v4167
      %v4510 = vsel %vm4506, %v4477, %v4169
      %v4512 = vsel %vm4506, %v4479, %v4171
      %v4514 = vsel %vm4506, %v4481, %v4173
      %v4516 = vsel %vm4506, %v4483, %v4175
      %v4518 = vsel %vm4506, %v4485, %v4177
      %v4520 = vsel %vm4506, %v4487, %v4179
      %v4522 = vsel %vm4506, %v4489, %v4181
      %v4524 = vsel %vm4506, %v4491, %v4183
      %v4526 = vsel %vm4506, %v4493, %v4185
      %v4528 = vsel %vm4506, %v4495, %v4187
      %v4530 = vsel %vm4506, %v4497, %v4189
      %v4532 = vsel %vm4506, %v4499, %v4191
      %v4534 = vsel %vm4506, %v4501, %v4193
      %v4536 = vsel %vm4506, %v4503, %v4195
      %v4538 = vsel %vm4506, %v4505, %v4197
      %vm4539 = vcmask 916480
      %v4541 = vsel %vm4539, %v4508, %v4247
      %v4544 = vsel %vm4539, %v4510, %v4249
      %v4547 = vsel %vm4539, %v4512, %v4251
      %v4550 = vsel %vm4539, %v4514, %v4253
      %v4553 = vsel %vm4539, %v4516, %v4255
      %v4556 = vsel %vm4539, %v4518, %v4257
      %v4559 = vsel %vm4539, %v4520, %v4259
      %v4562 = vsel %vm4539, %v4522, %v4261
      %v4565 = vsel %vm4539, %v4524, %v4263
      %v4568 = vsel %vm4539, %v4526, %v4265
      %v4571 = vsel %vm4539, %v4528, %v4267
      %v4574 = vsel %vm4539, %v4530, %v4269
      %v4577 = vsel %vm4539, %v4532, %v4271
      %v4580 = vsel %vm4539, %v4534, %v4273
      %v4583 = vsel %vm4539, %v4536, %v4275
      %v4586 = vsel %vm4539, %v4538, %v4277
      %v4589 = vlaneseq
      %v4590 = vshrl.u32 %v4589, 7
      %v4591 = vsub.s32 0, %v4590
      %v4592 = vrot.slane %v836, %v4591
      %v4612 = vunpack.c.l.b16 %v818
      %v4613 = vunpack.c.l.b16 %v819
      %v4614 = vunpack.c.l.b16 %v820
      %v4615 = vunpack.c.l.b16 %v821
      %v4616 = vunpack.c.l.b16 %v822
      %v4617 = vunpack.c.l.b16 %v823
      %v4618 = vunpack.c.l.b16 %v824
      %v4619 = vunpack.c.l.b16 %v825
      %v4620 = vunpack.c.l.b16 %v826
      %v4621 = vunpack.c.l.b16 %v827
      %v4622 = vunpack.c.l.b16 %v828
      %v4623 = vunpack.c.l.b16 %v829
      %v4624 = vunpack.c.l.b16 %v830
      %v4625 = vunpack.c.l.b16 %v831
      %v4626 = vunpack.c.l.b16 %v832
      %v4627 = vunpack.c.l.b16 %v833
      %v4628 = vunpack.c.l.b16 %v834
      %v4629 = vunpack.c.l.b16 %v835
      %v4630 = vpack.c.b16 %v4613, %v4612
      %v4631 = vpack.c.b16 %v4615, %v4614
      %v4632 = vpack.c.b16 %v4617, %v4616
      %v4633 = vpack.c.b16 %v4619, %v4618
      %v4634 = vpack.c.b16 %v4621, %v4620
      %v4635 = vpack.c.b16 %v4623, %v4622
      %v4636 = vpack.c.b16 %v4625, %v4624
      %v4637 = vpack.c.b16 %v4627, %v4626
      %v4638 = vpack.c.b16 %v4629, %v4628
      %v4649 = vsel %vm1007, %v4310, 0
      %v4652 = vsel %vm1007, %v4311, 0
      %v4655 = vsel %vm1007, %v4312, 0
      %v4658 = vsel %vm1007, %v4313, 0
      %v4661 = vsel %vm1007, %v4314, 0
      %v4664 = vsel %vm1007, %v4315, 0
      %v4667 = vsel %vm1007, %v4316, 0
      %v4670 = vsel %vm1007, %v4317, 0
      %v4673 = vsel %vm1007, %v4318, 0
      %v4676 = vsel %vm1007, %v4319, 0
      %v4679 = vsel %vm1007, %v4320, 0
      %v4682 = vsel %vm1007, %v4321, 0
      %v4685 = vsel %vm1007, %v4322, 0
      %v4688 = vsel %vm1007, %v4323, 0
      %v4691 = vsel %vm1007, %v4324, 0
      %v4694 = vsel %vm1007, %v4325, 0
      %4696 = vmatprep.subr.bf16.mxu0 0
      %4697 = vmatpush1.bf16.msra.mxu0 %v4637
      %4698 = vmatprep.subr.bf16.mxu0 0
      %4699 = vmatpush1.bf16.msra.mxu0 %v4636
      %4700 = vmatprep.subr.bf16.mxu0 0
      %4701 = vmatpush1.bf16.msra.mxu0 %v4635
      %4702 = vmatprep.subr.bf16.mxu0 0
      %4703 = vmatpush1.bf16.msra.mxu0 %v4634
      %4704 = vmatprep.subr.bf16.mxu0 0
      %4705 = vmatpush1.bf16.msra.mxu0 %v4633
      %4706 = vmatprep.subr.bf16.mxu0 0
      %4707 = vmatpush1.bf16.msra.mxu0 %v4632
      %4708 = vmatprep.subr.bf16.mxu0 0
      %4709 = vmatpush1.bf16.msra.mxu0 %v4631
      %4710 = vmatprep.subr.bf16.mxu0 0
      %4711 = vmatpush1.bf16.msra.mxu0 %v4630
      %4712 = vmatprep.subr.bf16.mxu0 0
      %4713 = vmatpush2.bf16.msra.mxu0 0
      %4714 = vmatprep.subr.bf16.mxu0 0
      %4715 = vmatpush2.bf16.msra.mxu0 0
      %4716 = vmatprep.subr.bf16.mxu0 0
      %4717 = vmatpush2.bf16.msra.mxu0 0
      %4718 = vmatprep.subr.bf16.mxu0 0
      %4719 = vmatpush2.bf16.msra.mxu0 0
      %4720 = vmatprep.subr.bf16.mxu0 0
      %4721 = vmatpush2.bf16.msra.mxu0 0
      %4722 = vmatprep.subr.bf16.mxu0 0
      %4723 = vmatpush2.bf16.msra.mxu0 0
      %4724 = vmatprep.subr.bf16.mxu0 0
      %4725 = vmatpush2.bf16.msra.mxu0 0
      %4726 = vmatprep.subr.bf16.mxu0 0
      %4727 = vmatpush2.bf16.msra.mxu0 %v4638
      %4728 = vmatprep.mubr.bf16.mxu0 %v4649
      %4729 = vmatmul.mubr.bf16.gmra.mxu0 %v4541
      %v4730 = vpop.f32.mrf.mxu0
      %v4731 = vadd.f32 %v4592, %v4730
      %v4732 = vpop.f32.mrf.mxu0
      %v4733 = vpop.f32.mrf.mxu0
      %v4734 = vadd.f32 %v4592, %v4733
      %v4735 = vpop.f32.mrf.mxu0
      %4736 = vmatprep.mubr.bf16.mxu0 %v4652
      %4737 = vmatmul.mubr.bf16.gmra.mxu0 %v4544
      %v4738 = vpop.f32.mrf.mxu0
      %v4739 = vadd.f32 %v4592, %v4738
      %v4740 = vpop.f32.mrf.mxu0
      %v4741 = vpop.f32.mrf.mxu0
      %v4742 = vadd.f32 %v4592, %v4741
      %v4743 = vpop.f32.mrf.mxu0
      %4744 = vmatprep.mubr.bf16.mxu0 %v4655
      %4745 = vmatmul.mubr.bf16.gmra.mxu0 %v4547
      %v4746 = vpop.f32.mrf.mxu0
      %v4747 = vadd.f32 %v4592, %v4746
      %v4748 = vpop.f32.mrf.mxu0
      %v4749 = vpop.f32.mrf.mxu0
      %v4750 = vadd.f32 %v4592, %v4749
      %v4751 = vpop.f32.mrf.mxu0
      %4752 = vmatprep.mubr.bf16.mxu0 %v4658
      %4753 = vmatmul.mubr.bf16.gmra.mxu0 %v4550
      %v4754 = vpop.f32.mrf.mxu0
      %v4755 = vadd.f32 %v4592, %v4754
      %v4756 = vpop.f32.mrf.mxu0
      %v4757 = vpop.f32.mrf.mxu0
      %v4758 = vadd.f32 %v4592, %v4757
      %v4759 = vpop.f32.mrf.mxu0
      %4760 = vmatprep.mubr.bf16.mxu0 %v4661
      %4761 = vmatmul.mubr.bf16.gmra.mxu0 %v4553
      %v4762 = vpop.f32.mrf.mxu0
      %v4763 = vadd.f32 %v4592, %v4762
      %v4764 = vpop.f32.mrf.mxu0
      %v4765 = vpop.f32.mrf.mxu0
      %v4766 = vadd.f32 %v4592, %v4765
      %v4767 = vpop.f32.mrf.mxu0
      %4768 = vmatprep.mubr.bf16.mxu0 %v4664
      %4769 = vmatmul.mubr.bf16.gmra.mxu0 %v4556
      %v4770 = vpop.f32.mrf.mxu0
      %v4771 = vadd.f32 %v4592, %v4770
      %v4772 = vpop.f32.mrf.mxu0
      %v4773 = vpop.f32.mrf.mxu0
      %v4774 = vadd.f32 %v4592, %v4773
      %v4775 = vpop.f32.mrf.mxu0
      %4776 = vmatprep.mubr.bf16.mxu0 %v4667
      %4777 = vmatmul.mubr.bf16.gmra.mxu0 %v4559
      %v4778 = vpop.f32.mrf.mxu0
      %v4779 = vadd.f32 %v4592, %v4778
      %v4780 = vpop.f32.mrf.mxu0
      %v4781 = vpop.f32.mrf.mxu0
      %v4782 = vadd.f32 %v4592, %v4781
      %v4783 = vpop.f32.mrf.mxu0
      %4784 = vmatprep.mubr.bf16.mxu0 %v4670
      %4785 = vmatmul.mubr.bf16.gmra.mxu0 %v4562
      %v4786 = vpop.f32.mrf.mxu0
      %v4787 = vadd.f32 %v4592, %v4786
      %v4788 = vpop.f32.mrf.mxu0
      %v4789 = vpop.f32.mrf.mxu0
      %v4790 = vadd.f32 %v4592, %v4789
      %v4791 = vpop.f32.mrf.mxu0
      %4792 = vmatprep.mubr.bf16.mxu0 %v4673
      %4793 = vmatmul.mubr.bf16.gmra.mxu0 %v4565
      %v4794 = vpop.f32.mrf.mxu0
      %v4795 = vadd.f32 %v4592, %v4794
      %v4796 = vpop.f32.mrf.mxu0
      %v4797 = vpop.f32.mrf.mxu0
      %v4798 = vadd.f32 %v4592, %v4797
      %v4799 = vpop.f32.mrf.mxu0
      %4800 = vmatprep.mubr.bf16.mxu0 %v4676
      %4801 = vmatmul.mubr.bf16.gmra.mxu0 %v4568
      %v4802 = vpop.f32.mrf.mxu0
      %v4803 = vadd.f32 %v4592, %v4802
      %v4804 = vpop.f32.mrf.mxu0
      %v4805 = vpop.f32.mrf.mxu0
      %v4806 = vadd.f32 %v4592, %v4805
      %v4807 = vpop.f32.mrf.mxu0
      %4808 = vmatprep.mubr.bf16.mxu0 %v4679
      %4809 = vmatmul.mubr.bf16.gmra.mxu0 %v4571
      %v4810 = vpop.f32.mrf.mxu0
      %v4811 = vadd.f32 %v4592, %v4810
      %v4812 = vpop.f32.mrf.mxu0
      %v4813 = vpop.f32.mrf.mxu0
      %v4814 = vadd.f32 %v4592, %v4813
      %v4815 = vpop.f32.mrf.mxu0
      %4816 = vmatprep.mubr.bf16.mxu0 %v4682
      %4817 = vmatmul.mubr.bf16.gmra.mxu0 %v4574
      %v4818 = vpop.f32.mrf.mxu0
      %v4819 = vadd.f32 %v4592, %v4818
      %v4820 = vpop.f32.mrf.mxu0
      %v4821 = vpop.f32.mrf.mxu0
      %v4822 = vadd.f32 %v4592, %v4821
      %v4823 = vpop.f32.mrf.mxu0
      %4824 = vmatprep.mubr.bf16.mxu0 %v4685
      %4825 = vmatmul.mubr.bf16.gmra.mxu0 %v4577
      %v4826 = vpop.f32.mrf.mxu0
      %v4827 = vadd.f32 %v4592, %v4826
      %v4828 = vpop.f32.mrf.mxu0
      %v4829 = vpop.f32.mrf.mxu0
      %v4830 = vadd.f32 %v4592, %v4829
      %v4831 = vpop.f32.mrf.mxu0
      %4832 = vmatprep.mubr.bf16.mxu0 %v4688
      %4833 = vmatmul.mubr.bf16.gmra.mxu0 %v4580
      %v4834 = vpop.f32.mrf.mxu0
      %v4835 = vadd.f32 %v4592, %v4834
      %v4836 = vpop.f32.mrf.mxu0
      %v4837 = vpop.f32.mrf.mxu0
      %v4838 = vadd.f32 %v4592, %v4837
      %v4839 = vpop.f32.mrf.mxu0
      %4840 = vmatprep.mubr.bf16.mxu0 %v4691
      %4841 = vmatmul.mubr.bf16.gmra.mxu0 %v4583
      %v4842 = vpop.f32.mrf.mxu0
      %v4843 = vadd.f32 %v4592, %v4842
      %v4844 = vpop.f32.mrf.mxu0
      %v4845 = vpop.f32.mrf.mxu0
      %v4846 = vadd.f32 %v4592, %v4845
      %v4847 = vpop.f32.mrf.mxu0
      %4848 = vmatprep.mubr.bf16.mxu0 %v4694
      %4849 = vmatmul.mubr.bf16.gmra.mxu0 %v4586
      %v4850 = vpop.f32.mrf.mxu0
      %v4851 = vadd.f32 %v4592, %v4850
      %v4852 = vpop.f32.mrf.mxu0
      %v4853 = vpop.f32.mrf.mxu0
      %v4854 = vadd.f32 %v4592, %v4853
      %v4855 = vpop.f32.mrf.mxu0
      %4856 = vdwg.mxu0
      %4889 = vrot.lane.b32.xlu0 %v4731, 4
      %v4890 = vpop.permute.xlu0 %4889
      %4891 = vrot.lane.b32.xlu0 %v4734, 4
      %v4892 = vpop.permute.xlu0 %4891
      %4893 = vrot.lane.b32.xlu0 %v4739, 4
      %v4894 = vpop.permute.xlu0 %4893
      %4895 = vrot.lane.b32.xlu0 %v4742, 4
      %v4896 = vpop.permute.xlu0 %4895
      %4897 = vrot.lane.b32.xlu0 %v4747, 4
      %v4898 = vpop.permute.xlu0 %4897
      %4899 = vrot.lane.b32.xlu0 %v4750, 4
      %v4900 = vpop.permute.xlu0 %4899
      %4901 = vrot.lane.b32.xlu0 %v4755, 4
      %v4902 = vpop.permute.xlu0 %4901
      %4903 = vrot.lane.b32.xlu0 %v4758, 4
      %v4904 = vpop.permute.xlu0 %4903
      %4905 = vrot.lane.b32.xlu0 %v4763, 4
      %v4906 = vpop.permute.xlu0 %4905
      %4907 = vrot.lane.b32.xlu0 %v4766, 4
      %v4908 = vpop.permute.xlu0 %4907
      %4909 = vrot.lane.b32.xlu0 %v4771, 4
      %v4910 = vpop.permute.xlu0 %4909
      %4911 = vrot.lane.b32.xlu0 %v4774, 4
      %v4912 = vpop.permute.xlu0 %4911
      %4913 = vrot.lane.b32.xlu0 %v4779, 4
      %v4914 = vpop.permute.xlu0 %4913
      %4915 = vrot.lane.b32.xlu0 %v4782, 4
      %v4916 = vpop.permute.xlu0 %4915
      %4917 = vrot.lane.b32.xlu0 %v4787, 4
      %v4918 = vpop.permute.xlu0 %4917
      %4919 = vrot.lane.b32.xlu0 %v4790, 4
      %v4920 = vpop.permute.xlu0 %4919
      %4921 = vrot.lane.b32.xlu0 %v4795, 4
      %v4922 = vpop.permute.xlu0 %4921
      %4923 = vrot.lane.b32.xlu0 %v4798, 4
      %v4924 = vpop.permute.xlu0 %4923
      %4925 = vrot.lane.b32.xlu0 %v4803, 4
      %v4926 = vpop.permute.xlu0 %4925
      %4927 = vrot.lane.b32.xlu0 %v4806, 4
      %v4928 = vpop.permute.xlu0 %4927
      %4929 = vrot.lane.b32.xlu0 %v4811, 4
      %v4930 = vpop.permute.xlu0 %4929
      %4931 = vrot.lane.b32.xlu0 %v4814, 4
      %v4932 = vpop.permute.xlu0 %4931
      %4933 = vrot.lane.b32.xlu0 %v4819, 4
      %v4934 = vpop.permute.xlu0 %4933
      %4935 = vrot.lane.b32.xlu0 %v4822, 4
      %v4936 = vpop.permute.xlu0 %4935
      %4937 = vrot.lane.b32.xlu0 %v4827, 4
      %v4938 = vpop.permute.xlu0 %4937
      %4939 = vrot.lane.b32.xlu0 %v4830, 4
      %v4940 = vpop.permute.xlu0 %4939
      %4941 = vrot.lane.b32.xlu0 %v4835, 4
      %v4942 = vpop.permute.xlu0 %4941
      %4943 = vrot.lane.b32.xlu0 %v4838, 4
      %v4944 = vpop.permute.xlu0 %4943
      %4945 = vrot.lane.b32.xlu0 %v4843, 4
      %v4946 = vpop.permute.xlu0 %4945
      %4947 = vrot.lane.b32.xlu0 %v4846, 4
      %v4948 = vpop.permute.xlu0 %4947
      %4949 = vrot.lane.b32.xlu0 %v4851, 4
      %v4950 = vpop.permute.xlu0 %4949
      %4951 = vrot.lane.b32.xlu0 %v4854, 4
      %v4952 = vpop.permute.xlu0 %4951
      %vm4985 = vcmask 64544
      %4986 = vst.msk [vmem:[%s838] sm:$0xff] %vm4985, %v4890
      %4987 = vst.msk [vmem:[%s838 + $0x8] sm:$0xff] %vm4985, %v4892
      %4988 = vst.msk [vmem:[%s838 + $0x10] sm:$0xff] %vm4985, %v4894
      %4989 = vst.msk [vmem:[%s838 + $0x18] sm:$0xff] %vm4985, %v4896
      %4990 = vst.msk [vmem:[%s838 + $0x20] sm:$0xff] %vm4985, %v4898
      %4991 = vst.msk [vmem:[%s838 + $0x28] sm:$0xff] %vm4985, %v4900
      %4992 = vst.msk [vmem:[%s838 + $0x30] sm:$0xff] %vm4985, %v4902
      %4993 = vst.msk [vmem:[%s838 + $0x38] sm:$0xff] %vm4985, %v4904
      %4994 = vst.msk [vmem:[%s838 + $0x40] sm:$0xff] %vm4985, %v4906
      %4995 = vst.msk [vmem:[%s838 + $0x48] sm:$0xff] %vm4985, %v4908
      %4996 = vst.msk [vmem:[%s838 + $0x50] sm:$0xff] %vm4985, %v4910
      %4997 = vst.msk [vmem:[%s838 + $0x58] sm:$0xff] %vm4985, %v4912
      %4998 = vst.msk [vmem:[%s838 + $0x60] sm:$0xff] %vm4985, %v4914
      %4999 = vst.msk [vmem:[%s838 + $0x68] sm:$0xff] %vm4985, %v4916
      %5000 = vst.msk [vmem:[%s838 + $0x70] sm:$0xff] %vm4985, %v4918
      %5001 = vst.msk [vmem:[%s838 + $0x78] sm:$0xff] %vm4985, %v4920
      %5002 = vst.msk [vmem:[%s838 + $0x80] sm:$0xff] %vm4985, %v4922
      %5003 = vst.msk [vmem:[%s838 + $0x88] sm:$0xff] %vm4985, %v4924
      %5004 = vst.msk [vmem:[%s838 + $0x90] sm:$0xff] %vm4985, %v4926
      %5005 = vst.msk [vmem:[%s838 + $0x98] sm:$0xff] %vm4985, %v4928
      %5006 = vst.msk [vmem:[%s838 + $0xa0] sm:$0xff] %vm4985, %v4930
      %5007 = vst.msk [vmem:[%s838 + $0xa8] sm:$0xff] %vm4985, %v4932
      %5008 = vst.msk [vmem:[%s838 + $0xb0] sm:$0xff] %vm4985, %v4934
      %5009 = vst.msk [vmem:[%s838 + $0xb8] sm:$0xff] %vm4985, %v4936
      %5010 = vst.msk [vmem:[%s838 + $0xc0] sm:$0xff] %vm4985, %v4938
      %5011 = vst.msk [vmem:[%s838 + $0xc8] sm:$0xff] %vm4985, %v4940
      %5012 = vst.msk [vmem:[%s838 + $0xd0] sm:$0xff] %vm4985, %v4942
      %5013 = vst.msk [vmem:[%s838 + $0xd8] sm:$0xff] %vm4985, %v4944
      %5014 = vst.msk [vmem:[%s838 + $0xe0] sm:$0xff] %vm4985, %v4946
      %5015 = vst.msk [vmem:[%s838 + $0xe8] sm:$0xff] %vm4985, %v4948
      %5016 = vst.msk [vmem:[%s838 + $0xf0] sm:$0xff] %vm4985, %v4950
      %5017 = vst.msk [vmem:[%s838 + $0xf8] sm:$0xff] %vm4985, %v4952
      %v5018 = vld [vmem:[%s7] sm:$0x1]
      %v5019 = vld [vmem:[%s8] sm:$0x1]
      %v5020 = vld [vmem:[%s9] sm:$0xf]
      %v5021 = vld [vmem:[%s9 + $0x4] sm:$0xf]
      %v5022 = vld [vmem:[%s10] sm:$0x1]
      %v5023 = vld [vmem:[%s11] sm:$0xf]
      %v5024 = vld [vmem:[%s11 + $0x4] sm:$0xf]
      %v5025 = vld [vmem:[%s11 + $0x8] sm:$0xf]
      %v5026 = vld [vmem:[%s11 + $0xc] sm:$0xf]
      %v5027 = vld [vmem:[%s11 + $0x10] sm:$0xf]
      %v5028 = vld [vmem:[%s11 + $0x14] sm:$0xf]
      %v5029 = vld [vmem:[%s11 + $0x18] sm:$0xf]
      %v5030 = vld [vmem:[%s11 + $0x1c] sm:$0xf]
      %v5031 = vld [vmem:[%s11 + $0x20] sm:$0xf]
      %v5032 = vld [vmem:[%s11 + $0x24] sm:$0xf]
      %v5033 = vld [vmem:[%s11 + $0x28] sm:$0xf]
      %v5034 = vld [vmem:[%s11 + $0x2c] sm:$0xf]
      %v5035 = vld [vmem:[%s11 + $0x30] sm:$0xf]
      %v5036 = vld [vmem:[%s11 + $0x34] sm:$0xf]
      %v5037 = vld [vmem:[%s11 + $0x38] sm:$0xf]
      %v5038 = vld [vmem:[%s11 + $0x3c] sm:$0xf]
      %v5039 = vld [vmem:[%s11 + $0x40] sm:$0xf]
      %v5040 = vld [vmem:[%s11 + $0x44] sm:$0xf]
      %v5041 = vld [vmem:[%s12] sm:$0x1]
      %v5042 = vld [vmem:[%s838] sm:$0xff]
      %v5043 = vld [vmem:[%s838 + $0x8] sm:$0xff]
      %v5044 = vld [vmem:[%s838 + $0x10] sm:$0xff]
      %v5045 = vld [vmem:[%s838 + $0x18] sm:$0xff]
      %v5046 = vld [vmem:[%s838 + $0x20] sm:$0xff]
      %v5047 = vld [vmem:[%s838 + $0x28] sm:$0xff]
      %v5048 = vld [vmem:[%s838 + $0x30] sm:$0xff]
      %v5049 = vld [vmem:[%s838 + $0x38] sm:$0xff]
      %v5050 = vld [vmem:[%s838 + $0x40] sm:$0xff]
      %v5051 = vld [vmem:[%s838 + $0x48] sm:$0xff]
      %v5052 = vld [vmem:[%s838 + $0x50] sm:$0xff]
      %v5053 = vld [vmem:[%s838 + $0x58] sm:$0xff]
      %v5054 = vld [vmem:[%s838 + $0x60] sm:$0xff]
      %v5055 = vld [vmem:[%s838 + $0x68] sm:$0xff]
      %v5056 = vld [vmem:[%s838 + $0x70] sm:$0xff]
      %v5057 = vld [vmem:[%s838 + $0x78] sm:$0xff]
      %v5058 = vld [vmem:[%s838 + $0x80] sm:$0xff]
      %v5059 = vld [vmem:[%s838 + $0x88] sm:$0xff]
      %v5060 = vld [vmem:[%s838 + $0x90] sm:$0xff]
      %v5061 = vld [vmem:[%s838 + $0x98] sm:$0xff]
      %v5062 = vld [vmem:[%s838 + $0xa0] sm:$0xff]
      %v5063 = vld [vmem:[%s838 + $0xa8] sm:$0xff]
      %v5064 = vld [vmem:[%s838 + $0xb0] sm:$0xff]
      %v5065 = vld [vmem:[%s838 + $0xb8] sm:$0xff]
      %v5066 = vld [vmem:[%s838 + $0xc0] sm:$0xff]
      %v5067 = vld [vmem:[%s838 + $0xc8] sm:$0xff]
      %v5068 = vld [vmem:[%s838 + $0xd0] sm:$0xff]
      %v5069 = vld [vmem:[%s838 + $0xd8] sm:$0xff]
      %v5070 = vld [vmem:[%s838 + $0xe0] sm:$0xff]
      %v5071 = vld [vmem:[%s838 + $0xe8] sm:$0xff]
      %v5072 = vld [vmem:[%s838 + $0xf0] sm:$0xff]
      %v5073 = vld [vmem:[%s838 + $0xf8] sm:$0xff]
      %v5075 = vlaneseq
      %v5076 = vshrl.u32 %v5075, 7
      %v5077 = vsub.s32 0, %v5076
      %v5078 = vrot.slane %v5018, %v5077
      %v5080 = vmul.f32 %v5042, %v5078
      %v5081 = vmul.f32 %v5043, %v5078
      %v5082 = vmul.f32 %v5044, %v5078
      %v5083 = vmul.f32 %v5045, %v5078
      %v5084 = vmul.f32 %v5046, %v5078
      %v5085 = vmul.f32 %v5047, %v5078
      %v5086 = vmul.f32 %v5048, %v5078
      %v5087 = vmul.f32 %v5049, %v5078
      %v5088 = vmul.f32 %v5050, %v5078
      %v5089 = vmul.f32 %v5051, %v5078
      %v5090 = vmul.f32 %v5052, %v5078
      %v5091 = vmul.f32 %v5053, %v5078
      %v5092 = vmul.f32 %v5054, %v5078
      %v5093 = vmul.f32 %v5055, %v5078
      %v5094 = vmul.f32 %v5056, %v5078
      %v5095 = vmul.f32 %v5057, %v5078
      %v5096 = vmul.f32 %v5058, %v5078
      %v5097 = vmul.f32 %v5059, %v5078
      %v5098 = vmul.f32 %v5060, %v5078
      %v5099 = vmul.f32 %v5061, %v5078
      %v5100 = vmul.f32 %v5062, %v5078
      %v5101 = vmul.f32 %v5063, %v5078
      %v5102 = vmul.f32 %v5064, %v5078
      %v5103 = vmul.f32 %v5065, %v5078
      %v5104 = vmul.f32 %v5066, %v5078
      %v5105 = vmul.f32 %v5067, %v5078
      %v5106 = vmul.f32 %v5068, %v5078
      %v5107 = vmul.f32 %v5069, %v5078
      %v5108 = vmul.f32 %v5070, %v5078
      %v5109 = vmul.f32 %v5071, %v5078
      %v5110 = vmul.f32 %v5072, %v5078
      %v5111 = vmul.f32 %v5073, %v5078
      %v5113 = vlaneseq
      %v5114 = vshrl.u32 %v5113, 7
      %v5115 = vsub.s32 0, %v5114
      %v5116 = vrot.slane %v5019, %v5115
      %v5118 = vadd.f32 %v5080, %v5116
      %v5119 = vadd.f32 %v5081, %v5116
      %v5120 = vadd.f32 %v5082, %v5116
      %v5121 = vadd.f32 %v5083, %v5116
      %v5122 = vadd.f32 %v5084, %v5116
      %v5123 = vadd.f32 %v5085, %v5116
      %v5124 = vadd.f32 %v5086, %v5116
      %v5125 = vadd.f32 %v5087, %v5116
      %v5126 = vadd.f32 %v5088, %v5116
      %v5127 = vadd.f32 %v5089, %v5116
      %v5128 = vadd.f32 %v5090, %v5116
      %v5129 = vadd.f32 %v5091, %v5116
      %v5130 = vadd.f32 %v5092, %v5116
      %v5131 = vadd.f32 %v5093, %v5116
      %v5132 = vadd.f32 %v5094, %v5116
      %v5133 = vadd.f32 %v5095, %v5116
      %v5134 = vadd.f32 %v5096, %v5116
      %v5135 = vadd.f32 %v5097, %v5116
      %v5136 = vadd.f32 %v5098, %v5116
      %v5137 = vadd.f32 %v5099, %v5116
      %v5138 = vadd.f32 %v5100, %v5116
      %v5139 = vadd.f32 %v5101, %v5116
      %v5140 = vadd.f32 %v5102, %v5116
      %v5141 = vadd.f32 %v5103, %v5116
      %v5142 = vadd.f32 %v5104, %v5116
      %v5143 = vadd.f32 %v5105, %v5116
      %v5144 = vadd.f32 %v5106, %v5116
      %v5145 = vadd.f32 %v5107, %v5116
      %v5146 = vadd.f32 %v5108, %v5116
      %v5147 = vadd.f32 %v5109, %v5116
      %v5148 = vadd.f32 %v5110, %v5116
      %v5149 = vadd.f32 %v5111, %v5116
      %v5150 = vmax.f32 %v5118, 0.0
      %v5151 = vmax.f32 %v5119, 0.0
      %v5152 = vmax.f32 %v5120, 0.0
      %v5153 = vmax.f32 %v5121, 0.0
      %v5154 = vmax.f32 %v5122, 0.0
      %v5155 = vmax.f32 %v5123, 0.0
      %v5156 = vmax.f32 %v5124, 0.0
      %v5157 = vmax.f32 %v5125, 0.0
      %v5158 = vmax.f32 %v5126, 0.0
      %v5159 = vmax.f32 %v5127, 0.0
      %v5160 = vmax.f32 %v5128, 0.0
      %v5161 = vmax.f32 %v5129, 0.0
      %v5162 = vmax.f32 %v5130, 0.0
      %v5163 = vmax.f32 %v5131, 0.0
      %v5164 = vmax.f32 %v5132, 0.0
      %v5165 = vmax.f32 %v5133, 0.0
      %v5166 = vmax.f32 %v5134, 0.0
      %v5167 = vmax.f32 %v5135, 0.0
      %v5168 = vmax.f32 %v5136, 0.0
      %v5169 = vmax.f32 %v5137, 0.0
      %v5170 = vmax.f32 %v5138, 0.0
      %v5171 = vmax.f32 %v5139, 0.0
      %v5172 = vmax.f32 %v5140, 0.0
      %v5173 = vmax.f32 %v5141, 0.0
      %v5174 = vmax.f32 %v5142, 0.0
      %v5175 = vmax.f32 %v5143, 0.0
      %v5176 = vmax.f32 %v5144, 0.0
      %v5177 = vmax.f32 %v5145, 0.0
      %v5178 = vmax.f32 %v5146, 0.0
      %v5179 = vmax.f32 %v5147, 0.0
      %v5180 = vmax.f32 %v5148, 0.0
      %v5181 = vmax.f32 %v5149, 0.0
      %v5182 = vpack.c.bf16 %v5151, %v5150
      %v5183 = vpack.c.bf16 %v5153, %v5152
      %v5184 = vpack.c.bf16 %v5155, %v5154
      %v5185 = vpack.c.bf16 %v5157, %v5156
      %v5186 = vpack.c.bf16 %v5159, %v5158
      %v5187 = vpack.c.bf16 %v5161, %v5160
      %v5188 = vpack.c.bf16 %v5163, %v5162
      %v5189 = vpack.c.bf16 %v5165, %v5164
      %v5190 = vpack.c.bf16 %v5167, %v5166
      %v5191 = vpack.c.bf16 %v5169, %v5168
      %v5192 = vpack.c.bf16 %v5171, %v5170
      %v5193 = vpack.c.bf16 %v5173, %v5172
      %v5194 = vpack.c.bf16 %v5175, %v5174
      %v5195 = vpack.c.bf16 %v5177, %v5176
      %v5196 = vpack.c.bf16 %v5179, %v5178
      %v5197 = vpack.c.bf16 %v5181, %v5180
      %v5199 = vlaneseq
      %v5200 = vshrl.u32 %v5199, 7
      %v5201 = vsub.s32 0, %v5200
      %v5202 = vrot.slane %v5022, %v5201
      %v5206 = vunpack.c.l.b16 %v5020
      %v5207 = vunpack.c.l.b16 %v5021
      %v5208 = vpack.c.b16 %v5207, %v5206
      %v5211 = vsel %vm1007, %v5182, 0
      %v5214 = vsel %vm1007, %v5183, 0
      %v5217 = vsel %vm1007, %v5184, 0
      %v5220 = vsel %vm1007, %v5185, 0
      %v5223 = vsel %vm1007, %v5186, 0
      %v5226 = vsel %vm1007, %v5187, 0
      %v5229 = vsel %vm1007, %v5188, 0
      %v5232 = vsel %vm1007, %v5189, 0
      %v5235 = vsel %vm1007, %v5190, 0
      %v5238 = vsel %vm1007, %v5191, 0
      %v5241 = vsel %vm1007, %v5192, 0
      %v5244 = vsel %vm1007, %v5193, 0
      %v5247 = vsel %vm1007, %v5194, 0
      %v5250 = vsel %vm1007, %v5195, 0
      %v5253 = vsel %vm1007, %v5196, 0
      %v5256 = vsel %vm1007, %v5197, 0
      %5258 = vmatprep.subr.bf16.mxu0 0
      %5259 = vmatpush1.bf16.msra.mxu0 0
      %5260 = vmatprep.subr.bf16.mxu0 0
      %5261 = vmatpush1.bf16.msra.mxu0 0
      %5262 = vmatprep.subr.bf16.mxu0 0
      %5263 = vmatpush1.bf16.msra.mxu0 0
      %5264 = vmatprep.subr.bf16.mxu0 0
      %5265 = vmatpush1.bf16.msra.mxu0 0
      %5266 = vmatprep.subr.bf16.mxu0 0
      %5267 = vmatpush1.bf16.msra.mxu0 0
      %5268 = vmatprep.subr.bf16.mxu0 0
      %5269 = vmatpush1.bf16.msra.mxu0 0
      %5270 = vmatprep.subr.bf16.mxu0 0
      %5271 = vmatpush1.bf16.msra.mxu0 0
      %5272 = vmatprep.subr.bf16.mxu0 0
      %5273 = vmatpush1.bf16.msra.mxu0 %v5208
      %5274 = vmatprep.subr.bf16.mxu0 0
      %5275 = vmatpush2.bf16.msra.mxu0 0
      %5276 = vmatprep.subr.bf16.mxu0 0
      %5277 = vmatpush2.bf16.msra.mxu0 0
      %5278 = vmatprep.subr.bf16.mxu0 0
      %5279 = vmatpush2.bf16.msra.mxu0 0
      %5280 = vmatprep.subr.bf16.mxu0 0
      %5281 = vmatpush2.bf16.msra.mxu0 0
      %5282 = vmatprep.subr.bf16.mxu0 0
      %5283 = vmatpush2.bf16.msra.mxu0 0
      %5284 = vmatprep.subr.bf16.mxu0 0
      %5285 = vmatpush2.bf16.msra.mxu0 0
      %5286 = vmatprep.subr.bf16.mxu0 0
      %5287 = vmatpush2.bf16.msra.mxu0 0
      %5288 = vmatprep.subr.bf16.mxu0 0
      %5289 = vmatpush2.bf16.msra.mxu0 0
      %5290 = vmatprep.mubr.bf16.mxu0 0
      %5291 = vmatmul.mubr.bf16.gmra.mxu0 %v5211
      %v5292 = vpop.f32.mrf.mxu0
      %v5293 = vadd.f32 %v5202, %v5292
      %v5294 = vpop.f32.mrf.mxu0
      %v5295 = vpop.f32.mrf.mxu0
      %v5296 = vadd.f32 %v5202, %v5295
      %v5297 = vpop.f32.mrf.mxu0
      %5298 = vmatprep.mubr.bf16.mxu0 0
      %5299 = vmatmul.mubr.bf16.gmra.mxu0 %v5214
      %v5300 = vpop.f32.mrf.mxu0
      %v5301 = vadd.f32 %v5202, %v5300
      %v5302 = vpop.f32.mrf.mxu0
      %v5303 = vpop.f32.mrf.mxu0
      %v5304 = vadd.f32 %v5202, %v5303
      %v5305 = vpop.f32.mrf.mxu0
      %5306 = vmatprep.mubr.bf16.mxu0 0
      %5307 = vmatmul.mubr.bf16.gmra.mxu0 %v5217
      %v5308 = vpop.f32.mrf.mxu0
      %v5309 = vadd.f32 %v5202, %v5308
      %v5310 = vpop.f32.mrf.mxu0
      %v5311 = vpop.f32.mrf.mxu0
      %v5312 = vadd.f32 %v5202, %v5311
      %v5313 = vpop.f32.mrf.mxu0
      %5314 = vmatprep.mubr.bf16.mxu0 0
      %5315 = vmatmul.mubr.bf16.gmra.mxu0 %v5220
      %v5316 = vpop.f32.mrf.mxu0
      %v5317 = vadd.f32 %v5202, %v5316
      %v5318 = vpop.f32.mrf.mxu0
      %v5319 = vpop.f32.mrf.mxu0
      %v5320 = vadd.f32 %v5202, %v5319
      %v5321 = vpop.f32.mrf.mxu0
      %5322 = vmatprep.mubr.bf16.mxu0 0
      %5323 = vmatmul.mubr.bf16.gmra.mxu0 %v5223
      %v5324 = vpop.f32.mrf.mxu0
      %v5325 = vadd.f32 %v5202, %v5324
      %v5326 = vpop.f32.mrf.mxu0
      %v5327 = vpop.f32.mrf.mxu0
      %v5328 = vadd.f32 %v5202, %v5327
      %v5329 = vpop.f32.mrf.mxu0
      %5330 = vmatprep.mubr.bf16.mxu0 0
      %5331 = vmatmul.mubr.bf16.gmra.mxu0 %v5226
      %v5332 = vpop.f32.mrf.mxu0
      %v5333 = vadd.f32 %v5202, %v5332
      %v5334 = vpop.f32.mrf.mxu0
      %v5335 = vpop.f32.mrf.mxu0
      %v5336 = vadd.f32 %v5202, %v5335
      %v5337 = vpop.f32.mrf.mxu0
      %5338 = vmatprep.mubr.bf16.mxu0 0
      %5339 = vmatmul.mubr.bf16.gmra.mxu0 %v5229
      %v5340 = vpop.f32.mrf.mxu0
      %v5341 = vadd.f32 %v5202, %v5340
      %v5342 = vpop.f32.mrf.mxu0
      %v5343 = vpop.f32.mrf.mxu0
      %v5344 = vadd.f32 %v5202, %v5343
      %v5345 = vpop.f32.mrf.mxu0
      %5346 = vmatprep.mubr.bf16.mxu0 0
      %5347 = vmatmul.mubr.bf16.gmra.mxu0 %v5232
      %v5348 = vpop.f32.mrf.mxu0
      %v5349 = vadd.f32 %v5202, %v5348
      %v5350 = vpop.f32.mrf.mxu0
      %v5351 = vpop.f32.mrf.mxu0
      %v5352 = vadd.f32 %v5202, %v5351
      %v5353 = vpop.f32.mrf.mxu0
      %5354 = vmatprep.mubr.bf16.mxu0 0
      %5355 = vmatmul.mubr.bf16.gmra.mxu0 %v5235
      %v5356 = vpop.f32.mrf.mxu0
      %v5357 = vadd.f32 %v5202, %v5356
      %v5358 = vpop.f32.mrf.mxu0
      %v5359 = vpop.f32.mrf.mxu0
      %v5360 = vadd.f32 %v5202, %v5359
      %v5361 = vpop.f32.mrf.mxu0
      %5362 = vmatprep.mubr.bf16.mxu0 0
      %5363 = vmatmul.mubr.bf16.gmra.mxu0 %v5238
      %v5364 = vpop.f32.mrf.mxu0
      %v5365 = vadd.f32 %v5202, %v5364
      %v5366 = vpop.f32.mrf.mxu0
      %v5367 = vpop.f32.mrf.mxu0
      %v5368 = vadd.f32 %v5202, %v5367
      %v5369 = vpop.f32.mrf.mxu0
      %5370 = vmatprep.mubr.bf16.mxu0 0
      %5371 = vmatmul.mubr.bf16.gmra.mxu0 %v5241
      %v5372 = vpop.f32.mrf.mxu0
      %v5373 = vadd.f32 %v5202, %v5372
      %v5374 = vpop.f32.mrf.mxu0
      %v5375 = vpop.f32.mrf.mxu0
      %v5376 = vadd.f32 %v5202, %v5375
      %v5377 = vpop.f32.mrf.mxu0
      %5378 = vmatprep.mubr.bf16.mxu0 0
      %5379 = vmatmul.mubr.bf16.gmra.mxu0 %v5244
      %v5380 = vpop.f32.mrf.mxu0
      %v5381 = vadd.f32 %v5202, %v5380
      %v5382 = vpop.f32.mrf.mxu0
      %v5383 = vpop.f32.mrf.mxu0
      %v5384 = vadd.f32 %v5202, %v5383
      %v5385 = vpop.f32.mrf.mxu0
      %5386 = vmatprep.mubr.bf16.mxu0 0
      %5387 = vmatmul.mubr.bf16.gmra.mxu0 %v5247
      %v5388 = vpop.f32.mrf.mxu0
      %v5389 = vadd.f32 %v5202, %v5388
      %v5390 = vpop.f32.mrf.mxu0
      %v5391 = vpop.f32.mrf.mxu0
      %v5392 = vadd.f32 %v5202, %v5391
      %v5393 = vpop.f32.mrf.mxu0
      %5394 = vmatprep.mubr.bf16.mxu0 0
      %5395 = vmatmul.mubr.bf16.gmra.mxu0 %v5250
      %v5396 = vpop.f32.mrf.mxu0
      %v5397 = vadd.f32 %v5202, %v5396
      %v5398 = vpop.f32.mrf.mxu0
      %v5399 = vpop.f32.mrf.mxu0
      %v5400 = vadd.f32 %v5202, %v5399
      %v5401 = vpop.f32.mrf.mxu0
      %5402 = vmatprep.mubr.bf16.mxu0 0
      %5403 = vmatmul.mubr.bf16.gmra.mxu0 %v5253
      %v5404 = vpop.f32.mrf.mxu0
      %v5405 = vadd.f32 %v5202, %v5404
      %v5406 = vpop.f32.mrf.mxu0
      %v5407 = vpop.f32.mrf.mxu0
      %v5408 = vadd.f32 %v5202, %v5407
      %v5409 = vpop.f32.mrf.mxu0
      %5410 = vmatprep.mubr.bf16.mxu0 0
      %5411 = vmatmul.mubr.bf16.gmra.mxu0 %v5256
      %v5412 = vpop.f32.mrf.mxu0
      %v5413 = vadd.f32 %v5202, %v5412
      %v5414 = vpop.f32.mrf.mxu0
      %v5415 = vpop.f32.mrf.mxu0
      %v5416 = vadd.f32 %v5202, %v5415
      %v5417 = vpop.f32.mrf.mxu0
      %5418 = vdwg.mxu0
      %v5419 = vmax.f32 %v5293, 0.0
      %v5420 = vmax.f32 %v5296, 0.0
      %v5421 = vmax.f32 %v5301, 0.0
      %v5422 = vmax.f32 %v5304, 0.0
      %v5423 = vmax.f32 %v5309, 0.0
      %v5424 = vmax.f32 %v5312, 0.0
      %v5425 = vmax.f32 %v5317, 0.0
      %v5426 = vmax.f32 %v5320, 0.0
      %v5427 = vmax.f32 %v5325, 0.0
      %v5428 = vmax.f32 %v5328, 0.0
      %v5429 = vmax.f32 %v5333, 0.0
      %v5430 = vmax.f32 %v5336, 0.0
      %v5431 = vmax.f32 %v5341, 0.0
      %v5432 = vmax.f32 %v5344, 0.0
      %v5433 = vmax.f32 %v5349, 0.0
      %v5434 = vmax.f32 %v5352, 0.0
      %v5435 = vmax.f32 %v5357, 0.0
      %v5436 = vmax.f32 %v5360, 0.0
      %v5437 = vmax.f32 %v5365, 0.0
      %v5438 = vmax.f32 %v5368, 0.0
      %v5439 = vmax.f32 %v5373, 0.0
      %v5440 = vmax.f32 %v5376, 0.0
      %v5441 = vmax.f32 %v5381, 0.0
      %v5442 = vmax.f32 %v5384, 0.0
      %v5443 = vmax.f32 %v5389, 0.0
      %v5444 = vmax.f32 %v5392, 0.0
      %v5445 = vmax.f32 %v5397, 0.0
      %v5446 = vmax.f32 %v5400, 0.0
      %v5447 = vmax.f32 %v5405, 0.0
      %v5448 = vmax.f32 %v5408, 0.0
      %v5449 = vmax.f32 %v5413, 0.0
      %v5450 = vmax.f32 %v5416, 0.0
      %v5451 = vpack.c.bf16 %v5420, %v5419
      %v5452 = vpack.c.bf16 %v5422, %v5421
      %v5453 = vpack.c.bf16 %v5424, %v5423
      %v5454 = vpack.c.bf16 %v5426, %v5425
      %v5455 = vpack.c.bf16 %v5428, %v5427
      %v5456 = vpack.c.bf16 %v5430, %v5429
      %v5457 = vpack.c.bf16 %v5432, %v5431
      %v5458 = vpack.c.bf16 %v5434, %v5433
      %v5459 = vpack.c.bf16 %v5436, %v5435
      %v5460 = vpack.c.bf16 %v5438, %v5437
      %v5461 = vpack.c.bf16 %v5440, %v5439
      %v5462 = vpack.c.bf16 %v5442, %v5441
      %v5463 = vpack.c.bf16 %v5444, %v5443
      %v5464 = vpack.c.bf16 %v5446, %v5445
      %v5465 = vpack.c.bf16 %v5448, %v5447
      %v5466 = vpack.c.bf16 %v5450, %v5449
      %v5483 = vunpack.c.l.b16 %v5451
      %v5484 = vunpack.c.h.b16 %v5451
      %v5485 = vunpack.c.l.b16 %v5452
      %v5486 = vunpack.c.h.b16 %v5452
      %v5487 = vunpack.c.l.b16 %v5453
      %v5488 = vunpack.c.h.b16 %v5453
      %v5489 = vunpack.c.l.b16 %v5454
      %v5490 = vunpack.c.h.b16 %v5454
      %v5491 = vunpack.c.l.b16 %v5455
      %v5492 = vunpack.c.h.b16 %v5455
      %v5493 = vunpack.c.l.b16 %v5456
      %v5494 = vunpack.c.h.b16 %v5456
      %v5495 = vunpack.c.l.b16 %v5457
      %v5496 = vunpack.c.h.b16 %v5457
      %v5497 = vunpack.c.l.b16 %v5458
      %v5498 = vunpack.c.h.b16 %v5458
      %v5499 = vunpack.c.l.b16 %v5459
      %v5500 = vunpack.c.h.b16 %v5459
      %v5501 = vunpack.c.l.b16 %v5460
      %v5502 = vunpack.c.h.b16 %v5460
      %v5503 = vunpack.c.l.b16 %v5461
      %v5504 = vunpack.c.h.b16 %v5461
      %v5505 = vunpack.c.l.b16 %v5462
      %v5506 = vunpack.c.h.b16 %v5462
      %v5507 = vunpack.c.l.b16 %v5463
      %v5508 = vunpack.c.h.b16 %v5463
      %v5509 = vunpack.c.l.b16 %v5464
      %v5510 = vunpack.c.h.b16 %v5464
      %v5511 = vunpack.c.l.b16 %v5465
      %v5512 = vunpack.c.h.b16 %v5465
      %v5513 = vunpack.c.l.b16 %v5466
      %v5514 = vunpack.c.h.b16 %v5466
      %v5515 = vpack.c.b16 %v5483, %v5483
      %v5516 = vpack.c.b16 %v5484, %v5484
      %v5517 = vpack.c.b16 %v5485, %v5485
      %v5518 = vpack.c.b16 %v5486, %v5486
      %v5519 = vpack.c.b16 %v5487, %v5487
      %v5520 = vpack.c.b16 %v5488, %v5488
      %v5521 = vpack.c.b16 %v5489, %v5489
      %v5522 = vpack.c.b16 %v5490, %v5490
      %v5523 = vpack.c.b16 %v5491, %v5491
      %v5524 = vpack.c.b16 %v5492, %v5492
      %v5525 = vpack.c.b16 %v5493, %v5493
      %v5526 = vpack.c.b16 %v5494, %v5494
      %v5527 = vpack.c.b16 %v5495, %v5495
      %v5528 = vpack.c.b16 %v5496, %v5496
      %v5529 = vpack.c.b16 %v5497, %v5497
      %v5530 = vpack.c.b16 %v5498, %v5498
      %v5531 = vpack.c.b16 %v5499, %v5499
      %v5532 = vpack.c.b16 %v5500, %v5500
      %v5533 = vpack.c.b16 %v5501, %v5501
      %v5534 = vpack.c.b16 %v5502, %v5502
      %v5535 = vpack.c.b16 %v5503, %v5503
      %v5536 = vpack.c.b16 %v5504, %v5504
      %v5537 = vpack.c.b16 %v5505, %v5505
      %v5538 = vpack.c.b16 %v5506, %v5506
      %v5539 = vpack.c.b16 %v5507, %v5507
      %v5540 = vpack.c.b16 %v5508, %v5508
      %v5541 = vpack.c.b16 %v5509, %v5509
      %v5542 = vpack.c.b16 %v5510, %v5510
      %v5543 = vpack.c.b16 %v5511, %v5511
      %v5544 = vpack.c.b16 %v5512, %v5512
      %v5545 = vpack.c.b16 %v5513, %v5513
      %v5546 = vpack.c.b16 %v5514, %v5514
      %v5548 = vshrl.u32 %v5515, 16
      %v5550 = vrot.slane %v5548, 7
      %v5551 = vshll.u32 %v5515, 16
      %v5553 = vor.u32 %v5550, %v5551
      %v5554 = vrot.slane %v5550, 4
      %v5556 = vshrl.u32 %v5516, 16
      %v5558 = vrot.slane %v5556, 7
      %v5559 = vshll.u32 %v5516, 16
      %v5561 = vor.u32 %v5558, %v5559
      %v5562 = vsel %vm1347, %v5554, %v5561
      %v5563 = vrot.slane %v5558, 4
      %v5565 = vshrl.u32 %v5517, 16
      %v5567 = vrot.slane %v5565, 7
      %v5568 = vshll.u32 %v5517, 16
      %v5570 = vor.u32 %v5567, %v5568
      %v5571 = vrot.slane %v5567, 4
      %v5573 = vshrl.u32 %v5518, 16
      %v5575 = vrot.slane %v5573, 7
      %v5576 = vshll.u32 %v5518, 16
      %v5578 = vor.u32 %v5575, %v5576
      %v5579 = vsel %vm1347, %v5571, %v5578
      %v5580 = vrot.slane %v5575, 4
      %v5582 = vshrl.u32 %v5519, 16
      %v5584 = vrot.slane %v5582, 7
      %v5585 = vshll.u32 %v5519, 16
      %v5587 = vor.u32 %v5584, %v5585
      %v5588 = vrot.slane %v5584, 4
      %v5590 = vshrl.u32 %v5520, 16
      %v5592 = vrot.slane %v5590, 7
      %v5593 = vshll.u32 %v5520, 16
      %v5595 = vor.u32 %v5592, %v5593
      %v5596 = vsel %vm1347, %v5588, %v5595
      %v5597 = vrot.slane %v5592, 4
      %v5599 = vshrl.u32 %v5521, 16
      %v5601 = vrot.slane %v5599, 7
      %v5602 = vshll.u32 %v5521, 16
      %v5604 = vor.u32 %v5601, %v5602
      %v5605 = vrot.slane %v5601, 4
      %v5607 = vshrl.u32 %v5522, 16
      %v5609 = vrot.slane %v5607, 7
      %v5610 = vshll.u32 %v5522, 16
      %v5612 = vor.u32 %v5609, %v5610
      %v5613 = vsel %vm1347, %v5605, %v5612
      %v5614 = vrot.slane %v5609, 4
      %v5616 = vshrl.u32 %v5523, 16
      %v5618 = vrot.slane %v5616, 7
      %v5619 = vshll.u32 %v5523, 16
      %v5621 = vor.u32 %v5618, %v5619
      %v5622 = vrot.slane %v5618, 4
      %v5624 = vshrl.u32 %v5524, 16
      %v5626 = vrot.slane %v5624, 7
      %v5627 = vshll.u32 %v5524, 16
      %v5629 = vor.u32 %v5626, %v5627
      %v5630 = vsel %vm1347, %v5622, %v5629
      %v5631 = vrot.slane %v5626, 4
      %v5633 = vshrl.u32 %v5525, 16
      %v5635 = vrot.slane %v5633, 7
      %v5636 = vshll.u32 %v5525, 16
      %v5638 = vor.u32 %v5635, %v5636
      %v5639 = vrot.slane %v5635, 4
      %v5641 = vshrl.u32 %v5526, 16
      %v5643 = vrot.slane %v5641, 7
      %v5644 = vshll.u32 %v5526, 16
      %v5646 = vor.u32 %v5643, %v5644
      %v5647 = vsel %vm1347, %v5639, %v5646
      %v5648 = vrot.slane %v5643, 4
      %v5650 = vshrl.u32 %v5527, 16
      %v5652 = vrot.slane %v5650, 7
      %v5653 = vshll.u32 %v5527, 16
      %v5655 = vor.u32 %v5652, %v5653
      %v5656 = vrot.slane %v5652, 4
      %v5658 = vshrl.u32 %v5528, 16
      %v5660 = vrot.slane %v5658, 7
      %v5661 = vshll.u32 %v5528, 16
      %v5663 = vor.u32 %v5660, %v5661
      %v5664 = vsel %vm1347, %v5656, %v5663
      %v5665 = vrot.slane %v5660, 4
      %v5667 = vshrl.u32 %v5529, 16
      %v5669 = vrot.slane %v5667, 7
      %v5670 = vshll.u32 %v5529, 16
      %v5672 = vor.u32 %v5669, %v5670
      %v5673 = vrot.slane %v5669, 4
      %v5675 = vshrl.u32 %v5530, 16
      %v5677 = vrot.slane %v5675, 7
      %v5678 = vshll.u32 %v5530, 16
      %v5680 = vor.u32 %v5677, %v5678
      %v5681 = vsel %vm1347, %v5673, %v5680
      %v5682 = vrot.slane %v5677, 4
      %v5684 = vshrl.u32 %v5531, 16
      %v5686 = vrot.slane %v5684, 7
      %v5687 = vshll.u32 %v5531, 16
      %v5689 = vor.u32 %v5686, %v5687
      %v5690 = vrot.slane %v5686, 4
      %v5692 = vshrl.u32 %v5532, 16
      %v5694 = vrot.slane %v5692, 7
      %v5695 = vshll.u32 %v5532, 16
      %v5697 = vor.u32 %v5694, %v5695
      %v5698 = vsel %vm1347, %v5690, %v5697
      %v5699 = vrot.slane %v5694, 4
      %v5701 = vshrl.u32 %v5533, 16
      %v5703 = vrot.slane %v5701, 7
      %v5704 = vshll.u32 %v5533, 16
      %v5706 = vor.u32 %v5703, %v5704
      %v5707 = vrot.slane %v5703, 4
      %v5709 = vshrl.u32 %v5534, 16
      %v5711 = vrot.slane %v5709, 7
      %v5712 = vshll.u32 %v5534, 16
      %v5714 = vor.u32 %v5711, %v5712
      %v5715 = vsel %vm1347, %v5707, %v5714
      %v5716 = vrot.slane %v5711, 4
      %v5718 = vshrl.u32 %v5535, 16
      %v5720 = vrot.slane %v5718, 7
      %v5721 = vshll.u32 %v5535, 16
      %v5723 = vor.u32 %v5720, %v5721
      %v5724 = vrot.slane %v5720, 4
      %v5726 = vshrl.u32 %v5536, 16
      %v5728 = vrot.slane %v5726, 7
      %v5729 = vshll.u32 %v5536, 16
      %v5731 = vor.u32 %v5728, %v5729
      %v5732 = vsel %vm1347, %v5724, %v5731
      %v5733 = vrot.slane %v5728, 4
      %v5735 = vshrl.u32 %v5537, 16
      %v5737 = vrot.slane %v5735, 7
      %v5738 = vshll.u32 %v5537, 16
      %v5740 = vor.u32 %v5737, %v5738
      %v5741 = vrot.slane %v5737, 4
      %v5743 = vshrl.u32 %v5538, 16
      %v5745 = vrot.slane %v5743, 7
      %v5746 = vshll.u32 %v5538, 16
      %v5748 = vor.u32 %v5745, %v5746
      %v5749 = vsel %vm1347, %v5741, %v5748
      %v5750 = vrot.slane %v5745, 4
      %v5752 = vshrl.u32 %v5539, 16
      %v5754 = vrot.slane %v5752, 7
      %v5755 = vshll.u32 %v5539, 16
      %v5757 = vor.u32 %v5754, %v5755
      %v5758 = vrot.slane %v5754, 4
      %v5760 = vshrl.u32 %v5540, 16
      %v5762 = vrot.slane %v5760, 7
      %v5763 = vshll.u32 %v5540, 16
      %v5765 = vor.u32 %v5762, %v5763
      %v5766 = vsel %vm1347, %v5758, %v5765
      %v5767 = vrot.slane %v5762, 4
      %v5769 = vshrl.u32 %v5541, 16
      %v5771 = vrot.slane %v5769, 7
      %v5772 = vshll.u32 %v5541, 16
      %v5774 = vor.u32 %v5771, %v5772
      %v5775 = vrot.slane %v5771, 4
      %v5777 = vshrl.u32 %v5542, 16
      %v5779 = vrot.slane %v5777, 7
      %v5780 = vshll.u32 %v5542, 16
      %v5782 = vor.u32 %v5779, %v5780
      %v5783 = vsel %vm1347, %v5775, %v5782
      %v5784 = vrot.slane %v5779, 4
      %v5786 = vshrl.u32 %v5543, 16
      %v5788 = vrot.slane %v5786, 7
      %v5789 = vshll.u32 %v5543, 16
      %v5791 = vor.u32 %v5788, %v5789
      %v5792 = vrot.slane %v5788, 4
      %v5794 = vshrl.u32 %v5544, 16
      %v5796 = vrot.slane %v5794, 7
      %v5797 = vshll.u32 %v5544, 16
      %v5799 = vor.u32 %v5796, %v5797
      %v5800 = vsel %vm1347, %v5792, %v5799
      %v5801 = vrot.slane %v5796, 4
      %v5803 = vshrl.u32 %v5545, 16
      %v5805 = vrot.slane %v5803, 7
      %v5806 = vshll.u32 %v5545, 16
      %v5808 = vor.u32 %v5805, %v5806
      %v5809 = vrot.slane %v5805, 4
      %v5811 = vshrl.u32 %v5546, 16
      %v5813 = vrot.slane %v5811, 7
      %v5814 = vshll.u32 %v5546, 16
      %v5816 = vor.u32 %v5813, %v5814
      %v5817 = vsel %vm1347, %v5809, %v5816
      %v5818 = vrot.slane %v5813, 4
      %v5867 = vld [vmem:[%s1670] sm:$0xf]
      %v5868 = vsel %vm1672, %v5553, %v5867
      %5869 = vst [vmem:[%s1670] sm:$0xf] %v5868
      %5870 = vst.msk [vmem:[%s1670 + $0x4] sm:$0xf] %vm702, %v5562
      %v5871 = vld [vmem:[%s1670 + $0x8] sm:$0x1]
      %v5872 = vsel %vm714, %v5563, %v5871
      %5873 = vst [vmem:[%s1670 + $0x8] sm:$0x1] %v5872
      %v5874 = vld [vmem:[%s1670 + $0xc] sm:$0xf]
      %v5875 = vsel %vm1672, %v5570, %v5874
      %5876 = vst [vmem:[%s1670 + $0xc] sm:$0xf] %v5875
      %5877 = vst.msk [vmem:[%s1670 + $0x10] sm:$0xf] %vm702, %v5579
      %v5878 = vld [vmem:[%s1670 + $0x14] sm:$0x1]
      %v5879 = vsel %vm714, %v5580, %v5878
      %5880 = vst [vmem:[%s1670 + $0x14] sm:$0x1] %v5879
      %v5881 = vld [vmem:[%s1670 + $0x18] sm:$0xf]
      %v5882 = vsel %vm1672, %v5587, %v5881
      %5883 = vst [vmem:[%s1670 + $0x18] sm:$0xf] %v5882
      %5884 = vst.msk [vmem:[%s1670 + $0x1c] sm:$0xf] %vm702, %v5596
      %v5885 = vld [vmem:[%s1670 + $0x20] sm:$0x1]
      %v5886 = vsel %vm714, %v5597, %v5885
      %5887 = vst [vmem:[%s1670 + $0x20] sm:$0x1] %v5886
      %v5888 = vld [vmem:[%s1670 + $0x24] sm:$0xf]
      %v5889 = vsel %vm1672, %v5604, %v5888
      %5890 = vst [vmem:[%s1670 + $0x24] sm:$0xf] %v5889
      %5891 = vst.msk [vmem:[%s1670 + $0x28] sm:$0xf] %vm702, %v5613
      %v5892 = vld [vmem:[%s1670 + $0x2c] sm:$0x1]
      %v5893 = vsel %vm714, %v5614, %v5892
      %5894 = vst [vmem:[%s1670 + $0x2c] sm:$0x1] %v5893
      %v5895 = vld [vmem:[%s1670 + $0x30] sm:$0xf]
      %v5896 = vsel %vm1672, %v5621, %v5895
      %5897 = vst [vmem:[%s1670 + $0x30] sm:$0xf] %v5896
      %5898 = vst.msk [vmem:[%s1670 + $0x34] sm:$0xf] %vm702, %v5630
      %v5899 = vld [vmem:[%s1670 + $0x38] sm:$0x1]
      %v5900 = vsel %vm714, %v5631, %v5899
      %5901 = vst [vmem:[%s1670 + $0x38] sm:$0x1] %v5900
      %v5902 = vld [vmem:[%s1670 + $0x3c] sm:$0xf]
      %v5903 = vsel %vm1672, %v5638, %v5902
      %5904 = vst [vmem:[%s1670 + $0x3c] sm:$0xf] %v5903
      %5905 = vst.msk [vmem:[%s1670 + $0x40] sm:$0xf] %vm702, %v5647
      %v5906 = vld [vmem:[%s1670 + $0x44] sm:$0x1]
      %v5907 = vsel %vm714, %v5648, %v5906
      %5908 = vst [vmem:[%s1670 + $0x44] sm:$0x1] %v5907
      %v5909 = vld [vmem:[%s1670 + $0x48] sm:$0xf]
      %v5910 = vsel %vm1672, %v5655, %v5909
      %5911 = vst [vmem:[%s1670 + $0x48] sm:$0xf] %v5910
      %5912 = vst.msk [vmem:[%s1670 + $0x4c] sm:$0xf] %vm702, %v5664
      %v5913 = vld [vmem:[%s1670 + $0x50] sm:$0x1]
      %v5914 = vsel %vm714, %v5665, %v5913
      %5915 = vst [vmem:[%s1670 + $0x50] sm:$0x1] %v5914
      %v5916 = vld [vmem:[%s1670 + $0x54] sm:$0xf]
      %v5917 = vsel %vm1672, %v5672, %v5916
      %5918 = vst [vmem:[%s1670 + $0x54] sm:$0xf] %v5917
      %5919 = vst.msk [vmem:[%s1670 + $0x58] sm:$0xf] %vm702, %v5681
      %v5920 = vld [vmem:[%s1670 + $0x5c] sm:$0x1]
      %v5921 = vsel %vm714, %v5682, %v5920
      %5922 = vst [vmem:[%s1670 + $0x5c] sm:$0x1] %v5921
      %v5923 = vld [vmem:[%s1670 + $0x60] sm:$0xf]
      %v5924 = vsel %vm1672, %v5689, %v5923
      %5925 = vst [vmem:[%s1670 + $0x60] sm:$0xf] %v5924
      %5926 = vst.msk [vmem:[%s1670 + $0x64] sm:$0xf] %vm702, %v5698
      %v5927 = vld [vmem:[%s1670 + $0x68] sm:$0x1]
      %v5928 = vsel %vm714, %v5699, %v5927
      %5929 = vst [vmem:[%s1670 + $0x68] sm:$0x1] %v5928
      %v5930 = vld [vmem:[%s1670 + $0x6c] sm:$0xf]
      %v5931 = vsel %vm1672, %v5706, %v5930
      %5932 = vst [vmem:[%s1670 + $0x6c] sm:$0xf] %v5931
      %5933 = vst.msk [vmem:[%s1670 + $0x70] sm:$0xf] %vm702, %v5715
      %v5934 = vld [vmem:[%s1670 + $0x74] sm:$0x1]
      %v5935 = vsel %vm714, %v5716, %v5934
      %5936 = vst [vmem:[%s1670 + $0x74] sm:$0x1] %v5935
      %v5937 = vld [vmem:[%s1670 + $0x78] sm:$0xf]
      %v5938 = vsel %vm1672, %v5723, %v5937
      %5939 = vst [vmem:[%s1670 + $0x78] sm:$0xf] %v5938
      %5940 = vst.msk [vmem:[%s1670 + $0x7c] sm:$0xf] %vm702, %v5732
      %v5941 = vld [vmem:[%s1670 + $0x80] sm:$0x1]
      %v5942 = vsel %vm714, %v5733, %v5941
      %5943 = vst [vmem:[%s1670 + $0x80] sm:$0x1] %v5942
      %v5944 = vld [vmem:[%s1670 + $0x84] sm:$0xf]
      %v5945 = vsel %vm1672, %v5740, %v5944
      %5946 = vst [vmem:[%s1670 + $0x84] sm:$0xf] %v5945
      %5947 = vst.msk [vmem:[%s1670 + $0x88] sm:$0xf] %vm702, %v5749
      %v5948 = vld [vmem:[%s1670 + $0x8c] sm:$0x1]
      %v5949 = vsel %vm714, %v5750, %v5948
      %5950 = vst [vmem:[%s1670 + $0x8c] sm:$0x1] %v5949
      %v5951 = vld [vmem:[%s1670 + $0x90] sm:$0xf]
      %v5952 = vsel %vm1672, %v5757, %v5951
      %5953 = vst [vmem:[%s1670 + $0x90] sm:$0xf] %v5952
      %5954 = vst.msk [vmem:[%s1670 + $0x94] sm:$0xf] %vm702, %v5766
      %v5955 = vld [vmem:[%s1670 + $0x98] sm:$0x1]
      %v5956 = vsel %vm714, %v5767, %v5955
      %5957 = vst [vmem:[%s1670 + $0x98] sm:$0x1] %v5956
      %v5958 = vld [vmem:[%s1670 + $0x9c] sm:$0xf]
      %v5959 = vsel %vm1672, %v5774, %v5958
      %5960 = vst [vmem:[%s1670 + $0x9c] sm:$0xf] %v5959
      %5961 = vst.msk [vmem:[%s1670 + $0xa0] sm:$0xf] %vm702, %v5783
      %v5962 = vld [vmem:[%s1670 + $0xa4] sm:$0x1]
      %v5963 = vsel %vm714, %v5784, %v5962
      %5964 = vst [vmem:[%s1670 + $0xa4] sm:$0x1] %v5963
      %v5965 = vld [vmem:[%s1670 + $0xa8] sm:$0xf]
      %v5966 = vsel %vm1672, %v5791, %v5965
      %5967 = vst [vmem:[%s1670 + $0xa8] sm:$0xf] %v5966
      %5968 = vst.msk [vmem:[%s1670 + $0xac] sm:$0xf] %vm702, %v5800
      %v5969 = vld [vmem:[%s1670 + $0xb0] sm:$0x1]
      %v5970 = vsel %vm714, %v5801, %v5969
      %5971 = vst [vmem:[%s1670 + $0xb0] sm:$0x1] %v5970
      %v5972 = vld [vmem:[%s1670 + $0xb4] sm:$0xf]
      %v5973 = vsel %vm1672, %v5808, %v5972
      %5974 = vst [vmem:[%s1670 + $0xb4] sm:$0xf] %v5973
      %5975 = vst.msk [vmem:[%s1670 + $0xb8] sm:$0xf] %vm702, %v5817
      %v5976 = vld [vmem:[%s1670 + $0xbc] sm:$0x1]
      %v5977 = vsel %vm714, %v5818, %v5976
      %5978 = vst [vmem:[%s1670 + $0xbc] sm:$0x1] %v5977
      %v5979 = vld [vmem:[%s1787] sm:$0xf]
      %v5980 = vld [vmem:[%s1787 + $0x4] sm:$0xf]
      %v5981 = vld [vmem:[%s1787 + $0xc] sm:$0xf]
      %v5982 = vld [vmem:[%s1787 + $0x10] sm:$0xf]
      %v5983 = vld [vmem:[%s1787 + $0x18] sm:$0xf]
      %v5984 = vld [vmem:[%s1787 + $0x1c] sm:$0xf]
      %v5985 = vld [vmem:[%s1787 + $0x24] sm:$0xf]
      %v5986 = vld [vmem:[%s1787 + $0x28] sm:$0xf]
      %v5987 = vld [vmem:[%s1787 + $0x30] sm:$0xf]
      %v5988 = vld [vmem:[%s1787 + $0x34] sm:$0xf]
      %v5989 = vld [vmem:[%s1787 + $0x3c] sm:$0xf]
      %v5990 = vld [vmem:[%s1787 + $0x40] sm:$0xf]
      %v5991 = vld [vmem:[%s1787 + $0x48] sm:$0xf]
      %v5992 = vld [vmem:[%s1787 + $0x4c] sm:$0xf]
      %v5993 = vld [vmem:[%s1787 + $0x54] sm:$0xf]
      %v5994 = vld [vmem:[%s1787 + $0x58] sm:$0xf]
      %v5995 = vld [vmem:[%s1787 + $0x60] sm:$0xf]
      %v5996 = vld [vmem:[%s1787 + $0x64] sm:$0xf]
      %v5997 = vld [vmem:[%s1787 + $0x6c] sm:$0xf]
      %v5998 = vld [vmem:[%s1787 + $0x70] sm:$0xf]
      %v5999 = vld [vmem:[%s1787 + $0x78] sm:$0xf]
      %v6000 = vld [vmem:[%s1787 + $0x7c] sm:$0xf]
      %v6001 = vld [vmem:[%s1787 + $0x84] sm:$0xf]
      %v6002 = vld [vmem:[%s1787 + $0x88] sm:$0xf]
      %v6003 = vld [vmem:[%s1787 + $0x90] sm:$0xf]
      %v6004 = vld [vmem:[%s1787 + $0x94] sm:$0xf]
      %v6005 = vld [vmem:[%s1787 + $0x9c] sm:$0xf]
      %v6006 = vld [vmem:[%s1787 + $0xa0] sm:$0xf]
      %v6007 = vld [vmem:[%s1787 + $0xa8] sm:$0xf]
      %v6008 = vld [vmem:[%s1787 + $0xac] sm:$0xf]
      %v6009 = vld [vmem:[%s1787 + $0xb4] sm:$0xf]
      %v6010 = vld [vmem:[%s1787 + $0xb8] sm:$0xf]
      %v6011 = vld [vmem:[%s1787 + $0x8] sm:$0x1]
      %v6012 = vld [vmem:[%s1787 + $0x14] sm:$0x1]
      %v6013 = vld [vmem:[%s1787 + $0x20] sm:$0x1]
      %v6014 = vld [vmem:[%s1787 + $0x2c] sm:$0x1]
      %v6015 = vld [vmem:[%s1787 + $0x38] sm:$0x1]
      %v6016 = vld [vmem:[%s1787 + $0x44] sm:$0x1]
      %v6017 = vld [vmem:[%s1787 + $0x50] sm:$0x1]
      %v6018 = vld [vmem:[%s1787 + $0x5c] sm:$0x1]
      %v6019 = vld [vmem:[%s1787 + $0x68] sm:$0x1]
      %v6020 = vld [vmem:[%s1787 + $0x74] sm:$0x1]
      %v6021 = vld [vmem:[%s1787 + $0x80] sm:$0x1]
      %v6022 = vld [vmem:[%s1787 + $0x8c] sm:$0x1]
      %v6023 = vld [vmem:[%s1787 + $0x98] sm:$0x1]
      %v6024 = vld [vmem:[%s1787 + $0xa4] sm:$0x1]
      %v6025 = vld [vmem:[%s1787 + $0xb0] sm:$0x1]
      %v6026 = vld [vmem:[%s1787 + $0xbc] sm:$0x1]
      %v6028 = vshrl.u32 %v5979, 16
      %v6030 = vrot.slane %v6028, 4
      %v6031 = vshll.u32 %v5979, 16
      %v6033 = vrot.slane %v6031, 5
      %v6034 = vor.u32 %v6030, %v6033
      %v6035 = vrot.slane %v6034, 4
      %v6037 = vshll.u32 %v5980, 16
      %v6039 = vrot.slane %v6037, 5
      %v6040 = vsel %vm1838, %v6035, %v6039
      %v6041 = vshrl.u32 %v5980, 16
      %v6043 = vrot.slane %v6041, 4
      %v6044 = vor.u32 %v6043, %v6039
      %v6045 = vrot.slane %v6044, 4
      %v6047 = vshll.u32 %v6011, 16
      %v6049 = vrot.slane %v6047, 5
      %v6050 = vsel %vm1838, %v6045, %v6049
      %v6052 = vshrl.u32 %v5981, 16
      %v6054 = vrot.slane %v6052, 4
      %v6055 = vshll.u32 %v5981, 16
      %v6057 = vrot.slane %v6055, 5
      %v6058 = vor.u32 %v6054, %v6057
      %v6059 = vrot.slane %v6058, 4
      %v6061 = vshll.u32 %v5982, 16
      %v6063 = vrot.slane %v6061, 5
      %v6064 = vsel %vm1838, %v6059, %v6063
      %v6065 = vshrl.u32 %v5982, 16
      %v6067 = vrot.slane %v6065, 4
      %v6068 = vor.u32 %v6067, %v6063
      %v6069 = vrot.slane %v6068, 4
      %v6071 = vshll.u32 %v6012, 16
      %v6073 = vrot.slane %v6071, 5
      %v6074 = vsel %vm1838, %v6069, %v6073
      %v6076 = vshrl.u32 %v5983, 16
      %v6078 = vrot.slane %v6076, 4
      %v6079 = vshll.u32 %v5983, 16
      %v6081 = vrot.slane %v6079, 5
      %v6082 = vor.u32 %v6078, %v6081
      %v6083 = vrot.slane %v6082, 4
      %v6085 = vshll.u32 %v5984, 16
      %v6087 = vrot.slane %v6085, 5
      %v6088 = vsel %vm1838, %v6083, %v6087
      %v6089 = vshrl.u32 %v5984, 16
      %v6091 = vrot.slane %v6089, 4
      %v6092 = vor.u32 %v6091, %v6087
      %v6093 = vrot.slane %v6092, 4
      %v6095 = vshll.u32 %v6013, 16
      %v6097 = vrot.slane %v6095, 5
      %v6098 = vsel %vm1838, %v6093, %v6097
      %v6100 = vshrl.u32 %v5985, 16
      %v6102 = vrot.slane %v6100, 4
      %v6103 = vshll.u32 %v5985, 16
      %v6105 = vrot.slane %v6103, 5
      %v6106 = vor.u32 %v6102, %v6105
      %v6107 = vrot.slane %v6106, 4
      %v6109 = vshll.u32 %v5986, 16
      %v6111 = vrot.slane %v6109, 5
      %v6112 = vsel %vm1838, %v6107, %v6111
      %v6113 = vshrl.u32 %v5986, 16
      %v6115 = vrot.slane %v6113, 4
      %v6116 = vor.u32 %v6115, %v6111
      %v6117 = vrot.slane %v6116, 4
      %v6119 = vshll.u32 %v6014, 16
      %v6121 = vrot.slane %v6119, 5
      %v6122 = vsel %vm1838, %v6117, %v6121
      %v6124 = vshrl.u32 %v5987, 16
      %v6126 = vrot.slane %v6124, 4
      %v6127 = vshll.u32 %v5987, 16
      %v6129 = vrot.slane %v6127, 5
      %v6130 = vor.u32 %v6126, %v6129
      %v6131 = vrot.slane %v6130, 4
      %v6133 = vshll.u32 %v5988, 16
      %v6135 = vrot.slane %v6133, 5
      %v6136 = vsel %vm1838, %v6131, %v6135
      %v6137 = vshrl.u32 %v5988, 16
      %v6139 = vrot.slane %v6137, 4
      %v6140 = vor.u32 %v6139, %v6135
      %v6141 = vrot.slane %v6140, 4
      %v6143 = vshll.u32 %v6015, 16
      %v6145 = vrot.slane %v6143, 5
      %v6146 = vsel %vm1838, %v6141, %v6145
      %v6148 = vshrl.u32 %v5989, 16
      %v6150 = vrot.slane %v6148, 4
      %v6151 = vshll.u32 %v5989, 16
      %v6153 = vrot.slane %v6151, 5
      %v6154 = vor.u32 %v6150, %v6153
      %v6155 = vrot.slane %v6154, 4
      %v6157 = vshll.u32 %v5990, 16
      %v6159 = vrot.slane %v6157, 5
      %v6160 = vsel %vm1838, %v6155, %v6159
      %v6161 = vshrl.u32 %v5990, 16
      %v6163 = vrot.slane %v6161, 4
      %v6164 = vor.u32 %v6163, %v6159
      %v6165 = vrot.slane %v6164, 4
      %v6167 = vshll.u32 %v6016, 16
      %v6169 = vrot.slane %v6167, 5
      %v6170 = vsel %vm1838, %v6165, %v6169
      %v6172 = vshrl.u32 %v5991, 16
      %v6174 = vrot.slane %v6172, 4
      %v6175 = vshll.u32 %v5991, 16
      %v6177 = vrot.slane %v6175, 5
      %v6178 = vor.u32 %v6174, %v6177
      %v6179 = vrot.slane %v6178, 4
      %v6181 = vshll.u32 %v5992, 16
      %v6183 = vrot.slane %v6181, 5
      %v6184 = vsel %vm1838, %v6179, %v6183
      %v6185 = vshrl.u32 %v5992, 16
      %v6187 = vrot.slane %v6185, 4
      %v6188 = vor.u32 %v6187, %v6183
      %v6189 = vrot.slane %v6188, 4
      %v6191 = vshll.u32 %v6017, 16
      %v6193 = vrot.slane %v6191, 5
      %v6194 = vsel %vm1838, %v6189, %v6193
      %v6196 = vshrl.u32 %v5993, 16
      %v6198 = vrot.slane %v6196, 4
      %v6199 = vshll.u32 %v5993, 16
      %v6201 = vrot.slane %v6199, 5
      %v6202 = vor.u32 %v6198, %v6201
      %v6203 = vrot.slane %v6202, 4
      %v6205 = vshll.u32 %v5994, 16
      %v6207 = vrot.slane %v6205, 5
      %v6208 = vsel %vm1838, %v6203, %v6207
      %v6209 = vshrl.u32 %v5994, 16
      %v6211 = vrot.slane %v6209, 4
      %v6212 = vor.u32 %v6211, %v6207
      %v6213 = vrot.slane %v6212, 4
      %v6215 = vshll.u32 %v6018, 16
      %v6217 = vrot.slane %v6215, 5
      %v6218 = vsel %vm1838, %v6213, %v6217
      %v6220 = vshrl.u32 %v5995, 16
      %v6222 = vrot.slane %v6220, 4
      %v6223 = vshll.u32 %v5995, 16
      %v6225 = vrot.slane %v6223, 5
      %v6226 = vor.u32 %v6222, %v6225
      %v6227 = vrot.slane %v6226, 4
      %v6229 = vshll.u32 %v5996, 16
      %v6231 = vrot.slane %v6229, 5
      %v6232 = vsel %vm1838, %v6227, %v6231
      %v6233 = vshrl.u32 %v5996, 16
      %v6235 = vrot.slane %v6233, 4
      %v6236 = vor.u32 %v6235, %v6231
      %v6237 = vrot.slane %v6236, 4
      %v6239 = vshll.u32 %v6019, 16
      %v6241 = vrot.slane %v6239, 5
      %v6242 = vsel %vm1838, %v6237, %v6241
      %v6244 = vshrl.u32 %v5997, 16
      %v6246 = vrot.slane %v6244, 4
      %v6247 = vshll.u32 %v5997, 16
      %v6249 = vrot.slane %v6247, 5
      %v6250 = vor.u32 %v6246, %v6249
      %v6251 = vrot.slane %v6250, 4
      %v6253 = vshll.u32 %v5998, 16
      %v6255 = vrot.slane %v6253, 5
      %v6256 = vsel %vm1838, %v6251, %v6255
      %v6257 = vshrl.u32 %v5998, 16
      %v6259 = vrot.slane %v6257, 4
      %v6260 = vor.u32 %v6259, %v6255
      %v6261 = vrot.slane %v6260, 4
      %v6263 = vshll.u32 %v6020, 16
      %v6265 = vrot.slane %v6263, 5
      %v6266 = vsel %vm1838, %v6261, %v6265
      %v6268 = vshrl.u32 %v5999, 16
      %v6270 = vrot.slane %v6268, 4
      %v6271 = vshll.u32 %v5999, 16
      %v6273 = vrot.slane %v6271, 5
      %v6274 = vor.u32 %v6270, %v6273
      %v6275 = vrot.slane %v6274, 4
      %v6277 = vshll.u32 %v6000, 16
      %v6279 = vrot.slane %v6277, 5
      %v6280 = vsel %vm1838, %v6275, %v6279
      %v6281 = vshrl.u32 %v6000, 16
      %v6283 = vrot.slane %v6281, 4
      %v6284 = vor.u32 %v6283, %v6279
      %v6285 = vrot.slane %v6284, 4
      %v6287 = vshll.u32 %v6021, 16
      %v6289 = vrot.slane %v6287, 5
      %v6290 = vsel %vm1838, %v6285, %v6289
      %v6292 = vshrl.u32 %v6001, 16
      %v6294 = vrot.slane %v6292, 4
      %v6295 = vshll.u32 %v6001, 16
      %v6297 = vrot.slane %v6295, 5
      %v6298 = vor.u32 %v6294, %v6297
      %v6299 = vrot.slane %v6298, 4
      %v6301 = vshll.u32 %v6002, 16
      %v6303 = vrot.slane %v6301, 5
      %v6304 = vsel %vm1838, %v6299, %v6303
      %v6305 = vshrl.u32 %v6002, 16
      %v6307 = vrot.slane %v6305, 4
      %v6308 = vor.u32 %v6307, %v6303
      %v6309 = vrot.slane %v6308, 4
      %v6311 = vshll.u32 %v6022, 16
      %v6313 = vrot.slane %v6311, 5
      %v6314 = vsel %vm1838, %v6309, %v6313
      %v6316 = vshrl.u32 %v6003, 16
      %v6318 = vrot.slane %v6316, 4
      %v6319 = vshll.u32 %v6003, 16
      %v6321 = vrot.slane %v6319, 5
      %v6322 = vor.u32 %v6318, %v6321
      %v6323 = vrot.slane %v6322, 4
      %v6325 = vshll.u32 %v6004, 16
      %v6327 = vrot.slane %v6325, 5
      %v6328 = vsel %vm1838, %v6323, %v6327
      %v6329 = vshrl.u32 %v6004, 16
      %v6331 = vrot.slane %v6329, 4
      %v6332 = vor.u32 %v6331, %v6327
      %v6333 = vrot.slane %v6332, 4
      %v6335 = vshll.u32 %v6023, 16
      %v6337 = vrot.slane %v6335, 5
      %v6338 = vsel %vm1838, %v6333, %v6337
      %v6340 = vshrl.u32 %v6005, 16
      %v6342 = vrot.slane %v6340, 4
      %v6343 = vshll.u32 %v6005, 16
      %v6345 = vrot.slane %v6343, 5
      %v6346 = vor.u32 %v6342, %v6345
      %v6347 = vrot.slane %v6346, 4
      %v6349 = vshll.u32 %v6006, 16
      %v6351 = vrot.slane %v6349, 5
      %v6352 = vsel %vm1838, %v6347, %v6351
      %v6353 = vshrl.u32 %v6006, 16
      %v6355 = vrot.slane %v6353, 4
      %v6356 = vor.u32 %v6355, %v6351
      %v6357 = vrot.slane %v6356, 4
      %v6359 = vshll.u32 %v6024, 16
      %v6361 = vrot.slane %v6359, 5
      %v6362 = vsel %vm1838, %v6357, %v6361
      %v6364 = vshrl.u32 %v6007, 16
      %v6366 = vrot.slane %v6364, 4
      %v6367 = vshll.u32 %v6007, 16
      %v6369 = vrot.slane %v6367, 5
      %v6370 = vor.u32 %v6366, %v6369
      %v6371 = vrot.slane %v6370, 4
      %v6373 = vshll.u32 %v6008, 16
      %v6375 = vrot.slane %v6373, 5
      %v6376 = vsel %vm1838, %v6371, %v6375
      %v6377 = vshrl.u32 %v6008, 16
      %v6379 = vrot.slane %v6377, 4
      %v6380 = vor.u32 %v6379, %v6375
      %v6381 = vrot.slane %v6380, 4
      %v6383 = vshll.u32 %v6025, 16
      %v6385 = vrot.slane %v6383, 5
      %v6386 = vsel %vm1838, %v6381, %v6385
      %v6388 = vshrl.u32 %v6009, 16
      %v6390 = vrot.slane %v6388, 4
      %v6391 = vshll.u32 %v6009, 16
      %v6393 = vrot.slane %v6391, 5
      %v6394 = vor.u32 %v6390, %v6393
      %v6395 = vrot.slane %v6394, 4
      %v6397 = vshll.u32 %v6010, 16
      %v6399 = vrot.slane %v6397, 5
      %v6400 = vsel %vm1838, %v6395, %v6399
      %v6401 = vshrl.u32 %v6010, 16
      %v6403 = vrot.slane %v6401, 4
      %v6404 = vor.u32 %v6403, %v6399
      %v6405 = vrot.slane %v6404, 4
      %v6407 = vshll.u32 %v6026, 16
      %v6409 = vrot.slane %v6407, 5
      %v6410 = vsel %vm1838, %v6405, %v6409
      %v6411 = vld [vmem:[%s1787] sm:$0xe]
      %v6412 = vld [vmem:[%s1787 + $0xc] sm:$0xe]
      %v6413 = vld [vmem:[%s1787 + $0x18] sm:$0xe]
      %v6414 = vld [vmem:[%s1787 + $0x24] sm:$0xe]
      %v6415 = vld [vmem:[%s1787 + $0x30] sm:$0xe]
      %v6416 = vld [vmem:[%s1787 + $0x3c] sm:$0xe]
      %v6417 = vld [vmem:[%s1787 + $0x48] sm:$0xe]
      %v6418 = vld [vmem:[%s1787 + $0x54] sm:$0xe]
      %v6419 = vld [vmem:[%s1787 + $0x60] sm:$0xe]
      %v6420 = vld [vmem:[%s1787 + $0x6c] sm:$0xe]
      %v6421 = vld [vmem:[%s1787 + $0x78] sm:$0xe]
      %v6422 = vld [vmem:[%s1787 + $0x84] sm:$0xe]
      %v6423 = vld [vmem:[%s1787 + $0x90] sm:$0xe]
      %v6424 = vld [vmem:[%s1787 + $0x9c] sm:$0xe]
      %v6425 = vld [vmem:[%s1787 + $0xa8] sm:$0xe]
      %v6426 = vld [vmem:[%s1787 + $0xb4] sm:$0xe]
      %v6475 = vrot.slane %v6411, 5
      %v6476 = vrot.slane %v6475, 4
      %v6477 = vrot.slane %v5980, 5
      %v6478 = vsel %vm2289, %v6476, %v6477
      %v6479 = vrot.slane %v6477, 4
      %v6480 = vrot.slane %v6011, 5
      %v6481 = vsel %vm2289, %v6479, %v6480
      %v6482 = vrot.slane %v6412, 5
      %v6483 = vrot.slane %v6482, 4
      %v6484 = vrot.slane %v5982, 5
      %v6485 = vsel %vm2289, %v6483, %v6484
      %v6486 = vrot.slane %v6484, 4
      %v6487 = vrot.slane %v6012, 5
      %v6488 = vsel %vm2289, %v6486, %v6487
      %v6489 = vrot.slane %v6413, 5
      %v6490 = vrot.slane %v6489, 4
      %v6491 = vrot.slane %v5984, 5
      %v6492 = vsel %vm2289, %v6490, %v6491
      %v6493 = vrot.slane %v6491, 4
      %v6494 = vrot.slane %v6013, 5
      %v6495 = vsel %vm2289, %v6493, %v6494
      %v6496 = vrot.slane %v6414, 5
      %v6497 = vrot.slane %v6496, 4
      %v6498 = vrot.slane %v5986, 5
      %v6499 = vsel %vm2289, %v6497, %v6498
      %v6500 = vrot.slane %v6498, 4
      %v6501 = vrot.slane %v6014, 5
      %v6502 = vsel %vm2289, %v6500, %v6501
      %v6503 = vrot.slane %v6415, 5
      %v6504 = vrot.slane %v6503, 4
      %v6505 = vrot.slane %v5988, 5
      %v6506 = vsel %vm2289, %v6504, %v6505
      %v6507 = vrot.slane %v6505, 4
      %v6508 = vrot.slane %v6015, 5
      %v6509 = vsel %vm2289, %v6507, %v6508
      %v6510 = vrot.slane %v6416, 5
      %v6511 = vrot.slane %v6510, 4
      %v6512 = vrot.slane %v5990, 5
      %v6513 = vsel %vm2289, %v6511, %v6512
      %v6514 = vrot.slane %v6512, 4
      %v6515 = vrot.slane %v6016, 5
      %v6516 = vsel %vm2289, %v6514, %v6515
      %v6517 = vrot.slane %v6417, 5
      %v6518 = vrot.slane %v6517, 4
      %v6519 = vrot.slane %v5992, 5
      %v6520 = vsel %vm2289, %v6518, %v6519
      %v6521 = vrot.slane %v6519, 4
      %v6522 = vrot.slane %v6017, 5
      %v6523 = vsel %vm2289, %v6521, %v6522
      %v6524 = vrot.slane %v6418, 5
      %v6525 = vrot.slane %v6524, 4
      %v6526 = vrot.slane %v5994, 5
      %v6527 = vsel %vm2289, %v6525, %v6526
      %v6528 = vrot.slane %v6526, 4
      %v6529 = vrot.slane %v6018, 5
      %v6530 = vsel %vm2289, %v6528, %v6529
      %v6531 = vrot.slane %v6419, 5
      %v6532 = vrot.slane %v6531, 4
      %v6533 = vrot.slane %v5996, 5
      %v6534 = vsel %vm2289, %v6532, %v6533
      %v6535 = vrot.slane %v6533, 4
      %v6536 = vrot.slane %v6019, 5
      %v6537 = vsel %vm2289, %v6535, %v6536
      %v6538 = vrot.slane %v6420, 5
      %v6539 = vrot.slane %v6538, 4
      %v6540 = vrot.slane %v5998, 5
      %v6541 = vsel %vm2289, %v6539, %v6540
      %v6542 = vrot.slane %v6540, 4
      %v6543 = vrot.slane %v6020, 5
      %v6544 = vsel %vm2289, %v6542, %v6543
      %v6545 = vrot.slane %v6421, 5
      %v6546 = vrot.slane %v6545, 4
      %v6547 = vrot.slane %v6000, 5
      %v6548 = vsel %vm2289, %v6546, %v6547
      %v6549 = vrot.slane %v6547, 4
      %v6550 = vrot.slane %v6021, 5
      %v6551 = vsel %vm2289, %v6549, %v6550
      %v6552 = vrot.slane %v6422, 5
      %v6553 = vrot.slane %v6552, 4
      %v6554 = vrot.slane %v6002, 5
      %v6555 = vsel %vm2289, %v6553, %v6554
      %v6556 = vrot.slane %v6554, 4
      %v6557 = vrot.slane %v6022, 5
      %v6558 = vsel %vm2289, %v6556, %v6557
      %v6559 = vrot.slane %v6423, 5
      %v6560 = vrot.slane %v6559, 4
      %v6561 = vrot.slane %v6004, 5
      %v6562 = vsel %vm2289, %v6560, %v6561
      %v6563 = vrot.slane %v6561, 4
      %v6564 = vrot.slane %v6023, 5
      %v6565 = vsel %vm2289, %v6563, %v6564
      %v6566 = vrot.slane %v6424, 5
      %v6567 = vrot.slane %v6566, 4
      %v6568 = vrot.slane %v6006, 5
      %v6569 = vsel %vm2289, %v6567, %v6568
      %v6570 = vrot.slane %v6568, 4
      %v6571 = vrot.slane %v6024, 5
      %v6572 = vsel %vm2289, %v6570, %v6571
      %v6573 = vrot.slane %v6425, 5
      %v6574 = vrot.slane %v6573, 4
      %v6575 = vrot.slane %v6008, 5
      %v6576 = vsel %vm2289, %v6574, %v6575
      %v6577 = vrot.slane %v6575, 4
      %v6578 = vrot.slane %v6025, 5
      %v6579 = vsel %vm2289, %v6577, %v6578
      %v6580 = vrot.slane %v6426, 5
      %v6581 = vrot.slane %v6580, 4
      %v6582 = vrot.slane %v6010, 5
      %v6583 = vsel %vm2289, %v6581, %v6582
      %v6584 = vrot.slane %v6582, 4
      %v6585 = vrot.slane %v6026, 5
      %v6586 = vsel %vm2289, %v6584, %v6585
      %v6587 = vld [vmem:[%s1670] sm:$0xf]
      %v6588 = vld [vmem:[%s1670 + $0x4] sm:$0xf]
      %v6589 = vld [vmem:[%s1670 + $0xc] sm:$0xf]
      %v6590 = vld [vmem:[%s1670 + $0x10] sm:$0xf]
      %v6591 = vld [vmem:[%s1670 + $0x18] sm:$0xf]
      %v6592 = vld [vmem:[%s1670 + $0x1c] sm:$0xf]
      %v6593 = vld [vmem:[%s1670 + $0x24] sm:$0xf]
      %v6594 = vld [vmem:[%s1670 + $0x28] sm:$0xf]
      %v6595 = vld [vmem:[%s1670 + $0x30] sm:$0xf]
      %v6596 = vld [vmem:[%s1670 + $0x34] sm:$0xf]
      %v6597 = vld [vmem:[%s1670 + $0x3c] sm:$0xf]
      %v6598 = vld [vmem:[%s1670 + $0x40] sm:$0xf]
      %v6599 = vld [vmem:[%s1670 + $0x48] sm:$0xf]
      %v6600 = vld [vmem:[%s1670 + $0x4c] sm:$0xf]
      %v6601 = vld [vmem:[%s1670 + $0x54] sm:$0xf]
      %v6602 = vld [vmem:[%s1670 + $0x58] sm:$0xf]
      %v6603 = vld [vmem:[%s1670 + $0x60] sm:$0xf]
      %v6604 = vld [vmem:[%s1670 + $0x64] sm:$0xf]
      %v6605 = vld [vmem:[%s1670 + $0x6c] sm:$0xf]
      %v6606 = vld [vmem:[%s1670 + $0x70] sm:$0xf]
      %v6607 = vld [vmem:[%s1670 + $0x78] sm:$0xf]
      %v6608 = vld [vmem:[%s1670 + $0x7c] sm:$0xf]
      %v6609 = vld [vmem:[%s1670 + $0x84] sm:$0xf]
      %v6610 = vld [vmem:[%s1670 + $0x88] sm:$0xf]
      %v6611 = vld [vmem:[%s1670 + $0x90] sm:$0xf]
      %v6612 = vld [vmem:[%s1670 + $0x94] sm:$0xf]
      %v6613 = vld [vmem:[%s1670 + $0x9c] sm:$0xf]
      %v6614 = vld [vmem:[%s1670 + $0xa0] sm:$0xf]
      %v6615 = vld [vmem:[%s1670 + $0xa8] sm:$0xf]
      %v6616 = vld [vmem:[%s1670 + $0xac] sm:$0xf]
      %v6617 = vld [vmem:[%s1670 + $0xb4] sm:$0xf]
      %v6618 = vld [vmem:[%s1670 + $0xb8] sm:$0xf]
      %v6619 = vld [vmem:[%s1670 + $0x8] sm:$0x1]
      %v6620 = vld [vmem:[%s1670 + $0x14] sm:$0x1]
      %v6621 = vld [vmem:[%s1670 + $0x20] sm:$0x1]
      %v6622 = vld [vmem:[%s1670 + $0x2c] sm:$0x1]
      %v6623 = vld [vmem:[%s1670 + $0x38] sm:$0x1]
      %v6624 = vld [vmem:[%s1670 + $0x44] sm:$0x1]
      %v6625 = vld [vmem:[%s1670 + $0x50] sm:$0x1]
      %v6626 = vld [vmem:[%s1670 + $0x5c] sm:$0x1]
      %v6627 = vld [vmem:[%s1670 + $0x68] sm:$0x1]
      %v6628 = vld [vmem:[%s1670 + $0x74] sm:$0x1]
      %v6629 = vld [vmem:[%s1670 + $0x80] sm:$0x1]
      %v6630 = vld [vmem:[%s1670 + $0x8c] sm:$0x1]
      %v6631 = vld [vmem:[%s1670 + $0x98] sm:$0x1]
      %v6632 = vld [vmem:[%s1670 + $0xa4] sm:$0x1]
      %v6633 = vld [vmem:[%s1670 + $0xb0] sm:$0x1]
      %v6634 = vld [vmem:[%s1670 + $0xbc] sm:$0x1]
      %v6636 = vshrl.u32 %v6587, 16
      %v6638 = vrot.slane %v6636, 4
      %v6639 = vshll.u32 %v6587, 16
      %v6641 = vrot.slane %v6639, 5
      %v6642 = vor.u32 %v6638, %v6641
      %v6643 = vrot.slane %v6642, 4
      %v6645 = vshll.u32 %v6588, 16
      %v6647 = vrot.slane %v6645, 5
      %v6648 = vsel %vm1838, %v6643, %v6647
      %v6649 = vshrl.u32 %v6588, 16
      %v6651 = vrot.slane %v6649, 4
      %v6652 = vor.u32 %v6651, %v6647
      %v6653 = vrot.slane %v6652, 4
      %v6655 = vshll.u32 %v6619, 16
      %v6657 = vrot.slane %v6655, 5
      %v6658 = vsel %vm1838, %v6653, %v6657
      %v6660 = vshrl.u32 %v6589, 16
      %v6662 = vrot.slane %v6660, 4
      %v6663 = vshll.u32 %v6589, 16
      %v6665 = vrot.slane %v6663, 5
      %v6666 = vor.u32 %v6662, %v6665
      %v6667 = vrot.slane %v6666, 4
      %v6669 = vshll.u32 %v6590, 16
      %v6671 = vrot.slane %v6669, 5
      %v6672 = vsel %vm1838, %v6667, %v6671
      %v6673 = vshrl.u32 %v6590, 16
      %v6675 = vrot.slane %v6673, 4
      %v6676 = vor.u32 %v6675, %v6671
      %v6677 = vrot.slane %v6676, 4
      %v6679 = vshll.u32 %v6620, 16
      %v6681 = vrot.slane %v6679, 5
      %v6682 = vsel %vm1838, %v6677, %v6681
      %v6684 = vshrl.u32 %v6591, 16
      %v6686 = vrot.slane %v6684, 4
      %v6687 = vshll.u32 %v6591, 16
      %v6689 = vrot.slane %v6687, 5
      %v6690 = vor.u32 %v6686, %v6689
      %v6691 = vrot.slane %v6690, 4
      %v6693 = vshll.u32 %v6592, 16
      %v6695 = vrot.slane %v6693, 5
      %v6696 = vsel %vm1838, %v6691, %v6695
      %v6697 = vshrl.u32 %v6592, 16
      %v6699 = vrot.slane %v6697, 4
      %v6700 = vor.u32 %v6699, %v6695
      %v6701 = vrot.slane %v6700, 4
      %v6703 = vshll.u32 %v6621, 16
      %v6705 = vrot.slane %v6703, 5
      %v6706 = vsel %vm1838, %v6701, %v6705
      %v6708 = vshrl.u32 %v6593, 16
      %v6710 = vrot.slane %v6708, 4
      %v6711 = vshll.u32 %v6593, 16
      %v6713 = vrot.slane %v6711, 5
      %v6714 = vor.u32 %v6710, %v6713
      %v6715 = vrot.slane %v6714, 4
      %v6717 = vshll.u32 %v6594, 16
      %v6719 = vrot.slane %v6717, 5
      %v6720 = vsel %vm1838, %v6715, %v6719
      %v6721 = vshrl.u32 %v6594, 16
      %v6723 = vrot.slane %v6721, 4
      %v6724 = vor.u32 %v6723, %v6719
      %v6725 = vrot.slane %v6724, 4
      %v6727 = vshll.u32 %v6622, 16
      %v6729 = vrot.slane %v6727, 5
      %v6730 = vsel %vm1838, %v6725, %v6729
      %v6732 = vshrl.u32 %v6595, 16
      %v6734 = vrot.slane %v6732, 4
      %v6735 = vshll.u32 %v6595, 16
      %v6737 = vrot.slane %v6735, 5
      %v6738 = vor.u32 %v6734, %v6737
      %v6739 = vrot.slane %v6738, 4
      %v6741 = vshll.u32 %v6596, 16
      %v6743 = vrot.slane %v6741, 5
      %v6744 = vsel %vm1838, %v6739, %v6743
      %v6745 = vshrl.u32 %v6596, 16
      %v6747 = vrot.slane %v6745, 4
      %v6748 = vor.u32 %v6747, %v6743
      %v6749 = vrot.slane %v6748, 4
      %v6751 = vshll.u32 %v6623, 16
      %v6753 = vrot.slane %v6751, 5
      %v6754 = vsel %vm1838, %v6749, %v6753
      %v6756 = vshrl.u32 %v6597, 16
      %v6758 = vrot.slane %v6756, 4
      %v6759 = vshll.u32 %v6597, 16
      %v6761 = vrot.slane %v6759, 5
      %v6762 = vor.u32 %v6758, %v6761
      %v6763 = vrot.slane %v6762, 4
      %v6765 = vshll.u32 %v6598, 16
      %v6767 = vrot.slane %v6765, 5
      %v6768 = vsel %vm1838, %v6763, %v6767
      %v6769 = vshrl.u32 %v6598, 16
      %v6771 = vrot.slane %v6769, 4
      %v6772 = vor.u32 %v6771, %v6767
      %v6773 = vrot.slane %v6772, 4
      %v6775 = vshll.u32 %v6624, 16
      %v6777 = vrot.slane %v6775, 5
      %v6778 = vsel %vm1838, %v6773, %v6777
      %v6780 = vshrl.u32 %v6599, 16
      %v6782 = vrot.slane %v6780, 4
      %v6783 = vshll.u32 %v6599, 16
      %v6785 = vrot.slane %v6783, 5
      %v6786 = vor.u32 %v6782, %v6785
      %v6787 = vrot.slane %v6786, 4
      %v6789 = vshll.u32 %v6600, 16
      %v6791 = vrot.slane %v6789, 5
      %v6792 = vsel %vm1838, %v6787, %v6791
      %v6793 = vshrl.u32 %v6600, 16
      %v6795 = vrot.slane %v6793, 4
      %v6796 = vor.u32 %v6795, %v6791
      %v6797 = vrot.slane %v6796, 4
      %v6799 = vshll.u32 %v6625, 16
      %v6801 = vrot.slane %v6799, 5
      %v6802 = vsel %vm1838, %v6797, %v6801
      %v6804 = vshrl.u32 %v6601, 16
      %v6806 = vrot.slane %v6804, 4
      %v6807 = vshll.u32 %v6601, 16
      %v6809 = vrot.slane %v6807, 5
      %v6810 = vor.u32 %v6806, %v6809
      %v6811 = vrot.slane %v6810, 4
      %v6813 = vshll.u32 %v6602, 16
      %v6815 = vrot.slane %v6813, 5
      %v6816 = vsel %vm1838, %v6811, %v6815
      %v6817 = vshrl.u32 %v6602, 16
      %v6819 = vrot.slane %v6817, 4
      %v6820 = vor.u32 %v6819, %v6815
      %v6821 = vrot.slane %v6820, 4
      %v6823 = vshll.u32 %v6626, 16
      %v6825 = vrot.slane %v6823, 5
      %v6826 = vsel %vm1838, %v6821, %v6825
      %v6828 = vshrl.u32 %v6603, 16
      %v6830 = vrot.slane %v6828, 4
      %v6831 = vshll.u32 %v6603, 16
      %v6833 = vrot.slane %v6831, 5
      %v6834 = vor.u32 %v6830, %v6833
      %v6835 = vrot.slane %v6834, 4
      %v6837 = vshll.u32 %v6604, 16
      %v6839 = vrot.slane %v6837, 5
      %v6840 = vsel %vm1838, %v6835, %v6839
      %v6841 = vshrl.u32 %v6604, 16
      %v6843 = vrot.slane %v6841, 4
      %v6844 = vor.u32 %v6843, %v6839
      %v6845 = vrot.slane %v6844, 4
      %v6847 = vshll.u32 %v6627, 16
      %v6849 = vrot.slane %v6847, 5
      %v6850 = vsel %vm1838, %v6845, %v6849
      %v6852 = vshrl.u32 %v6605, 16
      %v6854 = vrot.slane %v6852, 4
      %v6855 = vshll.u32 %v6605, 16
      %v6857 = vrot.slane %v6855, 5
      %v6858 = vor.u32 %v6854, %v6857
      %v6859 = vrot.slane %v6858, 4
      %v6861 = vshll.u32 %v6606, 16
      %v6863 = vrot.slane %v6861, 5
      %v6864 = vsel %vm1838, %v6859, %v6863
      %v6865 = vshrl.u32 %v6606, 16
      %v6867 = vrot.slane %v6865, 4
      %v6868 = vor.u32 %v6867, %v6863
      %v6869 = vrot.slane %v6868, 4
      %v6871 = vshll.u32 %v6628, 16
      %v6873 = vrot.slane %v6871, 5
      %v6874 = vsel %vm1838, %v6869, %v6873
      %v6876 = vshrl.u32 %v6607, 16
      %v6878 = vrot.slane %v6876, 4
      %v6879 = vshll.u32 %v6607, 16
      %v6881 = vrot.slane %v6879, 5
      %v6882 = vor.u32 %v6878, %v6881
      %v6883 = vrot.slane %v6882, 4
      %v6885 = vshll.u32 %v6608, 16
      %v6887 = vrot.slane %v6885, 5
      %v6888 = vsel %vm1838, %v6883, %v6887
      %v6889 = vshrl.u32 %v6608, 16
      %v6891 = vrot.slane %v6889, 4
      %v6892 = vor.u32 %v6891, %v6887
      %v6893 = vrot.slane %v6892, 4
      %v6895 = vshll.u32 %v6629, 16
      %v6897 = vrot.slane %v6895, 5
      %v6898 = vsel %vm1838, %v6893, %v6897
      %v6900 = vshrl.u32 %v6609, 16
      %v6902 = vrot.slane %v6900, 4
      %v6903 = vshll.u32 %v6609, 16
      %v6905 = vrot.slane %v6903, 5
      %v6906 = vor.u32 %v6902, %v6905
      %v6907 = vrot.slane %v6906, 4
      %v6909 = vshll.u32 %v6610, 16
      %v6911 = vrot.slane %v6909, 5
      %v6912 = vsel %vm1838, %v6907, %v6911
      %v6913 = vshrl.u32 %v6610, 16
      %v6915 = vrot.slane %v6913, 4
      %v6916 = vor.u32 %v6915, %v6911
      %v6917 = vrot.slane %v6916, 4
      %v6919 = vshll.u32 %v6630, 16
      %v6921 = vrot.slane %v6919, 5
      %v6922 = vsel %vm1838, %v6917, %v6921
      %v6924 = vshrl.u32 %v6611, 16
      %v6926 = vrot.slane %v6924, 4
      %v6927 = vshll.u32 %v6611, 16
      %v6929 = vrot.slane %v6927, 5
      %v6930 = vor.u32 %v6926, %v6929
      %v6931 = vrot.slane %v6930, 4
      %v6933 = vshll.u32 %v6612, 16
      %v6935 = vrot.slane %v6933, 5
      %v6936 = vsel %vm1838, %v6931, %v6935
      %v6937 = vshrl.u32 %v6612, 16
      %v6939 = vrot.slane %v6937, 4
      %v6940 = vor.u32 %v6939, %v6935
      %v6941 = vrot.slane %v6940, 4
      %v6943 = vshll.u32 %v6631, 16
      %v6945 = vrot.slane %v6943, 5
      %v6946 = vsel %vm1838, %v6941, %v6945
      %v6948 = vshrl.u32 %v6613, 16
      %v6950 = vrot.slane %v6948, 4
      %v6951 = vshll.u32 %v6613, 16
      %v6953 = vrot.slane %v6951, 5
      %v6954 = vor.u32 %v6950, %v6953
      %v6955 = vrot.slane %v6954, 4
      %v6957 = vshll.u32 %v6614, 16
      %v6959 = vrot.slane %v6957, 5
      %v6960 = vsel %vm1838, %v6955, %v6959
      %v6961 = vshrl.u32 %v6614, 16
      %v6963 = vrot.slane %v6961, 4
      %v6964 = vor.u32 %v6963, %v6959
      %v6965 = vrot.slane %v6964, 4
      %v6967 = vshll.u32 %v6632, 16
      %v6969 = vrot.slane %v6967, 5
      %v6970 = vsel %vm1838, %v6965, %v6969
      %v6972 = vshrl.u32 %v6615, 16
      %v6974 = vrot.slane %v6972, 4
      %v6975 = vshll.u32 %v6615, 16
      %v6977 = vrot.slane %v6975, 5
      %v6978 = vor.u32 %v6974, %v6977
      %v6979 = vrot.slane %v6978, 4
      %v6981 = vshll.u32 %v6616, 16
      %v6983 = vrot.slane %v6981, 5
      %v6984 = vsel %vm1838, %v6979, %v6983
      %v6985 = vshrl.u32 %v6616, 16
      %v6987 = vrot.slane %v6985, 4
      %v6988 = vor.u32 %v6987, %v6983
      %v6989 = vrot.slane %v6988, 4
      %v6991 = vshll.u32 %v6633, 16
      %v6993 = vrot.slane %v6991, 5
      %v6994 = vsel %vm1838, %v6989, %v6993
      %v6996 = vshrl.u32 %v6617, 16
      %v6998 = vrot.slane %v6996, 4
      %v6999 = vshll.u32 %v6617, 16
      %v7001 = vrot.slane %v6999, 5
      %v7002 = vor.u32 %v6998, %v7001
      %v7003 = vrot.slane %v7002, 4
      %v7005 = vshll.u32 %v6618, 16
      %v7007 = vrot.slane %v7005, 5
      %v7008 = vsel %vm1838, %v7003, %v7007
      %v7009 = vshrl.u32 %v6618, 16
      %v7011 = vrot.slane %v7009, 4
      %v7012 = vor.u32 %v7011, %v7007
      %v7013 = vrot.slane %v7012, 4
      %v7015 = vshll.u32 %v6634, 16
      %v7017 = vrot.slane %v7015, 5
      %v7018 = vsel %vm1838, %v7013, %v7017
      %v7019 = vld [vmem:[%s1670] sm:$0xe]
      %v7020 = vld [vmem:[%s1670 + $0xc] sm:$0xe]
      %v7021 = vld [vmem:[%s1670 + $0x18] sm:$0xe]
      %v7022 = vld [vmem:[%s1670 + $0x24] sm:$0xe]
      %v7023 = vld [vmem:[%s1670 + $0x30] sm:$0xe]
      %v7024 = vld [vmem:[%s1670 + $0x3c] sm:$0xe]
      %v7025 = vld [vmem:[%s1670 + $0x48] sm:$0xe]
      %v7026 = vld [vmem:[%s1670 + $0x54] sm:$0xe]
      %v7027 = vld [vmem:[%s1670 + $0x60] sm:$0xe]
      %v7028 = vld [vmem:[%s1670 + $0x6c] sm:$0xe]
      %v7029 = vld [vmem:[%s1670 + $0x78] sm:$0xe]
      %v7030 = vld [vmem:[%s1670 + $0x84] sm:$0xe]
      %v7031 = vld [vmem:[%s1670 + $0x90] sm:$0xe]
      %v7032 = vld [vmem:[%s1670 + $0x9c] sm:$0xe]
      %v7033 = vld [vmem:[%s1670 + $0xa8] sm:$0xe]
      %v7034 = vld [vmem:[%s1670 + $0xb4] sm:$0xe]
      %v7083 = vrot.slane %v7019, 5
      %v7084 = vrot.slane %v7083, 4
      %v7085 = vrot.slane %v6588, 5
      %v7086 = vsel %vm2289, %v7084, %v7085
      %v7087 = vrot.slane %v7085, 4
      %v7088 = vrot.slane %v6619, 5
      %v7089 = vsel %vm2289, %v7087, %v7088
      %v7090 = vrot.slane %v7020, 5
      %v7091 = vrot.slane %v7090, 4
      %v7092 = vrot.slane %v6590, 5
      %v7093 = vsel %vm2289, %v7091, %v7092
      %v7094 = vrot.slane %v7092, 4
      %v7095 = vrot.slane %v6620, 5
      %v7096 = vsel %vm2289, %v7094, %v7095
      %v7097 = vrot.slane %v7021, 5
      %v7098 = vrot.slane %v7097, 4
      %v7099 = vrot.slane %v6592, 5
      %v7100 = vsel %vm2289, %v7098, %v7099
      %v7101 = vrot.slane %v7099, 4
      %v7102 = vrot.slane %v6621, 5
      %v7103 = vsel %vm2289, %v7101, %v7102
      %v7104 = vrot.slane %v7022, 5
      %v7105 = vrot.slane %v7104, 4
      %v7106 = vrot.slane %v6594, 5
      %v7107 = vsel %vm2289, %v7105, %v7106
      %v7108 = vrot.slane %v7106, 4
      %v7109 = vrot.slane %v6622, 5
      %v7110 = vsel %vm2289, %v7108, %v7109
      %v7111 = vrot.slane %v7023, 5
      %v7112 = vrot.slane %v7111, 4
      %v7113 = vrot.slane %v6596, 5
      %v7114 = vsel %vm2289, %v7112, %v7113
      %v7115 = vrot.slane %v7113, 4
      %v7116 = vrot.slane %v6623, 5
      %v7117 = vsel %vm2289, %v7115, %v7116
      %v7118 = vrot.slane %v7024, 5
      %v7119 = vrot.slane %v7118, 4
      %v7120 = vrot.slane %v6598, 5
      %v7121 = vsel %vm2289, %v7119, %v7120
      %v7122 = vrot.slane %v7120, 4
      %v7123 = vrot.slane %v6624, 5
      %v7124 = vsel %vm2289, %v7122, %v7123
      %v7125 = vrot.slane %v7025, 5
      %v7126 = vrot.slane %v7125, 4
      %v7127 = vrot.slane %v6600, 5
      %v7128 = vsel %vm2289, %v7126, %v7127
      %v7129 = vrot.slane %v7127, 4
      %v7130 = vrot.slane %v6625, 5
      %v7131 = vsel %vm2289, %v7129, %v7130
      %v7132 = vrot.slane %v7026, 5
      %v7133 = vrot.slane %v7132, 4
      %v7134 = vrot.slane %v6602, 5
      %v7135 = vsel %vm2289, %v7133, %v7134
      %v7136 = vrot.slane %v7134, 4
      %v7137 = vrot.slane %v6626, 5
      %v7138 = vsel %vm2289, %v7136, %v7137
      %v7139 = vrot.slane %v7027, 5
      %v7140 = vrot.slane %v7139, 4
      %v7141 = vrot.slane %v6604, 5
      %v7142 = vsel %vm2289, %v7140, %v7141
      %v7143 = vrot.slane %v7141, 4
      %v7144 = vrot.slane %v6627, 5
      %v7145 = vsel %vm2289, %v7143, %v7144
      %v7146 = vrot.slane %v7028, 5
      %v7147 = vrot.slane %v7146, 4
      %v7148 = vrot.slane %v6606, 5
      %v7149 = vsel %vm2289, %v7147, %v7148
      %v7150 = vrot.slane %v7148, 4
      %v7151 = vrot.slane %v6628, 5
      %v7152 = vsel %vm2289, %v7150, %v7151
      %v7153 = vrot.slane %v7029, 5
      %v7154 = vrot.slane %v7153, 4
      %v7155 = vrot.slane %v6608, 5
      %v7156 = vsel %vm2289, %v7154, %v7155
      %v7157 = vrot.slane %v7155, 4
      %v7158 = vrot.slane %v6629, 5
      %v7159 = vsel %vm2289, %v7157, %v7158
      %v7160 = vrot.slane %v7030, 5
      %v7161 = vrot.slane %v7160, 4
      %v7162 = vrot.slane %v6610, 5
      %v7163 = vsel %vm2289, %v7161, %v7162
      %v7164 = vrot.slane %v7162, 4
      %v7165 = vrot.slane %v6630, 5
      %v7166 = vsel %vm2289, %v7164, %v7165
      %v7167 = vrot.slane %v7031, 5
      %v7168 = vrot.slane %v7167, 4
      %v7169 = vrot.slane %v6612, 5
      %v7170 = vsel %vm2289, %v7168, %v7169
      %v7171 = vrot.slane %v7169, 4
      %v7172 = vrot.slane %v6631, 5
      %v7173 = vsel %vm2289, %v7171, %v7172
      %v7174 = vrot.slane %v7032, 5
      %v7175 = vrot.slane %v7174, 4
      %v7176 = vrot.slane %v6614, 5
      %v7177 = vsel %vm2289, %v7175, %v7176
      %v7178 = vrot.slane %v7176, 4
      %v7179 = vrot.slane %v6632, 5
      %v7180 = vsel %vm2289, %v7178, %v7179
      %v7181 = vrot.slane %v7033, 5
      %v7182 = vrot.slane %v7181, 4
      %v7183 = vrot.slane %v6616, 5
      %v7184 = vsel %vm2289, %v7182, %v7183
      %v7185 = vrot.slane %v7183, 4
      %v7186 = vrot.slane %v6633, 5
      %v7187 = vsel %vm2289, %v7185, %v7186
      %v7188 = vrot.slane %v7034, 5
      %v7189 = vrot.slane %v7188, 4
      %v7190 = vrot.slane %v6618, 5
      %v7191 = vsel %vm2289, %v7189, %v7190
      %v7192 = vrot.slane %v7190, 4
      %v7193 = vrot.slane %v6634, 5
      %v7194 = vsel %vm2289, %v7192, %v7193
      %v7195 = vld [vmem:[%s3013] sm:$0xf]
      %v7196 = vld [vmem:[%s3013 + $0x4] sm:$0xf]
      %v7197 = vld [vmem:[%s3013 + $0xc] sm:$0xf]
      %v7198 = vld [vmem:[%s3013 + $0x10] sm:$0xf]
      %v7199 = vld [vmem:[%s3013 + $0x18] sm:$0xf]
      %v7200 = vld [vmem:[%s3013 + $0x1c] sm:$0xf]
      %v7201 = vld [vmem:[%s3013 + $0x24] sm:$0xf]
      %v7202 = vld [vmem:[%s3013 + $0x28] sm:$0xf]
      %v7203 = vld [vmem:[%s3013 + $0x30] sm:$0xf]
      %v7204 = vld [vmem:[%s3013 + $0x34] sm:$0xf]
      %v7205 = vld [vmem:[%s3013 + $0x3c] sm:$0xf]
      %v7206 = vld [vmem:[%s3013 + $0x40] sm:$0xf]
      %v7207 = vld [vmem:[%s3013 + $0x48] sm:$0xf]
      %v7208 = vld [vmem:[%s3013 + $0x4c] sm:$0xf]
      %v7209 = vld [vmem:[%s3013 + $0x54] sm:$0xf]
      %v7210 = vld [vmem:[%s3013 + $0x58] sm:$0xf]
      %v7211 = vld [vmem:[%s3013 + $0x60] sm:$0xf]
      %v7212 = vld [vmem:[%s3013 + $0x64] sm:$0xf]
      %v7213 = vld [vmem:[%s3013 + $0x6c] sm:$0xf]
      %v7214 = vld [vmem:[%s3013 + $0x70] sm:$0xf]
      %v7215 = vld [vmem:[%s3013 + $0x78] sm:$0xf]
      %v7216 = vld [vmem:[%s3013 + $0x7c] sm:$0xf]
      %v7217 = vld [vmem:[%s3013 + $0x84] sm:$0xf]
      %v7218 = vld [vmem:[%s3013 + $0x88] sm:$0xf]
      %v7219 = vld [vmem:[%s3013 + $0x90] sm:$0xf]
      %v7220 = vld [vmem:[%s3013 + $0x94] sm:$0xf]
      %v7221 = vld [vmem:[%s3013 + $0x9c] sm:$0xf]
      %v7222 = vld [vmem:[%s3013 + $0xa0] sm:$0xf]
      %v7223 = vld [vmem:[%s3013 + $0xa8] sm:$0xf]
      %v7224 = vld [vmem:[%s3013 + $0xac] sm:$0xf]
      %v7225 = vld [vmem:[%s3013 + $0xb4] sm:$0xf]
      %v7226 = vld [vmem:[%s3013 + $0xb8] sm:$0xf]
      %v7227 = vld [vmem:[%s3013 + $0x8] sm:$0x1]
      %v7228 = vld [vmem:[%s3013 + $0x14] sm:$0x1]
      %v7229 = vld [vmem:[%s3013 + $0x20] sm:$0x1]
      %v7230 = vld [vmem:[%s3013 + $0x2c] sm:$0x1]
      %v7231 = vld [vmem:[%s3013 + $0x38] sm:$0x1]
      %v7232 = vld [vmem:[%s3013 + $0x44] sm:$0x1]
      %v7233 = vld [vmem:[%s3013 + $0x50] sm:$0x1]
      %v7234 = vld [vmem:[%s3013 + $0x5c] sm:$0x1]
      %v7235 = vld [vmem:[%s3013 + $0x68] sm:$0x1]
      %v7236 = vld [vmem:[%s3013 + $0x74] sm:$0x1]
      %v7237 = vld [vmem:[%s3013 + $0x80] sm:$0x1]
      %v7238 = vld [vmem:[%s3013 + $0x8c] sm:$0x1]
      %v7239 = vld [vmem:[%s3013 + $0x98] sm:$0x1]
      %v7240 = vld [vmem:[%s3013 + $0xa4] sm:$0x1]
      %v7241 = vld [vmem:[%s3013 + $0xb0] sm:$0x1]
      %v7242 = vld [vmem:[%s3013 + $0xbc] sm:$0x1]
      %v7244 = vshrl.u32 %v7195, 16
      %v7246 = vrot.slane %v7244, 4
      %v7247 = vshll.u32 %v7195, 16
      %v7249 = vrot.slane %v7247, 5
      %v7250 = vor.u32 %v7246, %v7249
      %v7251 = vrot.slane %v7250, 4
      %v7253 = vshll.u32 %v7196, 16
      %v7255 = vrot.slane %v7253, 5
      %v7256 = vsel %vm1838, %v7251, %v7255
      %v7257 = vshrl.u32 %v7196, 16
      %v7259 = vrot.slane %v7257, 4
      %v7260 = vor.u32 %v7259, %v7255
      %v7261 = vrot.slane %v7260, 4
      %v7263 = vshll.u32 %v7227, 16
      %v7265 = vrot.slane %v7263, 5
      %v7266 = vsel %vm1838, %v7261, %v7265
      %v7268 = vshrl.u32 %v7197, 16
      %v7270 = vrot.slane %v7268, 4
      %v7271 = vshll.u32 %v7197, 16
      %v7273 = vrot.slane %v7271, 5
      %v7274 = vor.u32 %v7270, %v7273
      %v7275 = vrot.slane %v7274, 4
      %v7277 = vshll.u32 %v7198, 16
      %v7279 = vrot.slane %v7277, 5
      %v7280 = vsel %vm1838, %v7275, %v7279
      %v7281 = vshrl.u32 %v7198, 16
      %v7283 = vrot.slane %v7281, 4
      %v7284 = vor.u32 %v7283, %v7279
      %v7285 = vrot.slane %v7284, 4
      %v7287 = vshll.u32 %v7228, 16
      %v7289 = vrot.slane %v7287, 5
      %v7290 = vsel %vm1838, %v7285, %v7289
      %v7292 = vshrl.u32 %v7199, 16
      %v7294 = vrot.slane %v7292, 4
      %v7295 = vshll.u32 %v7199, 16
      %v7297 = vrot.slane %v7295, 5
      %v7298 = vor.u32 %v7294, %v7297
      %v7299 = vrot.slane %v7298, 4
      %v7301 = vshll.u32 %v7200, 16
      %v7303 = vrot.slane %v7301, 5
      %v7304 = vsel %vm1838, %v7299, %v7303
      %v7305 = vshrl.u32 %v7200, 16
      %v7307 = vrot.slane %v7305, 4
      %v7308 = vor.u32 %v7307, %v7303
      %v7309 = vrot.slane %v7308, 4
      %v7311 = vshll.u32 %v7229, 16
      %v7313 = vrot.slane %v7311, 5
      %v7314 = vsel %vm1838, %v7309, %v7313
      %v7316 = vshrl.u32 %v7201, 16
      %v7318 = vrot.slane %v7316, 4
      %v7319 = vshll.u32 %v7201, 16
      %v7321 = vrot.slane %v7319, 5
      %v7322 = vor.u32 %v7318, %v7321
      %v7323 = vrot.slane %v7322, 4
      %v7325 = vshll.u32 %v7202, 16
      %v7327 = vrot.slane %v7325, 5
      %v7328 = vsel %vm1838, %v7323, %v7327
      %v7329 = vshrl.u32 %v7202, 16
      %v7331 = vrot.slane %v7329, 4
      %v7332 = vor.u32 %v7331, %v7327
      %v7333 = vrot.slane %v7332, 4
      %v7335 = vshll.u32 %v7230, 16
      %v7337 = vrot.slane %v7335, 5
      %v7338 = vsel %vm1838, %v7333, %v7337
      %v7340 = vshrl.u32 %v7203, 16
      %v7342 = vrot.slane %v7340, 4
      %v7343 = vshll.u32 %v7203, 16
      %v7345 = vrot.slane %v7343, 5
      %v7346 = vor.u32 %v7342, %v7345
      %v7347 = vrot.slane %v7346, 4
      %v7349 = vshll.u32 %v7204, 16
      %v7351 = vrot.slane %v7349, 5
      %v7352 = vsel %vm1838, %v7347, %v7351
      %v7353 = vshrl.u32 %v7204, 16
      %v7355 = vrot.slane %v7353, 4
      %v7356 = vor.u32 %v7355, %v7351
      %v7357 = vrot.slane %v7356, 4
      %v7359 = vshll.u32 %v7231, 16
      %v7361 = vrot.slane %v7359, 5
      %v7362 = vsel %vm1838, %v7357, %v7361
      %v7364 = vshrl.u32 %v7205, 16
      %v7366 = vrot.slane %v7364, 4
      %v7367 = vshll.u32 %v7205, 16
      %v7369 = vrot.slane %v7367, 5
      %v7370 = vor.u32 %v7366, %v7369
      %v7371 = vrot.slane %v7370, 4
      %v7373 = vshll.u32 %v7206, 16
      %v7375 = vrot.slane %v7373, 5
      %v7376 = vsel %vm1838, %v7371, %v7375
      %v7377 = vshrl.u32 %v7206, 16
      %v7379 = vrot.slane %v7377, 4
      %v7380 = vor.u32 %v7379, %v7375
      %v7381 = vrot.slane %v7380, 4
      %v7383 = vshll.u32 %v7232, 16
      %v7385 = vrot.slane %v7383, 5
      %v7386 = vsel %vm1838, %v7381, %v7385
      %v7388 = vshrl.u32 %v7207, 16
      %v7390 = vrot.slane %v7388, 4
      %v7391 = vshll.u32 %v7207, 16
      %v7393 = vrot.slane %v7391, 5
      %v7394 = vor.u32 %v7390, %v7393
      %v7395 = vrot.slane %v7394, 4
      %v7397 = vshll.u32 %v7208, 16
      %v7399 = vrot.slane %v7397, 5
      %v7400 = vsel %vm1838, %v7395, %v7399
      %v7401 = vshrl.u32 %v7208, 16
      %v7403 = vrot.slane %v7401, 4
      %v7404 = vor.u32 %v7403, %v7399
      %v7405 = vrot.slane %v7404, 4
      %v7407 = vshll.u32 %v7233, 16
      %v7409 = vrot.slane %v7407, 5
      %v7410 = vsel %vm1838, %v7405, %v7409
      %v7412 = vshrl.u32 %v7209, 16
      %v7414 = vrot.slane %v7412, 4
      %v7415 = vshll.u32 %v7209, 16
      %v7417 = vrot.slane %v7415, 5
      %v7418 = vor.u32 %v7414, %v7417
      %v7419 = vrot.slane %v7418, 4
      %v7421 = vshll.u32 %v7210, 16
      %v7423 = vrot.slane %v7421, 5
      %v7424 = vsel %vm1838, %v7419, %v7423
      %v7425 = vshrl.u32 %v7210, 16
      %v7427 = vrot.slane %v7425, 4
      %v7428 = vor.u32 %v7427, %v7423
      %v7429 = vrot.slane %v7428, 4
      %v7431 = vshll.u32 %v7234, 16
      %v7433 = vrot.slane %v7431, 5
      %v7434 = vsel %vm1838, %v7429, %v7433
      %v7436 = vshrl.u32 %v7211, 16
      %v7438 = vrot.slane %v7436, 4
      %v7439 = vshll.u32 %v7211, 16
      %v7441 = vrot.slane %v7439, 5
      %v7442 = vor.u32 %v7438, %v7441
      %v7443 = vrot.slane %v7442, 4
      %v7445 = vshll.u32 %v7212, 16
      %v7447 = vrot.slane %v7445, 5
      %v7448 = vsel %vm1838, %v7443, %v7447
      %v7449 = vshrl.u32 %v7212, 16
      %v7451 = vrot.slane %v7449, 4
      %v7452 = vor.u32 %v7451, %v7447
      %v7453 = vrot.slane %v7452, 4
      %v7455 = vshll.u32 %v7235, 16
      %v7457 = vrot.slane %v7455, 5
      %v7458 = vsel %vm1838, %v7453, %v7457
      %v7460 = vshrl.u32 %v7213, 16
      %v7462 = vrot.slane %v7460, 4
      %v7463 = vshll.u32 %v7213, 16
      %v7465 = vrot.slane %v7463, 5
      %v7466 = vor.u32 %v7462, %v7465
      %v7467 = vrot.slane %v7466, 4
      %v7469 = vshll.u32 %v7214, 16
      %v7471 = vrot.slane %v7469, 5
      %v7472 = vsel %vm1838, %v7467, %v7471
      %v7473 = vshrl.u32 %v7214, 16
      %v7475 = vrot.slane %v7473, 4
      %v7476 = vor.u32 %v7475, %v7471
      %v7477 = vrot.slane %v7476, 4
      %v7479 = vshll.u32 %v7236, 16
      %v7481 = vrot.slane %v7479, 5
      %v7482 = vsel %vm1838, %v7477, %v7481
      %v7484 = vshrl.u32 %v7215, 16
      %v7486 = vrot.slane %v7484, 4
      %v7487 = vshll.u32 %v7215, 16
      %v7489 = vrot.slane %v7487, 5
      %v7490 = vor.u32 %v7486, %v7489
      %v7491 = vrot.slane %v7490, 4
      %v7493 = vshll.u32 %v7216, 16
      %v7495 = vrot.slane %v7493, 5
      %v7496 = vsel %vm1838, %v7491, %v7495
      %v7497 = vshrl.u32 %v7216, 16
      %v7499 = vrot.slane %v7497, 4
      %v7500 = vor.u32 %v7499, %v7495
      %v7501 = vrot.slane %v7500, 4
      %v7503 = vshll.u32 %v7237, 16
      %v7505 = vrot.slane %v7503, 5
      %v7506 = vsel %vm1838, %v7501, %v7505
      %v7508 = vshrl.u32 %v7217, 16
      %v7510 = vrot.slane %v7508, 4
      %v7511 = vshll.u32 %v7217, 16
      %v7513 = vrot.slane %v7511, 5
      %v7514 = vor.u32 %v7510, %v7513
      %v7515 = vrot.slane %v7514, 4
      %v7517 = vshll.u32 %v7218, 16
      %v7519 = vrot.slane %v7517, 5
      %v7520 = vsel %vm1838, %v7515, %v7519
      %v7521 = vshrl.u32 %v7218, 16
      %v7523 = vrot.slane %v7521, 4
      %v7524 = vor.u32 %v7523, %v7519
      %v7525 = vrot.slane %v7524, 4
      %v7527 = vshll.u32 %v7238, 16
      %v7529 = vrot.slane %v7527, 5
      %v7530 = vsel %vm1838, %v7525, %v7529
      %v7532 = vshrl.u32 %v7219, 16
      %v7534 = vrot.slane %v7532, 4
      %v7535 = vshll.u32 %v7219, 16
      %v7537 = vrot.slane %v7535, 5
      %v7538 = vor.u32 %v7534, %v7537
      %v7539 = vrot.slane %v7538, 4
      %v7541 = vshll.u32 %v7220, 16
      %v7543 = vrot.slane %v7541, 5
      %v7544 = vsel %vm1838, %v7539, %v7543
      %v7545 = vshrl.u32 %v7220, 16
      %v7547 = vrot.slane %v7545, 4
      %v7548 = vor.u32 %v7547, %v7543
      %v7549 = vrot.slane %v7548, 4
      %v7551 = vshll.u32 %v7239, 16
      %v7553 = vrot.slane %v7551, 5
      %v7554 = vsel %vm1838, %v7549, %v7553
      %v7556 = vshrl.u32 %v7221, 16
      %v7558 = vrot.slane %v7556, 4
      %v7559 = vshll.u32 %v7221, 16
      %v7561 = vrot.slane %v7559, 5
      %v7562 = vor.u32 %v7558, %v7561
      %v7563 = vrot.slane %v7562, 4
      %v7565 = vshll.u32 %v7222, 16
      %v7567 = vrot.slane %v7565, 5
      %v7568 = vsel %vm1838, %v7563, %v7567
      %v7569 = vshrl.u32 %v7222, 16
      %v7571 = vrot.slane %v7569, 4
      %v7572 = vor.u32 %v7571, %v7567
      %v7573 = vrot.slane %v7572, 4
      %v7575 = vshll.u32 %v7240, 16
      %v7577 = vrot.slane %v7575, 5
      %v7578 = vsel %vm1838, %v7573, %v7577
      %v7580 = vshrl.u32 %v7223, 16
      %v7582 = vrot.slane %v7580, 4
      %v7583 = vshll.u32 %v7223, 16
      %v7585 = vrot.slane %v7583, 5
      %v7586 = vor.u32 %v7582, %v7585
      %v7587 = vrot.slane %v7586, 4
      %v7589 = vshll.u32 %v7224, 16
      %v7591 = vrot.slane %v7589, 5
      %v7592 = vsel %vm1838, %v7587, %v7591
      %v7593 = vshrl.u32 %v7224, 16
      %v7595 = vrot.slane %v7593, 4
      %v7596 = vor.u32 %v7595, %v7591
      %v7597 = vrot.slane %v7596, 4
      %v7599 = vshll.u32 %v7241, 16
      %v7601 = vrot.slane %v7599, 5
      %v7602 = vsel %vm1838, %v7597, %v7601
      %v7604 = vshrl.u32 %v7225, 16
      %v7606 = vrot.slane %v7604, 4
      %v7607 = vshll.u32 %v7225, 16
      %v7609 = vrot.slane %v7607, 5
      %v7610 = vor.u32 %v7606, %v7609
      %v7611 = vrot.slane %v7610, 4
      %v7613 = vshll.u32 %v7226, 16
      %v7615 = vrot.slane %v7613, 5
      %v7616 = vsel %vm1838, %v7611, %v7615
      %v7617 = vshrl.u32 %v7226, 16
      %v7619 = vrot.slane %v7617, 4
      %v7620 = vor.u32 %v7619, %v7615
      %v7621 = vrot.slane %v7620, 4
      %v7623 = vshll.u32 %v7242, 16
      %v7625 = vrot.slane %v7623, 5
      %v7626 = vsel %vm1838, %v7621, %v7625
      %v7627 = vld [vmem:[%s3013] sm:$0xe]
      %v7628 = vld [vmem:[%s3013 + $0xc] sm:$0xe]
      %v7629 = vld [vmem:[%s3013 + $0x18] sm:$0xe]
      %v7630 = vld [vmem:[%s3013 + $0x24] sm:$0xe]
      %v7631 = vld [vmem:[%s3013 + $0x30] sm:$0xe]
      %v7632 = vld [vmem:[%s3013 + $0x3c] sm:$0xe]
      %v7633 = vld [vmem:[%s3013 + $0x48] sm:$0xe]
      %v7634 = vld [vmem:[%s3013 + $0x54] sm:$0xe]
      %v7635 = vld [vmem:[%s3013 + $0x60] sm:$0xe]
      %v7636 = vld [vmem:[%s3013 + $0x6c] sm:$0xe]
      %v7637 = vld [vmem:[%s3013 + $0x78] sm:$0xe]
      %v7638 = vld [vmem:[%s3013 + $0x84] sm:$0xe]
      %v7639 = vld [vmem:[%s3013 + $0x90] sm:$0xe]
      %v7640 = vld [vmem:[%s3013 + $0x9c] sm:$0xe]
      %v7641 = vld [vmem:[%s3013 + $0xa8] sm:$0xe]
      %v7642 = vld [vmem:[%s3013 + $0xb4] sm:$0xe]
      %v7691 = vrot.slane %v7627, 5
      %v7692 = vrot.slane %v7691, 4
      %v7693 = vrot.slane %v7196, 5
      %v7694 = vsel %vm2289, %v7692, %v7693
      %v7695 = vrot.slane %v7693, 4
      %v7696 = vrot.slane %v7227, 5
      %v7697 = vsel %vm2289, %v7695, %v7696
      %v7698 = vrot.slane %v7628, 5
      %v7699 = vrot.slane %v7698, 4
      %v7700 = vrot.slane %v7198, 5
      %v7701 = vsel %vm2289, %v7699, %v7700
      %v7702 = vrot.slane %v7700, 4
      %v7703 = vrot.slane %v7228, 5
      %v7704 = vsel %vm2289, %v7702, %v7703
      %v7705 = vrot.slane %v7629, 5
      %v7706 = vrot.slane %v7705, 4
      %v7707 = vrot.slane %v7200, 5
      %v7708 = vsel %vm2289, %v7706, %v7707
      %v7709 = vrot.slane %v7707, 4
      %v7710 = vrot.slane %v7229, 5
      %v7711 = vsel %vm2289, %v7709, %v7710
      %v7712 = vrot.slane %v7630, 5
      %v7713 = vrot.slane %v7712, 4
      %v7714 = vrot.slane %v7202, 5
      %v7715 = vsel %vm2289, %v7713, %v7714
      %v7716 = vrot.slane %v7714, 4
      %v7717 = vrot.slane %v7230, 5
      %v7718 = vsel %vm2289, %v7716, %v7717
      %v7719 = vrot.slane %v7631, 5
      %v7720 = vrot.slane %v7719, 4
      %v7721 = vrot.slane %v7204, 5
      %v7722 = vsel %vm2289, %v7720, %v7721
      %v7723 = vrot.slane %v7721, 4
      %v7724 = vrot.slane %v7231, 5
      %v7725 = vsel %vm2289, %v7723, %v7724
      %v7726 = vrot.slane %v7632, 5
      %v7727 = vrot.slane %v7726, 4
      %v7728 = vrot.slane %v7206, 5
      %v7729 = vsel %vm2289, %v7727, %v7728
      %v7730 = vrot.slane %v7728, 4
      %v7731 = vrot.slane %v7232, 5
      %v7732 = vsel %vm2289, %v7730, %v7731
      %v7733 = vrot.slane %v7633, 5
      %v7734 = vrot.slane %v7733, 4
      %v7735 = vrot.slane %v7208, 5
      %v7736 = vsel %vm2289, %v7734, %v7735
      %v7737 = vrot.slane %v7735, 4
      %v7738 = vrot.slane %v7233, 5
      %v7739 = vsel %vm2289, %v7737, %v7738
      %v7740 = vrot.slane %v7634, 5
      %v7741 = vrot.slane %v7740, 4
      %v7742 = vrot.slane %v7210, 5
      %v7743 = vsel %vm2289, %v7741, %v7742
      %v7744 = vrot.slane %v7742, 4
      %v7745 = vrot.slane %v7234, 5
      %v7746 = vsel %vm2289, %v7744, %v7745
      %v7747 = vrot.slane %v7635, 5
      %v7748 = vrot.slane %v7747, 4
      %v7749 = vrot.slane %v7212, 5
      %v7750 = vsel %vm2289, %v7748, %v7749
      %v7751 = vrot.slane %v7749, 4
      %v7752 = vrot.slane %v7235, 5
      %v7753 = vsel %vm2289, %v7751, %v7752
      %v7754 = vrot.slane %v7636, 5
      %v7755 = vrot.slane %v7754, 4
      %v7756 = vrot.slane %v7214, 5
      %v7757 = vsel %vm2289, %v7755, %v7756
      %v7758 = vrot.slane %v7756, 4
      %v7759 = vrot.slane %v7236, 5
      %v7760 = vsel %vm2289, %v7758, %v7759
      %v7761 = vrot.slane %v7637, 5
      %v7762 = vrot.slane %v7761, 4
      %v7763 = vrot.slane %v7216, 5
      %v7764 = vsel %vm2289, %v7762, %v7763
      %v7765 = vrot.slane %v7763, 4
      %v7766 = vrot.slane %v7237, 5
      %v7767 = vsel %vm2289, %v7765, %v7766
      %v7768 = vrot.slane %v7638, 5
      %v7769 = vrot.slane %v7768, 4
      %v7770 = vrot.slane %v7218, 5
      %v7771 = vsel %vm2289, %v7769, %v7770
      %v7772 = vrot.slane %v7770, 4
      %v7773 = vrot.slane %v7238, 5
      %v7774 = vsel %vm2289, %v7772, %v7773
      %v7775 = vrot.slane %v7639, 5
      %v7776 = vrot.slane %v7775, 4
      %v7777 = vrot.slane %v7220, 5
      %v7778 = vsel %vm2289, %v7776, %v7777
      %v7779 = vrot.slane %v7777, 4
      %v7780 = vrot.slane %v7239, 5
      %v7781 = vsel %vm2289, %v7779, %v7780
      %v7782 = vrot.slane %v7640, 5
      %v7783 = vrot.slane %v7782, 4
      %v7784 = vrot.slane %v7222, 5
      %v7785 = vsel %vm2289, %v7783, %v7784
      %v7786 = vrot.slane %v7784, 4
      %v7787 = vrot.slane %v7240, 5
      %v7788 = vsel %vm2289, %v7786, %v7787
      %v7789 = vrot.slane %v7641, 5
      %v7790 = vrot.slane %v7789, 4
      %v7791 = vrot.slane %v7224, 5
      %v7792 = vsel %vm2289, %v7790, %v7791
      %v7793 = vrot.slane %v7791, 4
      %v7794 = vrot.slane %v7241, 5
      %v7795 = vsel %vm2289, %v7793, %v7794
      %v7796 = vrot.slane %v7642, 5
      %v7797 = vrot.slane %v7796, 4
      %v7798 = vrot.slane %v7226, 5
      %v7799 = vsel %vm2289, %v7797, %v7798
      %v7800 = vrot.slane %v7798, 4
      %v7801 = vrot.slane %v7242, 5
      %v7802 = vsel %vm2289, %v7800, %v7801
      %v7819 = vunpack.c.l.b16 %v5979
      %v7820 = vunpack.c.l.b16 %v5980
      %v7821 = vunpack.c.l.b16 %v5981
      %v7822 = vunpack.c.l.b16 %v5982
      %v7823 = vunpack.c.l.b16 %v5983
      %v7824 = vunpack.c.l.b16 %v5984
      %v7825 = vunpack.c.l.b16 %v5985
      %v7826 = vunpack.c.l.b16 %v5986
      %v7827 = vunpack.c.l.b16 %v5987
      %v7828 = vunpack.c.l.b16 %v5988
      %v7829 = vunpack.c.l.b16 %v5989
      %v7830 = vunpack.c.l.b16 %v5990
      %v7831 = vunpack.c.l.b16 %v5991
      %v7832 = vunpack.c.l.b16 %v5992
      %v7833 = vunpack.c.l.b16 %v5993
      %v7834 = vunpack.c.l.b16 %v5994
      %v7835 = vunpack.c.l.b16 %v5995
      %v7836 = vunpack.c.l.b16 %v5996
      %v7837 = vunpack.c.l.b16 %v5997
      %v7838 = vunpack.c.l.b16 %v5998
      %v7839 = vunpack.c.l.b16 %v5999
      %v7840 = vunpack.c.l.b16 %v6000
      %v7841 = vunpack.c.l.b16 %v6001
      %v7842 = vunpack.c.l.b16 %v6002
      %v7843 = vunpack.c.l.b16 %v6003
      %v7844 = vunpack.c.l.b16 %v6004
      %v7845 = vunpack.c.l.b16 %v6005
      %v7846 = vunpack.c.l.b16 %v6006
      %v7847 = vunpack.c.l.b16 %v6007
      %v7848 = vunpack.c.l.b16 %v6008
      %v7849 = vunpack.c.l.b16 %v6009
      %v7850 = vunpack.c.l.b16 %v6010
      %v7851 = vpack.c.b16 %v7820, %v7819
      %v7852 = vpack.c.b16 %v7822, %v7821
      %v7853 = vpack.c.b16 %v7824, %v7823
      %v7854 = vpack.c.b16 %v7826, %v7825
      %v7855 = vpack.c.b16 %v7828, %v7827
      %v7856 = vpack.c.b16 %v7830, %v7829
      %v7857 = vpack.c.b16 %v7832, %v7831
      %v7858 = vpack.c.b16 %v7834, %v7833
      %v7859 = vpack.c.b16 %v7836, %v7835
      %v7860 = vpack.c.b16 %v7838, %v7837
      %v7861 = vpack.c.b16 %v7840, %v7839
      %v7862 = vpack.c.b16 %v7842, %v7841
      %v7863 = vpack.c.b16 %v7844, %v7843
      %v7864 = vpack.c.b16 %v7846, %v7845
      %v7865 = vpack.c.b16 %v7848, %v7847
      %v7866 = vpack.c.b16 %v7850, %v7849
      %v7867 = vunpack.c.l.b16 %v6040
      %v7868 = vunpack.c.l.b16 %v6050
      %v7869 = vunpack.c.l.b16 %v6064
      %v7870 = vunpack.c.l.b16 %v6074
      %v7871 = vunpack.c.l.b16 %v6088
      %v7872 = vunpack.c.l.b16 %v6098
      %v7873 = vunpack.c.l.b16 %v6112
      %v7874 = vunpack.c.l.b16 %v6122
      %v7875 = vunpack.c.l.b16 %v6136
      %v7876 = vunpack.c.l.b16 %v6146
      %v7877 = vunpack.c.l.b16 %v6160
      %v7878 = vunpack.c.l.b16 %v6170
      %v7879 = vunpack.c.l.b16 %v6184
      %v7880 = vunpack.c.l.b16 %v6194
      %v7881 = vunpack.c.l.b16 %v6208
      %v7882 = vunpack.c.l.b16 %v6218
      %v7883 = vunpack.c.l.b16 %v6232
      %v7884 = vunpack.c.l.b16 %v6242
      %v7885 = vunpack.c.l.b16 %v6256
      %v7886 = vunpack.c.l.b16 %v6266
      %v7887 = vunpack.c.l.b16 %v6280
      %v7888 = vunpack.c.l.b16 %v6290
      %v7889 = vunpack.c.l.b16 %v6304
      %v7890 = vunpack.c.l.b16 %v6314
      %v7891 = vunpack.c.l.b16 %v6328
      %v7892 = vunpack.c.l.b16 %v6338
      %v7893 = vunpack.c.l.b16 %v6352
      %v7894 = vunpack.c.l.b16 %v6362
      %v7895 = vunpack.c.l.b16 %v6376
      %v7896 = vunpack.c.l.b16 %v6386
      %v7897 = vunpack.c.l.b16 %v6400
      %v7898 = vunpack.c.l.b16 %v6410
      %v7899 = vpack.c.b16 %v7868, %v7867
      %v7900 = vpack.c.b16 %v7870, %v7869
      %v7901 = vpack.c.b16 %v7872, %v7871
      %v7902 = vpack.c.b16 %v7874, %v7873
      %v7903 = vpack.c.b16 %v7876, %v7875
      %v7904 = vpack.c.b16 %v7878, %v7877
      %v7905 = vpack.c.b16 %v7880, %v7879
      %v7906 = vpack.c.b16 %v7882, %v7881
      %v7907 = vpack.c.b16 %v7884, %v7883
      %v7908 = vpack.c.b16 %v7886, %v7885
      %v7909 = vpack.c.b16 %v7888, %v7887
      %v7910 = vpack.c.b16 %v7890, %v7889
      %v7911 = vpack.c.b16 %v7892, %v7891
      %v7912 = vpack.c.b16 %v7894, %v7893
      %v7913 = vpack.c.b16 %v7896, %v7895
      %v7914 = vpack.c.b16 %v7898, %v7897
      %7915 = vrot.lane.b32.xlu0 %v7899, 16
      %v7916 = vpop.permute.xlu0 %7915
      %7917 = vrot.lane.b32.xlu0 %v7900, 16
      %v7918 = vpop.permute.xlu0 %7917
      %7919 = vrot.lane.b32.xlu0 %v7901, 16
      %v7920 = vpop.permute.xlu0 %7919
      %7921 = vrot.lane.b32.xlu0 %v7902, 16
      %v7922 = vpop.permute.xlu0 %7921
      %7923 = vrot.lane.b32.xlu0 %v7903, 16
      %v7924 = vpop.permute.xlu0 %7923
      %7925 = vrot.lane.b32.xlu0 %v7904, 16
      %v7926 = vpop.permute.xlu0 %7925
      %7927 = vrot.lane.b32.xlu0 %v7905, 16
      %v7928 = vpop.permute.xlu0 %7927
      %7929 = vrot.lane.b32.xlu0 %v7906, 16
      %v7930 = vpop.permute.xlu0 %7929
      %7931 = vrot.lane.b32.xlu0 %v7907, 16
      %v7932 = vpop.permute.xlu0 %7931
      %7933 = vrot.lane.b32.xlu0 %v7908, 16
      %v7934 = vpop.permute.xlu0 %7933
      %7935 = vrot.lane.b32.xlu0 %v7909, 16
      %v7936 = vpop.permute.xlu0 %7935
      %7937 = vrot.lane.b32.xlu0 %v7910, 16
      %v7938 = vpop.permute.xlu0 %7937
      %7939 = vrot.lane.b32.xlu0 %v7911, 16
      %v7940 = vpop.permute.xlu0 %7939
      %7941 = vrot.lane.b32.xlu0 %v7912, 16
      %v7942 = vpop.permute.xlu0 %7941
      %7943 = vrot.lane.b32.xlu0 %v7913, 16
      %v7944 = vpop.permute.xlu0 %7943
      %7945 = vrot.lane.b32.xlu0 %v7914, 16
      %v7946 = vpop.permute.xlu0 %7945
      %v7947 = vunpack.c.l.b16 %v6478
      %v7948 = vunpack.c.l.b16 %v6481
      %v7949 = vunpack.c.l.b16 %v6485
      %v7950 = vunpack.c.l.b16 %v6488
      %v7951 = vunpack.c.l.b16 %v6492
      %v7952 = vunpack.c.l.b16 %v6495
      %v7953 = vunpack.c.l.b16 %v6499
      %v7954 = vunpack.c.l.b16 %v6502
      %v7955 = vunpack.c.l.b16 %v6506
      %v7956 = vunpack.c.l.b16 %v6509
      %v7957 = vunpack.c.l.b16 %v6513
      %v7958 = vunpack.c.l.b16 %v6516
      %v7959 = vunpack.c.l.b16 %v6520
      %v7960 = vunpack.c.l.b16 %v6523
      %v7961 = vunpack.c.l.b16 %v6527
      %v7962 = vunpack.c.l.b16 %v6530
      %v7963 = vunpack.c.l.b16 %v6534
      %v7964 = vunpack.c.l.b16 %v6537
      %v7965 = vunpack.c.l.b16 %v6541
      %v7966 = vunpack.c.l.b16 %v6544
      %v7967 = vunpack.c.l.b16 %v6548
      %v7968 = vunpack.c.l.b16 %v6551
      %v7969 = vunpack.c.l.b16 %v6555
      %v7970 = vunpack.c.l.b16 %v6558
      %v7971 = vunpack.c.l.b16 %v6562
      %v7972 = vunpack.c.l.b16 %v6565
      %v7973 = vunpack.c.l.b16 %v6569
      %v7974 = vunpack.c.l.b16 %v6572
      %v7975 = vunpack.c.l.b16 %v6576
      %v7976 = vunpack.c.l.b16 %v6579
      %v7977 = vunpack.c.l.b16 %v6583
      %v7978 = vunpack.c.l.b16 %v6586
      %v7979 = vpack.c.b16 %v7948, %v7947
      %v7980 = vpack.c.b16 %v7950, %v7949
      %v7981 = vpack.c.b16 %v7952, %v7951
      %v7982 = vpack.c.b16 %v7954, %v7953
      %v7983 = vpack.c.b16 %v7956, %v7955
      %v7984 = vpack.c.b16 %v7958, %v7957
      %v7985 = vpack.c.b16 %v7960, %v7959
      %v7986 = vpack.c.b16 %v7962, %v7961
      %v7987 = vpack.c.b16 %v7964, %v7963
      %v7988 = vpack.c.b16 %v7966, %v7965
      %v7989 = vpack.c.b16 %v7968, %v7967
      %v7990 = vpack.c.b16 %v7970, %v7969
      %v7991 = vpack.c.b16 %v7972, %v7971
      %v7992 = vpack.c.b16 %v7974, %v7973
      %v7993 = vpack.c.b16 %v7976, %v7975
      %v7994 = vpack.c.b16 %v7978, %v7977
      %7995 = vrot.lane.b32.xlu0 %v7979, 32
      %v7996 = vpop.permute.xlu0 %7995
      %7997 = vrot.lane.b32.xlu0 %v7980, 32
      %v7998 = vpop.permute.xlu0 %7997
      %7999 = vrot.lane.b32.xlu0 %v7981, 32
      %v8000 = vpop.permute.xlu0 %7999
      %8001 = vrot.lane.b32.xlu0 %v7982, 32
      %v8002 = vpop.permute.xlu0 %8001
      %8003 = vrot.lane.b32.xlu0 %v7983, 32
      %v8004 = vpop.permute.xlu0 %8003
      %8005 = vrot.lane.b32.xlu0 %v7984, 32
      %v8006 = vpop.permute.xlu0 %8005
      %8007 = vrot.lane.b32.xlu0 %v7985, 32
      %v8008 = vpop.permute.xlu0 %8007
      %8009 = vrot.lane.b32.xlu0 %v7986, 32
      %v8010 = vpop.permute.xlu0 %8009
      %8011 = vrot.lane.b32.xlu0 %v7987, 32
      %v8012 = vpop.permute.xlu0 %8011
      %8013 = vrot.lane.b32.xlu0 %v7988, 32
      %v8014 = vpop.permute.xlu0 %8013
      %8015 = vrot.lane.b32.xlu0 %v7989, 32
      %v8016 = vpop.permute.xlu0 %8015
      %8017 = vrot.lane.b32.xlu0 %v7990, 32
      %v8018 = vpop.permute.xlu0 %8017
      %8019 = vrot.lane.b32.xlu0 %v7991, 32
      %v8020 = vpop.permute.xlu0 %8019
      %8021 = vrot.lane.b32.xlu0 %v7992, 32
      %v8022 = vpop.permute.xlu0 %8021
      %8023 = vrot.lane.b32.xlu0 %v7993, 32
      %v8024 = vpop.permute.xlu0 %8023
      %8025 = vrot.lane.b32.xlu0 %v7994, 32
      %v8026 = vpop.permute.xlu0 %8025
      %v8043 = vunpack.c.l.b16 %v6587
      %v8044 = vunpack.c.l.b16 %v6588
      %v8045 = vunpack.c.l.b16 %v6589
      %v8046 = vunpack.c.l.b16 %v6590
      %v8047 = vunpack.c.l.b16 %v6591
      %v8048 = vunpack.c.l.b16 %v6592
      %v8049 = vunpack.c.l.b16 %v6593
      %v8050 = vunpack.c.l.b16 %v6594
      %v8051 = vunpack.c.l.b16 %v6595
      %v8052 = vunpack.c.l.b16 %v6596
      %v8053 = vunpack.c.l.b16 %v6597
      %v8054 = vunpack.c.l.b16 %v6598
      %v8055 = vunpack.c.l.b16 %v6599
      %v8056 = vunpack.c.l.b16 %v6600
      %v8057 = vunpack.c.l.b16 %v6601
      %v8058 = vunpack.c.l.b16 %v6602
      %v8059 = vunpack.c.l.b16 %v6603
      %v8060 = vunpack.c.l.b16 %v6604
      %v8061 = vunpack.c.l.b16 %v6605
      %v8062 = vunpack.c.l.b16 %v6606
      %v8063 = vunpack.c.l.b16 %v6607
      %v8064 = vunpack.c.l.b16 %v6608
      %v8065 = vunpack.c.l.b16 %v6609
      %v8066 = vunpack.c.l.b16 %v6610
      %v8067 = vunpack.c.l.b16 %v6611
      %v8068 = vunpack.c.l.b16 %v6612
      %v8069 = vunpack.c.l.b16 %v6613
      %v8070 = vunpack.c.l.b16 %v6614
      %v8071 = vunpack.c.l.b16 %v6615
      %v8072 = vunpack.c.l.b16 %v6616
      %v8073 = vunpack.c.l.b16 %v6617
      %v8074 = vunpack.c.l.b16 %v6618
      %v8075 = vpack.c.b16 %v8044, %v8043
      %v8076 = vpack.c.b16 %v8046, %v8045
      %v8077 = vpack.c.b16 %v8048, %v8047
      %v8078 = vpack.c.b16 %v8050, %v8049
      %v8079 = vpack.c.b16 %v8052, %v8051
      %v8080 = vpack.c.b16 %v8054, %v8053
      %v8081 = vpack.c.b16 %v8056, %v8055
      %v8082 = vpack.c.b16 %v8058, %v8057
      %v8083 = vpack.c.b16 %v8060, %v8059
      %v8084 = vpack.c.b16 %v8062, %v8061
      %v8085 = vpack.c.b16 %v8064, %v8063
      %v8086 = vpack.c.b16 %v8066, %v8065
      %v8087 = vpack.c.b16 %v8068, %v8067
      %v8088 = vpack.c.b16 %v8070, %v8069
      %v8089 = vpack.c.b16 %v8072, %v8071
      %v8090 = vpack.c.b16 %v8074, %v8073
      %8091 = vrot.lane.b32.xlu0 %v8075, 48
      %v8092 = vpop.permute.xlu0 %8091
      %8093 = vrot.lane.b32.xlu0 %v8076, 48
      %v8094 = vpop.permute.xlu0 %8093
      %8095 = vrot.lane.b32.xlu0 %v8077, 48
      %v8096 = vpop.permute.xlu0 %8095
      %8097 = vrot.lane.b32.xlu0 %v8078, 48
      %v8098 = vpop.permute.xlu0 %8097
      %8099 = vrot.lane.b32.xlu0 %v8079, 48
      %v8100 = vpop.permute.xlu0 %8099
      %8101 = vrot.lane.b32.xlu0 %v8080, 48
      %v8102 = vpop.permute.xlu0 %8101
      %8103 = vrot.lane.b32.xlu0 %v8081, 48
      %v8104 = vpop.permute.xlu0 %8103
      %8105 = vrot.lane.b32.xlu0 %v8082, 48
      %v8106 = vpop.permute.xlu0 %8105
      %8107 = vrot.lane.b32.xlu0 %v8083, 48
      %v8108 = vpop.permute.xlu0 %8107
      %8109 = vrot.lane.b32.xlu0 %v8084, 48
      %v8110 = vpop.permute.xlu0 %8109
      %8111 = vrot.lane.b32.xlu0 %v8085, 48
      %v8112 = vpop.permute.xlu0 %8111
      %8113 = vrot.lane.b32.xlu0 %v8086, 48
      %v8114 = vpop.permute.xlu0 %8113
      %8115 = vrot.lane.b32.xlu0 %v8087, 48
      %v8116 = vpop.permute.xlu0 %8115
      %8117 = vrot.lane.b32.xlu0 %v8088, 48
      %v8118 = vpop.permute.xlu0 %8117
      %8119 = vrot.lane.b32.xlu0 %v8089, 48
      %v8120 = vpop.permute.xlu0 %8119
      %8121 = vrot.lane.b32.xlu0 %v8090, 48
      %v8122 = vpop.permute.xlu0 %8121
      %v8123 = vunpack.c.l.b16 %v6648
      %v8124 = vunpack.c.l.b16 %v6658
      %v8125 = vunpack.c.l.b16 %v6672
      %v8126 = vunpack.c.l.b16 %v6682
      %v8127 = vunpack.c.l.b16 %v6696
      %v8128 = vunpack.c.l.b16 %v6706
      %v8129 = vunpack.c.l.b16 %v6720
      %v8130 = vunpack.c.l.b16 %v6730
      %v8131 = vunpack.c.l.b16 %v6744
      %v8132 = vunpack.c.l.b16 %v6754
      %v8133 = vunpack.c.l.b16 %v6768
      %v8134 = vunpack.c.l.b16 %v6778
      %v8135 = vunpack.c.l.b16 %v6792
      %v8136 = vunpack.c.l.b16 %v6802
      %v8137 = vunpack.c.l.b16 %v6816
      %v8138 = vunpack.c.l.b16 %v6826
      %v8139 = vunpack.c.l.b16 %v6840
      %v8140 = vunpack.c.l.b16 %v6850
      %v8141 = vunpack.c.l.b16 %v6864
      %v8142 = vunpack.c.l.b16 %v6874
      %v8143 = vunpack.c.l.b16 %v6888
      %v8144 = vunpack.c.l.b16 %v6898
      %v8145 = vunpack.c.l.b16 %v6912
      %v8146 = vunpack.c.l.b16 %v6922
      %v8147 = vunpack.c.l.b16 %v6936
      %v8148 = vunpack.c.l.b16 %v6946
      %v8149 = vunpack.c.l.b16 %v6960
      %v8150 = vunpack.c.l.b16 %v6970
      %v8151 = vunpack.c.l.b16 %v6984
      %v8152 = vunpack.c.l.b16 %v6994
      %v8153 = vunpack.c.l.b16 %v7008
      %v8154 = vunpack.c.l.b16 %v7018
      %v8155 = vpack.c.b16 %v8124, %v8123
      %v8156 = vpack.c.b16 %v8126, %v8125
      %v8157 = vpack.c.b16 %v8128, %v8127
      %v8158 = vpack.c.b16 %v8130, %v8129
      %v8159 = vpack.c.b16 %v8132, %v8131
      %v8160 = vpack.c.b16 %v8134, %v8133
      %v8161 = vpack.c.b16 %v8136, %v8135
      %v8162 = vpack.c.b16 %v8138, %v8137
      %v8163 = vpack.c.b16 %v8140, %v8139
      %v8164 = vpack.c.b16 %v8142, %v8141
      %v8165 = vpack.c.b16 %v8144, %v8143
      %v8166 = vpack.c.b16 %v8146, %v8145
      %v8167 = vpack.c.b16 %v8148, %v8147
      %v8168 = vpack.c.b16 %v8150, %v8149
      %v8169 = vpack.c.b16 %v8152, %v8151
      %v8170 = vpack.c.b16 %v8154, %v8153
      %8171 = vrot.lane.b32.xlu0 %v8155, 64
      %v8172 = vpop.permute.xlu0 %8171
      %8173 = vrot.lane.b32.xlu0 %v8156, 64
      %v8174 = vpop.permute.xlu0 %8173
      %8175 = vrot.lane.b32.xlu0 %v8157, 64
      %v8176 = vpop.permute.xlu0 %8175
      %8177 = vrot.lane.b32.xlu0 %v8158, 64
      %v8178 = vpop.permute.xlu0 %8177
      %8179 = vrot.lane.b32.xlu0 %v8159, 64
      %v8180 = vpop.permute.xlu0 %8179
      %8181 = vrot.lane.b32.xlu0 %v8160, 64
      %v8182 = vpop.permute.xlu0 %8181
      %8183 = vrot.lane.b32.xlu0 %v8161, 64
      %v8184 = vpop.permute.xlu0 %8183
      %8185 = vrot.lane.b32.xlu0 %v8162, 64
      %v8186 = vpop.permute.xlu0 %8185
      %8187 = vrot.lane.b32.xlu0 %v8163, 64
      %v8188 = vpop.permute.xlu0 %8187
      %8189 = vrot.lane.b32.xlu0 %v8164, 64
      %v8190 = vpop.permute.xlu0 %8189
      %8191 = vrot.lane.b32.xlu0 %v8165, 64
      %v8192 = vpop.permute.xlu0 %8191
      %8193 = vrot.lane.b32.xlu0 %v8166, 64
      %v8194 = vpop.permute.xlu0 %8193
      %8195 = vrot.lane.b32.xlu0 %v8167, 64
      %v8196 = vpop.permute.xlu0 %8195
      %8197 = vrot.lane.b32.xlu0 %v8168, 64
      %v8198 = vpop.permute.xlu0 %8197
      %8199 = vrot.lane.b32.xlu0 %v8169, 64
      %v8200 = vpop.permute.xlu0 %8199
      %8201 = vrot.lane.b32.xlu0 %v8170, 64
      %v8202 = vpop.permute.xlu0 %8201
      %v8203 = vunpack.c.l.b16 %v7086
      %v8204 = vunpack.c.l.b16 %v7089
      %v8205 = vunpack.c.l.b16 %v7093
      %v8206 = vunpack.c.l.b16 %v7096
      %v8207 = vunpack.c.l.b16 %v7100
      %v8208 = vunpack.c.l.b16 %v7103
      %v8209 = vunpack.c.l.b16 %v7107
      %v8210 = vunpack.c.l.b16 %v7110
      %v8211 = vunpack.c.l.b16 %v7114
      %v8212 = vunpack.c.l.b16 %v7117
      %v8213 = vunpack.c.l.b16 %v7121
      %v8214 = vunpack.c.l.b16 %v7124
      %v8215 = vunpack.c.l.b16 %v7128
      %v8216 = vunpack.c.l.b16 %v7131
      %v8217 = vunpack.c.l.b16 %v7135
      %v8218 = vunpack.c.l.b16 %v7138
      %v8219 = vunpack.c.l.b16 %v7142
      %v8220 = vunpack.c.l.b16 %v7145
      %v8221 = vunpack.c.l.b16 %v7149
      %v8222 = vunpack.c.l.b16 %v7152
      %v8223 = vunpack.c.l.b16 %v7156
      %v8224 = vunpack.c.l.b16 %v7159
      %v8225 = vunpack.c.l.b16 %v7163
      %v8226 = vunpack.c.l.b16 %v7166
      %v8227 = vunpack.c.l.b16 %v7170
      %v8228 = vunpack.c.l.b16 %v7173
      %v8229 = vunpack.c.l.b16 %v7177
      %v8230 = vunpack.c.l.b16 %v7180
      %v8231 = vunpack.c.l.b16 %v7184
      %v8232 = vunpack.c.l.b16 %v7187
      %v8233 = vunpack.c.l.b16 %v7191
      %v8234 = vunpack.c.l.b16 %v7194
      %v8235 = vpack.c.b16 %v8204, %v8203
      %v8236 = vpack.c.b16 %v8206, %v8205
      %v8237 = vpack.c.b16 %v8208, %v8207
      %v8238 = vpack.c.b16 %v8210, %v8209
      %v8239 = vpack.c.b16 %v8212, %v8211
      %v8240 = vpack.c.b16 %v8214, %v8213
      %v8241 = vpack.c.b16 %v8216, %v8215
      %v8242 = vpack.c.b16 %v8218, %v8217
      %v8243 = vpack.c.b16 %v8220, %v8219
      %v8244 = vpack.c.b16 %v8222, %v8221
      %v8245 = vpack.c.b16 %v8224, %v8223
      %v8246 = vpack.c.b16 %v8226, %v8225
      %v8247 = vpack.c.b16 %v8228, %v8227
      %v8248 = vpack.c.b16 %v8230, %v8229
      %v8249 = vpack.c.b16 %v8232, %v8231
      %v8250 = vpack.c.b16 %v8234, %v8233
      %8251 = vrot.lane.b32.xlu0 %v8235, 80
      %v8252 = vpop.permute.xlu0 %8251
      %8253 = vrot.lane.b32.xlu0 %v8236, 80
      %v8254 = vpop.permute.xlu0 %8253
      %8255 = vrot.lane.b32.xlu0 %v8237, 80
      %v8256 = vpop.permute.xlu0 %8255
      %8257 = vrot.lane.b32.xlu0 %v8238, 80
      %v8258 = vpop.permute.xlu0 %8257
      %8259 = vrot.lane.b32.xlu0 %v8239, 80
      %v8260 = vpop.permute.xlu0 %8259
      %8261 = vrot.lane.b32.xlu0 %v8240, 80
      %v8262 = vpop.permute.xlu0 %8261
      %8263 = vrot.lane.b32.xlu0 %v8241, 80
      %v8264 = vpop.permute.xlu0 %8263
      %8265 = vrot.lane.b32.xlu0 %v8242, 80
      %v8266 = vpop.permute.xlu0 %8265
      %8267 = vrot.lane.b32.xlu0 %v8243, 80
      %v8268 = vpop.permute.xlu0 %8267
      %8269 = vrot.lane.b32.xlu0 %v8244, 80
      %v8270 = vpop.permute.xlu0 %8269
      %8271 = vrot.lane.b32.xlu0 %v8245, 80
      %v8272 = vpop.permute.xlu0 %8271
      %8273 = vrot.lane.b32.xlu0 %v8246, 80
      %v8274 = vpop.permute.xlu0 %8273
      %8275 = vrot.lane.b32.xlu0 %v8247, 80
      %v8276 = vpop.permute.xlu0 %8275
      %8277 = vrot.lane.b32.xlu0 %v8248, 80
      %v8278 = vpop.permute.xlu0 %8277
      %8279 = vrot.lane.b32.xlu0 %v8249, 80
      %v8280 = vpop.permute.xlu0 %8279
      %8281 = vrot.lane.b32.xlu0 %v8250, 80
      %v8282 = vpop.permute.xlu0 %8281
      %v8299 = vunpack.c.l.b16 %v7195
      %v8300 = vunpack.c.l.b16 %v7196
      %v8301 = vunpack.c.l.b16 %v7197
      %v8302 = vunpack.c.l.b16 %v7198
      %v8303 = vunpack.c.l.b16 %v7199
      %v8304 = vunpack.c.l.b16 %v7200
      %v8305 = vunpack.c.l.b16 %v7201
      %v8306 = vunpack.c.l.b16 %v7202
      %v8307 = vunpack.c.l.b16 %v7203
      %v8308 = vunpack.c.l.b16 %v7204
      %v8309 = vunpack.c.l.b16 %v7205
      %v8310 = vunpack.c.l.b16 %v7206
      %v8311 = vunpack.c.l.b16 %v7207
      %v8312 = vunpack.c.l.b16 %v7208
      %v8313 = vunpack.c.l.b16 %v7209
      %v8314 = vunpack.c.l.b16 %v7210
      %v8315 = vunpack.c.l.b16 %v7211
      %v8316 = vunpack.c.l.b16 %v7212
      %v8317 = vunpack.c.l.b16 %v7213
      %v8318 = vunpack.c.l.b16 %v7214
      %v8319 = vunpack.c.l.b16 %v7215
      %v8320 = vunpack.c.l.b16 %v7216
      %v8321 = vunpack.c.l.b16 %v7217
      %v8322 = vunpack.c.l.b16 %v7218
      %v8323 = vunpack.c.l.b16 %v7219
      %v8324 = vunpack.c.l.b16 %v7220
      %v8325 = vunpack.c.l.b16 %v7221
      %v8326 = vunpack.c.l.b16 %v7222
      %v8327 = vunpack.c.l.b16 %v7223
      %v8328 = vunpack.c.l.b16 %v7224
      %v8329 = vunpack.c.l.b16 %v7225
      %v8330 = vunpack.c.l.b16 %v7226
      %v8331 = vpack.c.b16 %v8300, %v8299
      %v8332 = vpack.c.b16 %v8302, %v8301
      %v8333 = vpack.c.b16 %v8304, %v8303
      %v8334 = vpack.c.b16 %v8306, %v8305
      %v8335 = vpack.c.b16 %v8308, %v8307
      %v8336 = vpack.c.b16 %v8310, %v8309
      %v8337 = vpack.c.b16 %v8312, %v8311
      %v8338 = vpack.c.b16 %v8314, %v8313
      %v8339 = vpack.c.b16 %v8316, %v8315
      %v8340 = vpack.c.b16 %v8318, %v8317
      %v8341 = vpack.c.b16 %v8320, %v8319
      %v8342 = vpack.c.b16 %v8322, %v8321
      %v8343 = vpack.c.b16 %v8324, %v8323
      %v8344 = vpack.c.b16 %v8326, %v8325
      %v8345 = vpack.c.b16 %v8328, %v8327
      %v8346 = vpack.c.b16 %v8330, %v8329
      %8347 = vrot.lane.b32.xlu0 %v8331, 96
      %v8348 = vpop.permute.xlu0 %8347
      %8349 = vrot.lane.b32.xlu0 %v8332, 96
      %v8350 = vpop.permute.xlu0 %8349
      %8351 = vrot.lane.b32.xlu0 %v8333, 96
      %v8352 = vpop.permute.xlu0 %8351
      %8353 = vrot.lane.b32.xlu0 %v8334, 96
      %v8354 = vpop.permute.xlu0 %8353
      %8355 = vrot.lane.b32.xlu0 %v8335, 96
      %v8356 = vpop.permute.xlu0 %8355
      %8357 = vrot.lane.b32.xlu0 %v8336, 96
      %v8358 = vpop.permute.xlu0 %8357
      %8359 = vrot.lane.b32.xlu0 %v8337, 96
      %v8360 = vpop.permute.xlu0 %8359
      %8361 = vrot.lane.b32.xlu0 %v8338, 96
      %v8362 = vpop.permute.xlu0 %8361
      %8363 = vrot.lane.b32.xlu0 %v8339, 96
      %v8364 = vpop.permute.xlu0 %8363
      %8365 = vrot.lane.b32.xlu0 %v8340, 96
      %v8366 = vpop.permute.xlu0 %8365
      %8367 = vrot.lane.b32.xlu0 %v8341, 96
      %v8368 = vpop.permute.xlu0 %8367
      %8369 = vrot.lane.b32.xlu0 %v8342, 96
      %v8370 = vpop.permute.xlu0 %8369
      %8371 = vrot.lane.b32.xlu0 %v8343, 96
      %v8372 = vpop.permute.xlu0 %8371
      %8373 = vrot.lane.b32.xlu0 %v8344, 96
      %v8374 = vpop.permute.xlu0 %8373
      %8375 = vrot.lane.b32.xlu0 %v8345, 96
      %v8376 = vpop.permute.xlu0 %8375
      %8377 = vrot.lane.b32.xlu0 %v8346, 96
      %v8378 = vpop.permute.xlu0 %8377
      %v8379 = vunpack.c.l.b16 %v7256
      %v8380 = vunpack.c.l.b16 %v7266
      %v8381 = vunpack.c.l.b16 %v7280
      %v8382 = vunpack.c.l.b16 %v7290
      %v8383 = vunpack.c.l.b16 %v7304
      %v8384 = vunpack.c.l.b16 %v7314
      %v8385 = vunpack.c.l.b16 %v7328
      %v8386 = vunpack.c.l.b16 %v7338
      %v8387 = vunpack.c.l.b16 %v7352
      %v8388 = vunpack.c.l.b16 %v7362
      %v8389 = vunpack.c.l.b16 %v7376
      %v8390 = vunpack.c.l.b16 %v7386
      %v8391 = vunpack.c.l.b16 %v7400
      %v8392 = vunpack.c.l.b16 %v7410
      %v8393 = vunpack.c.l.b16 %v7424
      %v8394 = vunpack.c.l.b16 %v7434
      %v8395 = vunpack.c.l.b16 %v7448
      %v8396 = vunpack.c.l.b16 %v7458
      %v8397 = vunpack.c.l.b16 %v7472
      %v8398 = vunpack.c.l.b16 %v7482
      %v8399 = vunpack.c.l.b16 %v7496
      %v8400 = vunpack.c.l.b16 %v7506
      %v8401 = vunpack.c.l.b16 %v7520
      %v8402 = vunpack.c.l.b16 %v7530
      %v8403 = vunpack.c.l.b16 %v7544
      %v8404 = vunpack.c.l.b16 %v7554
      %v8405 = vunpack.c.l.b16 %v7568
      %v8406 = vunpack.c.l.b16 %v7578
      %v8407 = vunpack.c.l.b16 %v7592
      %v8408 = vunpack.c.l.b16 %v7602
      %v8409 = vunpack.c.l.b16 %v7616
      %v8410 = vunpack.c.l.b16 %v7626
      %v8411 = vpack.c.b16 %v8380, %v8379
      %v8412 = vpack.c.b16 %v8382, %v8381
      %v8413 = vpack.c.b16 %v8384, %v8383
      %v8414 = vpack.c.b16 %v8386, %v8385
      %v8415 = vpack.c.b16 %v8388, %v8387
      %v8416 = vpack.c.b16 %v8390, %v8389
      %v8417 = vpack.c.b16 %v8392, %v8391
      %v8418 = vpack.c.b16 %v8394, %v8393
      %v8419 = vpack.c.b16 %v8396, %v8395
      %v8420 = vpack.c.b16 %v8398, %v8397
      %v8421 = vpack.c.b16 %v8400, %v8399
      %v8422 = vpack.c.b16 %v8402, %v8401
      %v8423 = vpack.c.b16 %v8404, %v8403
      %v8424 = vpack.c.b16 %v8406, %v8405
      %v8425 = vpack.c.b16 %v8408, %v8407
      %v8426 = vpack.c.b16 %v8410, %v8409
      %8427 = vrot.lane.b32.xlu0 %v8411, 112
      %v8428 = vpop.permute.xlu0 %8427
      %8429 = vrot.lane.b32.xlu0 %v8412, 112
      %v8430 = vpop.permute.xlu0 %8429
      %8431 = vrot.lane.b32.xlu0 %v8413, 112
      %v8432 = vpop.permute.xlu0 %8431
      %8433 = vrot.lane.b32.xlu0 %v8414, 112
      %v8434 = vpop.permute.xlu0 %8433
      %8435 = vrot.lane.b32.xlu0 %v8415, 112
      %v8436 = vpop.permute.xlu0 %8435
      %8437 = vrot.lane.b32.xlu0 %v8416, 112
      %v8438 = vpop.permute.xlu0 %8437
      %8439 = vrot.lane.b32.xlu0 %v8417, 112
      %v8440 = vpop.permute.xlu0 %8439
      %8441 = vrot.lane.b32.xlu0 %v8418, 112
      %v8442 = vpop.permute.xlu0 %8441
      %8443 = vrot.lane.b32.xlu0 %v8419, 112
      %v8444 = vpop.permute.xlu0 %8443
      %8445 = vrot.lane.b32.xlu0 %v8420, 112
      %v8446 = vpop.permute.xlu0 %8445
      %8447 = vrot.lane.b32.xlu0 %v8421, 112
      %v8448 = vpop.permute.xlu0 %8447
      %8449 = vrot.lane.b32.xlu0 %v8422, 112
      %v8450 = vpop.permute.xlu0 %8449
      %8451 = vrot.lane.b32.xlu0 %v8423, 112
      %v8452 = vpop.permute.xlu0 %8451
      %8453 = vrot.lane.b32.xlu0 %v8424, 112
      %v8454 = vpop.permute.xlu0 %8453
      %8455 = vrot.lane.b32.xlu0 %v8425, 112
      %v8456 = vpop.permute.xlu0 %8455
      %8457 = vrot.lane.b32.xlu0 %v8426, 112
      %v8458 = vpop.permute.xlu0 %8457
      %v8459 = vunpack.c.l.b16 %v7694
      %v8460 = vunpack.c.l.b16 %v7697
      %v8461 = vunpack.c.l.b16 %v7701
      %v8462 = vunpack.c.l.b16 %v7704
      %v8463 = vunpack.c.l.b16 %v7708
      %v8464 = vunpack.c.l.b16 %v7711
      %v8465 = vunpack.c.l.b16 %v7715
      %v8466 = vunpack.c.l.b16 %v7718
      %v8467 = vunpack.c.l.b16 %v7722
      %v8468 = vunpack.c.l.b16 %v7725
      %v8469 = vunpack.c.l.b16 %v7729
      %v8470 = vunpack.c.l.b16 %v7732
      %v8471 = vunpack.c.l.b16 %v7736
      %v8472 = vunpack.c.l.b16 %v7739
      %v8473 = vunpack.c.l.b16 %v7743
      %v8474 = vunpack.c.l.b16 %v7746
      %v8475 = vunpack.c.l.b16 %v7750
      %v8476 = vunpack.c.l.b16 %v7753
      %v8477 = vunpack.c.l.b16 %v7757
      %v8478 = vunpack.c.l.b16 %v7760
      %v8479 = vunpack.c.l.b16 %v7764
      %v8480 = vunpack.c.l.b16 %v7767
      %v8481 = vunpack.c.l.b16 %v7771
      %v8482 = vunpack.c.l.b16 %v7774
      %v8483 = vunpack.c.l.b16 %v7778
      %v8484 = vunpack.c.l.b16 %v7781
      %v8485 = vunpack.c.l.b16 %v7785
      %v8486 = vunpack.c.l.b16 %v7788
      %v8487 = vunpack.c.l.b16 %v7792
      %v8488 = vunpack.c.l.b16 %v7795
      %v8489 = vunpack.c.l.b16 %v7799
      %v8490 = vunpack.c.l.b16 %v7802
      %v8491 = vpack.c.b16 %v8460, %v8459
      %v8492 = vpack.c.b16 %v8462, %v8461
      %v8493 = vpack.c.b16 %v8464, %v8463
      %v8494 = vpack.c.b16 %v8466, %v8465
      %v8495 = vpack.c.b16 %v8468, %v8467
      %v8496 = vpack.c.b16 %v8470, %v8469
      %v8497 = vpack.c.b16 %v8472, %v8471
      %v8498 = vpack.c.b16 %v8474, %v8473
      %v8499 = vpack.c.b16 %v8476, %v8475
      %v8500 = vpack.c.b16 %v8478, %v8477
      %v8501 = vpack.c.b16 %v8480, %v8479
      %v8502 = vpack.c.b16 %v8482, %v8481
      %v8503 = vpack.c.b16 %v8484, %v8483
      %v8504 = vpack.c.b16 %v8486, %v8485
      %v8505 = vpack.c.b16 %v8488, %v8487
      %v8506 = vpack.c.b16 %v8490, %v8489
      %v8509 = vsel %vm1007, %v7851, %v7916
      %v8512 = vsel %vm1007, %v7852, %v7918
      %v8515 = vsel %vm1007, %v7853, %v7920
      %v8518 = vsel %vm1007, %v7854, %v7922
      %v8521 = vsel %vm1007, %v7855, %v7924
      %v8524 = vsel %vm1007, %v7856, %v7926
      %v8527 = vsel %vm1007, %v7857, %v7928
      %v8530 = vsel %vm1007, %v7858, %v7930
      %v8533 = vsel %vm1007, %v7859, %v7932
      %v8536 = vsel %vm1007, %v7860, %v7934
      %v8539 = vsel %vm1007, %v7861, %v7936
      %v8542 = vsel %vm1007, %v7862, %v7938
      %v8545 = vsel %vm1007, %v7863, %v7940
      %v8548 = vsel %vm1007, %v7864, %v7942
      %v8551 = vsel %vm1007, %v7865, %v7944
      %v8554 = vsel %vm1007, %v7866, %v7946
      %v8556 = vsel %vm4374, %v8509, %v7996
      %v8558 = vsel %vm4374, %v8512, %v7998
      %v8560 = vsel %vm4374, %v8515, %v8000
      %v8562 = vsel %vm4374, %v8518, %v8002
      %v8564 = vsel %vm4374, %v8521, %v8004
      %v8566 = vsel %vm4374, %v8524, %v8006
      %v8568 = vsel %vm4374, %v8527, %v8008
      %v8570 = vsel %vm4374, %v8530, %v8010
      %v8572 = vsel %vm4374, %v8533, %v8012
      %v8574 = vsel %vm4374, %v8536, %v8014
      %v8576 = vsel %vm4374, %v8539, %v8016
      %v8578 = vsel %vm4374, %v8542, %v8018
      %v8580 = vsel %vm4374, %v8545, %v8020
      %v8582 = vsel %vm4374, %v8548, %v8022
      %v8584 = vsel %vm4374, %v8551, %v8024
      %v8586 = vsel %vm4374, %v8554, %v8026
      %v8588 = vsel %vm4407, %v8556, %v8092
      %v8590 = vsel %vm4407, %v8558, %v8094
      %v8592 = vsel %vm4407, %v8560, %v8096
      %v8594 = vsel %vm4407, %v8562, %v8098
      %v8596 = vsel %vm4407, %v8564, %v8100
      %v8598 = vsel %vm4407, %v8566, %v8102
      %v8600 = vsel %vm4407, %v8568, %v8104
      %v8602 = vsel %vm4407, %v8570, %v8106
      %v8604 = vsel %vm4407, %v8572, %v8108
      %v8606 = vsel %vm4407, %v8574, %v8110
      %v8608 = vsel %vm4407, %v8576, %v8112
      %v8610 = vsel %vm4407, %v8578, %v8114
      %v8612 = vsel %vm4407, %v8580, %v8116
      %v8614 = vsel %vm4407, %v8582, %v8118
      %v8616 = vsel %vm4407, %v8584, %v8120
      %v8618 = vsel %vm4407, %v8586, %v8122
      %v8620 = vsel %vm4440, %v8588, %v8172
      %v8622 = vsel %vm4440, %v8590, %v8174
      %v8624 = vsel %vm4440, %v8592, %v8176
      %v8626 = vsel %vm4440, %v8594, %v8178
      %v8628 = vsel %vm4440, %v8596, %v8180
      %v8630 = vsel %vm4440, %v8598, %v8182
      %v8632 = vsel %vm4440, %v8600, %v8184
      %v8634 = vsel %vm4440, %v8602, %v8186
      %v8636 = vsel %vm4440, %v8604, %v8188
      %v8638 = vsel %vm4440, %v8606, %v8190
      %v8640 = vsel %vm4440, %v8608, %v8192
      %v8642 = vsel %vm4440, %v8610, %v8194
      %v8644 = vsel %vm4440, %v8612, %v8196
      %v8646 = vsel %vm4440, %v8614, %v8198
      %v8648 = vsel %vm4440, %v8616, %v8200
      %v8650 = vsel %vm4440, %v8618, %v8202
      %v8652 = vsel %vm4473, %v8620, %v8252
      %v8654 = vsel %vm4473, %v8622, %v8254
      %v8656 = vsel %vm4473, %v8624, %v8256
      %v8658 = vsel %vm4473, %v8626, %v8258
      %v8660 = vsel %vm4473, %v8628, %v8260
      %v8662 = vsel %vm4473, %v8630, %v8262
      %v8664 = vsel %vm4473, %v8632, %v8264
      %v8666 = vsel %vm4473, %v8634, %v8266
      %v8668 = vsel %vm4473, %v8636, %v8268
      %v8670 = vsel %vm4473, %v8638, %v8270
      %v8672 = vsel %vm4473, %v8640, %v8272
      %v8674 = vsel %vm4473, %v8642, %v8274
      %v8676 = vsel %vm4473, %v8644, %v8276
      %v8678 = vsel %vm4473, %v8646, %v8278
      %v8680 = vsel %vm4473, %v8648, %v8280
      %v8682 = vsel %vm4473, %v8650, %v8282
      %v8684 = vsel %vm4506, %v8652, %v8348
      %v8686 = vsel %vm4506, %v8654, %v8350
      %v8688 = vsel %vm4506, %v8656, %v8352
      %v8690 = vsel %vm4506, %v8658, %v8354
      %v8692 = vsel %vm4506, %v8660, %v8356
      %v8694 = vsel %vm4506, %v8662, %v8358
      %v8696 = vsel %vm4506, %v8664, %v8360
      %v8698 = vsel %vm4506, %v8666, %v8362
      %v8700 = vsel %vm4506, %v8668, %v8364
      %v8702 = vsel %vm4506, %v8670, %v8366
      %v8704 = vsel %vm4506, %v8672, %v8368
      %v8706 = vsel %vm4506, %v8674, %v8370
      %v8708 = vsel %vm4506, %v8676, %v8372
      %v8710 = vsel %vm4506, %v8678, %v8374
      %v8712 = vsel %vm4506, %v8680, %v8376
      %v8714 = vsel %vm4506, %v8682, %v8378
      %v8716 = vsel %vm4539, %v8684, %v8428
      %v8719 = vsel %vm4539, %v8686, %v8430
      %v8722 = vsel %vm4539, %v8688, %v8432
      %v8725 = vsel %vm4539, %v8690, %v8434
      %v8728 = vsel %vm4539, %v8692, %v8436
      %v8731 = vsel %vm4539, %v8694, %v8438
      %v8734 = vsel %vm4539, %v8696, %v8440
      %v8737 = vsel %vm4539, %v8698, %v8442
      %v8740 = vsel %vm4539, %v8700, %v8444
      %v8743 = vsel %vm4539, %v8702, %v8446
      %v8746 = vsel %vm4539, %v8704, %v8448
      %v8749 = vsel %vm4539, %v8706, %v8450
      %v8752 = vsel %vm4539, %v8708, %v8452
      %v8755 = vsel %vm4539, %v8710, %v8454
      %v8758 = vsel %vm4539, %v8712, %v8456
      %v8761 = vsel %vm4539, %v8714, %v8458
      %v8764 = vlaneseq
      %v8765 = vshrl.u32 %v8764, 7
      %v8766 = vsub.s32 0, %v8765
      %v8767 = vrot.slane %v5041, %v8766
      %v8787 = vunpack.c.l.b16 %v5023
      %v8788 = vunpack.c.l.b16 %v5024
      %v8789 = vunpack.c.l.b16 %v5025
      %v8790 = vunpack.c.l.b16 %v5026
      %v8791 = vunpack.c.l.b16 %v5027
      %v8792 = vunpack.c.l.b16 %v5028
      %v8793 = vunpack.c.l.b16 %v5029
      %v8794 = vunpack.c.l.b16 %v5030
      %v8795 = vunpack.c.l.b16 %v5031
      %v8796 = vunpack.c.l.b16 %v5032
      %v8797 = vunpack.c.l.b16 %v5033
      %v8798 = vunpack.c.l.b16 %v5034
      %v8799 = vunpack.c.l.b16 %v5035
      %v8800 = vunpack.c.l.b16 %v5036
      %v8801 = vunpack.c.l.b16 %v5037
      %v8802 = vunpack.c.l.b16 %v5038
      %v8803 = vunpack.c.l.b16 %v5039
      %v8804 = vunpack.c.l.b16 %v5040
      %v8805 = vpack.c.b16 %v8788, %v8787
      %v8806 = vpack.c.b16 %v8790, %v8789
      %v8807 = vpack.c.b16 %v8792, %v8791
      %v8808 = vpack.c.b16 %v8794, %v8793
      %v8809 = vpack.c.b16 %v8796, %v8795
      %v8810 = vpack.c.b16 %v8798, %v8797
      %v8811 = vpack.c.b16 %v8800, %v8799
      %v8812 = vpack.c.b16 %v8802, %v8801
      %v8813 = vpack.c.b16 %v8804, %v8803
      %v8824 = vsel %vm1007, %v8491, 0
      %v8827 = vsel %vm1007, %v8492, 0
      %v8830 = vsel %vm1007, %v8493, 0
      %v8833 = vsel %vm1007, %v8494, 0
      %v8836 = vsel %vm1007, %v8495, 0
      %v8839 = vsel %vm1007, %v8496, 0
      %v8842 = vsel %vm1007, %v8497, 0
      %v8845 = vsel %vm1007, %v8498, 0
      %v8848 = vsel %vm1007, %v8499, 0
      %v8851 = vsel %vm1007, %v8500, 0
      %v8854 = vsel %vm1007, %v8501, 0
      %v8857 = vsel %vm1007, %v8502, 0
      %v8860 = vsel %vm1007, %v8503, 0
      %v8863 = vsel %vm1007, %v8504, 0
      %v8866 = vsel %vm1007, %v8505, 0
      %v8869 = vsel %vm1007, %v8506, 0
      %8871 = vmatprep.subr.bf16.mxu0 0
      %8872 = vmatpush1.bf16.msra.mxu0 %v8812
      %8873 = vmatprep.subr.bf16.mxu0 0
      %8874 = vmatpush1.bf16.msra.mxu0 %v8811
      %8875 = vmatprep.subr.bf16.mxu0 0
      %8876 = vmatpush1.bf16.msra.mxu0 %v8810
      %8877 = vmatprep.subr.bf16.mxu0 0
      %8878 = vmatpush1.bf16.msra.mxu0 %v8809
      %8879 = vmatprep.subr.bf16.mxu0 0
      %8880 = vmatpush1.bf16.msra.mxu0 %v8808
      %8881 = vmatprep.subr.bf16.mxu0 0
      %8882 = vmatpush1.bf16.msra.mxu0 %v8807
      %8883 = vmatprep.subr.bf16.mxu0 0
      %8884 = vmatpush1.bf16.msra.mxu0 %v8806
      %8885 = vmatprep.subr.bf16.mxu0 0
      %8886 = vmatpush1.bf16.msra.mxu0 %v8805
      %8887 = vmatprep.subr.bf16.mxu0 0
      %8888 = vmatpush2.bf16.msra.mxu0 0
      %8889 = vmatprep.subr.bf16.mxu0 0
      %8890 = vmatpush2.bf16.msra.mxu0 0
      %8891 = vmatprep.subr.bf16.mxu0 0
      %8892 = vmatpush2.bf16.msra.mxu0 0
      %8893 = vmatprep.subr.bf16.mxu0 0
      %8894 = vmatpush2.bf16.msra.mxu0 0
      %8895 = vmatprep.subr.bf16.mxu0 0
      %8896 = vmatpush2.bf16.msra.mxu0 0
      %8897 = vmatprep.subr.bf16.mxu0 0
      %8898 = vmatpush2.bf16.msra.mxu0 0
      %8899 = vmatprep.subr.bf16.mxu0 0
      %8900 = vmatpush2.bf16.msra.mxu0 0
      %8901 = vmatprep.subr.bf16.mxu0 0
      %8902 = vmatpush2.bf16.msra.mxu0 %v8813
      %8903 = vmatprep.mubr.bf16.mxu0 %v8824
      %8904 = vmatmul.mubr.bf16.gmra.mxu0 %v8716
      %v8905 = vpop.f32.mrf.mxu0
      %v8906 = vadd.f32 %v8767, %v8905
      %v8907 = vpop.f32.mrf.mxu0
      %v8908 = vpop.f32.mrf.mxu0
      %v8909 = vadd.f32 %v8767, %v8908
      %v8910 = vpop.f32.mrf.mxu0
      %8911 = vmatprep.mubr.bf16.mxu0 %v8827
      %8912 = vmatmul.mubr.bf16.gmra.mxu0 %v8719
      %v8913 = vpop.f32.mrf.mxu0
      %v8914 = vadd.f32 %v8767, %v8913
      %v8915 = vpop.f32.mrf.mxu0
      %v8916 = vpop.f32.mrf.mxu0
      %v8917 = vadd.f32 %v8767, %v8916
      %v8918 = vpop.f32.mrf.mxu0
      %8919 = vmatprep.mubr.bf16.mxu0 %v8830
      %8920 = vmatmul.mubr.bf16.gmra.mxu0 %v8722
      %v8921 = vpop.f32.mrf.mxu0
      %v8922 = vadd.f32 %v8767, %v8921
      %v8923 = vpop.f32.mrf.mxu0
      %v8924 = vpop.f32.mrf.mxu0
      %v8925 = vadd.f32 %v8767, %v8924
      %v8926 = vpop.f32.mrf.mxu0
      %8927 = vmatprep.mubr.bf16.mxu0 %v8833
      %8928 = vmatmul.mubr.bf16.gmra.mxu0 %v8725
      %v8929 = vpop.f32.mrf.mxu0
      %v8930 = vadd.f32 %v8767, %v8929
      %v8931 = vpop.f32.mrf.mxu0
      %v8932 = vpop.f32.mrf.mxu0
      %v8933 = vadd.f32 %v8767, %v8932
      %v8934 = vpop.f32.mrf.mxu0
      %8935 = vmatprep.mubr.bf16.mxu0 %v8836
      %8936 = vmatmul.mubr.bf16.gmra.mxu0 %v8728
      %v8937 = vpop.f32.mrf.mxu0
      %v8938 = vadd.f32 %v8767, %v8937
      %v8939 = vpop.f32.mrf.mxu0
      %v8940 = vpop.f32.mrf.mxu0
      %v8941 = vadd.f32 %v8767, %v8940
      %v8942 = vpop.f32.mrf.mxu0
      %8943 = vmatprep.mubr.bf16.mxu0 %v8839
      %8944 = vmatmul.mubr.bf16.gmra.mxu0 %v8731
      %v8945 = vpop.f32.mrf.mxu0
      %v8946 = vadd.f32 %v8767, %v8945
      %v8947 = vpop.f32.mrf.mxu0
      %v8948 = vpop.f32.mrf.mxu0
      %v8949 = vadd.f32 %v8767, %v8948
      %v8950 = vpop.f32.mrf.mxu0
      %8951 = vmatprep.mubr.bf16.mxu0 %v8842
      %8952 = vmatmul.mubr.bf16.gmra.mxu0 %v8734
      %v8953 = vpop.f32.mrf.mxu0
      %v8954 = vadd.f32 %v8767, %v8953
      %v8955 = vpop.f32.mrf.mxu0
      %v8956 = vpop.f32.mrf.mxu0
      %v8957 = vadd.f32 %v8767, %v8956
      %v8958 = vpop.f32.mrf.mxu0
      %8959 = vmatprep.mubr.bf16.mxu0 %v8845
      %8960 = vmatmul.mubr.bf16.gmra.mxu0 %v8737
      %v8961 = vpop.f32.mrf.mxu0
      %v8962 = vadd.f32 %v8767, %v8961
      %v8963 = vpop.f32.mrf.mxu0
      %v8964 = vpop.f32.mrf.mxu0
      %v8965 = vadd.f32 %v8767, %v8964
      %v8966 = vpop.f32.mrf.mxu0
      %8967 = vmatprep.mubr.bf16.mxu0 %v8848
      %8968 = vmatmul.mubr.bf16.gmra.mxu0 %v8740
      %v8969 = vpop.f32.mrf.mxu0
      %v8970 = vadd.f32 %v8767, %v8969
      %v8971 = vpop.f32.mrf.mxu0
      %v8972 = vpop.f32.mrf.mxu0
      %v8973 = vadd.f32 %v8767, %v8972
      %v8974 = vpop.f32.mrf.mxu0
      %8975 = vmatprep.mubr.bf16.mxu0 %v8851
      %8976 = vmatmul.mubr.bf16.gmra.mxu0 %v8743
      %v8977 = vpop.f32.mrf.mxu0
      %v8978 = vadd.f32 %v8767, %v8977
      %v8979 = vpop.f32.mrf.mxu0
      %v8980 = vpop.f32.mrf.mxu0
      %v8981 = vadd.f32 %v8767, %v8980
      %v8982 = vpop.f32.mrf.mxu0
      %8983 = vmatprep.mubr.bf16.mxu0 %v8854
      %8984 = vmatmul.mubr.bf16.gmra.mxu0 %v8746
      %v8985 = vpop.f32.mrf.mxu0
      %v8986 = vadd.f32 %v8767, %v8985
      %v8987 = vpop.f32.mrf.mxu0
      %v8988 = vpop.f32.mrf.mxu0
      %v8989 = vadd.f32 %v8767, %v8988
      %v8990 = vpop.f32.mrf.mxu0
      %8991 = vmatprep.mubr.bf16.mxu0 %v8857
      %8992 = vmatmul.mubr.bf16.gmra.mxu0 %v8749
      %v8993 = vpop.f32.mrf.mxu0
      %v8994 = vadd.f32 %v8767, %v8993
      %v8995 = vpop.f32.mrf.mxu0
      %v8996 = vpop.f32.mrf.mxu0
      %v8997 = vadd.f32 %v8767, %v8996
      %v8998 = vpop.f32.mrf.mxu0
      %8999 = vmatprep.mubr.bf16.mxu0 %v8860
      %9000 = vmatmul.mubr.bf16.gmra.mxu0 %v8752
      %v9001 = vpop.f32.mrf.mxu0
      %v9002 = vadd.f32 %v8767, %v9001
      %v9003 = vpop.f32.mrf.mxu0
      %v9004 = vpop.f32.mrf.mxu0
      %v9005 = vadd.f32 %v8767, %v9004
      %v9006 = vpop.f32.mrf.mxu0
      %9007 = vmatprep.mubr.bf16.mxu0 %v8863
      %9008 = vmatmul.mubr.bf16.gmra.mxu0 %v8755
      %v9009 = vpop.f32.mrf.mxu0
      %v9010 = vadd.f32 %v8767, %v9009
      %v9011 = vpop.f32.mrf.mxu0
      %v9012 = vpop.f32.mrf.mxu0
      %v9013 = vadd.f32 %v8767, %v9012
      %v9014 = vpop.f32.mrf.mxu0
      %9015 = vmatprep.mubr.bf16.mxu0 %v8866
      %9016 = vmatmul.mubr.bf16.gmra.mxu0 %v8758
      %v9017 = vpop.f32.mrf.mxu0
      %v9018 = vadd.f32 %v8767, %v9017
      %v9019 = vpop.f32.mrf.mxu0
      %v9020 = vpop.f32.mrf.mxu0
      %v9021 = vadd.f32 %v8767, %v9020
      %v9022 = vpop.f32.mrf.mxu0
      %9023 = vmatprep.mubr.bf16.mxu0 %v8869
      %9024 = vmatmul.mubr.bf16.gmra.mxu0 %v8761
      %v9025 = vpop.f32.mrf.mxu0
      %v9026 = vadd.f32 %v8767, %v9025
      %v9027 = vpop.f32.mrf.mxu0
      %v9028 = vpop.f32.mrf.mxu0
      %v9029 = vadd.f32 %v8767, %v9028
      %v9030 = vpop.f32.mrf.mxu0
      %9031 = vdwg.mxu0
      %9064 = vrot.lane.b32.xlu0 %v8906, 8
      %v9065 = vpop.permute.xlu0 %9064
      %9066 = vrot.lane.b32.xlu0 %v8909, 8
      %v9067 = vpop.permute.xlu0 %9066
      %9068 = vrot.lane.b32.xlu0 %v8914, 8
      %v9069 = vpop.permute.xlu0 %9068
      %9070 = vrot.lane.b32.xlu0 %v8917, 8
      %v9071 = vpop.permute.xlu0 %9070
      %9072 = vrot.lane.b32.xlu0 %v8922, 8
      %v9073 = vpop.permute.xlu0 %9072
      %9074 = vrot.lane.b32.xlu0 %v8925, 8
      %v9075 = vpop.permute.xlu0 %9074
      %9076 = vrot.lane.b32.xlu0 %v8930, 8
      %v9077 = vpop.permute.xlu0 %9076
      %9078 = vrot.lane.b32.xlu0 %v8933, 8
      %v9079 = vpop.permute.xlu0 %9078
      %9080 = vrot.lane.b32.xlu0 %v8938, 8
      %v9081 = vpop.permute.xlu0 %9080
      %9082 = vrot.lane.b32.xlu0 %v8941, 8
      %v9083 = vpop.permute.xlu0 %9082
      %9084 = vrot.lane.b32.xlu0 %v8946, 8
      %v9085 = vpop.permute.xlu0 %9084
      %9086 = vrot.lane.b32.xlu0 %v8949, 8
      %v9087 = vpop.permute.xlu0 %9086
      %9088 = vrot.lane.b32.xlu0 %v8954, 8
      %v9089 = vpop.permute.xlu0 %9088
      %9090 = vrot.lane.b32.xlu0 %v8957, 8
      %v9091 = vpop.permute.xlu0 %9090
      %9092 = vrot.lane.b32.xlu0 %v8962, 8
      %v9093 = vpop.permute.xlu0 %9092
      %9094 = vrot.lane.b32.xlu0 %v8965, 8
      %v9095 = vpop.permute.xlu0 %9094
      %9096 = vrot.lane.b32.xlu0 %v8970, 8
      %v9097 = vpop.permute.xlu0 %9096
      %9098 = vrot.lane.b32.xlu0 %v8973, 8
      %v9099 = vpop.permute.xlu0 %9098
      %9100 = vrot.lane.b32.xlu0 %v8978, 8
      %v9101 = vpop.permute.xlu0 %9100
      %9102 = vrot.lane.b32.xlu0 %v8981, 8
      %v9103 = vpop.permute.xlu0 %9102
      %9104 = vrot.lane.b32.xlu0 %v8986, 8
      %v9105 = vpop.permute.xlu0 %9104
      %9106 = vrot.lane.b32.xlu0 %v8989, 8
      %v9107 = vpop.permute.xlu0 %9106
      %9108 = vrot.lane.b32.xlu0 %v8994, 8
      %v9109 = vpop.permute.xlu0 %9108
      %9110 = vrot.lane.b32.xlu0 %v8997, 8
      %v9111 = vpop.permute.xlu0 %9110
      %9112 = vrot.lane.b32.xlu0 %v9002, 8
      %v9113 = vpop.permute.xlu0 %9112
      %9114 = vrot.lane.b32.xlu0 %v9005, 8
      %v9115 = vpop.permute.xlu0 %9114
      %9116 = vrot.lane.b32.xlu0 %v9010, 8
      %v9117 = vpop.permute.xlu0 %9116
      %9118 = vrot.lane.b32.xlu0 %v9013, 8
      %v9119 = vpop.permute.xlu0 %9118
      %9120 = vrot.lane.b32.xlu0 %v9018, 8
      %v9121 = vpop.permute.xlu0 %9120
      %9122 = vrot.lane.b32.xlu0 %v9021, 8
      %v9123 = vpop.permute.xlu0 %9122
      %9124 = vrot.lane.b32.xlu0 %v9026, 8
      %v9125 = vpop.permute.xlu0 %9124
      %9126 = vrot.lane.b32.xlu0 %v9029, 8
      %v9127 = vpop.permute.xlu0 %9126
      %vm9160 = vcmask 97344
      %9161 = vst.msk [vmem:[%s838] sm:$0xff] %vm9160, %v9065
      %9162 = vst.msk [vmem:[%s838 + $0x8] sm:$0xff] %vm9160, %v9067
      %9163 = vst.msk [vmem:[%s838 + $0x10] sm:$0xff] %vm9160, %v9069
      %9164 = vst.msk [vmem:[%s838 + $0x18] sm:$0xff] %vm9160, %v9071
      %9165 = vst.msk [vmem:[%s838 + $0x20] sm:$0xff] %vm9160, %v9073
      %9166 = vst.msk [vmem:[%s838 + $0x28] sm:$0xff] %vm9160, %v9075
      %9167 = vst.msk [vmem:[%s838 + $0x30] sm:$0xff] %vm9160, %v9077
      %9168 = vst.msk [vmem:[%s838 + $0x38] sm:$0xff] %vm9160, %v9079
      %9169 = vst.msk [vmem:[%s838 + $0x40] sm:$0xff] %vm9160, %v9081
      %9170 = vst.msk [vmem:[%s838 + $0x48] sm:$0xff] %vm9160, %v9083
      %9171 = vst.msk [vmem:[%s838 + $0x50] sm:$0xff] %vm9160, %v9085
      %9172 = vst.msk [vmem:[%s838 + $0x58] sm:$0xff] %vm9160, %v9087
      %9173 = vst.msk [vmem:[%s838 + $0x60] sm:$0xff] %vm9160, %v9089
      %9174 = vst.msk [vmem:[%s838 + $0x68] sm:$0xff] %vm9160, %v9091
      %9175 = vst.msk [vmem:[%s838 + $0x70] sm:$0xff] %vm9160, %v9093
      %9176 = vst.msk [vmem:[%s838 + $0x78] sm:$0xff] %vm9160, %v9095
      %9177 = vst.msk [vmem:[%s838 + $0x80] sm:$0xff] %vm9160, %v9097
      %9178 = vst.msk [vmem:[%s838 + $0x88] sm:$0xff] %vm9160, %v9099
      %9179 = vst.msk [vmem:[%s838 + $0x90] sm:$0xff] %vm9160, %v9101
      %9180 = vst.msk [vmem:[%s838 + $0x98] sm:$0xff] %vm9160, %v9103
      %9181 = vst.msk [vmem:[%s838 + $0xa0] sm:$0xff] %vm9160, %v9105
      %9182 = vst.msk [vmem:[%s838 + $0xa8] sm:$0xff] %vm9160, %v9107
      %9183 = vst.msk [vmem:[%s838 + $0xb0] sm:$0xff] %vm9160, %v9109
      %9184 = vst.msk [vmem:[%s838 + $0xb8] sm:$0xff] %vm9160, %v9111
      %9185 = vst.msk [vmem:[%s838 + $0xc0] sm:$0xff] %vm9160, %v9113
      %9186 = vst.msk [vmem:[%s838 + $0xc8] sm:$0xff] %vm9160, %v9115
      %9187 = vst.msk [vmem:[%s838 + $0xd0] sm:$0xff] %vm9160, %v9117
      %9188 = vst.msk [vmem:[%s838 + $0xd8] sm:$0xff] %vm9160, %v9119
      %9189 = vst.msk [vmem:[%s838 + $0xe0] sm:$0xff] %vm9160, %v9121
      %9190 = vst.msk [vmem:[%s838 + $0xe8] sm:$0xff] %vm9160, %v9123
      %9191 = vst.msk [vmem:[%s838 + $0xf0] sm:$0xff] %vm9160, %v9125
      %9192 = vst.msk [vmem:[%s838 + $0xf8] sm:$0xff] %vm9160, %v9127
      %v9193 = vld [vmem:[%s13] sm:$0x1]
      %v9194 = vld [vmem:[%s14] sm:$0x1]
      %v9195 = vld [vmem:[%s15] sm:$0xf]
      %v9196 = vld [vmem:[%s15 + $0x4] sm:$0xf]
      %v9197 = vld [vmem:[%s16] sm:$0x1]
      %v9198 = vld [vmem:[%s17] sm:$0xf]
      %v9199 = vld [vmem:[%s17 + $0x4] sm:$0xf]
      %v9200 = vld [vmem:[%s17 + $0x8] sm:$0xf]
      %v9201 = vld [vmem:[%s17 + $0xc] sm:$0xf]
      %v9202 = vld [vmem:[%s17 + $0x10] sm:$0xf]
      %v9203 = vld [vmem:[%s17 + $0x14] sm:$0xf]
      %v9204 = vld [vmem:[%s17 + $0x18] sm:$0xf]
      %v9205 = vld [vmem:[%s17 + $0x1c] sm:$0xf]
      %v9206 = vld [vmem:[%s17 + $0x20] sm:$0xf]
      %v9207 = vld [vmem:[%s17 + $0x24] sm:$0xf]
      %v9208 = vld [vmem:[%s17 + $0x28] sm:$0xf]
      %v9209 = vld [vmem:[%s17 + $0x2c] sm:$0xf]
      %v9210 = vld [vmem:[%s17 + $0x30] sm:$0xf]
      %v9211 = vld [vmem:[%s17 + $0x34] sm:$0xf]
      %v9212 = vld [vmem:[%s17 + $0x38] sm:$0xf]
      %v9213 = vld [vmem:[%s17 + $0x3c] sm:$0xf]
      %v9214 = vld [vmem:[%s17 + $0x40] sm:$0xf]
      %v9215 = vld [vmem:[%s17 + $0x44] sm:$0xf]
      %v9216 = vld [vmem:[%s18] sm:$0x1]
      %v9217 = vld [vmem:[%s838] sm:$0xff]
      %v9218 = vld [vmem:[%s838 + $0x8] sm:$0xff]
      %v9219 = vld [vmem:[%s838 + $0x10] sm:$0xff]
      %v9220 = vld [vmem:[%s838 + $0x18] sm:$0xff]
      %v9221 = vld [vmem:[%s838 + $0x20] sm:$0xff]
      %v9222 = vld [vmem:[%s838 + $0x28] sm:$0xff]
      %v9223 = vld [vmem:[%s838 + $0x30] sm:$0xff]
      %v9224 = vld [vmem:[%s838 + $0x38] sm:$0xff]
      %v9225 = vld [vmem:[%s838 + $0x40] sm:$0xff]
      %v9226 = vld [vmem:[%s838 + $0x48] sm:$0xff]
      %v9227 = vld [vmem:[%s838 + $0x50] sm:$0xff]
      %v9228 = vld [vmem:[%s838 + $0x58] sm:$0xff]
      %v9229 = vld [vmem:[%s838 + $0x60] sm:$0xff]
      %v9230 = vld [vmem:[%s838 + $0x68] sm:$0xff]
      %v9231 = vld [vmem:[%s838 + $0x70] sm:$0xff]
      %v9232 = vld [vmem:[%s838 + $0x78] sm:$0xff]
      %v9233 = vld [vmem:[%s838 + $0x80] sm:$0xff]
      %v9234 = vld [vmem:[%s838 + $0x88] sm:$0xff]
      %v9235 = vld [vmem:[%s838 + $0x90] sm:$0xff]
      %v9236 = vld [vmem:[%s838 + $0x98] sm:$0xff]
      %v9237 = vld [vmem:[%s838 + $0xa0] sm:$0xff]
      %v9238 = vld [vmem:[%s838 + $0xa8] sm:$0xff]
      %v9239 = vld [vmem:[%s838 + $0xb0] sm:$0xff]
      %v9240 = vld [vmem:[%s838 + $0xb8] sm:$0xff]
      %v9241 = vld [vmem:[%s838 + $0xc0] sm:$0xff]
      %v9242 = vld [vmem:[%s838 + $0xc8] sm:$0xff]
      %v9243 = vld [vmem:[%s838 + $0xd0] sm:$0xff]
      %v9244 = vld [vmem:[%s838 + $0xd8] sm:$0xff]
      %v9245 = vld [vmem:[%s838 + $0xe0] sm:$0xff]
      %v9246 = vld [vmem:[%s838 + $0xe8] sm:$0xff]
      %v9247 = vld [vmem:[%s838 + $0xf0] sm:$0xff]
      %v9248 = vld [vmem:[%s838 + $0xf8] sm:$0xff]
      %v9250 = vlaneseq
      %v9251 = vshrl.u32 %v9250, 7
      %v9252 = vsub.s32 0, %v9251
      %v9253 = vrot.slane %v9193, %v9252
      %v9255 = vmul.f32 %v9217, %v9253
      %v9256 = vmul.f32 %v9218, %v9253
      %v9257 = vmul.f32 %v9219, %v9253
      %v9258 = vmul.f32 %v9220, %v9253
      %v9259 = vmul.f32 %v9221, %v9253
      %v9260 = vmul.f32 %v9222, %v9253
      %v9261 = vmul.f32 %v9223, %v9253
      %v9262 = vmul.f32 %v9224, %v9253
      %v9263 = vmul.f32 %v9225, %v9253
      %v9264 = vmul.f32 %v9226, %v9253
      %v9265 = vmul.f32 %v9227, %v9253
      %v9266 = vmul.f32 %v9228, %v9253
      %v9267 = vmul.f32 %v9229, %v9253
      %v9268 = vmul.f32 %v9230, %v9253
      %v9269 = vmul.f32 %v9231, %v9253
      %v9270 = vmul.f32 %v9232, %v9253
      %v9271 = vmul.f32 %v9233, %v9253
      %v9272 = vmul.f32 %v9234, %v9253
      %v9273 = vmul.f32 %v9235, %v9253
      %v9274 = vmul.f32 %v9236, %v9253
      %v9275 = vmul.f32 %v9237, %v9253
      %v9276 = vmul.f32 %v9238, %v9253
      %v9277 = vmul.f32 %v9239, %v9253
      %v9278 = vmul.f32 %v9240, %v9253
      %v9279 = vmul.f32 %v9241, %v9253
      %v9280 = vmul.f32 %v9242, %v9253
      %v9281 = vmul.f32 %v9243, %v9253
      %v9282 = vmul.f32 %v9244, %v9253
      %v9283 = vmul.f32 %v9245, %v9253
      %v9284 = vmul.f32 %v9246, %v9253
      %v9285 = vmul.f32 %v9247, %v9253
      %v9286 = vmul.f32 %v9248, %v9253
      %v9288 = vlaneseq
      %v9289 = vshrl.u32 %v9288, 7
      %v9290 = vsub.s32 0, %v9289
      %v9291 = vrot.slane %v9194, %v9290
      %v9293 = vadd.f32 %v9255, %v9291
      %v9294 = vadd.f32 %v9256, %v9291
      %v9295 = vadd.f32 %v9257, %v9291
      %v9296 = vadd.f32 %v9258, %v9291
      %v9297 = vadd.f32 %v9259, %v9291
      %v9298 = vadd.f32 %v9260, %v9291
      %v9299 = vadd.f32 %v9261, %v9291
      %v9300 = vadd.f32 %v9262, %v9291
      %v9301 = vadd.f32 %v9263, %v9291
      %v9302 = vadd.f32 %v9264, %v9291
      %v9303 = vadd.f32 %v9265, %v9291
      %v9304 = vadd.f32 %v9266, %v9291
      %v9305 = vadd.f32 %v9267, %v9291
      %v9306 = vadd.f32 %v9268, %v9291
      %v9307 = vadd.f32 %v9269, %v9291
      %v9308 = vadd.f32 %v9270, %v9291
      %v9309 = vadd.f32 %v9271, %v9291
      %v9310 = vadd.f32 %v9272, %v9291
      %v9311 = vadd.f32 %v9273, %v9291
      %v9312 = vadd.f32 %v9274, %v9291
      %v9313 = vadd.f32 %v9275, %v9291
      %v9314 = vadd.f32 %v9276, %v9291
      %v9315 = vadd.f32 %v9277, %v9291
      %v9316 = vadd.f32 %v9278, %v9291
      %v9317 = vadd.f32 %v9279, %v9291
      %v9318 = vadd.f32 %v9280, %v9291
      %v9319 = vadd.f32 %v9281, %v9291
      %v9320 = vadd.f32 %v9282, %v9291
      %v9321 = vadd.f32 %v9283, %v9291
      %v9322 = vadd.f32 %v9284, %v9291
      %v9323 = vadd.f32 %v9285, %v9291
      %v9324 = vadd.f32 %v9286, %v9291
      %v9325 = vmax.f32 %v9293, 0.0
      %v9326 = vmax.f32 %v9294, 0.0
      %v9327 = vmax.f32 %v9295, 0.0
      %v9328 = vmax.f32 %v9296, 0.0
      %v9329 = vmax.f32 %v9297, 0.0
      %v9330 = vmax.f32 %v9298, 0.0
      %v9331 = vmax.f32 %v9299, 0.0
      %v9332 = vmax.f32 %v9300, 0.0
      %v9333 = vmax.f32 %v9301, 0.0
      %v9334 = vmax.f32 %v9302, 0.0
      %v9335 = vmax.f32 %v9303, 0.0
      %v9336 = vmax.f32 %v9304, 0.0
      %v9337 = vmax.f32 %v9305, 0.0
      %v9338 = vmax.f32 %v9306, 0.0
      %v9339 = vmax.f32 %v9307, 0.0
      %v9340 = vmax.f32 %v9308, 0.0
      %v9341 = vmax.f32 %v9309, 0.0
      %v9342 = vmax.f32 %v9310, 0.0
      %v9343 = vmax.f32 %v9311, 0.0
      %v9344 = vmax.f32 %v9312, 0.0
      %v9345 = vmax.f32 %v9313, 0.0
      %v9346 = vmax.f32 %v9314, 0.0
      %v9347 = vmax.f32 %v9315, 0.0
      %v9348 = vmax.f32 %v9316, 0.0
      %v9349 = vmax.f32 %v9317, 0.0
      %v9350 = vmax.f32 %v9318, 0.0
      %v9351 = vmax.f32 %v9319, 0.0
      %v9352 = vmax.f32 %v9320, 0.0
      %v9353 = vmax.f32 %v9321, 0.0
      %v9354 = vmax.f32 %v9322, 0.0
      %v9355 = vmax.f32 %v9323, 0.0
      %v9356 = vmax.f32 %v9324, 0.0
      %v9357 = vpack.c.bf16 %v9326, %v9325
      %v9358 = vpack.c.bf16 %v9328, %v9327
      %v9359 = vpack.c.bf16 %v9330, %v9329
      %v9360 = vpack.c.bf16 %v9332, %v9331
      %v9361 = vpack.c.bf16 %v9334, %v9333
      %v9362 = vpack.c.bf16 %v9336, %v9335
      %v9363 = vpack.c.bf16 %v9338, %v9337
      %v9364 = vpack.c.bf16 %v9340, %v9339
      %v9365 = vpack.c.bf16 %v9342, %v9341
      %v9366 = vpack.c.bf16 %v9344, %v9343
      %v9367 = vpack.c.bf16 %v9346, %v9345
      %v9368 = vpack.c.bf16 %v9348, %v9347
      %v9369 = vpack.c.bf16 %v9350, %v9349
      %v9370 = vpack.c.bf16 %v9352, %v9351
      %v9371 = vpack.c.bf16 %v9354, %v9353
      %v9372 = vpack.c.bf16 %v9356, %v9355
      %v9374 = vlaneseq
      %v9375 = vshrl.u32 %v9374, 7
      %v9376 = vsub.s32 0, %v9375
      %v9377 = vrot.slane %v9197, %v9376
      %v9381 = vunpack.c.l.b16 %v9195
      %v9382 = vunpack.c.l.b16 %v9196
      %v9383 = vpack.c.b16 %v9382, %v9381
      %v9386 = vsel %vm1007, %v9357, 0
      %v9389 = vsel %vm1007, %v9358, 0
      %v9392 = vsel %vm1007, %v9359, 0
      %v9395 = vsel %vm1007, %v9360, 0
      %v9398 = vsel %vm1007, %v9361, 0
      %v9401 = vsel %vm1007, %v9362, 0
      %v9404 = vsel %vm1007, %v9363, 0
      %v9407 = vsel %vm1007, %v9364, 0
      %v9410 = vsel %vm1007, %v9365, 0
      %v9413 = vsel %vm1007, %v9366, 0
      %v9416 = vsel %vm1007, %v9367, 0
      %v9419 = vsel %vm1007, %v9368, 0
      %v9422 = vsel %vm1007, %v9369, 0
      %v9425 = vsel %vm1007, %v9370, 0
      %v9428 = vsel %vm1007, %v9371, 0
      %v9431 = vsel %vm1007, %v9372, 0
      %9433 = vmatprep.subr.bf16.mxu0 0
      %9434 = vmatpush1.bf16.msra.mxu0 0
      %9435 = vmatprep.subr.bf16.mxu0 0
      %9436 = vmatpush1.bf16.msra.mxu0 0
      %9437 = vmatprep.subr.bf16.mxu0 0
      %9438 = vmatpush1.bf16.msra.mxu0 0
      %9439 = vmatprep.subr.bf16.mxu0 0
      %9440 = vmatpush1.bf16.msra.mxu0 0
      %9441 = vmatprep.subr.bf16.mxu0 0
      %9442 = vmatpush1.bf16.msra.mxu0 0
      %9443 = vmatprep.subr.bf16.mxu0 0
      %9444 = vmatpush1.bf16.msra.mxu0 0
      %9445 = vmatprep.subr.bf16.mxu0 0
      %9446 = vmatpush1.bf16.msra.mxu0 0
      %9447 = vmatprep.subr.bf16.mxu0 0
      %9448 = vmatpush1.bf16.msra.mxu0 %v9383
      %9449 = vmatprep.subr.bf16.mxu0 0
      %9450 = vmatpush2.bf16.msra.mxu0 0
      %9451 = vmatprep.subr.bf16.mxu0 0
      %9452 = vmatpush2.bf16.msra.mxu0 0
      %9453 = vmatprep.subr.bf16.mxu0 0
      %9454 = vmatpush2.bf16.msra.mxu0 0
      %9455 = vmatprep.subr.bf16.mxu0 0
      %9456 = vmatpush2.bf16.msra.mxu0 0
      %9457 = vmatprep.subr.bf16.mxu0 0
      %9458 = vmatpush2.bf16.msra.mxu0 0
      %9459 = vmatprep.subr.bf16.mxu0 0
      %9460 = vmatpush2.bf16.msra.mxu0 0
      %9461 = vmatprep.subr.bf16.mxu0 0
      %9462 = vmatpush2.bf16.msra.mxu0 0
      %9463 = vmatprep.subr.bf16.mxu0 0
      %9464 = vmatpush2.bf16.msra.mxu0 0
      %9465 = vmatprep.mubr.bf16.mxu0 0
      %9466 = vmatmul.mubr.bf16.gmra.mxu0 %v9386
      %v9467 = vpop.f32.mrf.mxu0
      %v9468 = vadd.f32 %v9377, %v9467
      %v9469 = vpop.f32.mrf.mxu0
      %v9470 = vpop.f32.mrf.mxu0
      %v9471 = vadd.f32 %v9377, %v9470
      %v9472 = vpop.f32.mrf.mxu0
      %9473 = vmatprep.mubr.bf16.mxu0 0
      %9474 = vmatmul.mubr.bf16.gmra.mxu0 %v9389
      %v9475 = vpop.f32.mrf.mxu0
      %v9476 = vadd.f32 %v9377, %v9475
      %v9477 = vpop.f32.mrf.mxu0
      %v9478 = vpop.f32.mrf.mxu0
      %v9479 = vadd.f32 %v9377, %v9478
      %v9480 = vpop.f32.mrf.mxu0
      %9481 = vmatprep.mubr.bf16.mxu0 0
      %9482 = vmatmul.mubr.bf16.gmra.mxu0 %v9392
      %v9483 = vpop.f32.mrf.mxu0
      %v9484 = vadd.f32 %v9377, %v9483
      %v9485 = vpop.f32.mrf.mxu0
      %v9486 = vpop.f32.mrf.mxu0
      %v9487 = vadd.f32 %v9377, %v9486
      %v9488 = vpop.f32.mrf.mxu0
      %9489 = vmatprep.mubr.bf16.mxu0 0
      %9490 = vmatmul.mubr.bf16.gmra.mxu0 %v9395
      %v9491 = vpop.f32.mrf.mxu0
      %v9492 = vadd.f32 %v9377, %v9491
      %v9493 = vpop.f32.mrf.mxu0
      %v9494 = vpop.f32.mrf.mxu0
      %v9495 = vadd.f32 %v9377, %v9494
      %v9496 = vpop.f32.mrf.mxu0
      %9497 = vmatprep.mubr.bf16.mxu0 0
      %9498 = vmatmul.mubr.bf16.gmra.mxu0 %v9398
      %v9499 = vpop.f32.mrf.mxu0
      %v9500 = vadd.f32 %v9377, %v9499
      %v9501 = vpop.f32.mrf.mxu0
      %v9502 = vpop.f32.mrf.mxu0
      %v9503 = vadd.f32 %v9377, %v9502
      %v9504 = vpop.f32.mrf.mxu0
      %9505 = vmatprep.mubr.bf16.mxu0 0
      %9506 = vmatmul.mubr.bf16.gmra.mxu0 %v9401
      %v9507 = vpop.f32.mrf.mxu0
      %v9508 = vadd.f32 %v9377, %v9507
      %v9509 = vpop.f32.mrf.mxu0
      %v9510 = vpop.f32.mrf.mxu0
      %v9511 = vadd.f32 %v9377, %v9510
      %v9512 = vpop.f32.mrf.mxu0
      %9513 = vmatprep.mubr.bf16.mxu0 0
      %9514 = vmatmul.mubr.bf16.gmra.mxu0 %v9404
      %v9515 = vpop.f32.mrf.mxu0
      %v9516 = vadd.f32 %v9377, %v9515
      %v9517 = vpop.f32.mrf.mxu0
      %v9518 = vpop.f32.mrf.mxu0
      %v9519 = vadd.f32 %v9377, %v9518
      %v9520 = vpop.f32.mrf.mxu0
      %9521 = vmatprep.mubr.bf16.mxu0 0
      %9522 = vmatmul.mubr.bf16.gmra.mxu0 %v9407
      %v9523 = vpop.f32.mrf.mxu0
      %v9524 = vadd.f32 %v9377, %v9523
      %v9525 = vpop.f32.mrf.mxu0
      %v9526 = vpop.f32.mrf.mxu0
      %v9527 = vadd.f32 %v9377, %v9526
      %v9528 = vpop.f32.mrf.mxu0
      %9529 = vmatprep.mubr.bf16.mxu0 0
      %9530 = vmatmul.mubr.bf16.gmra.mxu0 %v9410
      %v9531 = vpop.f32.mrf.mxu0
      %v9532 = vadd.f32 %v9377, %v9531
      %v9533 = vpop.f32.mrf.mxu0
      %v9534 = vpop.f32.mrf.mxu0
      %v9535 = vadd.f32 %v9377, %v9534
      %v9536 = vpop.f32.mrf.mxu0
      %9537 = vmatprep.mubr.bf16.mxu0 0
      %9538 = vmatmul.mubr.bf16.gmra.mxu0 %v9413
      %v9539 = vpop.f32.mrf.mxu0
      %v9540 = vadd.f32 %v9377, %v9539
      %v9541 = vpop.f32.mrf.mxu0
      %v9542 = vpop.f32.mrf.mxu0
      %v9543 = vadd.f32 %v9377, %v9542
      %v9544 = vpop.f32.mrf.mxu0
      %9545 = vmatprep.mubr.bf16.mxu0 0
      %9546 = vmatmul.mubr.bf16.gmra.mxu0 %v9416
      %v9547 = vpop.f32.mrf.mxu0
      %v9548 = vadd.f32 %v9377, %v9547
      %v9549 = vpop.f32.mrf.mxu0
      %v9550 = vpop.f32.mrf.mxu0
      %v9551 = vadd.f32 %v9377, %v9550
      %v9552 = vpop.f32.mrf.mxu0
      %9553 = vmatprep.mubr.bf16.mxu0 0
      %9554 = vmatmul.mubr.bf16.gmra.mxu0 %v9419
      %v9555 = vpop.f32.mrf.mxu0
      %v9556 = vadd.f32 %v9377, %v9555
      %v9557 = vpop.f32.mrf.mxu0
      %v9558 = vpop.f32.mrf.mxu0
      %v9559 = vadd.f32 %v9377, %v9558
      %v9560 = vpop.f32.mrf.mxu0
      %9561 = vmatprep.mubr.bf16.mxu0 0
      %9562 = vmatmul.mubr.bf16.gmra.mxu0 %v9422
      %v9563 = vpop.f32.mrf.mxu0
      %v9564 = vadd.f32 %v9377, %v9563
      %v9565 = vpop.f32.mrf.mxu0
      %v9566 = vpop.f32.mrf.mxu0
      %v9567 = vadd.f32 %v9377, %v9566
      %v9568 = vpop.f32.mrf.mxu0
      %9569 = vmatprep.mubr.bf16.mxu0 0
      %9570 = vmatmul.mubr.bf16.gmra.mxu0 %v9425
      %v9571 = vpop.f32.mrf.mxu0
      %v9572 = vadd.f32 %v9377, %v9571
      %v9573 = vpop.f32.mrf.mxu0
      %v9574 = vpop.f32.mrf.mxu0
      %v9575 = vadd.f32 %v9377, %v9574
      %v9576 = vpop.f32.mrf.mxu0
      %9577 = vmatprep.mubr.bf16.mxu0 0
      %9578 = vmatmul.mubr.bf16.gmra.mxu0 %v9428
      %v9579 = vpop.f32.mrf.mxu0
      %v9580 = vadd.f32 %v9377, %v9579
      %v9581 = vpop.f32.mrf.mxu0
      %v9582 = vpop.f32.mrf.mxu0
      %v9583 = vadd.f32 %v9377, %v9582
      %v9584 = vpop.f32.mrf.mxu0
      %9585 = vmatprep.mubr.bf16.mxu0 0
      %9586 = vmatmul.mubr.bf16.gmra.mxu0 %v9431
      %v9587 = vpop.f32.mrf.mxu0
      %v9588 = vadd.f32 %v9377, %v9587
      %v9589 = vpop.f32.mrf.mxu0
      %v9590 = vpop.f32.mrf.mxu0
      %v9591 = vadd.f32 %v9377, %v9590
      %v9592 = vpop.f32.mrf.mxu0
      %9593 = vdwg.mxu0
      %v9594 = vmax.f32 %v9468, 0.0
      %v9595 = vmax.f32 %v9471, 0.0
      %v9596 = vmax.f32 %v9476, 0.0
      %v9597 = vmax.f32 %v9479, 0.0
      %v9598 = vmax.f32 %v9484, 0.0
      %v9599 = vmax.f32 %v9487, 0.0
      %v9600 = vmax.f32 %v9492, 0.0
      %v9601 = vmax.f32 %v9495, 0.0
      %v9602 = vmax.f32 %v9500, 0.0
      %v9603 = vmax.f32 %v9503, 0.0
      %v9604 = vmax.f32 %v9508, 0.0
      %v9605 = vmax.f32 %v9511, 0.0
      %v9606 = vmax.f32 %v9516, 0.0
      %v9607 = vmax.f32 %v9519, 0.0
      %v9608 = vmax.f32 %v9524, 0.0
      %v9609 = vmax.f32 %v9527, 0.0
      %v9610 = vmax.f32 %v9532, 0.0
      %v9611 = vmax.f32 %v9535, 0.0
      %v9612 = vmax.f32 %v9540, 0.0
      %v9613 = vmax.f32 %v9543, 0.0
      %v9614 = vmax.f32 %v9548, 0.0
      %v9615 = vmax.f32 %v9551, 0.0
      %v9616 = vmax.f32 %v9556, 0.0
      %v9617 = vmax.f32 %v9559, 0.0
      %v9618 = vmax.f32 %v9564, 0.0
      %v9619 = vmax.f32 %v9567, 0.0
      %v9620 = vmax.f32 %v9572, 0.0
      %v9621 = vmax.f32 %v9575, 0.0
      %v9622 = vmax.f32 %v9580, 0.0
      %v9623 = vmax.f32 %v9583, 0.0
      %v9624 = vmax.f32 %v9588, 0.0
      %v9625 = vmax.f32 %v9591, 0.0
      %v9626 = vpack.c.bf16 %v9595, %v9594
      %v9627 = vpack.c.bf16 %v9597, %v9596
      %v9628 = vpack.c.bf16 %v9599, %v9598
      %v9629 = vpack.c.bf16 %v9601, %v9600
      %v9630 = vpack.c.bf16 %v9603, %v9602
      %v9631 = vpack.c.bf16 %v9605, %v9604
      %v9632 = vpack.c.bf16 %v9607, %v9606
      %v9633 = vpack.c.bf16 %v9609, %v9608
      %v9634 = vpack.c.bf16 %v9611, %v9610
      %v9635 = vpack.c.bf16 %v9613, %v9612
      %v9636 = vpack.c.bf16 %v9615, %v9614
      %v9637 = vpack.c.bf16 %v9617, %v9616
      %v9638 = vpack.c.bf16 %v9619, %v9618
      %v9639 = vpack.c.bf16 %v9621, %v9620
      %v9640 = vpack.c.bf16 %v9623, %v9622
      %v9641 = vpack.c.bf16 %v9625, %v9624
      %v9658 = vunpack.c.l.b16 %v9626
      %v9659 = vunpack.c.h.b16 %v9626
      %v9660 = vunpack.c.l.b16 %v9627
      %v9661 = vunpack.c.h.b16 %v9627
      %v9662 = vunpack.c.l.b16 %v9628
      %v9663 = vunpack.c.h.b16 %v9628
      %v9664 = vunpack.c.l.b16 %v9629
      %v9665 = vunpack.c.h.b16 %v9629
      %v9666 = vunpack.c.l.b16 %v9630
      %v9667 = vunpack.c.h.b16 %v9630
      %v9668 = vunpack.c.l.b16 %v9631
      %v9669 = vunpack.c.h.b16 %v9631
      %v9670 = vunpack.c.l.b16 %v9632
      %v9671 = vunpack.c.h.b16 %v9632
      %v9672 = vunpack.c.l.b16 %v9633
      %v9673 = vunpack.c.h.b16 %v9633
      %v9674 = vunpack.c.l.b16 %v9634
      %v9675 = vunpack.c.h.b16 %v9634
      %v9676 = vunpack.c.l.b16 %v9635
      %v9677 = vunpack.c.h.b16 %v9635
      %v9678 = vunpack.c.l.b16 %v9636
      %v9679 = vunpack.c.h.b16 %v9636
      %v9680 = vunpack.c.l.b16 %v9637
      %v9681 = vunpack.c.h.b16 %v9637
      %v9682 = vunpack.c.l.b16 %v9638
      %v9683 = vunpack.c.h.b16 %v9638
      %v9684 = vunpack.c.l.b16 %v9639
      %v9685 = vunpack.c.h.b16 %v9639
      %v9686 = vunpack.c.l.b16 %v9640
      %v9687 = vunpack.c.h.b16 %v9640
      %v9688 = vunpack.c.l.b16 %v9641
      %v9689 = vunpack.c.h.b16 %v9641
      %v9690 = vpack.c.b16 %v9658, %v9658
      %v9691 = vpack.c.b16 %v9659, %v9659
      %v9692 = vpack.c.b16 %v9660, %v9660
      %v9693 = vpack.c.b16 %v9661, %v9661
      %v9694 = vpack.c.b16 %v9662, %v9662
      %v9695 = vpack.c.b16 %v9663, %v9663
      %v9696 = vpack.c.b16 %v9664, %v9664
      %v9697 = vpack.c.b16 %v9665, %v9665
      %v9698 = vpack.c.b16 %v9666, %v9666
      %v9699 = vpack.c.b16 %v9667, %v9667
      %v9700 = vpack.c.b16 %v9668, %v9668
      %v9701 = vpack.c.b16 %v9669, %v9669
      %v9702 = vpack.c.b16 %v9670, %v9670
      %v9703 = vpack.c.b16 %v9671, %v9671
      %v9704 = vpack.c.b16 %v9672, %v9672
      %v9705 = vpack.c.b16 %v9673, %v9673
      %v9706 = vpack.c.b16 %v9674, %v9674
      %v9707 = vpack.c.b16 %v9675, %v9675
      %v9708 = vpack.c.b16 %v9676, %v9676
      %v9709 = vpack.c.b16 %v9677, %v9677
      %v9710 = vpack.c.b16 %v9678, %v9678
      %v9711 = vpack.c.b16 %v9679, %v9679
      %v9712 = vpack.c.b16 %v9680, %v9680
      %v9713 = vpack.c.b16 %v9681, %v9681
      %v9714 = vpack.c.b16 %v9682, %v9682
      %v9715 = vpack.c.b16 %v9683, %v9683
      %v9716 = vpack.c.b16 %v9684, %v9684
      %v9717 = vpack.c.b16 %v9685, %v9685
      %v9718 = vpack.c.b16 %v9686, %v9686
      %v9719 = vpack.c.b16 %v9687, %v9687
      %v9720 = vpack.c.b16 %v9688, %v9688
      %v9721 = vpack.c.b16 %v9689, %v9689
      %v9723 = vshrl.u32 %v9690, 16
      %v9725 = vrot.slane %v9723, 7
      %v9726 = vshll.u32 %v9690, 16
      %v9728 = vor.u32 %v9725, %v9726
      %v9729 = vrot.slane %v9725, 4
      %v9731 = vshrl.u32 %v9691, 16
      %v9733 = vrot.slane %v9731, 7
      %v9734 = vshll.u32 %v9691, 16
      %v9736 = vor.u32 %v9733, %v9734
      %v9737 = vsel %vm1347, %v9729, %v9736
      %v9738 = vrot.slane %v9733, 4
      %v9740 = vshrl.u32 %v9692, 16
      %v9742 = vrot.slane %v9740, 7
      %v9743 = vshll.u32 %v9692, 16
      %v9745 = vor.u32 %v9742, %v9743
      %v9746 = vrot.slane %v9742, 4
      %v9748 = vshrl.u32 %v9693, 16
      %v9750 = vrot.slane %v9748, 7
      %v9751 = vshll.u32 %v9693, 16
      %v9753 = vor.u32 %v9750, %v9751
      %v9754 = vsel %vm1347, %v9746, %v9753
      %v9755 = vrot.slane %v9750, 4
      %v9757 = vshrl.u32 %v9694, 16
      %v9759 = vrot.slane %v9757, 7
      %v9760 = vshll.u32 %v9694, 16
      %v9762 = vor.u32 %v9759, %v9760
      %v9763 = vrot.slane %v9759, 4
      %v9765 = vshrl.u32 %v9695, 16
      %v9767 = vrot.slane %v9765, 7
      %v9768 = vshll.u32 %v9695, 16
      %v9770 = vor.u32 %v9767, %v9768
      %v9771 = vsel %vm1347, %v9763, %v9770
      %v9772 = vrot.slane %v9767, 4
      %v9774 = vshrl.u32 %v9696, 16
      %v9776 = vrot.slane %v9774, 7
      %v9777 = vshll.u32 %v9696, 16
      %v9779 = vor.u32 %v9776, %v9777
      %v9780 = vrot.slane %v9776, 4
      %v9782 = vshrl.u32 %v9697, 16
      %v9784 = vrot.slane %v9782, 7
      %v9785 = vshll.u32 %v9697, 16
      %v9787 = vor.u32 %v9784, %v9785
      %v9788 = vsel %vm1347, %v9780, %v9787
      %v9789 = vrot.slane %v9784, 4
      %v9791 = vshrl.u32 %v9698, 16
      %v9793 = vrot.slane %v9791, 7
      %v9794 = vshll.u32 %v9698, 16
      %v9796 = vor.u32 %v9793, %v9794
      %v9797 = vrot.slane %v9793, 4
      %v9799 = vshrl.u32 %v9699, 16
      %v9801 = vrot.slane %v9799, 7
      %v9802 = vshll.u32 %v9699, 16
      %v9804 = vor.u32 %v9801, %v9802
      %v9805 = vsel %vm1347, %v9797, %v9804
      %v9806 = vrot.slane %v9801, 4
      %v9808 = vshrl.u32 %v9700, 16
      %v9810 = vrot.slane %v9808, 7
      %v9811 = vshll.u32 %v9700, 16
      %v9813 = vor.u32 %v9810, %v9811
      %v9814 = vrot.slane %v9810, 4
      %v9816 = vshrl.u32 %v9701, 16
      %v9818 = vrot.slane %v9816, 7
      %v9819 = vshll.u32 %v9701, 16
      %v9821 = vor.u32 %v9818, %v9819
      %v9822 = vsel %vm1347, %v9814, %v9821
      %v9823 = vrot.slane %v9818, 4
      %v9825 = vshrl.u32 %v9702, 16
      %v9827 = vrot.slane %v9825, 7
      %v9828 = vshll.u32 %v9702, 16
      %v9830 = vor.u32 %v9827, %v9828
      %v9831 = vrot.slane %v9827, 4
      %v9833 = vshrl.u32 %v9703, 16
      %v9835 = vrot.slane %v9833, 7
      %v9836 = vshll.u32 %v9703, 16
      %v9838 = vor.u32 %v9835, %v9836
      %v9839 = vsel %vm1347, %v9831, %v9838
      %v9840 = vrot.slane %v9835, 4
      %v9842 = vshrl.u32 %v9704, 16
      %v9844 = vrot.slane %v9842, 7
      %v9845 = vshll.u32 %v9704, 16
      %v9847 = vor.u32 %v9844, %v9845
      %v9848 = vrot.slane %v9844, 4
      %v9850 = vshrl.u32 %v9705, 16
      %v9852 = vrot.slane %v9850, 7
      %v9853 = vshll.u32 %v9705, 16
      %v9855 = vor.u32 %v9852, %v9853
      %v9856 = vsel %vm1347, %v9848, %v9855
      %v9857 = vrot.slane %v9852, 4
      %v9859 = vshrl.u32 %v9706, 16
      %v9861 = vrot.slane %v9859, 7
      %v9862 = vshll.u32 %v9706, 16
      %v9864 = vor.u32 %v9861, %v9862
      %v9865 = vrot.slane %v9861, 4
      %v9867 = vshrl.u32 %v9707, 16
      %v9869 = vrot.slane %v9867, 7
      %v9870 = vshll.u32 %v9707, 16
      %v9872 = vor.u32 %v9869, %v9870
      %v9873 = vsel %vm1347, %v9865, %v9872
      %v9874 = vrot.slane %v9869, 4
      %v9876 = vshrl.u32 %v9708, 16
      %v9878 = vrot.slane %v9876, 7
      %v9879 = vshll.u32 %v9708, 16
      %v9881 = vor.u32 %v9878, %v9879
      %v9882 = vrot.slane %v9878, 4
      %v9884 = vshrl.u32 %v9709, 16
      %v9886 = vrot.slane %v9884, 7
      %v9887 = vshll.u32 %v9709, 16
      %v9889 = vor.u32 %v9886, %v9887
      %v9890 = vsel %vm1347, %v9882, %v9889
      %v9891 = vrot.slane %v9886, 4
      %v9893 = vshrl.u32 %v9710, 16
      %v9895 = vrot.slane %v9893, 7
      %v9896 = vshll.u32 %v9710, 16
      %v9898 = vor.u32 %v9895, %v9896
      %v9899 = vrot.slane %v9895, 4
      %v9901 = vshrl.u32 %v9711, 16
      %v9903 = vrot.slane %v9901, 7
      %v9904 = vshll.u32 %v9711, 16
      %v9906 = vor.u32 %v9903, %v9904
      %v9907 = vsel %vm1347, %v9899, %v9906
      %v9908 = vrot.slane %v9903, 4
      %v9910 = vshrl.u32 %v9712, 16
      %v9912 = vrot.slane %v9910, 7
      %v9913 = vshll.u32 %v9712, 16
      %v9915 = vor.u32 %v9912, %v9913
      %v9916 = vrot.slane %v9912, 4
      %v9918 = vshrl.u32 %v9713, 16
      %v9920 = vrot.slane %v9918, 7
      %v9921 = vshll.u32 %v9713, 16
      %v9923 = vor.u32 %v9920, %v9921
      %v9924 = vsel %vm1347, %v9916, %v9923
      %v9925 = vrot.slane %v9920, 4
      %v9927 = vshrl.u32 %v9714, 16
      %v9929 = vrot.slane %v9927, 7
      %v9930 = vshll.u32 %v9714, 16
      %v9932 = vor.u32 %v9929, %v9930
      %v9933 = vrot.slane %v9929, 4
      %v9935 = vshrl.u32 %v9715, 16
      %v9937 = vrot.slane %v9935, 7
      %v9938 = vshll.u32 %v9715, 16
      %v9940 = vor.u32 %v9937, %v9938
      %v9941 = vsel %vm1347, %v9933, %v9940
      %v9942 = vrot.slane %v9937, 4
      %v9944 = vshrl.u32 %v9716, 16
      %v9946 = vrot.slane %v9944, 7
      %v9947 = vshll.u32 %v9716, 16
      %v9949 = vor.u32 %v9946, %v9947
      %v9950 = vrot.slane %v9946, 4
      %v9952 = vshrl.u32 %v9717, 16
      %v9954 = vrot.slane %v9952, 7
      %v9955 = vshll.u32 %v9717, 16
      %v9957 = vor.u32 %v9954, %v9955
      %v9958 = vsel %vm1347, %v9950, %v9957
      %v9959 = vrot.slane %v9954, 4
      %v9961 = vshrl.u32 %v9718, 16
      %v9963 = vrot.slane %v9961, 7
      %v9964 = vshll.u32 %v9718, 16
      %v9966 = vor.u32 %v9963, %v9964
      %v9967 = vrot.slane %v9963, 4
      %v9969 = vshrl.u32 %v9719, 16
      %v9971 = vrot.slane %v9969, 7
      %v9972 = vshll.u32 %v9719, 16
      %v9974 = vor.u32 %v9971, %v9972
      %v9975 = vsel %vm1347, %v9967, %v9974
      %v9976 = vrot.slane %v9971, 4
      %v9978 = vshrl.u32 %v9720, 16
      %v9980 = vrot.slane %v9978, 7
      %v9981 = vshll.u32 %v9720, 16
      %v9983 = vor.u32 %v9980, %v9981
      %v9984 = vrot.slane %v9980, 4
      %v9986 = vshrl.u32 %v9721, 16
      %v9988 = vrot.slane %v9986, 7
      %v9989 = vshll.u32 %v9721, 16
      %v9991 = vor.u32 %v9988, %v9989
      %v9992 = vsel %vm1347, %v9984, %v9991
      %v9993 = vrot.slane %v9988, 4
      %v10042 = vld [vmem:[%s1670] sm:$0xf]
      %v10043 = vsel %vm1672, %v9728, %v10042
      %10044 = vst [vmem:[%s1670] sm:$0xf] %v10043
      %10045 = vst.msk [vmem:[%s1670 + $0x4] sm:$0xf] %vm702, %v9737
      %v10046 = vld [vmem:[%s1670 + $0x8] sm:$0x1]
      %v10047 = vsel %vm714, %v9738, %v10046
      %10048 = vst [vmem:[%s1670 + $0x8] sm:$0x1] %v10047
      %v10049 = vld [vmem:[%s1670 + $0xc] sm:$0xf]
      %v10050 = vsel %vm1672, %v9745, %v10049
      %10051 = vst [vmem:[%s1670 + $0xc] sm:$0xf] %v10050
      %10052 = vst.msk [vmem:[%s1670 + $0x10] sm:$0xf] %vm702, %v9754
      %v10053 = vld [vmem:[%s1670 + $0x14] sm:$0x1]
      %v10054 = vsel %vm714, %v9755, %v10053
      %10055 = vst [vmem:[%s1670 + $0x14] sm:$0x1] %v10054
      %v10056 = vld [vmem:[%s1670 + $0x18] sm:$0xf]
      %v10057 = vsel %vm1672, %v9762, %v10056
      %10058 = vst [vmem:[%s1670 + $0x18] sm:$0xf] %v10057
      %10059 = vst.msk [vmem:[%s1670 + $0x1c] sm:$0xf] %vm702, %v9771
      %v10060 = vld [vmem:[%s1670 + $0x20] sm:$0x1]
      %v10061 = vsel %vm714, %v9772, %v10060
      %10062 = vst [vmem:[%s1670 + $0x20] sm:$0x1] %v10061
      %v10063 = vld [vmem:[%s1670 + $0x24] sm:$0xf]
      %v10064 = vsel %vm1672, %v9779, %v10063
      %10065 = vst [vmem:[%s1670 + $0x24] sm:$0xf] %v10064
      %10066 = vst.msk [vmem:[%s1670 + $0x28] sm:$0xf] %vm702, %v9788
      %v10067 = vld [vmem:[%s1670 + $0x2c] sm:$0x1]
      %v10068 = vsel %vm714, %v9789, %v10067
      %10069 = vst [vmem:[%s1670 + $0x2c] sm:$0x1] %v10068
      %v10070 = vld [vmem:[%s1670 + $0x30] sm:$0xf]
      %v10071 = vsel %vm1672, %v9796, %v10070
      %10072 = vst [vmem:[%s1670 + $0x30] sm:$0xf] %v10071
      %10073 = vst.msk [vmem:[%s1670 + $0x34] sm:$0xf] %vm702, %v9805
      %v10074 = vld [vmem:[%s1670 + $0x38] sm:$0x1]
      %v10075 = vsel %vm714, %v9806, %v10074
      %10076 = vst [vmem:[%s1670 + $0x38] sm:$0x1] %v10075
      %v10077 = vld [vmem:[%s1670 + $0x3c] sm:$0xf]
      %v10078 = vsel %vm1672, %v9813, %v10077
      %10079 = vst [vmem:[%s1670 + $0x3c] sm:$0xf] %v10078
      %10080 = vst.msk [vmem:[%s1670 + $0x40] sm:$0xf] %vm702, %v9822
      %v10081 = vld [vmem:[%s1670 + $0x44] sm:$0x1]
      %v10082 = vsel %vm714, %v9823, %v10081
      %10083 = vst [vmem:[%s1670 + $0x44] sm:$0x1] %v10082
      %v10084 = vld [vmem:[%s1670 + $0x48] sm:$0xf]
      %v10085 = vsel %vm1672, %v9830, %v10084
      %10086 = vst [vmem:[%s1670 + $0x48] sm:$0xf] %v10085
      %10087 = vst.msk [vmem:[%s1670 + $0x4c] sm:$0xf] %vm702, %v9839
      %v10088 = vld [vmem:[%s1670 + $0x50] sm:$0x1]
      %v10089 = vsel %vm714, %v9840, %v10088
      %10090 = vst [vmem:[%s1670 + $0x50] sm:$0x1] %v10089
      %v10091 = vld [vmem:[%s1670 + $0x54] sm:$0xf]
      %v10092 = vsel %vm1672, %v9847, %v10091
      %10093 = vst [vmem:[%s1670 + $0x54] sm:$0xf] %v10092
      %10094 = vst.msk [vmem:[%s1670 + $0x58] sm:$0xf] %vm702, %v9856
      %v10095 = vld [vmem:[%s1670 + $0x5c] sm:$0x1]
      %v10096 = vsel %vm714, %v9857, %v10095
      %10097 = vst [vmem:[%s1670 + $0x5c] sm:$0x1] %v10096
      %v10098 = vld [vmem:[%s1670 + $0x60] sm:$0xf]
      %v10099 = vsel %vm1672, %v9864, %v10098
      %10100 = vst [vmem:[%s1670 + $0x60] sm:$0xf] %v10099
      %10101 = vst.msk [vmem:[%s1670 + $0x64] sm:$0xf] %vm702, %v9873
      %v10102 = vld [vmem:[%s1670 + $0x68] sm:$0x1]
      %v10103 = vsel %vm714, %v9874, %v10102
      %10104 = vst [vmem:[%s1670 + $0x68] sm:$0x1] %v10103
      %v10105 = vld [vmem:[%s1670 + $0x6c] sm:$0xf]
      %v10106 = vsel %vm1672, %v9881, %v10105
      %10107 = vst [vmem:[%s1670 + $0x6c] sm:$0xf] %v10106
      %10108 = vst.msk [vmem:[%s1670 + $0x70] sm:$0xf] %vm702, %v9890
      %v10109 = vld [vmem:[%s1670 + $0x74] sm:$0x1]
      %v10110 = vsel %vm714, %v9891, %v10109
      %10111 = vst [vmem:[%s1670 + $0x74] sm:$0x1] %v10110
      %v10112 = vld [vmem:[%s1670 + $0x78] sm:$0xf]
      %v10113 = vsel %vm1672, %v9898, %v10112
      %10114 = vst [vmem:[%s1670 + $0x78] sm:$0xf] %v10113
      %10115 = vst.msk [vmem:[%s1670 + $0x7c] sm:$0xf] %vm702, %v9907
      %v10116 = vld [vmem:[%s1670 + $0x80] sm:$0x1]
      %v10117 = vsel %vm714, %v9908, %v10116
      %10118 = vst [vmem:[%s1670 + $0x80] sm:$0x1] %v10117
      %v10119 = vld [vmem:[%s1670 + $0x84] sm:$0xf]
      %v10120 = vsel %vm1672, %v9915, %v10119
      %10121 = vst [vmem:[%s1670 + $0x84] sm:$0xf] %v10120
      %10122 = vst.msk [vmem:[%s1670 + $0x88] sm:$0xf] %vm702, %v9924
      %v10123 = vld [vmem:[%s1670 + $0x8c] sm:$0x1]
      %v10124 = vsel %vm714, %v9925, %v10123
      %10125 = vst [vmem:[%s1670 + $0x8c] sm:$0x1] %v10124
      %v10126 = vld [vmem:[%s1670 + $0x90] sm:$0xf]
      %v10127 = vsel %vm1672, %v9932, %v10126
      %10128 = vst [vmem:[%s1670 + $0x90] sm:$0xf] %v10127
      %10129 = vst.msk [vmem:[%s1670 + $0x94] sm:$0xf] %vm702, %v9941
      %v10130 = vld [vmem:[%s1670 + $0x98] sm:$0x1]
      %v10131 = vsel %vm714, %v9942, %v10130
      %10132 = vst [vmem:[%s1670 + $0x98] sm:$0x1] %v10131
      %v10133 = vld [vmem:[%s1670 + $0x9c] sm:$0xf]
      %v10134 = vsel %vm1672, %v9949, %v10133
      %10135 = vst [vmem:[%s1670 + $0x9c] sm:$0xf] %v10134
      %10136 = vst.msk [vmem:[%s1670 + $0xa0] sm:$0xf] %vm702, %v9958
      %v10137 = vld [vmem:[%s1670 + $0xa4] sm:$0x1]
      %v10138 = vsel %vm714, %v9959, %v10137
      %10139 = vst [vmem:[%s1670 + $0xa4] sm:$0x1] %v10138
      %v10140 = vld [vmem:[%s1670 + $0xa8] sm:$0xf]
      %v10141 = vsel %vm1672, %v9966, %v10140
      %10142 = vst [vmem:[%s1670 + $0xa8] sm:$0xf] %v10141
      %10143 = vst.msk [vmem:[%s1670 + $0xac] sm:$0xf] %vm702, %v9975
      %v10144 = vld [vmem:[%s1670 + $0xb0] sm:$0x1]
      %v10145 = vsel %vm714, %v9976, %v10144
      %10146 = vst [vmem:[%s1670 + $0xb0] sm:$0x1] %v10145
      %v10147 = vld [vmem:[%s1670 + $0xb4] sm:$0xf]
      %v10148 = vsel %vm1672, %v9983, %v10147
      %10149 = vst [vmem:[%s1670 + $0xb4] sm:$0xf] %v10148
      %10150 = vst.msk [vmem:[%s1670 + $0xb8] sm:$0xf] %vm702, %v9992
      %v10151 = vld [vmem:[%s1670 + $0xbc] sm:$0x1]
      %v10152 = vsel %vm714, %v9993, %v10151
      %10153 = vst [vmem:[%s1670 + $0xbc] sm:$0x1] %v10152
      %v10154 = vld [vmem:[%s1787] sm:$0xf]
      %v10155 = vld [vmem:[%s1787 + $0x4] sm:$0xf]
      %v10156 = vld [vmem:[%s1787 + $0xc] sm:$0xf]
      %v10157 = vld [vmem:[%s1787 + $0x10] sm:$0xf]
      %v10158 = vld [vmem:[%s1787 + $0x18] sm:$0xf]
      %v10159 = vld [vmem:[%s1787 + $0x1c] sm:$0xf]
      %v10160 = vld [vmem:[%s1787 + $0x24] sm:$0xf]
      %v10161 = vld [vmem:[%s1787 + $0x28] sm:$0xf]
      %v10162 = vld [vmem:[%s1787 + $0x30] sm:$0xf]
      %v10163 = vld [vmem:[%s1787 + $0x34] sm:$0xf]
      %v10164 = vld [vmem:[%s1787 + $0x3c] sm:$0xf]
      %v10165 = vld [vmem:[%s1787 + $0x40] sm:$0xf]
      %v10166 = vld [vmem:[%s1787 + $0x48] sm:$0xf]
      %v10167 = vld [vmem:[%s1787 + $0x4c] sm:$0xf]
      %v10168 = vld [vmem:[%s1787 + $0x54] sm:$0xf]
      %v10169 = vld [vmem:[%s1787 + $0x58] sm:$0xf]
      %v10170 = vld [vmem:[%s1787 + $0x60] sm:$0xf]
      %v10171 = vld [vmem:[%s1787 + $0x64] sm:$0xf]
      %v10172 = vld [vmem:[%s1787 + $0x6c] sm:$0xf]
      %v10173 = vld [vmem:[%s1787 + $0x70] sm:$0xf]
      %v10174 = vld [vmem:[%s1787 + $0x78] sm:$0xf]
      %v10175 = vld [vmem:[%s1787 + $0x7c] sm:$0xf]
      %v10176 = vld [vmem:[%s1787 + $0x84] sm:$0xf]
      %v10177 = vld [vmem:[%s1787 + $0x88] sm:$0xf]
      %v10178 = vld [vmem:[%s1787 + $0x90] sm:$0xf]
      %v10179 = vld [vmem:[%s1787 + $0x94] sm:$0xf]
      %v10180 = vld [vmem:[%s1787 + $0x9c] sm:$0xf]
      %v10181 = vld [vmem:[%s1787 + $0xa0] sm:$0xf]
      %v10182 = vld [vmem:[%s1787 + $0xa8] sm:$0xf]
      %v10183 = vld [vmem:[%s1787 + $0xac] sm:$0xf]
      %v10184 = vld [vmem:[%s1787 + $0xb4] sm:$0xf]
      %v10185 = vld [vmem:[%s1787 + $0xb8] sm:$0xf]
      %v10186 = vld [vmem:[%s1787 + $0x8] sm:$0x1]
      %v10187 = vld [vmem:[%s1787 + $0x14] sm:$0x1]
      %v10188 = vld [vmem:[%s1787 + $0x20] sm:$0x1]
      %v10189 = vld [vmem:[%s1787 + $0x2c] sm:$0x1]
      %v10190 = vld [vmem:[%s1787 + $0x38] sm:$0x1]
      %v10191 = vld [vmem:[%s1787 + $0x44] sm:$0x1]
      %v10192 = vld [vmem:[%s1787 + $0x50] sm:$0x1]
      %v10193 = vld [vmem:[%s1787 + $0x5c] sm:$0x1]
      %v10194 = vld [vmem:[%s1787 + $0x68] sm:$0x1]
      %v10195 = vld [vmem:[%s1787 + $0x74] sm:$0x1]
      %v10196 = vld [vmem:[%s1787 + $0x80] sm:$0x1]
      %v10197 = vld [vmem:[%s1787 + $0x8c] sm:$0x1]
      %v10198 = vld [vmem:[%s1787 + $0x98] sm:$0x1]
      %v10199 = vld [vmem:[%s1787 + $0xa4] sm:$0x1]
      %v10200 = vld [vmem:[%s1787 + $0xb0] sm:$0x1]
      %v10201 = vld [vmem:[%s1787 + $0xbc] sm:$0x1]
      %v10203 = vshrl.u32 %v10154, 16
      %v10205 = vrot.slane %v10203, 4
      %v10206 = vshll.u32 %v10154, 16
      %v10208 = vrot.slane %v10206, 5
      %v10209 = vor.u32 %v10205, %v10208
      %v10210 = vrot.slane %v10209, 4
      %v10212 = vshll.u32 %v10155, 16
      %v10214 = vrot.slane %v10212, 5
      %v10215 = vsel %vm1838, %v10210, %v10214
      %v10216 = vshrl.u32 %v10155, 16
      %v10218 = vrot.slane %v10216, 4
      %v10219 = vor.u32 %v10218, %v10214
      %v10220 = vrot.slane %v10219, 4
      %v10222 = vshll.u32 %v10186, 16
      %v10224 = vrot.slane %v10222, 5
      %v10225 = vsel %vm1838, %v10220, %v10224
      %v10227 = vshrl.u32 %v10156, 16
      %v10229 = vrot.slane %v10227, 4
      %v10230 = vshll.u32 %v10156, 16
      %v10232 = vrot.slane %v10230, 5
      %v10233 = vor.u32 %v10229, %v10232
      %v10234 = vrot.slane %v10233, 4
      %v10236 = vshll.u32 %v10157, 16
      %v10238 = vrot.slane %v10236, 5
      %v10239 = vsel %vm1838, %v10234, %v10238
      %v10240 = vshrl.u32 %v10157, 16
      %v10242 = vrot.slane %v10240, 4
      %v10243 = vor.u32 %v10242, %v10238
      %v10244 = vrot.slane %v10243, 4
      %v10246 = vshll.u32 %v10187, 16
      %v10248 = vrot.slane %v10246, 5
      %v10249 = vsel %vm1838, %v10244, %v10248
      %v10251 = vshrl.u32 %v10158, 16
      %v10253 = vrot.slane %v10251, 4
      %v10254 = vshll.u32 %v10158, 16
      %v10256 = vrot.slane %v10254, 5
      %v10257 = vor.u32 %v10253, %v10256
      %v10258 = vrot.slane %v10257, 4
      %v10260 = vshll.u32 %v10159, 16
      %v10262 = vrot.slane %v10260, 5
      %v10263 = vsel %vm1838, %v10258, %v10262
      %v10264 = vshrl.u32 %v10159, 16
      %v10266 = vrot.slane %v10264, 4
      %v10267 = vor.u32 %v10266, %v10262
      %v10268 = vrot.slane %v10267, 4
      %v10270 = vshll.u32 %v10188, 16
      %v10272 = vrot.slane %v10270, 5
      %v10273 = vsel %vm1838, %v10268, %v10272
      %v10275 = vshrl.u32 %v10160, 16
      %v10277 = vrot.slane %v10275, 4
      %v10278 = vshll.u32 %v10160, 16
      %v10280 = vrot.slane %v10278, 5
      %v10281 = vor.u32 %v10277, %v10280
      %v10282 = vrot.slane %v10281, 4
      %v10284 = vshll.u32 %v10161, 16
      %v10286 = vrot.slane %v10284, 5
      %v10287 = vsel %vm1838, %v10282, %v10286
      %v10288 = vshrl.u32 %v10161, 16
      %v10290 = vrot.slane %v10288, 4
      %v10291 = vor.u32 %v10290, %v10286
      %v10292 = vrot.slane %v10291, 4
      %v10294 = vshll.u32 %v10189, 16
      %v10296 = vrot.slane %v10294, 5
      %v10297 = vsel %vm1838, %v10292, %v10296
      %v10299 = vshrl.u32 %v10162, 16
      %v10301 = vrot.slane %v10299, 4
      %v10302 = vshll.u32 %v10162, 16
      %v10304 = vrot.slane %v10302, 5
      %v10305 = vor.u32 %v10301, %v10304
      %v10306 = vrot.slane %v10305, 4
      %v10308 = vshll.u32 %v10163, 16
      %v10310 = vrot.slane %v10308, 5
      %v10311 = vsel %vm1838, %v10306, %v10310
      %v10312 = vshrl.u32 %v10163, 16
      %v10314 = vrot.slane %v10312, 4
      %v10315 = vor.u32 %v10314, %v10310
      %v10316 = vrot.slane %v10315, 4
      %v10318 = vshll.u32 %v10190, 16
      %v10320 = vrot.slane %v10318, 5
      %v10321 = vsel %vm1838, %v10316, %v10320
      %v10323 = vshrl.u32 %v10164, 16
      %v10325 = vrot.slane %v10323, 4
      %v10326 = vshll.u32 %v10164, 16
      %v10328 = vrot.slane %v10326, 5
      %v10329 = vor.u32 %v10325, %v10328
      %v10330 = vrot.slane %v10329, 4
      %v10332 = vshll.u32 %v10165, 16
      %v10334 = vrot.slane %v10332, 5
      %v10335 = vsel %vm1838, %v10330, %v10334
      %v10336 = vshrl.u32 %v10165, 16
      %v10338 = vrot.slane %v10336, 4
      %v10339 = vor.u32 %v10338, %v10334
      %v10340 = vrot.slane %v10339, 4
      %v10342 = vshll.u32 %v10191, 16
      %v10344 = vrot.slane %v10342, 5
      %v10345 = vsel %vm1838, %v10340, %v10344
      %v10347 = vshrl.u32 %v10166, 16
      %v10349 = vrot.slane %v10347, 4
      %v10350 = vshll.u32 %v10166, 16
      %v10352 = vrot.slane %v10350, 5
      %v10353 = vor.u32 %v10349, %v10352
      %v10354 = vrot.slane %v10353, 4
      %v10356 = vshll.u32 %v10167, 16
      %v10358 = vrot.slane %v10356, 5
      %v10359 = vsel %vm1838, %v10354, %v10358
      %v10360 = vshrl.u32 %v10167, 16
      %v10362 = vrot.slane %v10360, 4
      %v10363 = vor.u32 %v10362, %v10358
      %v10364 = vrot.slane %v10363, 4
      %v10366 = vshll.u32 %v10192, 16
      %v10368 = vrot.slane %v10366, 5
      %v10369 = vsel %vm1838, %v10364, %v10368
      %v10371 = vshrl.u32 %v10168, 16
      %v10373 = vrot.slane %v10371, 4
      %v10374 = vshll.u32 %v10168, 16
      %v10376 = vrot.slane %v10374, 5
      %v10377 = vor.u32 %v10373, %v10376
      %v10378 = vrot.slane %v10377, 4
      %v10380 = vshll.u32 %v10169, 16
      %v10382 = vrot.slane %v10380, 5
      %v10383 = vsel %vm1838, %v10378, %v10382
      %v10384 = vshrl.u32 %v10169, 16
      %v10386 = vrot.slane %v10384, 4
      %v10387 = vor.u32 %v10386, %v10382
      %v10388 = vrot.slane %v10387, 4
      %v10390 = vshll.u32 %v10193, 16
      %v10392 = vrot.slane %v10390, 5
      %v10393 = vsel %vm1838, %v10388, %v10392
      %v10395 = vshrl.u32 %v10170, 16
      %v10397 = vrot.slane %v10395, 4
      %v10398 = vshll.u32 %v10170, 16
      %v10400 = vrot.slane %v10398, 5
      %v10401 = vor.u32 %v10397, %v10400
      %v10402 = vrot.slane %v10401, 4
      %v10404 = vshll.u32 %v10171, 16
      %v10406 = vrot.slane %v10404, 5
      %v10407 = vsel %vm1838, %v10402, %v10406
      %v10408 = vshrl.u32 %v10171, 16
      %v10410 = vrot.slane %v10408, 4
      %v10411 = vor.u32 %v10410, %v10406
      %v10412 = vrot.slane %v10411, 4
      %v10414 = vshll.u32 %v10194, 16
      %v10416 = vrot.slane %v10414, 5
      %v10417 = vsel %vm1838, %v10412, %v10416
      %v10419 = vshrl.u32 %v10172, 16
      %v10421 = vrot.slane %v10419, 4
      %v10422 = vshll.u32 %v10172, 16
      %v10424 = vrot.slane %v10422, 5
      %v10425 = vor.u32 %v10421, %v10424
      %v10426 = vrot.slane %v10425, 4
      %v10428 = vshll.u32 %v10173, 16
      %v10430 = vrot.slane %v10428, 5
      %v10431 = vsel %vm1838, %v10426, %v10430
      %v10432 = vshrl.u32 %v10173, 16
      %v10434 = vrot.slane %v10432, 4
      %v10435 = vor.u32 %v10434, %v10430
      %v10436 = vrot.slane %v10435, 4
      %v10438 = vshll.u32 %v10195, 16
      %v10440 = vrot.slane %v10438, 5
      %v10441 = vsel %vm1838, %v10436, %v10440
      %v10443 = vshrl.u32 %v10174, 16
      %v10445 = vrot.slane %v10443, 4
      %v10446 = vshll.u32 %v10174, 16
      %v10448 = vrot.slane %v10446, 5
      %v10449 = vor.u32 %v10445, %v10448
      %v10450 = vrot.slane %v10449, 4
      %v10452 = vshll.u32 %v10175, 16
      %v10454 = vrot.slane %v10452, 5
      %v10455 = vsel %vm1838, %v10450, %v10454
      %v10456 = vshrl.u32 %v10175, 16
      %v10458 = vrot.slane %v10456, 4
      %v10459 = vor.u32 %v10458, %v10454
      %v10460 = vrot.slane %v10459, 4
      %v10462 = vshll.u32 %v10196, 16
      %v10464 = vrot.slane %v10462, 5
      %v10465 = vsel %vm1838, %v10460, %v10464
      %v10467 = vshrl.u32 %v10176, 16
      %v10469 = vrot.slane %v10467, 4
      %v10470 = vshll.u32 %v10176, 16
      %v10472 = vrot.slane %v10470, 5
      %v10473 = vor.u32 %v10469, %v10472
      %v10474 = vrot.slane %v10473, 4
      %v10476 = vshll.u32 %v10177, 16
      %v10478 = vrot.slane %v10476, 5
      %v10479 = vsel %vm1838, %v10474, %v10478
      %v10480 = vshrl.u32 %v10177, 16
      %v10482 = vrot.slane %v10480, 4
      %v10483 = vor.u32 %v10482, %v10478
      %v10484 = vrot.slane %v10483, 4
      %v10486 = vshll.u32 %v10197, 16
      %v10488 = vrot.slane %v10486, 5
      %v10489 = vsel %vm1838, %v10484, %v10488
      %v10491 = vshrl.u32 %v10178, 16
      %v10493 = vrot.slane %v10491, 4
      %v10494 = vshll.u32 %v10178, 16
      %v10496 = vrot.slane %v10494, 5
      %v10497 = vor.u32 %v10493, %v10496
      %v10498 = vrot.slane %v10497, 4
      %v10500 = vshll.u32 %v10179, 16
      %v10502 = vrot.slane %v10500, 5
      %v10503 = vsel %vm1838, %v10498, %v10502
      %v10504 = vshrl.u32 %v10179, 16
      %v10506 = vrot.slane %v10504, 4
      %v10507 = vor.u32 %v10506, %v10502
      %v10508 = vrot.slane %v10507, 4
      %v10510 = vshll.u32 %v10198, 16
      %v10512 = vrot.slane %v10510, 5
      %v10513 = vsel %vm1838, %v10508, %v10512
      %v10515 = vshrl.u32 %v10180, 16
      %v10517 = vrot.slane %v10515, 4
      %v10518 = vshll.u32 %v10180, 16
      %v10520 = vrot.slane %v10518, 5
      %v10521 = vor.u32 %v10517, %v10520
      %v10522 = vrot.slane %v10521, 4
      %v10524 = vshll.u32 %v10181, 16
      %v10526 = vrot.slane %v10524, 5
      %v10527 = vsel %vm1838, %v10522, %v10526
      %v10528 = vshrl.u32 %v10181, 16
      %v10530 = vrot.slane %v10528, 4
      %v10531 = vor.u32 %v10530, %v10526
      %v10532 = vrot.slane %v10531, 4
      %v10534 = vshll.u32 %v10199, 16
      %v10536 = vrot.slane %v10534, 5
      %v10537 = vsel %vm1838, %v10532, %v10536
      %v10539 = vshrl.u32 %v10182, 16
      %v10541 = vrot.slane %v10539, 4
      %v10542 = vshll.u32 %v10182, 16
      %v10544 = vrot.slane %v10542, 5
      %v10545 = vor.u32 %v10541, %v10544
      %v10546 = vrot.slane %v10545, 4
      %v10548 = vshll.u32 %v10183, 16
      %v10550 = vrot.slane %v10548, 5
      %v10551 = vsel %vm1838, %v10546, %v10550
      %v10552 = vshrl.u32 %v10183, 16
      %v10554 = vrot.slane %v10552, 4
      %v10555 = vor.u32 %v10554, %v10550
      %v10556 = vrot.slane %v10555, 4
      %v10558 = vshll.u32 %v10200, 16
      %v10560 = vrot.slane %v10558, 5
      %v10561 = vsel %vm1838, %v10556, %v10560
      %v10563 = vshrl.u32 %v10184, 16
      %v10565 = vrot.slane %v10563, 4
      %v10566 = vshll.u32 %v10184, 16
      %v10568 = vrot.slane %v10566, 5
      %v10569 = vor.u32 %v10565, %v10568
      %v10570 = vrot.slane %v10569, 4
      %v10572 = vshll.u32 %v10185, 16
      %v10574 = vrot.slane %v10572, 5
      %v10575 = vsel %vm1838, %v10570, %v10574
      %v10576 = vshrl.u32 %v10185, 16
      %v10578 = vrot.slane %v10576, 4
      %v10579 = vor.u32 %v10578, %v10574
      %v10580 = vrot.slane %v10579, 4
      %v10582 = vshll.u32 %v10201, 16
      %v10584 = vrot.slane %v10582, 5
      %v10585 = vsel %vm1838, %v10580, %v10584
      %v10586 = vld [vmem:[%s1787] sm:$0xe]
      %v10587 = vld [vmem:[%s1787 + $0xc] sm:$0xe]
      %v10588 = vld [vmem:[%s1787 + $0x18] sm:$0xe]
      %v10589 = vld [vmem:[%s1787 + $0x24] sm:$0xe]
      %v10590 = vld [vmem:[%s1787 + $0x30] sm:$0xe]
      %v10591 = vld [vmem:[%s1787 + $0x3c] sm:$0xe]
      %v10592 = vld [vmem:[%s1787 + $0x48] sm:$0xe]
      %v10593 = vld [vmem:[%s1787 + $0x54] sm:$0xe]
      %v10594 = vld [vmem:[%s1787 + $0x60] sm:$0xe]
      %v10595 = vld [vmem:[%s1787 + $0x6c] sm:$0xe]
      %v10596 = vld [vmem:[%s1787 + $0x78] sm:$0xe]
      %v10597 = vld [vmem:[%s1787 + $0x84] sm:$0xe]
      %v10598 = vld [vmem:[%s1787 + $0x90] sm:$0xe]
      %v10599 = vld [vmem:[%s1787 + $0x9c] sm:$0xe]
      %v10600 = vld [vmem:[%s1787 + $0xa8] sm:$0xe]
      %v10601 = vld [vmem:[%s1787 + $0xb4] sm:$0xe]
      %v10650 = vrot.slane %v10586, 5
      %v10651 = vrot.slane %v10650, 4
      %v10652 = vrot.slane %v10155, 5
      %v10653 = vsel %vm2289, %v10651, %v10652
      %v10654 = vrot.slane %v10652, 4
      %v10655 = vrot.slane %v10186, 5
      %v10656 = vsel %vm2289, %v10654, %v10655
      %v10657 = vrot.slane %v10587, 5
      %v10658 = vrot.slane %v10657, 4
      %v10659 = vrot.slane %v10157, 5
      %v10660 = vsel %vm2289, %v10658, %v10659
      %v10661 = vrot.slane %v10659, 4
      %v10662 = vrot.slane %v10187, 5
      %v10663 = vsel %vm2289, %v10661, %v10662
      %v10664 = vrot.slane %v10588, 5
      %v10665 = vrot.slane %v10664, 4
      %v10666 = vrot.slane %v10159, 5
      %v10667 = vsel %vm2289, %v10665, %v10666
      %v10668 = vrot.slane %v10666, 4
      %v10669 = vrot.slane %v10188, 5
      %v10670 = vsel %vm2289, %v10668, %v10669
      %v10671 = vrot.slane %v10589, 5
      %v10672 = vrot.slane %v10671, 4
      %v10673 = vrot.slane %v10161, 5
      %v10674 = vsel %vm2289, %v10672, %v10673
      %v10675 = vrot.slane %v10673, 4
      %v10676 = vrot.slane %v10189, 5
      %v10677 = vsel %vm2289, %v10675, %v10676
      %v10678 = vrot.slane %v10590, 5
      %v10679 = vrot.slane %v10678, 4
      %v10680 = vrot.slane %v10163, 5
      %v10681 = vsel %vm2289, %v10679, %v10680
      %v10682 = vrot.slane %v10680, 4
      %v10683 = vrot.slane %v10190, 5
      %v10684 = vsel %vm2289, %v10682, %v10683
      %v10685 = vrot.slane %v10591, 5
      %v10686 = vrot.slane %v10685, 4
      %v10687 = vrot.slane %v10165, 5
      %v10688 = vsel %vm2289, %v10686, %v10687
      %v10689 = vrot.slane %v10687, 4
      %v10690 = vrot.slane %v10191, 5
      %v10691 = vsel %vm2289, %v10689, %v10690
      %v10692 = vrot.slane %v10592, 5
      %v10693 = vrot.slane %v10692, 4
      %v10694 = vrot.slane %v10167, 5
      %v10695 = vsel %vm2289, %v10693, %v10694
      %v10696 = vrot.slane %v10694, 4
      %v10697 = vrot.slane %v10192, 5
      %v10698 = vsel %vm2289, %v10696, %v10697
      %v10699 = vrot.slane %v10593, 5
      %v10700 = vrot.slane %v10699, 4
      %v10701 = vrot.slane %v10169, 5
      %v10702 = vsel %vm2289, %v10700, %v10701
      %v10703 = vrot.slane %v10701, 4
      %v10704 = vrot.slane %v10193, 5
      %v10705 = vsel %vm2289, %v10703, %v10704
      %v10706 = vrot.slane %v10594, 5
      %v10707 = vrot.slane %v10706, 4
      %v10708 = vrot.slane %v10171, 5
      %v10709 = vsel %vm2289, %v10707, %v10708
      %v10710 = vrot.slane %v10708, 4
      %v10711 = vrot.slane %v10194, 5
      %v10712 = vsel %vm2289, %v10710, %v10711
      %v10713 = vrot.slane %v10595, 5
      %v10714 = vrot.slane %v10713, 4
      %v10715 = vrot.slane %v10173, 5
      %v10716 = vsel %vm2289, %v10714, %v10715
      %v10717 = vrot.slane %v10715, 4
      %v10718 = vrot.slane %v10195, 5
      %v10719 = vsel %vm2289, %v10717, %v10718
      %v10720 = vrot.slane %v10596, 5
      %v10721 = vrot.slane %v10720, 4
      %v10722 = vrot.slane %v10175, 5
      %v10723 = vsel %vm2289, %v10721, %v10722
      %v10724 = vrot.slane %v10722, 4
      %v10725 = vrot.slane %v10196, 5
      %v10726 = vsel %vm2289, %v10724, %v10725
      %v10727 = vrot.slane %v10597, 5
      %v10728 = vrot.slane %v10727, 4
      %v10729 = vrot.slane %v10177, 5
      %v10730 = vsel %vm2289, %v10728, %v10729
      %v10731 = vrot.slane %v10729, 4
      %v10732 = vrot.slane %v10197, 5
      %v10733 = vsel %vm2289, %v10731, %v10732
      %v10734 = vrot.slane %v10598, 5
      %v10735 = vrot.slane %v10734, 4
      %v10736 = vrot.slane %v10179, 5
      %v10737 = vsel %vm2289, %v10735, %v10736
      %v10738 = vrot.slane %v10736, 4
      %v10739 = vrot.slane %v10198, 5
      %v10740 = vsel %vm2289, %v10738, %v10739
      %v10741 = vrot.slane %v10599, 5
      %v10742 = vrot.slane %v10741, 4
      %v10743 = vrot.slane %v10181, 5
      %v10744 = vsel %vm2289, %v10742, %v10743
      %v10745 = vrot.slane %v10743, 4
      %v10746 = vrot.slane %v10199, 5
      %v10747 = vsel %vm2289, %v10745, %v10746
      %v10748 = vrot.slane %v10600, 5
      %v10749 = vrot.slane %v10748, 4
      %v10750 = vrot.slane %v10183, 5
      %v10751 = vsel %vm2289, %v10749, %v10750
      %v10752 = vrot.slane %v10750, 4
      %v10753 = vrot.slane %v10200, 5
      %v10754 = vsel %vm2289, %v10752, %v10753
      %v10755 = vrot.slane %v10601, 5
      %v10756 = vrot.slane %v10755, 4
      %v10757 = vrot.slane %v10185, 5
      %v10758 = vsel %vm2289, %v10756, %v10757
      %v10759 = vrot.slane %v10757, 4
      %v10760 = vrot.slane %v10201, 5
      %v10761 = vsel %vm2289, %v10759, %v10760
      %v10762 = vld [vmem:[%s1670] sm:$0xf]
      %v10763 = vld [vmem:[%s1670 + $0x4] sm:$0xf]
      %v10764 = vld [vmem:[%s1670 + $0xc] sm:$0xf]
      %v10765 = vld [vmem:[%s1670 + $0x10] sm:$0xf]
      %v10766 = vld [vmem:[%s1670 + $0x18] sm:$0xf]
      %v10767 = vld [vmem:[%s1670 + $0x1c] sm:$0xf]
      %v10768 = vld [vmem:[%s1670 + $0x24] sm:$0xf]
      %v10769 = vld [vmem:[%s1670 + $0x28] sm:$0xf]
      %v10770 = vld [vmem:[%s1670 + $0x30] sm:$0xf]
      %v10771 = vld [vmem:[%s1670 + $0x34] sm:$0xf]
      %v10772 = vld [vmem:[%s1670 + $0x3c] sm:$0xf]
      %v10773 = vld [vmem:[%s1670 + $0x40] sm:$0xf]
      %v10774 = vld [vmem:[%s1670 + $0x48] sm:$0xf]
      %v10775 = vld [vmem:[%s1670 + $0x4c] sm:$0xf]
      %v10776 = vld [vmem:[%s1670 + $0x54] sm:$0xf]
      %v10777 = vld [vmem:[%s1670 + $0x58] sm:$0xf]
      %v10778 = vld [vmem:[%s1670 + $0x60] sm:$0xf]
      %v10779 = vld [vmem:[%s1670 + $0x64] sm:$0xf]
      %v10780 = vld [vmem:[%s1670 + $0x6c] sm:$0xf]
      %v10781 = vld [vmem:[%s1670 + $0x70] sm:$0xf]
      %v10782 = vld [vmem:[%s1670 + $0x78] sm:$0xf]
      %v10783 = vld [vmem:[%s1670 + $0x7c] sm:$0xf]
      %v10784 = vld [vmem:[%s1670 + $0x84] sm:$0xf]
      %v10785 = vld [vmem:[%s1670 + $0x88] sm:$0xf]
      %v10786 = vld [vmem:[%s1670 + $0x90] sm:$0xf]
      %v10787 = vld [vmem:[%s1670 + $0x94] sm:$0xf]
      %v10788 = vld [vmem:[%s1670 + $0x9c] sm:$0xf]
      %v10789 = vld [vmem:[%s1670 + $0xa0] sm:$0xf]
      %v10790 = vld [vmem:[%s1670 + $0xa8] sm:$0xf]
      %v10791 = vld [vmem:[%s1670 + $0xac] sm:$0xf]
      %v10792 = vld [vmem:[%s1670 + $0xb4] sm:$0xf]
      %v10793 = vld [vmem:[%s1670 + $0xb8] sm:$0xf]
      %v10794 = vld [vmem:[%s1670 + $0x8] sm:$0x1]
      %v10795 = vld [vmem:[%s1670 + $0x14] sm:$0x1]
      %v10796 = vld [vmem:[%s1670 + $0x20] sm:$0x1]
      %v10797 = vld [vmem:[%s1670 + $0x2c] sm:$0x1]
      %v10798 = vld [vmem:[%s1670 + $0x38] sm:$0x1]
      %v10799 = vld [vmem:[%s1670 + $0x44] sm:$0x1]
      %v10800 = vld [vmem:[%s1670 + $0x50] sm:$0x1]
      %v10801 = vld [vmem:[%s1670 + $0x5c] sm:$0x1]
      %v10802 = vld [vmem:[%s1670 + $0x68] sm:$0x1]
      %v10803 = vld [vmem:[%s1670 + $0x74] sm:$0x1]
      %v10804 = vld [vmem:[%s1670 + $0x80] sm:$0x1]
      %v10805 = vld [vmem:[%s1670 + $0x8c] sm:$0x1]
      %v10806 = vld [vmem:[%s1670 + $0x98] sm:$0x1]
      %v10807 = vld [vmem:[%s1670 + $0xa4] sm:$0x1]
      %v10808 = vld [vmem:[%s1670 + $0xb0] sm:$0x1]
      %v10809 = vld [vmem:[%s1670 + $0xbc] sm:$0x1]
      %v10811 = vshrl.u32 %v10762, 16
      %v10813 = vrot.slane %v10811, 4
      %v10814 = vshll.u32 %v10762, 16
      %v10816 = vrot.slane %v10814, 5
      %v10817 = vor.u32 %v10813, %v10816
      %v10818 = vrot.slane %v10817, 4
      %v10820 = vshll.u32 %v10763, 16
      %v10822 = vrot.slane %v10820, 5
      %v10823 = vsel %vm1838, %v10818, %v10822
      %v10824 = vshrl.u32 %v10763, 16
      %v10826 = vrot.slane %v10824, 4
      %v10827 = vor.u32 %v10826, %v10822
      %v10828 = vrot.slane %v10827, 4
      %v10830 = vshll.u32 %v10794, 16
      %v10832 = vrot.slane %v10830, 5
      %v10833 = vsel %vm1838, %v10828, %v10832
      %v10835 = vshrl.u32 %v10764, 16
      %v10837 = vrot.slane %v10835, 4
      %v10838 = vshll.u32 %v10764, 16
      %v10840 = vrot.slane %v10838, 5
      %v10841 = vor.u32 %v10837, %v10840
      %v10842 = vrot.slane %v10841, 4
      %v10844 = vshll.u32 %v10765, 16
      %v10846 = vrot.slane %v10844, 5
      %v10847 = vsel %vm1838, %v10842, %v10846
      %v10848 = vshrl.u32 %v10765, 16
      %v10850 = vrot.slane %v10848, 4
      %v10851 = vor.u32 %v10850, %v10846
      %v10852 = vrot.slane %v10851, 4
      %v10854 = vshll.u32 %v10795, 16
      %v10856 = vrot.slane %v10854, 5
      %v10857 = vsel %vm1838, %v10852, %v10856
      %v10859 = vshrl.u32 %v10766, 16
      %v10861 = vrot.slane %v10859, 4
      %v10862 = vshll.u32 %v10766, 16
      %v10864 = vrot.slane %v10862, 5
      %v10865 = vor.u32 %v10861, %v10864
      %v10866 = vrot.slane %v10865, 4
      %v10868 = vshll.u32 %v10767, 16
      %v10870 = vrot.slane %v10868, 5
      %v10871 = vsel %vm1838, %v10866, %v10870
      %v10872 = vshrl.u32 %v10767, 16
      %v10874 = vrot.slane %v10872, 4
      %v10875 = vor.u32 %v10874, %v10870
      %v10876 = vrot.slane %v10875, 4
      %v10878 = vshll.u32 %v10796, 16
      %v10880 = vrot.slane %v10878, 5
      %v10881 = vsel %vm1838, %v10876, %v10880
      %v10883 = vshrl.u32 %v10768, 16
      %v10885 = vrot.slane %v10883, 4
      %v10886 = vshll.u32 %v10768, 16
      %v10888 = vrot.slane %v10886, 5
      %v10889 = vor.u32 %v10885, %v10888
      %v10890 = vrot.slane %v10889, 4
      %v10892 = vshll.u32 %v10769, 16
      %v10894 = vrot.slane %v10892, 5
      %v10895 = vsel %vm1838, %v10890, %v10894
      %v10896 = vshrl.u32 %v10769, 16
      %v10898 = vrot.slane %v10896, 4
      %v10899 = vor.u32 %v10898, %v10894
      %v10900 = vrot.slane %v10899, 4
      %v10902 = vshll.u32 %v10797, 16
      %v10904 = vrot.slane %v10902, 5
      %v10905 = vsel %vm1838, %v10900, %v10904
      %v10907 = vshrl.u32 %v10770, 16
      %v10909 = vrot.slane %v10907, 4
      %v10910 = vshll.u32 %v10770, 16
      %v10912 = vrot.slane %v10910, 5
      %v10913 = vor.u32 %v10909, %v10912
      %v10914 = vrot.slane %v10913, 4
      %v10916 = vshll.u32 %v10771, 16
      %v10918 = vrot.slane %v10916, 5
      %v10919 = vsel %vm1838, %v10914, %v10918
      %v10920 = vshrl.u32 %v10771, 16
      %v10922 = vrot.slane %v10920, 4
      %v10923 = vor.u32 %v10922, %v10918
      %v10924 = vrot.slane %v10923, 4
      %v10926 = vshll.u32 %v10798, 16
      %v10928 = vrot.slane %v10926, 5
      %v10929 = vsel %vm1838, %v10924, %v10928
      %v10931 = vshrl.u32 %v10772, 16
      %v10933 = vrot.slane %v10931, 4
      %v10934 = vshll.u32 %v10772, 16
      %v10936 = vrot.slane %v10934, 5
      %v10937 = vor.u32 %v10933, %v10936
      %v10938 = vrot.slane %v10937, 4
      %v10940 = vshll.u32 %v10773, 16
      %v10942 = vrot.slane %v10940, 5
      %v10943 = vsel %vm1838, %v10938, %v10942
      %v10944 = vshrl.u32 %v10773, 16
      %v10946 = vrot.slane %v10944, 4
      %v10947 = vor.u32 %v10946, %v10942
      %v10948 = vrot.slane %v10947, 4
      %v10950 = vshll.u32 %v10799, 16
      %v10952 = vrot.slane %v10950, 5
      %v10953 = vsel %vm1838, %v10948, %v10952
      %v10955 = vshrl.u32 %v10774, 16
      %v10957 = vrot.slane %v10955, 4
      %v10958 = vshll.u32 %v10774, 16
      %v10960 = vrot.slane %v10958, 5
      %v10961 = vor.u32 %v10957, %v10960
      %v10962 = vrot.slane %v10961, 4
      %v10964 = vshll.u32 %v10775, 16
      %v10966 = vrot.slane %v10964, 5
      %v10967 = vsel %vm1838, %v10962, %v10966
      %v10968 = vshrl.u32 %v10775, 16
      %v10970 = vrot.slane %v10968, 4
      %v10971 = vor.u32 %v10970, %v10966
      %v10972 = vrot.slane %v10971, 4
      %v10974 = vshll.u32 %v10800, 16
      %v10976 = vrot.slane %v10974, 5
      %v10977 = vsel %vm1838, %v10972, %v10976
      %v10979 = vshrl.u32 %v10776, 16
      %v10981 = vrot.slane %v10979, 4
      %v10982 = vshll.u32 %v10776, 16
      %v10984 = vrot.slane %v10982, 5
      %v10985 = vor.u32 %v10981, %v10984
      %v10986 = vrot.slane %v10985, 4
      %v10988 = vshll.u32 %v10777, 16
      %v10990 = vrot.slane %v10988, 5
      %v10991 = vsel %vm1838, %v10986, %v10990
      %v10992 = vshrl.u32 %v10777, 16
      %v10994 = vrot.slane %v10992, 4
      %v10995 = vor.u32 %v10994, %v10990
      %v10996 = vrot.slane %v10995, 4
      %v10998 = vshll.u32 %v10801, 16
      %v11000 = vrot.slane %v10998, 5
      %v11001 = vsel %vm1838, %v10996, %v11000
      %v11003 = vshrl.u32 %v10778, 16
      %v11005 = vrot.slane %v11003, 4
      %v11006 = vshll.u32 %v10778, 16
      %v11008 = vrot.slane %v11006, 5
      %v11009 = vor.u32 %v11005, %v11008
      %v11010 = vrot.slane %v11009, 4
      %v11012 = vshll.u32 %v10779, 16
      %v11014 = vrot.slane %v11012, 5
      %v11015 = vsel %vm1838, %v11010, %v11014
      %v11016 = vshrl.u32 %v10779, 16
      %v11018 = vrot.slane %v11016, 4
      %v11019 = vor.u32 %v11018, %v11014
      %v11020 = vrot.slane %v11019, 4
      %v11022 = vshll.u32 %v10802, 16
      %v11024 = vrot.slane %v11022, 5
      %v11025 = vsel %vm1838, %v11020, %v11024
      %v11027 = vshrl.u32 %v10780, 16
      %v11029 = vrot.slane %v11027, 4
      %v11030 = vshll.u32 %v10780, 16
      %v11032 = vrot.slane %v11030, 5
      %v11033 = vor.u32 %v11029, %v11032
      %v11034 = vrot.slane %v11033, 4
      %v11036 = vshll.u32 %v10781, 16
      %v11038 = vrot.slane %v11036, 5
      %v11039 = vsel %vm1838, %v11034, %v11038
      %v11040 = vshrl.u32 %v10781, 16
      %v11042 = vrot.slane %v11040, 4
      %v11043 = vor.u32 %v11042, %v11038
      %v11044 = vrot.slane %v11043, 4
      %v11046 = vshll.u32 %v10803, 16
      %v11048 = vrot.slane %v11046, 5
      %v11049 = vsel %vm1838, %v11044, %v11048
      %v11051 = vshrl.u32 %v10782, 16
      %v11053 = vrot.slane %v11051, 4
      %v11054 = vshll.u32 %v10782, 16
      %v11056 = vrot.slane %v11054, 5
      %v11057 = vor.u32 %v11053, %v11056
      %v11058 = vrot.slane %v11057, 4
      %v11060 = vshll.u32 %v10783, 16
      %v11062 = vrot.slane %v11060, 5
      %v11063 = vsel %vm1838, %v11058, %v11062
      %v11064 = vshrl.u32 %v10783, 16
      %v11066 = vrot.slane %v11064, 4
      %v11067 = vor.u32 %v11066, %v11062
      %v11068 = vrot.slane %v11067, 4
      %v11070 = vshll.u32 %v10804, 16
      %v11072 = vrot.slane %v11070, 5
      %v11073 = vsel %vm1838, %v11068, %v11072
      %v11075 = vshrl.u32 %v10784, 16
      %v11077 = vrot.slane %v11075, 4
      %v11078 = vshll.u32 %v10784, 16
      %v11080 = vrot.slane %v11078, 5
      %v11081 = vor.u32 %v11077, %v11080
      %v11082 = vrot.slane %v11081, 4
      %v11084 = vshll.u32 %v10785, 16
      %v11086 = vrot.slane %v11084, 5
      %v11087 = vsel %vm1838, %v11082, %v11086
      %v11088 = vshrl.u32 %v10785, 16
      %v11090 = vrot.slane %v11088, 4
      %v11091 = vor.u32 %v11090, %v11086
      %v11092 = vrot.slane %v11091, 4
      %v11094 = vshll.u32 %v10805, 16
      %v11096 = vrot.slane %v11094, 5
      %v11097 = vsel %vm1838, %v11092, %v11096
      %v11099 = vshrl.u32 %v10786, 16
      %v11101 = vrot.slane %v11099, 4
      %v11102 = vshll.u32 %v10786, 16
      %v11104 = vrot.slane %v11102, 5
      %v11105 = vor.u32 %v11101, %v11104
      %v11106 = vrot.slane %v11105, 4
      %v11108 = vshll.u32 %v10787, 16
      %v11110 = vrot.slane %v11108, 5
      %v11111 = vsel %vm1838, %v11106, %v11110
      %v11112 = vshrl.u32 %v10787, 16
      %v11114 = vrot.slane %v11112, 4
      %v11115 = vor.u32 %v11114, %v11110
      %v11116 = vrot.slane %v11115, 4
      %v11118 = vshll.u32 %v10806, 16
      %v11120 = vrot.slane %v11118, 5
      %v11121 = vsel %vm1838, %v11116, %v11120
      %v11123 = vshrl.u32 %v10788, 16
      %v11125 = vrot.slane %v11123, 4
      %v11126 = vshll.u32 %v10788, 16
      %v11128 = vrot.slane %v11126, 5
      %v11129 = vor.u32 %v11125, %v11128
      %v11130 = vrot.slane %v11129, 4
      %v11132 = vshll.u32 %v10789, 16
      %v11134 = vrot.slane %v11132, 5
      %v11135 = vsel %vm1838, %v11130, %v11134
      %v11136 = vshrl.u32 %v10789, 16
      %v11138 = vrot.slane %v11136, 4
      %v11139 = vor.u32 %v11138, %v11134
      %v11140 = vrot.slane %v11139, 4
      %v11142 = vshll.u32 %v10807, 16
      %v11144 = vrot.slane %v11142, 5
      %v11145 = vsel %vm1838, %v11140, %v11144
      %v11147 = vshrl.u32 %v10790, 16
      %v11149 = vrot.slane %v11147, 4
      %v11150 = vshll.u32 %v10790, 16
      %v11152 = vrot.slane %v11150, 5
      %v11153 = vor.u32 %v11149, %v11152
      %v11154 = vrot.slane %v11153, 4
      %v11156 = vshll.u32 %v10791, 16
      %v11158 = vrot.slane %v11156, 5
      %v11159 = vsel %vm1838, %v11154, %v11158
      %v11160 = vshrl.u32 %v10791, 16
      %v11162 = vrot.slane %v11160, 4
      %v11163 = vor.u32 %v11162, %v11158
      %v11164 = vrot.slane %v11163, 4
      %v11166 = vshll.u32 %v10808, 16
      %v11168 = vrot.slane %v11166, 5
      %v11169 = vsel %vm1838, %v11164, %v11168
      %v11171 = vshrl.u32 %v10792, 16
      %v11173 = vrot.slane %v11171, 4
      %v11174 = vshll.u32 %v10792, 16
      %v11176 = vrot.slane %v11174, 5
      %v11177 = vor.u32 %v11173, %v11176
      %v11178 = vrot.slane %v11177, 4
      %v11180 = vshll.u32 %v10793, 16
      %v11182 = vrot.slane %v11180, 5
      %v11183 = vsel %vm1838, %v11178, %v11182
      %v11184 = vshrl.u32 %v10793, 16
      %v11186 = vrot.slane %v11184, 4
      %v11187 = vor.u32 %v11186, %v11182
      %v11188 = vrot.slane %v11187, 4
      %v11190 = vshll.u32 %v10809, 16
      %v11192 = vrot.slane %v11190, 5
      %v11193 = vsel %vm1838, %v11188, %v11192
      %v11194 = vld [vmem:[%s1670] sm:$0xe]
      %v11195 = vld [vmem:[%s1670 + $0xc] sm:$0xe]
      %v11196 = vld [vmem:[%s1670 + $0x18] sm:$0xe]
      %v11197 = vld [vmem:[%s1670 + $0x24] sm:$0xe]
      %v11198 = vld [vmem:[%s1670 + $0x30] sm:$0xe]
      %v11199 = vld [vmem:[%s1670 + $0x3c] sm:$0xe]
      %v11200 = vld [vmem:[%s1670 + $0x48] sm:$0xe]
      %v11201 = vld [vmem:[%s1670 + $0x54] sm:$0xe]
      %v11202 = vld [vmem:[%s1670 + $0x60] sm:$0xe]
      %v11203 = vld [vmem:[%s1670 + $0x6c] sm:$0xe]
      %v11204 = vld [vmem:[%s1670 + $0x78] sm:$0xe]
      %v11205 = vld [vmem:[%s1670 + $0x84] sm:$0xe]
      %v11206 = vld [vmem:[%s1670 + $0x90] sm:$0xe]
      %v11207 = vld [vmem:[%s1670 + $0x9c] sm:$0xe]
      %v11208 = vld [vmem:[%s1670 + $0xa8] sm:$0xe]
      %v11209 = vld [vmem:[%s1670 + $0xb4] sm:$0xe]
      %v11258 = vrot.slane %v11194, 5
      %v11259 = vrot.slane %v11258, 4
      %v11260 = vrot.slane %v10763, 5
      %v11261 = vsel %vm2289, %v11259, %v11260
      %v11262 = vrot.slane %v11260, 4
      %v11263 = vrot.slane %v10794, 5
      %v11264 = vsel %vm2289, %v11262, %v11263
      %v11265 = vrot.slane %v11195, 5
      %v11266 = vrot.slane %v11265, 4
      %v11267 = vrot.slane %v10765, 5
      %v11268 = vsel %vm2289, %v11266, %v11267
      %v11269 = vrot.slane %v11267, 4
      %v11270 = vrot.slane %v10795, 5
      %v11271 = vsel %vm2289, %v11269, %v11270
      %v11272 = vrot.slane %v11196, 5
      %v11273 = vrot.slane %v11272, 4
      %v11274 = vrot.slane %v10767, 5
      %v11275 = vsel %vm2289, %v11273, %v11274
      %v11276 = vrot.slane %v11274, 4
      %v11277 = vrot.slane %v10796, 5
      %v11278 = vsel %vm2289, %v11276, %v11277
      %v11279 = vrot.slane %v11197, 5
      %v11280 = vrot.slane %v11279, 4
      %v11281 = vrot.slane %v10769, 5
      %v11282 = vsel %vm2289, %v11280, %v11281
      %v11283 = vrot.slane %v11281, 4
      %v11284 = vrot.slane %v10797, 5
      %v11285 = vsel %vm2289, %v11283, %v11284
      %v11286 = vrot.slane %v11198, 5
      %v11287 = vrot.slane %v11286, 4
      %v11288 = vrot.slane %v10771, 5
      %v11289 = vsel %vm2289, %v11287, %v11288
      %v11290 = vrot.slane %v11288, 4
      %v11291 = vrot.slane %v10798, 5
      %v11292 = vsel %vm2289, %v11290, %v11291
      %v11293 = vrot.slane %v11199, 5
      %v11294 = vrot.slane %v11293, 4
      %v11295 = vrot.slane %v10773, 5
      %v11296 = vsel %vm2289, %v11294, %v11295
      %v11297 = vrot.slane %v11295, 4
      %v11298 = vrot.slane %v10799, 5
      %v11299 = vsel %vm2289, %v11297, %v11298
      %v11300 = vrot.slane %v11200, 5
      %v11301 = vrot.slane %v11300, 4
      %v11302 = vrot.slane %v10775, 5
      %v11303 = vsel %vm2289, %v11301, %v11302
      %v11304 = vrot.slane %v11302, 4
      %v11305 = vrot.slane %v10800, 5
      %v11306 = vsel %vm2289, %v11304, %v11305
      %v11307 = vrot.slane %v11201, 5
      %v11308 = vrot.slane %v11307, 4
      %v11309 = vrot.slane %v10777, 5
      %v11310 = vsel %vm2289, %v11308, %v11309
      %v11311 = vrot.slane %v11309, 4
      %v11312 = vrot.slane %v10801, 5
      %v11313 = vsel %vm2289, %v11311, %v11312
      %v11314 = vrot.slane %v11202, 5
      %v11315 = vrot.slane %v11314, 4
      %v11316 = vrot.slane %v10779, 5
      %v11317 = vsel %vm2289, %v11315, %v11316
      %v11318 = vrot.slane %v11316, 4
      %v11319 = vrot.slane %v10802, 5
      %v11320 = vsel %vm2289, %v11318, %v11319
      %v11321 = vrot.slane %v11203, 5
      %v11322 = vrot.slane %v11321, 4
      %v11323 = vrot.slane %v10781, 5
      %v11324 = vsel %vm2289, %v11322, %v11323
      %v11325 = vrot.slane %v11323, 4
      %v11326 = vrot.slane %v10803, 5
      %v11327 = vsel %vm2289, %v11325, %v11326
      %v11328 = vrot.slane %v11204, 5
      %v11329 = vrot.slane %v11328, 4
      %v11330 = vrot.slane %v10783, 5
      %v11331 = vsel %vm2289, %v11329, %v11330
      %v11332 = vrot.slane %v11330, 4
      %v11333 = vrot.slane %v10804, 5
      %v11334 = vsel %vm2289, %v11332, %v11333
      %v11335 = vrot.slane %v11205, 5
      %v11336 = vrot.slane %v11335, 4
      %v11337 = vrot.slane %v10785, 5
      %v11338 = vsel %vm2289, %v11336, %v11337
      %v11339 = vrot.slane %v11337, 4
      %v11340 = vrot.slane %v10805, 5
      %v11341 = vsel %vm2289, %v11339, %v11340
      %v11342 = vrot.slane %v11206, 5
      %v11343 = vrot.slane %v11342, 4
      %v11344 = vrot.slane %v10787, 5
      %v11345 = vsel %vm2289, %v11343, %v11344
      %v11346 = vrot.slane %v11344, 4
      %v11347 = vrot.slane %v10806, 5
      %v11348 = vsel %vm2289, %v11346, %v11347
      %v11349 = vrot.slane %v11207, 5
      %v11350 = vrot.slane %v11349, 4
      %v11351 = vrot.slane %v10789, 5
      %v11352 = vsel %vm2289, %v11350, %v11351
      %v11353 = vrot.slane %v11351, 4
      %v11354 = vrot.slane %v10807, 5
      %v11355 = vsel %vm2289, %v11353, %v11354
      %v11356 = vrot.slane %v11208, 5
      %v11357 = vrot.slane %v11356, 4
      %v11358 = vrot.slane %v10791, 5
      %v11359 = vsel %vm2289, %v11357, %v11358
      %v11360 = vrot.slane %v11358, 4
      %v11361 = vrot.slane %v10808, 5
      %v11362 = vsel %vm2289, %v11360, %v11361
      %v11363 = vrot.slane %v11209, 5
      %v11364 = vrot.slane %v11363, 4
      %v11365 = vrot.slane %v10793, 5
      %v11366 = vsel %vm2289, %v11364, %v11365
      %v11367 = vrot.slane %v11365, 4
      %v11368 = vrot.slane %v10809, 5
      %v11369 = vsel %vm2289, %v11367, %v11368
      %v11370 = vld [vmem:[%s3013] sm:$0xf]
      %v11371 = vld [vmem:[%s3013 + $0x4] sm:$0xf]
      %v11372 = vld [vmem:[%s3013 + $0xc] sm:$0xf]
      %v11373 = vld [vmem:[%s3013 + $0x10] sm:$0xf]
      %v11374 = vld [vmem:[%s3013 + $0x18] sm:$0xf]
      %v11375 = vld [vmem:[%s3013 + $0x1c] sm:$0xf]
      %v11376 = vld [vmem:[%s3013 + $0x24] sm:$0xf]
      %v11377 = vld [vmem:[%s3013 + $0x28] sm:$0xf]
      %v11378 = vld [vmem:[%s3013 + $0x30] sm:$0xf]
      %v11379 = vld [vmem:[%s3013 + $0x34] sm:$0xf]
      %v11380 = vld [vmem:[%s3013 + $0x3c] sm:$0xf]
      %v11381 = vld [vmem:[%s3013 + $0x40] sm:$0xf]
      %v11382 = vld [vmem:[%s3013 + $0x48] sm:$0xf]
      %v11383 = vld [vmem:[%s3013 + $0x4c] sm:$0xf]
      %v11384 = vld [vmem:[%s3013 + $0x54] sm:$0xf]
      %v11385 = vld [vmem:[%s3013 + $0x58] sm:$0xf]
      %v11386 = vld [vmem:[%s3013 + $0x60] sm:$0xf]
      %v11387 = vld [vmem:[%s3013 + $0x64] sm:$0xf]
      %v11388 = vld [vmem:[%s3013 + $0x6c] sm:$0xf]
      %v11389 = vld [vmem:[%s3013 + $0x70] sm:$0xf]
      %v11390 = vld [vmem:[%s3013 + $0x78] sm:$0xf]
      %v11391 = vld [vmem:[%s3013 + $0x7c] sm:$0xf]
      %v11392 = vld [vmem:[%s3013 + $0x84] sm:$0xf]
      %v11393 = vld [vmem:[%s3013 + $0x88] sm:$0xf]
      %v11394 = vld [vmem:[%s3013 + $0x90] sm:$0xf]
      %v11395 = vld [vmem:[%s3013 + $0x94] sm:$0xf]
      %v11396 = vld [vmem:[%s3013 + $0x9c] sm:$0xf]
      %v11397 = vld [vmem:[%s3013 + $0xa0] sm:$0xf]
      %v11398 = vld [vmem:[%s3013 + $0xa8] sm:$0xf]
      %v11399 = vld [vmem:[%s3013 + $0xac] sm:$0xf]
      %v11400 = vld [vmem:[%s3013 + $0xb4] sm:$0xf]
      %v11401 = vld [vmem:[%s3013 + $0xb8] sm:$0xf]
      %v11402 = vld [vmem:[%s3013 + $0x8] sm:$0x1]
      %v11403 = vld [vmem:[%s3013 + $0x14] sm:$0x1]
      %v11404 = vld [vmem:[%s3013 + $0x20] sm:$0x1]
      %v11405 = vld [vmem:[%s3013 + $0x2c] sm:$0x1]
      %v11406 = vld [vmem:[%s3013 + $0x38] sm:$0x1]
      %v11407 = vld [vmem:[%s3013 + $0x44] sm:$0x1]
      %v11408 = vld [vmem:[%s3013 + $0x50] sm:$0x1]
      %v11409 = vld [vmem:[%s3013 + $0x5c] sm:$0x1]
      %v11410 = vld [vmem:[%s3013 + $0x68] sm:$0x1]
      %v11411 = vld [vmem:[%s3013 + $0x74] sm:$0x1]
      %v11412 = vld [vmem:[%s3013 + $0x80] sm:$0x1]
      %v11413 = vld [vmem:[%s3013 + $0x8c] sm:$0x1]
      %v11414 = vld [vmem:[%s3013 + $0x98] sm:$0x1]
      %v11415 = vld [vmem:[%s3013 + $0xa4] sm:$0x1]
      %v11416 = vld [vmem:[%s3013 + $0xb0] sm:$0x1]
      %v11417 = vld [vmem:[%s3013 + $0xbc] sm:$0x1]
      %v11419 = vshrl.u32 %v11370, 16
      %v11421 = vrot.slane %v11419, 4
      %v11422 = vshll.u32 %v11370, 16
      %v11424 = vrot.slane %v11422, 5
      %v11425 = vor.u32 %v11421, %v11424
      %v11426 = vrot.slane %v11425, 4
      %v11428 = vshll.u32 %v11371, 16
      %v11430 = vrot.slane %v11428, 5
      %v11431 = vsel %vm1838, %v11426, %v11430
      %v11432 = vshrl.u32 %v11371, 16
      %v11434 = vrot.slane %v11432, 4
      %v11435 = vor.u32 %v11434, %v11430
      %v11436 = vrot.slane %v11435, 4
      %v11438 = vshll.u32 %v11402, 16
      %v11440 = vrot.slane %v11438, 5
      %v11441 = vsel %vm1838, %v11436, %v11440
      %v11443 = vshrl.u32 %v11372, 16
      %v11445 = vrot.slane %v11443, 4
      %v11446 = vshll.u32 %v11372, 16
      %v11448 = vrot.slane %v11446, 5
      %v11449 = vor.u32 %v11445, %v11448
      %v11450 = vrot.slane %v11449, 4
      %v11452 = vshll.u32 %v11373, 16
      %v11454 = vrot.slane %v11452, 5
      %v11455 = vsel %vm1838, %v11450, %v11454
      %v11456 = vshrl.u32 %v11373, 16
      %v11458 = vrot.slane %v11456, 4
      %v11459 = vor.u32 %v11458, %v11454
      %v11460 = vrot.slane %v11459, 4
      %v11462 = vshll.u32 %v11403, 16
      %v11464 = vrot.slane %v11462, 5
      %v11465 = vsel %vm1838, %v11460, %v11464
      %v11467 = vshrl.u32 %v11374, 16
      %v11469 = vrot.slane %v11467, 4
      %v11470 = vshll.u32 %v11374, 16
      %v11472 = vrot.slane %v11470, 5
      %v11473 = vor.u32 %v11469, %v11472
      %v11474 = vrot.slane %v11473, 4
      %v11476 = vshll.u32 %v11375, 16
      %v11478 = vrot.slane %v11476, 5
      %v11479 = vsel %vm1838, %v11474, %v11478
      %v11480 = vshrl.u32 %v11375, 16
      %v11482 = vrot.slane %v11480, 4
      %v11483 = vor.u32 %v11482, %v11478
      %v11484 = vrot.slane %v11483, 4
      %v11486 = vshll.u32 %v11404, 16
      %v11488 = vrot.slane %v11486, 5
      %v11489 = vsel %vm1838, %v11484, %v11488
      %v11491 = vshrl.u32 %v11376, 16
      %v11493 = vrot.slane %v11491, 4
      %v11494 = vshll.u32 %v11376, 16
      %v11496 = vrot.slane %v11494, 5
      %v11497 = vor.u32 %v11493, %v11496
      %v11498 = vrot.slane %v11497, 4
      %v11500 = vshll.u32 %v11377, 16
      %v11502 = vrot.slane %v11500, 5
      %v11503 = vsel %vm1838, %v11498, %v11502
      %v11504 = vshrl.u32 %v11377, 16
      %v11506 = vrot.slane %v11504, 4
      %v11507 = vor.u32 %v11506, %v11502
      %v11508 = vrot.slane %v11507, 4
      %v11510 = vshll.u32 %v11405, 16
      %v11512 = vrot.slane %v11510, 5
      %v11513 = vsel %vm1838, %v11508, %v11512
      %v11515 = vshrl.u32 %v11378, 16
      %v11517 = vrot.slane %v11515, 4
      %v11518 = vshll.u32 %v11378, 16
      %v11520 = vrot.slane %v11518, 5
      %v11521 = vor.u32 %v11517, %v11520
      %v11522 = vrot.slane %v11521, 4
      %v11524 = vshll.u32 %v11379, 16
      %v11526 = vrot.slane %v11524, 5
      %v11527 = vsel %vm1838, %v11522, %v11526
      %v11528 = vshrl.u32 %v11379, 16
      %v11530 = vrot.slane %v11528, 4
      %v11531 = vor.u32 %v11530, %v11526
      %v11532 = vrot.slane %v11531, 4
      %v11534 = vshll.u32 %v11406, 16
      %v11536 = vrot.slane %v11534, 5
      %v11537 = vsel %vm1838, %v11532, %v11536
      %v11539 = vshrl.u32 %v11380, 16
      %v11541 = vrot.slane %v11539, 4
      %v11542 = vshll.u32 %v11380, 16
      %v11544 = vrot.slane %v11542, 5
      %v11545 = vor.u32 %v11541, %v11544
      %v11546 = vrot.slane %v11545, 4
      %v11548 = vshll.u32 %v11381, 16
      %v11550 = vrot.slane %v11548, 5
      %v11551 = vsel %vm1838, %v11546, %v11550
      %v11552 = vshrl.u32 %v11381, 16
      %v11554 = vrot.slane %v11552, 4
      %v11555 = vor.u32 %v11554, %v11550
      %v11556 = vrot.slane %v11555, 4
      %v11558 = vshll.u32 %v11407, 16
      %v11560 = vrot.slane %v11558, 5
      %v11561 = vsel %vm1838, %v11556, %v11560
      %v11563 = vshrl.u32 %v11382, 16
      %v11565 = vrot.slane %v11563, 4
      %v11566 = vshll.u32 %v11382, 16
      %v11568 = vrot.slane %v11566, 5
      %v11569 = vor.u32 %v11565, %v11568
      %v11570 = vrot.slane %v11569, 4
      %v11572 = vshll.u32 %v11383, 16
      %v11574 = vrot.slane %v11572, 5
      %v11575 = vsel %vm1838, %v11570, %v11574
      %v11576 = vshrl.u32 %v11383, 16
      %v11578 = vrot.slane %v11576, 4
      %v11579 = vor.u32 %v11578, %v11574
      %v11580 = vrot.slane %v11579, 4
      %v11582 = vshll.u32 %v11408, 16
      %v11584 = vrot.slane %v11582, 5
      %v11585 = vsel %vm1838, %v11580, %v11584
      %v11587 = vshrl.u32 %v11384, 16
      %v11589 = vrot.slane %v11587, 4
      %v11590 = vshll.u32 %v11384, 16
      %v11592 = vrot.slane %v11590, 5
      %v11593 = vor.u32 %v11589, %v11592
      %v11594 = vrot.slane %v11593, 4
      %v11596 = vshll.u32 %v11385, 16
      %v11598 = vrot.slane %v11596, 5
      %v11599 = vsel %vm1838, %v11594, %v11598
      %v11600 = vshrl.u32 %v11385, 16
      %v11602 = vrot.slane %v11600, 4
      %v11603 = vor.u32 %v11602, %v11598
      %v11604 = vrot.slane %v11603, 4
      %v11606 = vshll.u32 %v11409, 16
      %v11608 = vrot.slane %v11606, 5
      %v11609 = vsel %vm1838, %v11604, %v11608
      %v11611 = vshrl.u32 %v11386, 16
      %v11613 = vrot.slane %v11611, 4
      %v11614 = vshll.u32 %v11386, 16
      %v11616 = vrot.slane %v11614, 5
      %v11617 = vor.u32 %v11613, %v11616
      %v11618 = vrot.slane %v11617, 4
      %v11620 = vshll.u32 %v11387, 16
      %v11622 = vrot.slane %v11620, 5
      %v11623 = vsel %vm1838, %v11618, %v11622
      %v11624 = vshrl.u32 %v11387, 16
      %v11626 = vrot.slane %v11624, 4
      %v11627 = vor.u32 %v11626, %v11622
      %v11628 = vrot.slane %v11627, 4
      %v11630 = vshll.u32 %v11410, 16
      %v11632 = vrot.slane %v11630, 5
      %v11633 = vsel %vm1838, %v11628, %v11632
      %v11635 = vshrl.u32 %v11388, 16
      %v11637 = vrot.slane %v11635, 4
      %v11638 = vshll.u32 %v11388, 16
      %v11640 = vrot.slane %v11638, 5
      %v11641 = vor.u32 %v11637, %v11640
      %v11642 = vrot.slane %v11641, 4
      %v11644 = vshll.u32 %v11389, 16
      %v11646 = vrot.slane %v11644, 5
      %v11647 = vsel %vm1838, %v11642, %v11646
      %v11648 = vshrl.u32 %v11389, 16
      %v11650 = vrot.slane %v11648, 4
      %v11651 = vor.u32 %v11650, %v11646
      %v11652 = vrot.slane %v11651, 4
      %v11654 = vshll.u32 %v11411, 16
      %v11656 = vrot.slane %v11654, 5
      %v11657 = vsel %vm1838, %v11652, %v11656
      %v11659 = vshrl.u32 %v11390, 16
      %v11661 = vrot.slane %v11659, 4
      %v11662 = vshll.u32 %v11390, 16
      %v11664 = vrot.slane %v11662, 5
      %v11665 = vor.u32 %v11661, %v11664
      %v11666 = vrot.slane %v11665, 4
      %v11668 = vshll.u32 %v11391, 16
      %v11670 = vrot.slane %v11668, 5
      %v11671 = vsel %vm1838, %v11666, %v11670
      %v11672 = vshrl.u32 %v11391, 16
      %v11674 = vrot.slane %v11672, 4
      %v11675 = vor.u32 %v11674, %v11670
      %v11676 = vrot.slane %v11675, 4
      %v11678 = vshll.u32 %v11412, 16
      %v11680 = vrot.slane %v11678, 5
      %v11681 = vsel %vm1838, %v11676, %v11680
      %v11683 = vshrl.u32 %v11392, 16
      %v11685 = vrot.slane %v11683, 4
      %v11686 = vshll.u32 %v11392, 16
      %v11688 = vrot.slane %v11686, 5
      %v11689 = vor.u32 %v11685, %v11688
      %v11690 = vrot.slane %v11689, 4
      %v11692 = vshll.u32 %v11393, 16
      %v11694 = vrot.slane %v11692, 5
      %v11695 = vsel %vm1838, %v11690, %v11694
      %v11696 = vshrl.u32 %v11393, 16
      %v11698 = vrot.slane %v11696, 4
      %v11699 = vor.u32 %v11698, %v11694
      %v11700 = vrot.slane %v11699, 4
      %v11702 = vshll.u32 %v11413, 16
      %v11704 = vrot.slane %v11702, 5
      %v11705 = vsel %vm1838, %v11700, %v11704
      %v11707 = vshrl.u32 %v11394, 16
      %v11709 = vrot.slane %v11707, 4
      %v11710 = vshll.u32 %v11394, 16
      %v11712 = vrot.slane %v11710, 5
      %v11713 = vor.u32 %v11709, %v11712
      %v11714 = vrot.slane %v11713, 4
      %v11716 = vshll.u32 %v11395, 16
      %v11718 = vrot.slane %v11716, 5
      %v11719 = vsel %vm1838, %v11714, %v11718
      %v11720 = vshrl.u32 %v11395, 16
      %v11722 = vrot.slane %v11720, 4
      %v11723 = vor.u32 %v11722, %v11718
      %v11724 = vrot.slane %v11723, 4
      %v11726 = vshll.u32 %v11414, 16
      %v11728 = vrot.slane %v11726, 5
      %v11729 = vsel %vm1838, %v11724, %v11728
      %v11731 = vshrl.u32 %v11396, 16
      %v11733 = vrot.slane %v11731, 4
      %v11734 = vshll.u32 %v11396, 16
      %v11736 = vrot.slane %v11734, 5
      %v11737 = vor.u32 %v11733, %v11736
      %v11738 = vrot.slane %v11737, 4
      %v11740 = vshll.u32 %v11397, 16
      %v11742 = vrot.slane %v11740, 5
      %v11743 = vsel %vm1838, %v11738, %v11742
      %v11744 = vshrl.u32 %v11397, 16
      %v11746 = vrot.slane %v11744, 4
      %v11747 = vor.u32 %v11746, %v11742
      %v11748 = vrot.slane %v11747, 4
      %v11750 = vshll.u32 %v11415, 16
      %v11752 = vrot.slane %v11750, 5
      %v11753 = vsel %vm1838, %v11748, %v11752
      %v11755 = vshrl.u32 %v11398, 16
      %v11757 = vrot.slane %v11755, 4
      %v11758 = vshll.u32 %v11398, 16
      %v11760 = vrot.slane %v11758, 5
      %v11761 = vor.u32 %v11757, %v11760
      %v11762 = vrot.slane %v11761, 4
      %v11764 = vshll.u32 %v11399, 16
      %v11766 = vrot.slane %v11764, 5
      %v11767 = vsel %vm1838, %v11762, %v11766
      %v11768 = vshrl.u32 %v11399, 16
      %v11770 = vrot.slane %v11768, 4
      %v11771 = vor.u32 %v11770, %v11766
      %v11772 = vrot.slane %v11771, 4
      %v11774 = vshll.u32 %v11416, 16
      %v11776 = vrot.slane %v11774, 5
      %v11777 = vsel %vm1838, %v11772, %v11776
      %v11779 = vshrl.u32 %v11400, 16
      %v11781 = vrot.slane %v11779, 4
      %v11782 = vshll.u32 %v11400, 16
      %v11784 = vrot.slane %v11782, 5
      %v11785 = vor.u32 %v11781, %v11784
      %v11786 = vrot.slane %v11785, 4
      %v11788 = vshll.u32 %v11401, 16
      %v11790 = vrot.slane %v11788, 5
      %v11791 = vsel %vm1838, %v11786, %v11790
      %v11792 = vshrl.u32 %v11401, 16
      %v11794 = vrot.slane %v11792, 4
      %v11795 = vor.u32 %v11794, %v11790
      %v11796 = vrot.slane %v11795, 4
      %v11798 = vshll.u32 %v11417, 16
      %v11800 = vrot.slane %v11798, 5
      %v11801 = vsel %vm1838, %v11796, %v11800
      %v11802 = vld [vmem:[%s3013] sm:$0xe]
      %v11803 = vld [vmem:[%s3013 + $0xc] sm:$0xe]
      %v11804 = vld [vmem:[%s3013 + $0x18] sm:$0xe]
      %v11805 = vld [vmem:[%s3013 + $0x24] sm:$0xe]
      %v11806 = vld [vmem:[%s3013 + $0x30] sm:$0xe]
      %v11807 = vld [vmem:[%s3013 + $0x3c] sm:$0xe]
      %v11808 = vld [vmem:[%s3013 + $0x48] sm:$0xe]
      %v11809 = vld [vmem:[%s3013 + $0x54] sm:$0xe]
      %v11810 = vld [vmem:[%s3013 + $0x60] sm:$0xe]
      %v11811 = vld [vmem:[%s3013 + $0x6c] sm:$0xe]
      %v11812 = vld [vmem:[%s3013 + $0x78] sm:$0xe]
      %v11813 = vld [vmem:[%s3013 + $0x84] sm:$0xe]
      %v11814 = vld [vmem:[%s3013 + $0x90] sm:$0xe]
      %v11815 = vld [vmem:[%s3013 + $0x9c] sm:$0xe]
      %v11816 = vld [vmem:[%s3013 + $0xa8] sm:$0xe]
      %v11817 = vld [vmem:[%s3013 + $0xb4] sm:$0xe]
      %v11866 = vrot.slane %v11802, 5
      %v11867 = vrot.slane %v11866, 4
      %v11868 = vrot.slane %v11371, 5
      %v11869 = vsel %vm2289, %v11867, %v11868
      %v11870 = vrot.slane %v11868, 4
      %v11871 = vrot.slane %v11402, 5
      %v11872 = vsel %vm2289, %v11870, %v11871
      %v11873 = vrot.slane %v11803, 5
      %v11874 = vrot.slane %v11873, 4
      %v11875 = vrot.slane %v11373, 5
      %v11876 = vsel %vm2289, %v11874, %v11875
      %v11877 = vrot.slane %v11875, 4
      %v11878 = vrot.slane %v11403, 5
      %v11879 = vsel %vm2289, %v11877, %v11878
      %v11880 = vrot.slane %v11804, 5
      %v11881 = vrot.slane %v11880, 4
      %v11882 = vrot.slane %v11375, 5
      %v11883 = vsel %vm2289, %v11881, %v11882
      %v11884 = vrot.slane %v11882, 4
      %v11885 = vrot.slane %v11404, 5
      %v11886 = vsel %vm2289, %v11884, %v11885
      %v11887 = vrot.slane %v11805, 5
      %v11888 = vrot.slane %v11887, 4
      %v11889 = vrot.slane %v11377, 5
      %v11890 = vsel %vm2289, %v11888, %v11889
      %v11891 = vrot.slane %v11889, 4
      %v11892 = vrot.slane %v11405, 5
      %v11893 = vsel %vm2289, %v11891, %v11892
      %v11894 = vrot.slane %v11806, 5
      %v11895 = vrot.slane %v11894, 4
      %v11896 = vrot.slane %v11379, 5
      %v11897 = vsel %vm2289, %v11895, %v11896
      %v11898 = vrot.slane %v11896, 4
      %v11899 = vrot.slane %v11406, 5
      %v11900 = vsel %vm2289, %v11898, %v11899
      %v11901 = vrot.slane %v11807, 5
      %v11902 = vrot.slane %v11901, 4
      %v11903 = vrot.slane %v11381, 5
      %v11904 = vsel %vm2289, %v11902, %v11903
      %v11905 = vrot.slane %v11903, 4
      %v11906 = vrot.slane %v11407, 5
      %v11907 = vsel %vm2289, %v11905, %v11906
      %v11908 = vrot.slane %v11808, 5
      %v11909 = vrot.slane %v11908, 4
      %v11910 = vrot.slane %v11383, 5
      %v11911 = vsel %vm2289, %v11909, %v11910
      %v11912 = vrot.slane %v11910, 4
      %v11913 = vrot.slane %v11408, 5
      %v11914 = vsel %vm2289, %v11912, %v11913
      %v11915 = vrot.slane %v11809, 5
      %v11916 = vrot.slane %v11915, 4
      %v11917 = vrot.slane %v11385, 5
      %v11918 = vsel %vm2289, %v11916, %v11917
      %v11919 = vrot.slane %v11917, 4
      %v11920 = vrot.slane %v11409, 5
      %v11921 = vsel %vm2289, %v11919, %v11920
      %v11922 = vrot.slane %v11810, 5
      %v11923 = vrot.slane %v11922, 4
      %v11924 = vrot.slane %v11387, 5
      %v11925 = vsel %vm2289, %v11923, %v11924
      %v11926 = vrot.slane %v11924, 4
      %v11927 = vrot.slane %v11410, 5
      %v11928 = vsel %vm2289, %v11926, %v11927
      %v11929 = vrot.slane %v11811, 5
      %v11930 = vrot.slane %v11929, 4
      %v11931 = vrot.slane %v11389, 5
      %v11932 = vsel %vm2289, %v11930, %v11931
      %v11933 = vrot.slane %v11931, 4
      %v11934 = vrot.slane %v11411, 5
      %v11935 = vsel %vm2289, %v11933, %v11934
      %v11936 = vrot.slane %v11812, 5
      %v11937 = vrot.slane %v11936, 4
      %v11938 = vrot.slane %v11391, 5
      %v11939 = vsel %vm2289, %v11937, %v11938
      %v11940 = vrot.slane %v11938, 4
      %v11941 = vrot.slane %v11412, 5
      %v11942 = vsel %vm2289, %v11940, %v11941
      %v11943 = vrot.slane %v11813, 5
      %v11944 = vrot.slane %v11943, 4
      %v11945 = vrot.slane %v11393, 5
      %v11946 = vsel %vm2289, %v11944, %v11945
      %v11947 = vrot.slane %v11945, 4
      %v11948 = vrot.slane %v11413, 5
      %v11949 = vsel %vm2289, %v11947, %v11948
      %v11950 = vrot.slane %v11814, 5
      %v11951 = vrot.slane %v11950, 4
      %v11952 = vrot.slane %v11395, 5
      %v11953 = vsel %vm2289, %v11951, %v11952
      %v11954 = vrot.slane %v11952, 4
      %v11955 = vrot.slane %v11414, 5
      %v11956 = vsel %vm2289, %v11954, %v11955
      %v11957 = vrot.slane %v11815, 5
      %v11958 = vrot.slane %v11957, 4
      %v11959 = vrot.slane %v11397, 5
      %v11960 = vsel %vm2289, %v11958, %v11959
      %v11961 = vrot.slane %v11959, 4
      %v11962 = vrot.slane %v11415, 5
      %v11963 = vsel %vm2289, %v11961, %v11962
      %v11964 = vrot.slane %v11816, 5
      %v11965 = vrot.slane %v11964, 4
      %v11966 = vrot.slane %v11399, 5
      %v11967 = vsel %vm2289, %v11965, %v11966
      %v11968 = vrot.slane %v11966, 4
      %v11969 = vrot.slane %v11416, 5
      %v11970 = vsel %vm2289, %v11968, %v11969
      %v11971 = vrot.slane %v11817, 5
      %v11972 = vrot.slane %v11971, 4
      %v11973 = vrot.slane %v11401, 5
      %v11974 = vsel %vm2289, %v11972, %v11973
      %v11975 = vrot.slane %v11973, 4
      %v11976 = vrot.slane %v11417, 5
      %v11977 = vsel %vm2289, %v11975, %v11976
      %v11994 = vunpack.c.l.b16 %v10154
      %v11995 = vunpack.c.l.b16 %v10155
      %v11996 = vunpack.c.l.b16 %v10156
      %v11997 = vunpack.c.l.b16 %v10157
      %v11998 = vunpack.c.l.b16 %v10158
      %v11999 = vunpack.c.l.b16 %v10159
      %v12000 = vunpack.c.l.b16 %v10160
      %v12001 = vunpack.c.l.b16 %v10161
      %v12002 = vunpack.c.l.b16 %v10162
      %v12003 = vunpack.c.l.b16 %v10163
      %v12004 = vunpack.c.l.b16 %v10164
      %v12005 = vunpack.c.l.b16 %v10165
      %v12006 = vunpack.c.l.b16 %v10166
      %v12007 = vunpack.c.l.b16 %v10167
      %v12008 = vunpack.c.l.b16 %v10168
      %v12009 = vunpack.c.l.b16 %v10169
      %v12010 = vunpack.c.l.b16 %v10170
      %v12011 = vunpack.c.l.b16 %v10171
      %v12012 = vunpack.c.l.b16 %v10172
      %v12013 = vunpack.c.l.b16 %v10173
      %v12014 = vunpack.c.l.b16 %v10174
      %v12015 = vunpack.c.l.b16 %v10175
      %v12016 = vunpack.c.l.b16 %v10176
      %v12017 = vunpack.c.l.b16 %v10177
      %v12018 = vunpack.c.l.b16 %v10178
      %v12019 = vunpack.c.l.b16 %v10179
      %v12020 = vunpack.c.l.b16 %v10180
      %v12021 = vunpack.c.l.b16 %v10181
      %v12022 = vunpack.c.l.b16 %v10182
      %v12023 = vunpack.c.l.b16 %v10183
      %v12024 = vunpack.c.l.b16 %v10184
      %v12025 = vunpack.c.l.b16 %v10185
      %v12026 = vpack.c.b16 %v11995, %v11994
      %v12027 = vpack.c.b16 %v11997, %v11996
      %v12028 = vpack.c.b16 %v11999, %v11998
      %v12029 = vpack.c.b16 %v12001, %v12000
      %v12030 = vpack.c.b16 %v12003, %v12002
      %v12031 = vpack.c.b16 %v12005, %v12004
      %v12032 = vpack.c.b16 %v12007, %v12006
      %v12033 = vpack.c.b16 %v12009, %v12008
      %v12034 = vpack.c.b16 %v12011, %v12010
      %v12035 = vpack.c.b16 %v12013, %v12012
      %v12036 = vpack.c.b16 %v12015, %v12014
      %v12037 = vpack.c.b16 %v12017, %v12016
      %v12038 = vpack.c.b16 %v12019, %v12018
      %v12039 = vpack.c.b16 %v12021, %v12020
      %v12040 = vpack.c.b16 %v12023, %v12022
      %v12041 = vpack.c.b16 %v12025, %v12024
      %v12042 = vunpack.c.l.b16 %v10215
      %v12043 = vunpack.c.l.b16 %v10225
      %v12044 = vunpack.c.l.b16 %v10239
      %v12045 = vunpack.c.l.b16 %v10249
      %v12046 = vunpack.c.l.b16 %v10263
      %v12047 = vunpack.c.l.b16 %v10273
      %v12048 = vunpack.c.l.b16 %v10287
      %v12049 = vunpack.c.l.b16 %v10297
      %v12050 = vunpack.c.l.b16 %v10311
      %v12051 = vunpack.c.l.b16 %v10321
      %v12052 = vunpack.c.l.b16 %v10335
      %v12053 = vunpack.c.l.b16 %v10345
      %v12054 = vunpack.c.l.b16 %v10359
      %v12055 = vunpack.c.l.b16 %v10369
      %v12056 = vunpack.c.l.b16 %v10383
      %v12057 = vunpack.c.l.b16 %v10393
      %v12058 = vunpack.c.l.b16 %v10407
      %v12059 = vunpack.c.l.b16 %v10417
      %v12060 = vunpack.c.l.b16 %v10431
      %v12061 = vunpack.c.l.b16 %v10441
      %v12062 = vunpack.c.l.b16 %v10455
      %v12063 = vunpack.c.l.b16 %v10465
      %v12064 = vunpack.c.l.b16 %v10479
      %v12065 = vunpack.c.l.b16 %v10489
      %v12066 = vunpack.c.l.b16 %v10503
      %v12067 = vunpack.c.l.b16 %v10513
      %v12068 = vunpack.c.l.b16 %v10527
      %v12069 = vunpack.c.l.b16 %v10537
      %v12070 = vunpack.c.l.b16 %v10551
      %v12071 = vunpack.c.l.b16 %v10561
      %v12072 = vunpack.c.l.b16 %v10575
      %v12073 = vunpack.c.l.b16 %v10585
      %v12074 = vpack.c.b16 %v12043, %v12042
      %v12075 = vpack.c.b16 %v12045, %v12044
      %v12076 = vpack.c.b16 %v12047, %v12046
      %v12077 = vpack.c.b16 %v12049, %v12048
      %v12078 = vpack.c.b16 %v12051, %v12050
      %v12079 = vpack.c.b16 %v12053, %v12052
      %v12080 = vpack.c.b16 %v12055, %v12054
      %v12081 = vpack.c.b16 %v12057, %v12056
      %v12082 = vpack.c.b16 %v12059, %v12058
      %v12083 = vpack.c.b16 %v12061, %v12060
      %v12084 = vpack.c.b16 %v12063, %v12062
      %v12085 = vpack.c.b16 %v12065, %v12064
      %v12086 = vpack.c.b16 %v12067, %v12066
      %v12087 = vpack.c.b16 %v12069, %v12068
      %v12088 = vpack.c.b16 %v12071, %v12070
      %v12089 = vpack.c.b16 %v12073, %v12072
      %12090 = vrot.lane.b32.xlu0 %v12074, 16
      %v12091 = vpop.permute.xlu0 %12090
      %12092 = vrot.lane.b32.xlu0 %v12075, 16
      %v12093 = vpop.permute.xlu0 %12092
      %12094 = vrot.lane.b32.xlu0 %v12076, 16
      %v12095 = vpop.permute.xlu0 %12094
      %12096 = vrot.lane.b32.xlu0 %v12077, 16
      %v12097 = vpop.permute.xlu0 %12096
      %12098 = vrot.lane.b32.xlu0 %v12078, 16
      %v12099 = vpop.permute.xlu0 %12098
      %12100 = vrot.lane.b32.xlu0 %v12079, 16
      %v12101 = vpop.permute.xlu0 %12100
      %12102 = vrot.lane.b32.xlu0 %v12080, 16
      %v12103 = vpop.permute.xlu0 %12102
      %12104 = vrot.lane.b32.xlu0 %v12081, 16
      %v12105 = vpop.permute.xlu0 %12104
      %12106 = vrot.lane.b32.xlu0 %v12082, 16
      %v12107 = vpop.permute.xlu0 %12106
      %12108 = vrot.lane.b32.xlu0 %v12083, 16
      %v12109 = vpop.permute.xlu0 %12108
      %12110 = vrot.lane.b32.xlu0 %v12084, 16
      %v12111 = vpop.permute.xlu0 %12110
      %12112 = vrot.lane.b32.xlu0 %v12085, 16
      %v12113 = vpop.permute.xlu0 %12112
      %12114 = vrot.lane.b32.xlu0 %v12086, 16
      %v12115 = vpop.permute.xlu0 %12114
      %12116 = vrot.lane.b32.xlu0 %v12087, 16
      %v12117 = vpop.permute.xlu0 %12116
      %12118 = vrot.lane.b32.xlu0 %v12088, 16
      %v12119 = vpop.permute.xlu0 %12118
      %12120 = vrot.lane.b32.xlu0 %v12089, 16
      %v12121 = vpop.permute.xlu0 %12120
      %v12122 = vunpack.c.l.b16 %v10653
      %v12123 = vunpack.c.l.b16 %v10656
      %v12124 = vunpack.c.l.b16 %v10660
      %v12125 = vunpack.c.l.b16 %v10663
      %v12126 = vunpack.c.l.b16 %v10667
      %v12127 = vunpack.c.l.b16 %v10670
      %v12128 = vunpack.c.l.b16 %v10674
      %v12129 = vunpack.c.l.b16 %v10677
      %v12130 = vunpack.c.l.b16 %v10681
      %v12131 = vunpack.c.l.b16 %v10684
      %v12132 = vunpack.c.l.b16 %v10688
      %v12133 = vunpack.c.l.b16 %v10691
      %v12134 = vunpack.c.l.b16 %v10695
      %v12135 = vunpack.c.l.b16 %v10698
      %v12136 = vunpack.c.l.b16 %v10702
      %v12137 = vunpack.c.l.b16 %v10705
      %v12138 = vunpack.c.l.b16 %v10709
      %v12139 = vunpack.c.l.b16 %v10712
      %v12140 = vunpack.c.l.b16 %v10716
      %v12141 = vunpack.c.l.b16 %v10719
      %v12142 = vunpack.c.l.b16 %v10723
      %v12143 = vunpack.c.l.b16 %v10726
      %v12144 = vunpack.c.l.b16 %v10730
      %v12145 = vunpack.c.l.b16 %v10733
      %v12146 = vunpack.c.l.b16 %v10737
      %v12147 = vunpack.c.l.b16 %v10740
      %v12148 = vunpack.c.l.b16 %v10744
      %v12149 = vunpack.c.l.b16 %v10747
      %v12150 = vunpack.c.l.b16 %v10751
      %v12151 = vunpack.c.l.b16 %v10754
      %v12152 = vunpack.c.l.b16 %v10758
      %v12153 = vunpack.c.l.b16 %v10761
      %v12154 = vpack.c.b16 %v12123, %v12122
      %v12155 = vpack.c.b16 %v12125, %v12124
      %v12156 = vpack.c.b16 %v12127, %v12126
      %v12157 = vpack.c.b16 %v12129, %v12128
      %v12158 = vpack.c.b16 %v12131, %v12130
      %v12159 = vpack.c.b16 %v12133, %v12132
      %v12160 = vpack.c.b16 %v12135, %v12134
      %v12161 = vpack.c.b16 %v12137, %v12136
      %v12162 = vpack.c.b16 %v12139, %v12138
      %v12163 = vpack.c.b16 %v12141, %v12140
      %v12164 = vpack.c.b16 %v12143, %v12142
      %v12165 = vpack.c.b16 %v12145, %v12144
      %v12166 = vpack.c.b16 %v12147, %v12146
      %v12167 = vpack.c.b16 %v12149, %v12148
      %v12168 = vpack.c.b16 %v12151, %v12150
      %v12169 = vpack.c.b16 %v12153, %v12152
      %12170 = vrot.lane.b32.xlu0 %v12154, 32
      %v12171 = vpop.permute.xlu0 %12170
      %12172 = vrot.lane.b32.xlu0 %v12155, 32
      %v12173 = vpop.permute.xlu0 %12172
      %12174 = vrot.lane.b32.xlu0 %v12156, 32
      %v12175 = vpop.permute.xlu0 %12174
      %12176 = vrot.lane.b32.xlu0 %v12157, 32
      %v12177 = vpop.permute.xlu0 %12176
      %12178 = vrot.lane.b32.xlu0 %v12158, 32
      %v12179 = vpop.permute.xlu0 %12178
      %12180 = vrot.lane.b32.xlu0 %v12159, 32
      %v12181 = vpop.permute.xlu0 %12180
      %12182 = vrot.lane.b32.xlu0 %v12160, 32
      %v12183 = vpop.permute.xlu0 %12182
      %12184 = vrot.lane.b32.xlu0 %v12161, 32
      %v12185 = vpop.permute.xlu0 %12184
      %12186 = vrot.lane.b32.xlu0 %v12162, 32
      %v12187 = vpop.permute.xlu0 %12186
      %12188 = vrot.lane.b32.xlu0 %v12163, 32
      %v12189 = vpop.permute.xlu0 %12188
      %12190 = vrot.lane.b32.xlu0 %v12164, 32
      %v12191 = vpop.permute.xlu0 %12190
      %12192 = vrot.lane.b32.xlu0 %v12165, 32
      %v12193 = vpop.permute.xlu0 %12192
      %12194 = vrot.lane.b32.xlu0 %v12166, 32
      %v12195 = vpop.permute.xlu0 %12194
      %12196 = vrot.lane.b32.xlu0 %v12167, 32
      %v12197 = vpop.permute.xlu0 %12196
      %12198 = vrot.lane.b32.xlu0 %v12168, 32
      %v12199 = vpop.permute.xlu0 %12198
      %12200 = vrot.lane.b32.xlu0 %v12169, 32
      %v12201 = vpop.permute.xlu0 %12200
      %v12218 = vunpack.c.l.b16 %v10762
      %v12219 = vunpack.c.l.b16 %v10763
      %v12220 = vunpack.c.l.b16 %v10764
      %v12221 = vunpack.c.l.b16 %v10765
      %v12222 = vunpack.c.l.b16 %v10766
      %v12223 = vunpack.c.l.b16 %v10767
      %v12224 = vunpack.c.l.b16 %v10768
      %v12225 = vunpack.c.l.b16 %v10769
      %v12226 = vunpack.c.l.b16 %v10770
      %v12227 = vunpack.c.l.b16 %v10771
      %v12228 = vunpack.c.l.b16 %v10772
      %v12229 = vunpack.c.l.b16 %v10773
      %v12230 = vunpack.c.l.b16 %v10774
      %v12231 = vunpack.c.l.b16 %v10775
      %v12232 = vunpack.c.l.b16 %v10776
      %v12233 = vunpack.c.l.b16 %v10777
      %v12234 = vunpack.c.l.b16 %v10778
      %v12235 = vunpack.c.l.b16 %v10779
      %v12236 = vunpack.c.l.b16 %v10780
      %v12237 = vunpack.c.l.b16 %v10781
      %v12238 = vunpack.c.l.b16 %v10782
      %v12239 = vunpack.c.l.b16 %v10783
      %v12240 = vunpack.c.l.b16 %v10784
      %v12241 = vunpack.c.l.b16 %v10785
      %v12242 = vunpack.c.l.b16 %v10786
      %v12243 = vunpack.c.l.b16 %v10787
      %v12244 = vunpack.c.l.b16 %v10788
      %v12245 = vunpack.c.l.b16 %v10789
      %v12246 = vunpack.c.l.b16 %v10790
      %v12247 = vunpack.c.l.b16 %v10791
      %v12248 = vunpack.c.l.b16 %v10792
      %v12249 = vunpack.c.l.b16 %v10793
      %v12250 = vpack.c.b16 %v12219, %v12218
      %v12251 = vpack.c.b16 %v12221, %v12220
      %v12252 = vpack.c.b16 %v12223, %v12222
      %v12253 = vpack.c.b16 %v12225, %v12224
      %v12254 = vpack.c.b16 %v12227, %v12226
      %v12255 = vpack.c.b16 %v12229, %v12228
      %v12256 = vpack.c.b16 %v12231, %v12230
      %v12257 = vpack.c.b16 %v12233, %v12232
      %v12258 = vpack.c.b16 %v12235, %v12234
      %v12259 = vpack.c.b16 %v12237, %v12236
      %v12260 = vpack.c.b16 %v12239, %v12238
      %v12261 = vpack.c.b16 %v12241, %v12240
      %v12262 = vpack.c.b16 %v12243, %v12242
      %v12263 = vpack.c.b16 %v12245, %v12244
      %v12264 = vpack.c.b16 %v12247, %v12246
      %v12265 = vpack.c.b16 %v12249, %v12248
      %12266 = vrot.lane.b32.xlu0 %v12250, 48
      %v12267 = vpop.permute.xlu0 %12266
      %12268 = vrot.lane.b32.xlu0 %v12251, 48
      %v12269 = vpop.permute.xlu0 %12268
      %12270 = vrot.lane.b32.xlu0 %v12252, 48
      %v12271 = vpop.permute.xlu0 %12270
      %12272 = vrot.lane.b32.xlu0 %v12253, 48
      %v12273 = vpop.permute.xlu0 %12272
      %12274 = vrot.lane.b32.xlu0 %v12254, 48
      %v12275 = vpop.permute.xlu0 %12274
      %12276 = vrot.lane.b32.xlu0 %v12255, 48
      %v12277 = vpop.permute.xlu0 %12276
      %12278 = vrot.lane.b32.xlu0 %v12256, 48
      %v12279 = vpop.permute.xlu0 %12278
      %12280 = vrot.lane.b32.xlu0 %v12257, 48
      %v12281 = vpop.permute.xlu0 %12280
      %12282 = vrot.lane.b32.xlu0 %v12258, 48
      %v12283 = vpop.permute.xlu0 %12282
      %12284 = vrot.lane.b32.xlu0 %v12259, 48
      %v12285 = vpop.permute.xlu0 %12284
      %12286 = vrot.lane.b32.xlu0 %v12260, 48
      %v12287 = vpop.permute.xlu0 %12286
      %12288 = vrot.lane.b32.xlu0 %v12261, 48
      %v12289 = vpop.permute.xlu0 %12288
      %12290 = vrot.lane.b32.xlu0 %v12262, 48
      %v12291 = vpop.permute.xlu0 %12290
      %12292 = vrot.lane.b32.xlu0 %v12263, 48
      %v12293 = vpop.permute.xlu0 %12292
      %12294 = vrot.lane.b32.xlu0 %v12264, 48
      %v12295 = vpop.permute.xlu0 %12294
      %12296 = vrot.lane.b32.xlu0 %v12265, 48
      %v12297 = vpop.permute.xlu0 %12296
      %v12298 = vunpack.c.l.b16 %v10823
      %v12299 = vunpack.c.l.b16 %v10833
      %v12300 = vunpack.c.l.b16 %v10847
      %v12301 = vunpack.c.l.b16 %v10857
      %v12302 = vunpack.c.l.b16 %v10871
      %v12303 = vunpack.c.l.b16 %v10881
      %v12304 = vunpack.c.l.b16 %v10895
      %v12305 = vunpack.c.l.b16 %v10905
      %v12306 = vunpack.c.l.b16 %v10919
      %v12307 = vunpack.c.l.b16 %v10929
      %v12308 = vunpack.c.l.b16 %v10943
      %v12309 = vunpack.c.l.b16 %v10953
      %v12310 = vunpack.c.l.b16 %v10967
      %v12311 = vunpack.c.l.b16 %v10977
      %v12312 = vunpack.c.l.b16 %v10991
      %v12313 = vunpack.c.l.b16 %v11001
      %v12314 = vunpack.c.l.b16 %v11015
      %v12315 = vunpack.c.l.b16 %v11025
      %v12316 = vunpack.c.l.b16 %v11039
      %v12317 = vunpack.c.l.b16 %v11049
      %v12318 = vunpack.c.l.b16 %v11063
      %v12319 = vunpack.c.l.b16 %v11073
      %v12320 = vunpack.c.l.b16 %v11087
      %v12321 = vunpack.c.l.b16 %v11097
      %v12322 = vunpack.c.l.b16 %v11111
      %v12323 = vunpack.c.l.b16 %v11121
      %v12324 = vunpack.c.l.b16 %v11135
      %v12325 = vunpack.c.l.b16 %v11145
      %v12326 = vunpack.c.l.b16 %v11159
      %v12327 = vunpack.c.l.b16 %v11169
      %v12328 = vunpack.c.l.b16 %v11183
      %v12329 = vunpack.c.l.b16 %v11193
      %v12330 = vpack.c.b16 %v12299, %v12298
      %v12331 = vpack.c.b16 %v12301, %v12300
      %v12332 = vpack.c.b16 %v12303, %v12302
      %v12333 = vpack.c.b16 %v12305, %v12304
      %v12334 = vpack.c.b16 %v12307, %v12306
      %v12335 = vpack.c.b16 %v12309, %v12308
      %v12336 = vpack.c.b16 %v12311, %v12310
      %v12337 = vpack.c.b16 %v12313, %v12312
      %v12338 = vpack.c.b16 %v12315, %v12314
      %v12339 = vpack.c.b16 %v12317, %v12316
      %v12340 = vpack.c.b16 %v12319, %v12318
      %v12341 = vpack.c.b16 %v12321, %v12320
      %v12342 = vpack.c.b16 %v12323, %v12322
      %v12343 = vpack.c.b16 %v12325, %v12324
      %v12344 = vpack.c.b16 %v12327, %v12326
      %v12345 = vpack.c.b16 %v12329, %v12328
      %12346 = vrot.lane.b32.xlu0 %v12330, 64
      %v12347 = vpop.permute.xlu0 %12346
      %12348 = vrot.lane.b32.xlu0 %v12331, 64
      %v12349 = vpop.permute.xlu0 %12348
      %12350 = vrot.lane.b32.xlu0 %v12332, 64
      %v12351 = vpop.permute.xlu0 %12350
      %12352 = vrot.lane.b32.xlu0 %v12333, 64
      %v12353 = vpop.permute.xlu0 %12352
      %12354 = vrot.lane.b32.xlu0 %v12334, 64
      %v12355 = vpop.permute.xlu0 %12354
      %12356 = vrot.lane.b32.xlu0 %v12335, 64
      %v12357 = vpop.permute.xlu0 %12356
      %12358 = vrot.lane.b32.xlu0 %v12336, 64
      %v12359 = vpop.permute.xlu0 %12358
      %12360 = vrot.lane.b32.xlu0 %v12337, 64
      %v12361 = vpop.permute.xlu0 %12360
      %12362 = vrot.lane.b32.xlu0 %v12338, 64
      %v12363 = vpop.permute.xlu0 %12362
      %12364 = vrot.lane.b32.xlu0 %v12339, 64
      %v12365 = vpop.permute.xlu0 %12364
      %12366 = vrot.lane.b32.xlu0 %v12340, 64
      %v12367 = vpop.permute.xlu0 %12366
      %12368 = vrot.lane.b32.xlu0 %v12341, 64
      %v12369 = vpop.permute.xlu0 %12368
      %12370 = vrot.lane.b32.xlu0 %v12342, 64
      %v12371 = vpop.permute.xlu0 %12370
      %12372 = vrot.lane.b32.xlu0 %v12343, 64
      %v12373 = vpop.permute.xlu0 %12372
      %12374 = vrot.lane.b32.xlu0 %v12344, 64
      %v12375 = vpop.permute.xlu0 %12374
      %12376 = vrot.lane.b32.xlu0 %v12345, 64
      %v12377 = vpop.permute.xlu0 %12376
      %v12378 = vunpack.c.l.b16 %v11261
      %v12379 = vunpack.c.l.b16 %v11264
      %v12380 = vunpack.c.l.b16 %v11268
      %v12381 = vunpack.c.l.b16 %v11271
      %v12382 = vunpack.c.l.b16 %v11275
      %v12383 = vunpack.c.l.b16 %v11278
      %v12384 = vunpack.c.l.b16 %v11282
      %v12385 = vunpack.c.l.b16 %v11285
      %v12386 = vunpack.c.l.b16 %v11289
      %v12387 = vunpack.c.l.b16 %v11292
      %v12388 = vunpack.c.l.b16 %v11296
      %v12389 = vunpack.c.l.b16 %v11299
      %v12390 = vunpack.c.l.b16 %v11303
      %v12391 = vunpack.c.l.b16 %v11306
      %v12392 = vunpack.c.l.b16 %v11310
      %v12393 = vunpack.c.l.b16 %v11313
      %v12394 = vunpack.c.l.b16 %v11317
      %v12395 = vunpack.c.l.b16 %v11320
      %v12396 = vunpack.c.l.b16 %v11324
      %v12397 = vunpack.c.l.b16 %v11327
      %v12398 = vunpack.c.l.b16 %v11331
      %v12399 = vunpack.c.l.b16 %v11334
      %v12400 = vunpack.c.l.b16 %v11338
      %v12401 = vunpack.c.l.b16 %v11341
      %v12402 = vunpack.c.l.b16 %v11345
      %v12403 = vunpack.c.l.b16 %v11348
      %v12404 = vunpack.c.l.b16 %v11352
      %v12405 = vunpack.c.l.b16 %v11355
      %v12406 = vunpack.c.l.b16 %v11359
      %v12407 = vunpack.c.l.b16 %v11362
      %v12408 = vunpack.c.l.b16 %v11366
      %v12409 = vunpack.c.l.b16 %v11369
      %v12410 = vpack.c.b16 %v12379, %v12378
      %v12411 = vpack.c.b16 %v12381, %v12380
      %v12412 = vpack.c.b16 %v12383, %v12382
      %v12413 = vpack.c.b16 %v12385, %v12384
      %v12414 = vpack.c.b16 %v12387, %v12386
      %v12415 = vpack.c.b16 %v12389, %v12388
      %v12416 = vpack.c.b16 %v12391, %v12390
      %v12417 = vpack.c.b16 %v12393, %v12392
      %v12418 = vpack.c.b16 %v12395, %v12394
      %v12419 = vpack.c.b16 %v12397, %v12396
      %v12420 = vpack.c.b16 %v12399, %v12398
      %v12421 = vpack.c.b16 %v12401, %v12400
      %v12422 = vpack.c.b16 %v12403, %v12402
      %v12423 = vpack.c.b16 %v12405, %v12404
      %v12424 = vpack.c.b16 %v12407, %v12406
      %v12425 = vpack.c.b16 %v12409, %v12408
      %12426 = vrot.lane.b32.xlu0 %v12410, 80
      %v12427 = vpop.permute.xlu0 %12426
      %12428 = vrot.lane.b32.xlu0 %v12411, 80
      %v12429 = vpop.permute.xlu0 %12428
      %12430 = vrot.lane.b32.xlu0 %v12412, 80
      %v12431 = vpop.permute.xlu0 %12430
      %12432 = vrot.lane.b32.xlu0 %v12413, 80
      %v12433 = vpop.permute.xlu0 %12432
      %12434 = vrot.lane.b32.xlu0 %v12414, 80
      %v12435 = vpop.permute.xlu0 %12434
      %12436 = vrot.lane.b32.xlu0 %v12415, 80
      %v12437 = vpop.permute.xlu0 %12436
      %12438 = vrot.lane.b32.xlu0 %v12416, 80
      %v12439 = vpop.permute.xlu0 %12438
      %12440 = vrot.lane.b32.xlu0 %v12417, 80
      %v12441 = vpop.permute.xlu0 %12440
      %12442 = vrot.lane.b32.xlu0 %v12418, 80
      %v12443 = vpop.permute.xlu0 %12442
      %12444 = vrot.lane.b32.xlu0 %v12419, 80
      %v12445 = vpop.permute.xlu0 %12444
      %12446 = vrot.lane.b32.xlu0 %v12420, 80
      %v12447 = vpop.permute.xlu0 %12446
      %12448 = vrot.lane.b32.xlu0 %v12421, 80
      %v12449 = vpop.permute.xlu0 %12448
      %12450 = vrot.lane.b32.xlu0 %v12422, 80
      %v12451 = vpop.permute.xlu0 %12450
      %12452 = vrot.lane.b32.xlu0 %v12423, 80
      %v12453 = vpop.permute.xlu0 %12452
      %12454 = vrot.lane.b32.xlu0 %v12424, 80
      %v12455 = vpop.permute.xlu0 %12454
      %12456 = vrot.lane.b32.xlu0 %v12425, 80
      %v12457 = vpop.permute.xlu0 %12456
      %v12474 = vunpack.c.l.b16 %v11370
      %v12475 = vunpack.c.l.b16 %v11371
      %v12476 = vunpack.c.l.b16 %v11372
      %v12477 = vunpack.c.l.b16 %v11373
      %v12478 = vunpack.c.l.b16 %v11374
      %v12479 = vunpack.c.l.b16 %v11375
      %v12480 = vunpack.c.l.b16 %v11376
      %v12481 = vunpack.c.l.b16 %v11377
      %v12482 = vunpack.c.l.b16 %v11378
      %v12483 = vunpack.c.l.b16 %v11379
      %v12484 = vunpack.c.l.b16 %v11380
      %v12485 = vunpack.c.l.b16 %v11381
      %v12486 = vunpack.c.l.b16 %v11382
      %v12487 = vunpack.c.l.b16 %v11383
      %v12488 = vunpack.c.l.b16 %v11384
      %v12489 = vunpack.c.l.b16 %v11385
      %v12490 = vunpack.c.l.b16 %v11386
      %v12491 = vunpack.c.l.b16 %v11387
      %v12492 = vunpack.c.l.b16 %v11388
      %v12493 = vunpack.c.l.b16 %v11389
      %v12494 = vunpack.c.l.b16 %v11390
      %v12495 = vunpack.c.l.b16 %v11391
      %v12496 = vunpack.c.l.b16 %v11392
      %v12497 = vunpack.c.l.b16 %v11393
      %v12498 = vunpack.c.l.b16 %v11394
      %v12499 = vunpack.c.l.b16 %v11395
      %v12500 = vunpack.c.l.b16 %v11396
      %v12501 = vunpack.c.l.b16 %v11397
      %v12502 = vunpack.c.l.b16 %v11398
      %v12503 = vunpack.c.l.b16 %v11399
      %v12504 = vunpack.c.l.b16 %v11400
      %v12505 = vunpack.c.l.b16 %v11401
      %v12506 = vpack.c.b16 %v12475, %v12474
      %v12507 = vpack.c.b16 %v12477, %v12476
      %v12508 = vpack.c.b16 %v12479, %v12478
      %v12509 = vpack.c.b16 %v12481, %v12480
      %v12510 = vpack.c.b16 %v12483, %v12482
      %v12511 = vpack.c.b16 %v12485, %v12484
      %v12512 = vpack.c.b16 %v12487, %v12486
      %v12513 = vpack.c.b16 %v12489, %v12488
      %v12514 = vpack.c.b16 %v12491, %v12490
      %v12515 = vpack.c.b16 %v12493, %v12492
      %v12516 = vpack.c.b16 %v12495, %v12494
      %v12517 = vpack.c.b16 %v12497, %v12496
      %v12518 = vpack.c.b16 %v12499, %v12498
      %v12519 = vpack.c.b16 %v12501, %v12500
      %v12520 = vpack.c.b16 %v12503, %v12502
      %v12521 = vpack.c.b16 %v12505, %v12504
      %12522 = vrot.lane.b32.xlu0 %v12506, 96
      %v12523 = vpop.permute.xlu0 %12522
      %12524 = vrot.lane.b32.xlu0 %v12507, 96
      %v12525 = vpop.permute.xlu0 %12524
      %12526 = vrot.lane.b32.xlu0 %v12508, 96
      %v12527 = vpop.permute.xlu0 %12526
      %12528 = vrot.lane.b32.xlu0 %v12509, 96
      %v12529 = vpop.permute.xlu0 %12528
      %12530 = vrot.lane.b32.xlu0 %v12510, 96
      %v12531 = vpop.permute.xlu0 %12530
      %12532 = vrot.lane.b32.xlu0 %v12511, 96
      %v12533 = vpop.permute.xlu0 %12532
      %12534 = vrot.lane.b32.xlu0 %v12512, 96
      %v12535 = vpop.permute.xlu0 %12534
      %12536 = vrot.lane.b32.xlu0 %v12513, 96
      %v12537 = vpop.permute.xlu0 %12536
      %12538 = vrot.lane.b32.xlu0 %v12514, 96
      %v12539 = vpop.permute.xlu0 %12538
      %12540 = vrot.lane.b32.xlu0 %v12515, 96
      %v12541 = vpop.permute.xlu0 %12540
      %12542 = vrot.lane.b32.xlu0 %v12516, 96
      %v12543 = vpop.permute.xlu0 %12542
      %12544 = vrot.lane.b32.xlu0 %v12517, 96
      %v12545 = vpop.permute.xlu0 %12544
      %12546 = vrot.lane.b32.xlu0 %v12518, 96
      %v12547 = vpop.permute.xlu0 %12546
      %12548 = vrot.lane.b32.xlu0 %v12519, 96
      %v12549 = vpop.permute.xlu0 %12548
      %12550 = vrot.lane.b32.xlu0 %v12520, 96
      %v12551 = vpop.permute.xlu0 %12550
      %12552 = vrot.lane.b32.xlu0 %v12521, 96
      %v12553 = vpop.permute.xlu0 %12552
      %v12554 = vunpack.c.l.b16 %v11431
      %v12555 = vunpack.c.l.b16 %v11441
      %v12556 = vunpack.c.l.b16 %v11455
      %v12557 = vunpack.c.l.b16 %v11465
      %v12558 = vunpack.c.l.b16 %v11479
      %v12559 = vunpack.c.l.b16 %v11489
      %v12560 = vunpack.c.l.b16 %v11503
      %v12561 = vunpack.c.l.b16 %v11513
      %v12562 = vunpack.c.l.b16 %v11527
      %v12563 = vunpack.c.l.b16 %v11537
      %v12564 = vunpack.c.l.b16 %v11551
      %v12565 = vunpack.c.l.b16 %v11561
      %v12566 = vunpack.c.l.b16 %v11575
      %v12567 = vunpack.c.l.b16 %v11585
      %v12568 = vunpack.c.l.b16 %v11599
      %v12569 = vunpack.c.l.b16 %v11609
      %v12570 = vunpack.c.l.b16 %v11623
      %v12571 = vunpack.c.l.b16 %v11633
      %v12572 = vunpack.c.l.b16 %v11647
      %v12573 = vunpack.c.l.b16 %v11657
      %v12574 = vunpack.c.l.b16 %v11671
      %v12575 = vunpack.c.l.b16 %v11681
      %v12576 = vunpack.c.l.b16 %v11695
      %v12577 = vunpack.c.l.b16 %v11705
      %v12578 = vunpack.c.l.b16 %v11719
      %v12579 = vunpack.c.l.b16 %v11729
      %v12580 = vunpack.c.l.b16 %v11743
      %v12581 = vunpack.c.l.b16 %v11753
      %v12582 = vunpack.c.l.b16 %v11767
      %v12583 = vunpack.c.l.b16 %v11777
      %v12584 = vunpack.c.l.b16 %v11791
      %v12585 = vunpack.c.l.b16 %v11801
      %v12586 = vpack.c.b16 %v12555, %v12554
      %v12587 = vpack.c.b16 %v12557, %v12556
      %v12588 = vpack.c.b16 %v12559, %v12558
      %v12589 = vpack.c.b16 %v12561, %v12560
      %v12590 = vpack.c.b16 %v12563, %v12562
      %v12591 = vpack.c.b16 %v12565, %v12564
      %v12592 = vpack.c.b16 %v12567, %v12566
      %v12593 = vpack.c.b16 %v12569, %v12568
      %v12594 = vpack.c.b16 %v12571, %v12570
      %v12595 = vpack.c.b16 %v12573, %v12572
      %v12596 = vpack.c.b16 %v12575, %v12574
      %v12597 = vpack.c.b16 %v12577, %v12576
      %v12598 = vpack.c.b16 %v12579, %v12578
      %v12599 = vpack.c.b16 %v12581, %v12580
      %v12600 = vpack.c.b16 %v12583, %v12582
      %v12601 = vpack.c.b16 %v12585, %v12584
      %12602 = vrot.lane.b32.xlu0 %v12586, 112
      %v12603 = vpop.permute.xlu0 %12602
      %12604 = vrot.lane.b32.xlu0 %v12587, 112
      %v12605 = vpop.permute.xlu0 %12604
      %12606 = vrot.lane.b32.xlu0 %v12588, 112
      %v12607 = vpop.permute.xlu0 %12606
      %12608 = vrot.lane.b32.xlu0 %v12589, 112
      %v12609 = vpop.permute.xlu0 %12608
      %12610 = vrot.lane.b32.xlu0 %v12590, 112
      %v12611 = vpop.permute.xlu0 %12610
      %12612 = vrot.lane.b32.xlu0 %v12591, 112
      %v12613 = vpop.permute.xlu0 %12612
      %12614 = vrot.lane.b32.xlu0 %v12592, 112
      %v12615 = vpop.permute.xlu0 %12614
      %12616 = vrot.lane.b32.xlu0 %v12593, 112
      %v12617 = vpop.permute.xlu0 %12616
      %12618 = vrot.lane.b32.xlu0 %v12594, 112
      %v12619 = vpop.permute.xlu0 %12618
      %12620 = vrot.lane.b32.xlu0 %v12595, 112
      %v12621 = vpop.permute.xlu0 %12620
      %12622 = vrot.lane.b32.xlu0 %v12596, 112
      %v12623 = vpop.permute.xlu0 %12622
      %12624 = vrot.lane.b32.xlu0 %v12597, 112
      %v12625 = vpop.permute.xlu0 %12624
      %12626 = vrot.lane.b32.xlu0 %v12598, 112
      %v12627 = vpop.permute.xlu0 %12626
      %12628 = vrot.lane.b32.xlu0 %v12599, 112
      %v12629 = vpop.permute.xlu0 %12628
      %12630 = vrot.lane.b32.xlu0 %v12600, 112
      %v12631 = vpop.permute.xlu0 %12630
      %12632 = vrot.lane.b32.xlu0 %v12601, 112
      %v12633 = vpop.permute.xlu0 %12632
      %v12634 = vunpack.c.l.b16 %v11869
      %v12635 = vunpack.c.l.b16 %v11872
      %v12636 = vunpack.c.l.b16 %v11876
      %v12637 = vunpack.c.l.b16 %v11879
      %v12638 = vunpack.c.l.b16 %v11883
      %v12639 = vunpack.c.l.b16 %v11886
      %v12640 = vunpack.c.l.b16 %v11890
      %v12641 = vunpack.c.l.b16 %v11893
      %v12642 = vunpack.c.l.b16 %v11897
      %v12643 = vunpack.c.l.b16 %v11900
      %v12644 = vunpack.c.l.b16 %v11904
      %v12645 = vunpack.c.l.b16 %v11907
      %v12646 = vunpack.c.l.b16 %v11911
      %v12647 = vunpack.c.l.b16 %v11914
      %v12648 = vunpack.c.l.b16 %v11918
      %v12649 = vunpack.c.l.b16 %v11921
      %v12650 = vunpack.c.l.b16 %v11925
      %v12651 = vunpack.c.l.b16 %v11928
      %v12652 = vunpack.c.l.b16 %v11932
      %v12653 = vunpack.c.l.b16 %v11935
      %v12654 = vunpack.c.l.b16 %v11939
      %v12655 = vunpack.c.l.b16 %v11942
      %v12656 = vunpack.c.l.b16 %v11946
      %v12657 = vunpack.c.l.b16 %v11949
      %v12658 = vunpack.c.l.b16 %v11953
      %v12659 = vunpack.c.l.b16 %v11956
      %v12660 = vunpack.c.l.b16 %v11960
      %v12661 = vunpack.c.l.b16 %v11963
      %v12662 = vunpack.c.l.b16 %v11967
      %v12663 = vunpack.c.l.b16 %v11970
      %v12664 = vunpack.c.l.b16 %v11974
      %v12665 = vunpack.c.l.b16 %v11977
      %v12666 = vpack.c.b16 %v12635, %v12634
      %v12667 = vpack.c.b16 %v12637, %v12636
      %v12668 = vpack.c.b16 %v12639, %v12638
      %v12669 = vpack.c.b16 %v12641, %v12640
      %v12670 = vpack.c.b16 %v12643, %v12642
      %v12671 = vpack.c.b16 %v12645, %v12644
      %v12672 = vpack.c.b16 %v12647, %v12646
      %v12673 = vpack.c.b16 %v12649, %v12648
      %v12674 = vpack.c.b16 %v12651, %v12650
      %v12675 = vpack.c.b16 %v12653, %v12652
      %v12676 = vpack.c.b16 %v12655, %v12654
      %v12677 = vpack.c.b16 %v12657, %v12656
      %v12678 = vpack.c.b16 %v12659, %v12658
      %v12679 = vpack.c.b16 %v12661, %v12660
      %v12680 = vpack.c.b16 %v12663, %v12662
      %v12681 = vpack.c.b16 %v12665, %v12664
      %v12684 = vsel %vm1007, %v12026, %v12091
      %v12687 = vsel %vm1007, %v12027, %v12093
      %v12690 = vsel %vm1007, %v12028, %v12095
      %v12693 = vsel %vm1007, %v12029, %v12097
      %v12696 = vsel %vm1007, %v12030, %v12099
      %v12699 = vsel %vm1007, %v12031, %v12101
      %v12702 = vsel %vm1007, %v12032, %v12103
      %v12705 = vsel %vm1007, %v12033, %v12105
      %v12708 = vsel %vm1007, %v12034, %v12107
      %v12711 = vsel %vm1007, %v12035, %v12109
      %v12714 = vsel %vm1007, %v12036, %v12111
      %v12717 = vsel %vm1007, %v12037, %v12113
      %v12720 = vsel %vm1007, %v12038, %v12115
      %v12723 = vsel %vm1007, %v12039, %v12117
      %v12726 = vsel %vm1007, %v12040, %v12119
      %v12729 = vsel %vm1007, %v12041, %v12121
      %v12731 = vsel %vm4374, %v12684, %v12171
      %v12733 = vsel %vm4374, %v12687, %v12173
      %v12735 = vsel %vm4374, %v12690, %v12175
      %v12737 = vsel %vm4374, %v12693, %v12177
      %v12739 = vsel %vm4374, %v12696, %v12179
      %v12741 = vsel %vm4374, %v12699, %v12181
      %v12743 = vsel %vm4374, %v12702, %v12183
      %v12745 = vsel %vm4374, %v12705, %v12185
      %v12747 = vsel %vm4374, %v12708, %v12187
      %v12749 = vsel %vm4374, %v12711, %v12189
      %v12751 = vsel %vm4374, %v12714, %v12191
      %v12753 = vsel %vm4374, %v12717, %v12193
      %v12755 = vsel %vm4374, %v12720, %v12195
      %v12757 = vsel %vm4374, %v12723, %v12197
      %v12759 = vsel %vm4374, %v12726, %v12199
      %v12761 = vsel %vm4374, %v12729, %v12201
      %v12763 = vsel %vm4407, %v12731, %v12267
      %v12765 = vsel %vm4407, %v12733, %v12269
      %v12767 = vsel %vm4407, %v12735, %v12271
      %v12769 = vsel %vm4407, %v12737, %v12273
      %v12771 = vsel %vm4407, %v12739, %v12275
      %v12773 = vsel %vm4407, %v12741, %v12277
      %v12775 = vsel %vm4407, %v12743, %v12279
      %v12777 = vsel %vm4407, %v12745, %v12281
      %v12779 = vsel %vm4407, %v12747, %v12283
      %v12781 = vsel %vm4407, %v12749, %v12285
      %v12783 = vsel %vm4407, %v12751, %v12287
      %v12785 = vsel %vm4407, %v12753, %v12289
      %v12787 = vsel %vm4407, %v12755, %v12291
      %v12789 = vsel %vm4407, %v12757, %v12293
      %v12791 = vsel %vm4407, %v12759, %v12295
      %v12793 = vsel %vm4407, %v12761, %v12297
      %v12795 = vsel %vm4440, %v12763, %v12347
      %v12797 = vsel %vm4440, %v12765, %v12349
      %v12799 = vsel %vm4440, %v12767, %v12351
      %v12801 = vsel %vm4440, %v12769, %v12353
      %v12803 = vsel %vm4440, %v12771, %v12355
      %v12805 = vsel %vm4440, %v12773, %v12357
      %v12807 = vsel %vm4440, %v12775, %v12359
      %v12809 = vsel %vm4440, %v12777, %v12361
      %v12811 = vsel %vm4440, %v12779, %v12363
      %v12813 = vsel %vm4440, %v12781, %v12365
      %v12815 = vsel %vm4440, %v12783, %v12367
      %v12817 = vsel %vm4440, %v12785, %v12369
      %v12819 = vsel %vm4440, %v12787, %v12371
      %v12821 = vsel %vm4440, %v12789, %v12373
      %v12823 = vsel %vm4440, %v12791, %v12375
      %v12825 = vsel %vm4440, %v12793, %v12377
      %v12827 = vsel %vm4473, %v12795, %v12427
      %v12829 = vsel %vm4473, %v12797, %v12429
      %v12831 = vsel %vm4473, %v12799, %v12431
      %v12833 = vsel %vm4473, %v12801, %v12433
      %v12835 = vsel %vm4473, %v12803, %v12435
      %v12837 = vsel %vm4473, %v12805, %v12437
      %v12839 = vsel %vm4473, %v12807, %v12439
      %v12841 = vsel %vm4473, %v12809, %v12441
      %v12843 = vsel %vm4473, %v12811, %v12443
      %v12845 = vsel %vm4473, %v12813, %v12445
      %v12847 = vsel %vm4473, %v12815, %v12447
      %v12849 = vsel %vm4473, %v12817, %v12449
      %v12851 = vsel %vm4473, %v12819, %v12451
      %v12853 = vsel %vm4473, %v12821, %v12453
      %v12855 = vsel %vm4473, %v12823, %v12455
      %v12857 = vsel %vm4473, %v12825, %v12457
      %v12859 = vsel %vm4506, %v12827, %v12523
      %v12861 = vsel %vm4506, %v12829, %v12525
      %v12863 = vsel %vm4506, %v12831, %v12527
      %v12865 = vsel %vm4506, %v12833, %v12529
      %v12867 = vsel %vm4506, %v12835, %v12531
      %v12869 = vsel %vm4506, %v12837, %v12533
      %v12871 = vsel %vm4506, %v12839, %v12535
      %v12873 = vsel %vm4506, %v12841, %v12537
      %v12875 = vsel %vm4506, %v12843, %v12539
      %v12877 = vsel %vm4506, %v12845, %v12541
      %v12879 = vsel %vm4506, %v12847, %v12543
      %v12881 = vsel %vm4506, %v12849, %v12545
      %v12883 = vsel %vm4506, %v12851, %v12547
      %v12885 = vsel %vm4506, %v12853, %v12549
      %v12887 = vsel %vm4506, %v12855, %v12551
      %v12889 = vsel %vm4506, %v12857, %v12553
      %v12891 = vsel %vm4539, %v12859, %v12603
      %v12894 = vsel %vm4539, %v12861, %v12605
      %v12897 = vsel %vm4539, %v12863, %v12607
      %v12900 = vsel %vm4539, %v12865, %v12609
      %v12903 = vsel %vm4539, %v12867, %v12611
      %v12906 = vsel %vm4539, %v12869, %v12613
      %v12909 = vsel %vm4539, %v12871, %v12615
      %v12912 = vsel %vm4539, %v12873, %v12617
      %v12915 = vsel %vm4539, %v12875, %v12619
      %v12918 = vsel %vm4539, %v12877, %v12621
      %v12921 = vsel %vm4539, %v12879, %v12623
      %v12924 = vsel %vm4539, %v12881, %v12625
      %v12927 = vsel %vm4539, %v12883, %v12627
      %v12930 = vsel %vm4539, %v12885, %v12629
      %v12933 = vsel %vm4539, %v12887, %v12631
      %v12936 = vsel %vm4539, %v12889, %v12633
      %v12939 = vlaneseq
      %v12940 = vshrl.u32 %v12939, 7
      %v12941 = vsub.s32 0, %v12940
      %v12942 = vrot.slane %v9216, %v12941
      %v12962 = vunpack.c.l.b16 %v9198
      %v12963 = vunpack.c.l.b16 %v9199
      %v12964 = vunpack.c.l.b16 %v9200
      %v12965 = vunpack.c.l.b16 %v9201
      %v12966 = vunpack.c.l.b16 %v9202
      %v12967 = vunpack.c.l.b16 %v9203
      %v12968 = vunpack.c.l.b16 %v9204
      %v12969 = vunpack.c.l.b16 %v9205
      %v12970 = vunpack.c.l.b16 %v9206
      %v12971 = vunpack.c.l.b16 %v9207
      %v12972 = vunpack.c.l.b16 %v9208
      %v12973 = vunpack.c.l.b16 %v9209
      %v12974 = vunpack.c.l.b16 %v9210
      %v12975 = vunpack.c.l.b16 %v9211
      %v12976 = vunpack.c.l.b16 %v9212
      %v12977 = vunpack.c.l.b16 %v9213
      %v12978 = vunpack.c.l.b16 %v9214
      %v12979 = vunpack.c.l.b16 %v9215
      %v12980 = vpack.c.b16 %v12963, %v12962
      %v12981 = vpack.c.b16 %v12965, %v12964
      %v12982 = vpack.c.b16 %v12967, %v12966
      %v12983 = vpack.c.b16 %v12969, %v12968
      %v12984 = vpack.c.b16 %v12971, %v12970
      %v12985 = vpack.c.b16 %v12973, %v12972
      %v12986 = vpack.c.b16 %v12975, %v12974
      %v12987 = vpack.c.b16 %v12977, %v12976
      %v12988 = vpack.c.b16 %v12979, %v12978
      %v12999 = vsel %vm1007, %v12666, 0
      %v13002 = vsel %vm1007, %v12667, 0
      %v13005 = vsel %vm1007, %v12668, 0
      %v13008 = vsel %vm1007, %v12669, 0
      %v13011 = vsel %vm1007, %v12670, 0
      %v13014 = vsel %vm1007, %v12671, 0
      %v13017 = vsel %vm1007, %v12672, 0
      %v13020 = vsel %vm1007, %v12673, 0
      %v13023 = vsel %vm1007, %v12674, 0
      %v13026 = vsel %vm1007, %v12675, 0
      %v13029 = vsel %vm1007, %v12676, 0
      %v13032 = vsel %vm1007, %v12677, 0
      %v13035 = vsel %vm1007, %v12678, 0
      %v13038 = vsel %vm1007, %v12679, 0
      %v13041 = vsel %vm1007, %v12680, 0
      %v13044 = vsel %vm1007, %v12681, 0
      %13046 = vmatprep.subr.bf16.mxu0 0
      %13047 = vmatpush1.bf16.msra.mxu0 %v12987
      %13048 = vmatprep.subr.bf16.mxu0 0
      %13049 = vmatpush1.bf16.msra.mxu0 %v12986
      %13050 = vmatprep.subr.bf16.mxu0 0
      %13051 = vmatpush1.bf16.msra.mxu0 %v12985
      %13052 = vmatprep.subr.bf16.mxu0 0
      %13053 = vmatpush1.bf16.msra.mxu0 %v12984
      %13054 = vmatprep.subr.bf16.mxu0 0
      %13055 = vmatpush1.bf16.msra.mxu0 %v12983
      %13056 = vmatprep.subr.bf16.mxu0 0
      %13057 = vmatpush1.bf16.msra.mxu0 %v12982
      %13058 = vmatprep.subr.bf16.mxu0 0
      %13059 = vmatpush1.bf16.msra.mxu0 %v12981
      %13060 = vmatprep.subr.bf16.mxu0 0
      %13061 = vmatpush1.bf16.msra.mxu0 %v12980
      %13062 = vmatprep.subr.bf16.mxu0 0
      %13063 = vmatpush2.bf16.msra.mxu0 0
      %13064 = vmatprep.subr.bf16.mxu0 0
      %13065 = vmatpush2.bf16.msra.mxu0 0
      %13066 = vmatprep.subr.bf16.mxu0 0
      %13067 = vmatpush2.bf16.msra.mxu0 0
      %13068 = vmatprep.subr.bf16.mxu0 0
      %13069 = vmatpush2.bf16.msra.mxu0 0
      %13070 = vmatprep.subr.bf16.mxu0 0
      %13071 = vmatpush2.bf16.msra.mxu0 0
      %13072 = vmatprep.subr.bf16.mxu0 0
      %13073 = vmatpush2.bf16.msra.mxu0 0
      %13074 = vmatprep.subr.bf16.mxu0 0
      %13075 = vmatpush2.bf16.msra.mxu0 0
      %13076 = vmatprep.subr.bf16.mxu0 0
      %13077 = vmatpush2.bf16.msra.mxu0 %v12988
      %13078 = vmatprep.mubr.bf16.mxu0 %v12999
      %13079 = vmatmul.mubr.bf16.gmra.mxu0 %v12891
      %v13080 = vpop.f32.mrf.mxu0
      %v13081 = vadd.f32 %v12942, %v13080
      %v13082 = vpop.f32.mrf.mxu0
      %v13083 = vpop.f32.mrf.mxu0
      %v13084 = vadd.f32 %v12942, %v13083
      %v13085 = vpop.f32.mrf.mxu0
      %13086 = vmatprep.mubr.bf16.mxu0 %v13002
      %13087 = vmatmul.mubr.bf16.gmra.mxu0 %v12894
      %v13088 = vpop.f32.mrf.mxu0
      %v13089 = vadd.f32 %v12942, %v13088
      %v13090 = vpop.f32.mrf.mxu0
      %v13091 = vpop.f32.mrf.mxu0
      %v13092 = vadd.f32 %v12942, %v13091
      %v13093 = vpop.f32.mrf.mxu0
      %13094 = vmatprep.mubr.bf16.mxu0 %v13005
      %13095 = vmatmul.mubr.bf16.gmra.mxu0 %v12897
      %v13096 = vpop.f32.mrf.mxu0
      %v13097 = vadd.f32 %v12942, %v13096
      %v13098 = vpop.f32.mrf.mxu0
      %v13099 = vpop.f32.mrf.mxu0
      %v13100 = vadd.f32 %v12942, %v13099
      %v13101 = vpop.f32.mrf.mxu0
      %13102 = vmatprep.mubr.bf16.mxu0 %v13008
      %13103 = vmatmul.mubr.bf16.gmra.mxu0 %v12900
      %v13104 = vpop.f32.mrf.mxu0
      %v13105 = vadd.f32 %v12942, %v13104
      %v13106 = vpop.f32.mrf.mxu0
      %v13107 = vpop.f32.mrf.mxu0
      %v13108 = vadd.f32 %v12942, %v13107
      %v13109 = vpop.f32.mrf.mxu0
      %13110 = vmatprep.mubr.bf16.mxu0 %v13011
      %13111 = vmatmul.mubr.bf16.gmra.mxu0 %v12903
      %v13112 = vpop.f32.mrf.mxu0
      %v13113 = vadd.f32 %v12942, %v13112
      %v13114 = vpop.f32.mrf.mxu0
      %v13115 = vpop.f32.mrf.mxu0
      %v13116 = vadd.f32 %v12942, %v13115
      %v13117 = vpop.f32.mrf.mxu0
      %13118 = vmatprep.mubr.bf16.mxu0 %v13014
      %13119 = vmatmul.mubr.bf16.gmra.mxu0 %v12906
      %v13120 = vpop.f32.mrf.mxu0
      %v13121 = vadd.f32 %v12942, %v13120
      %v13122 = vpop.f32.mrf.mxu0
      %v13123 = vpop.f32.mrf.mxu0
      %v13124 = vadd.f32 %v12942, %v13123
      %v13125 = vpop.f32.mrf.mxu0
      %13126 = vmatprep.mubr.bf16.mxu0 %v13017
      %13127 = vmatmul.mubr.bf16.gmra.mxu0 %v12909
      %v13128 = vpop.f32.mrf.mxu0
      %v13129 = vadd.f32 %v12942, %v13128
      %v13130 = vpop.f32.mrf.mxu0
      %v13131 = vpop.f32.mrf.mxu0
      %v13132 = vadd.f32 %v12942, %v13131
      %v13133 = vpop.f32.mrf.mxu0
      %13134 = vmatprep.mubr.bf16.mxu0 %v13020
      %13135 = vmatmul.mubr.bf16.gmra.mxu0 %v12912
      %v13136 = vpop.f32.mrf.mxu0
      %v13137 = vadd.f32 %v12942, %v13136
      %v13138 = vpop.f32.mrf.mxu0
      %v13139 = vpop.f32.mrf.mxu0
      %v13140 = vadd.f32 %v12942, %v13139
      %v13141 = vpop.f32.mrf.mxu0
      %13142 = vmatprep.mubr.bf16.mxu0 %v13023
      %13143 = vmatmul.mubr.bf16.gmra.mxu0 %v12915
      %v13144 = vpop.f32.mrf.mxu0
      %v13145 = vadd.f32 %v12942, %v13144
      %v13146 = vpop.f32.mrf.mxu0
      %v13147 = vpop.f32.mrf.mxu0
      %v13148 = vadd.f32 %v12942, %v13147
      %v13149 = vpop.f32.mrf.mxu0
      %13150 = vmatprep.mubr.bf16.mxu0 %v13026
      %13151 = vmatmul.mubr.bf16.gmra.mxu0 %v12918
      %v13152 = vpop.f32.mrf.mxu0
      %v13153 = vadd.f32 %v12942, %v13152
      %v13154 = vpop.f32.mrf.mxu0
      %v13155 = vpop.f32.mrf.mxu0
      %v13156 = vadd.f32 %v12942, %v13155
      %v13157 = vpop.f32.mrf.mxu0
      %13158 = vmatprep.mubr.bf16.mxu0 %v13029
      %13159 = vmatmul.mubr.bf16.gmra.mxu0 %v12921
      %v13160 = vpop.f32.mrf.mxu0
      %v13161 = vadd.f32 %v12942, %v13160
      %v13162 = vpop.f32.mrf.mxu0
      %v13163 = vpop.f32.mrf.mxu0
      %v13164 = vadd.f32 %v12942, %v13163
      %v13165 = vpop.f32.mrf.mxu0
      %13166 = vmatprep.mubr.bf16.mxu0 %v13032
      %13167 = vmatmul.mubr.bf16.gmra.mxu0 %v12924
      %v13168 = vpop.f32.mrf.mxu0
      %v13169 = vadd.f32 %v12942, %v13168
      %v13170 = vpop.f32.mrf.mxu0
      %v13171 = vpop.f32.mrf.mxu0
      %v13172 = vadd.f32 %v12942, %v13171
      %v13173 = vpop.f32.mrf.mxu0
      %13174 = vmatprep.mubr.bf16.mxu0 %v13035
      %13175 = vmatmul.mubr.bf16.gmra.mxu0 %v12927
      %v13176 = vpop.f32.mrf.mxu0
      %v13177 = vadd.f32 %v12942, %v13176
      %v13178 = vpop.f32.mrf.mxu0
      %v13179 = vpop.f32.mrf.mxu0
      %v13180 = vadd.f32 %v12942, %v13179
      %v13181 = vpop.f32.mrf.mxu0
      %13182 = vmatprep.mubr.bf16.mxu0 %v13038
      %13183 = vmatmul.mubr.bf16.gmra.mxu0 %v12930
      %v13184 = vpop.f32.mrf.mxu0
      %v13185 = vadd.f32 %v12942, %v13184
      %v13186 = vpop.f32.mrf.mxu0
      %v13187 = vpop.f32.mrf.mxu0
      %v13188 = vadd.f32 %v12942, %v13187
      %v13189 = vpop.f32.mrf.mxu0
      %13190 = vmatprep.mubr.bf16.mxu0 %v13041
      %13191 = vmatmul.mubr.bf16.gmra.mxu0 %v12933
      %v13192 = vpop.f32.mrf.mxu0
      %v13193 = vadd.f32 %v12942, %v13192
      %v13194 = vpop.f32.mrf.mxu0
      %v13195 = vpop.f32.mrf.mxu0
      %v13196 = vadd.f32 %v12942, %v13195
      %v13197 = vpop.f32.mrf.mxu0
      %13198 = vmatprep.mubr.bf16.mxu0 %v13044
      %13199 = vmatmul.mubr.bf16.gmra.mxu0 %v12936
      %v13200 = vpop.f32.mrf.mxu0
      %v13201 = vadd.f32 %v12942, %v13200
      %v13202 = vpop.f32.mrf.mxu0
      %v13203 = vpop.f32.mrf.mxu0
      %v13204 = vadd.f32 %v12942, %v13203
      %v13205 = vpop.f32.mrf.mxu0
      %13206 = vdwg.mxu0
      %13239 = vrot.lane.b32.xlu0 %v13081, 12
      %v13240 = vpop.permute.xlu0 %13239
      %13241 = vrot.lane.b32.xlu0 %v13084, 12
      %v13242 = vpop.permute.xlu0 %13241
      %13243 = vrot.lane.b32.xlu0 %v13089, 12
      %v13244 = vpop.permute.xlu0 %13243
      %13245 = vrot.lane.b32.xlu0 %v13092, 12
      %v13246 = vpop.permute.xlu0 %13245
      %13247 = vrot.lane.b32.xlu0 %v13097, 12
      %v13248 = vpop.permute.xlu0 %13247
      %13249 = vrot.lane.b32.xlu0 %v13100, 12
      %v13250 = vpop.permute.xlu0 %13249
      %13251 = vrot.lane.b32.xlu0 %v13105, 12
      %v13252 = vpop.permute.xlu0 %13251
      %13253 = vrot.lane.b32.xlu0 %v13108, 12
      %v13254 = vpop.permute.xlu0 %13253
      %13255 = vrot.lane.b32.xlu0 %v13113, 12
      %v13256 = vpop.permute.xlu0 %13255
      %13257 = vrot.lane.b32.xlu0 %v13116, 12
      %v13258 = vpop.permute.xlu0 %13257
      %13259 = vrot.lane.b32.xlu0 %v13121, 12
      %v13260 = vpop.permute.xlu0 %13259
      %13261 = vrot.lane.b32.xlu0 %v13124, 12
      %v13262 = vpop.permute.xlu0 %13261
      %13263 = vrot.lane.b32.xlu0 %v13129, 12
      %v13264 = vpop.permute.xlu0 %13263
      %13265 = vrot.lane.b32.xlu0 %v13132, 12
      %v13266 = vpop.permute.xlu0 %13265
      %13267 = vrot.lane.b32.xlu0 %v13137, 12
      %v13268 = vpop.permute.xlu0 %13267
      %13269 = vrot.lane.b32.xlu0 %v13140, 12
      %v13270 = vpop.permute.xlu0 %13269
      %13271 = vrot.lane.b32.xlu0 %v13145, 12
      %v13272 = vpop.permute.xlu0 %13271
      %13273 = vrot.lane.b32.xlu0 %v13148, 12
      %v13274 = vpop.permute.xlu0 %13273
      %13275 = vrot.lane.b32.xlu0 %v13153, 12
      %v13276 = vpop.permute.xlu0 %13275
      %13277 = vrot.lane.b32.xlu0 %v13156, 12
      %v13278 = vpop.permute.xlu0 %13277
      %13279 = vrot.lane.b32.xlu0 %v13161, 12
      %v13280 = vpop.permute.xlu0 %13279
      %13281 = vrot.lane.b32.xlu0 %v13164, 12
      %v13282 = vpop.permute.xlu0 %13281
      %13283 = vrot.lane.b32.xlu0 %v13169, 12
      %v13284 = vpop.permute.xlu0 %13283
      %13285 = vrot.lane.b32.xlu0 %v13172, 12
      %v13286 = vpop.permute.xlu0 %13285
      %13287 = vrot.lane.b32.xlu0 %v13177, 12
      %v13288 = vpop.permute.xlu0 %13287
      %13289 = vrot.lane.b32.xlu0 %v13180, 12
      %v13290 = vpop.permute.xlu0 %13289
      %13291 = vrot.lane.b32.xlu0 %v13185, 12
      %v13292 = vpop.permute.xlu0 %13291
      %13293 = vrot.lane.b32.xlu0 %v13188, 12
      %v13294 = vpop.permute.xlu0 %13293
      %13295 = vrot.lane.b32.xlu0 %v13193, 12
      %v13296 = vpop.permute.xlu0 %13295
      %13297 = vrot.lane.b32.xlu0 %v13196, 12
      %v13298 = vpop.permute.xlu0 %13297
      %13299 = vrot.lane.b32.xlu0 %v13201, 12
      %v13300 = vpop.permute.xlu0 %13299
      %13301 = vrot.lane.b32.xlu0 %v13204, 12
      %v13302 = vpop.permute.xlu0 %13301
      %vm13335 = vcmask 130144
      %13336 = vst.msk [vmem:[%s838] sm:$0xff] %vm13335, %v13240
      %13337 = vst.msk [vmem:[%s838 + $0x8] sm:$0xff] %vm13335, %v13242
      %13338 = vst.msk [vmem:[%s838 + $0x10] sm:$0xff] %vm13335, %v13244
      %13339 = vst.msk [vmem:[%s838 + $0x18] sm:$0xff] %vm13335, %v13246
      %13340 = vst.msk [vmem:[%s838 + $0x20] sm:$0xff] %vm13335, %v13248
      %13341 = vst.msk [vmem:[%s838 + $0x28] sm:$0xff] %vm13335, %v13250
      %13342 = vst.msk [vmem:[%s838 + $0x30] sm:$0xff] %vm13335, %v13252
      %13343 = vst.msk [vmem:[%s838 + $0x38] sm:$0xff] %vm13335, %v13254
      %13344 = vst.msk [vmem:[%s838 + $0x40] sm:$0xff] %vm13335, %v13256
      %13345 = vst.msk [vmem:[%s838 + $0x48] sm:$0xff] %vm13335, %v13258
      %13346 = vst.msk [vmem:[%s838 + $0x50] sm:$0xff] %vm13335, %v13260
      %13347 = vst.msk [vmem:[%s838 + $0x58] sm:$0xff] %vm13335, %v13262
      %13348 = vst.msk [vmem:[%s838 + $0x60] sm:$0xff] %vm13335, %v13264
      %13349 = vst.msk [vmem:[%s838 + $0x68] sm:$0xff] %vm13335, %v13266
      %13350 = vst.msk [vmem:[%s838 + $0x70] sm:$0xff] %vm13335, %v13268
      %13351 = vst.msk [vmem:[%s838 + $0x78] sm:$0xff] %vm13335, %v13270
      %13352 = vst.msk [vmem:[%s838 + $0x80] sm:$0xff] %vm13335, %v13272
      %13353 = vst.msk [vmem:[%s838 + $0x88] sm:$0xff] %vm13335, %v13274
      %13354 = vst.msk [vmem:[%s838 + $0x90] sm:$0xff] %vm13335, %v13276
      %13355 = vst.msk [vmem:[%s838 + $0x98] sm:$0xff] %vm13335, %v13278
      %13356 = vst.msk [vmem:[%s838 + $0xa0] sm:$0xff] %vm13335, %v13280
      %13357 = vst.msk [vmem:[%s838 + $0xa8] sm:$0xff] %vm13335, %v13282
      %13358 = vst.msk [vmem:[%s838 + $0xb0] sm:$0xff] %vm13335, %v13284
      %13359 = vst.msk [vmem:[%s838 + $0xb8] sm:$0xff] %vm13335, %v13286
      %13360 = vst.msk [vmem:[%s838 + $0xc0] sm:$0xff] %vm13335, %v13288
      %13361 = vst.msk [vmem:[%s838 + $0xc8] sm:$0xff] %vm13335, %v13290
      %13362 = vst.msk [vmem:[%s838 + $0xd0] sm:$0xff] %vm13335, %v13292
      %13363 = vst.msk [vmem:[%s838 + $0xd8] sm:$0xff] %vm13335, %v13294
      %13364 = vst.msk [vmem:[%s838 + $0xe0] sm:$0xff] %vm13335, %v13296
      %13365 = vst.msk [vmem:[%s838 + $0xe8] sm:$0xff] %vm13335, %v13298
      %13366 = vst.msk [vmem:[%s838 + $0xf0] sm:$0xff] %vm13335, %v13300
      %13367 = vst.msk [vmem:[%s838 + $0xf8] sm:$0xff] %vm13335, %v13302
      %p13368 = scmp.lt.s32.totalorder %s30, 1
      %s13369 = scalar_select %p13368, %s30, 1
      %s13370 = smul.addr %s13369, 32
      %s13371 = smul.addr %s13370, 8
      %s13372 = scalar_lea.vmem %s19, %s13371
      // Predicated region
      $region97: #{dense_block_pallas.1} parent=95 // pred_check
        %p13373 = pneg %p452
      $region98: #{dense_block_pallas.1} parent=95 // pred_check_branch
        %13375 = sbr.rel (%p13373) target = $region100
      $region99: #{dense_block_pallas.1} parent=95 // pred_region
        _
      $region100: #{dense_block_pallas.1} parent=95 // pred_fallthru
        _
    $region96: #{dense_block_pallas.1} parent=5 // pred_fallthru
      _
    %p13376 = scmp.le.s32.totalorder 2, %s25
    // Predicated region
    $region101: #{dense_block_pallas.1} parent=5 // pred_check
      %p13377 = pneg %p13376
    $region102: #{dense_block_pallas.1} parent=5 // pred_check_branch
      %13379 = sbr.rel (%p13377) target = $region104
    $region103: #{dense_block_pallas.1} parent=5 // pred_region
      %s13380 = ssub.s32 %s25, 2
      // Predicated region
      $region105: #{dense_block_pallas.1} parent=103 // pred_check
        %p13381 = pneg %p458
      $region106: #{dense_block_pallas.1} parent=103 // pred_check_branch
        %13383 = sbr.rel (%p13381) target = $region108
      $region107: #{dense_block_pallas.1} parent=103 // pred_region
        %p13384 = scmp.lt.s32.totalorder %s31, 1
        %s13385 = scalar_select %p13384, %s31, 1
        %s13386 = smul.addr %s13385, 32
        %s13387 = smul.addr %s13386, 8
        %s13388 = scalar_lea.vmem %s19, %s13387
      $region108: #{dense_block_pallas.1} parent=103 // pred_fallthru
        _
    $region104: #{dense_block_pallas.1} parent=5 // pred_fallthru
      _
  $region6: #{dense_block_pallas.1} parent=0 // loop_footer
    %s29 = sadd.s32 1, %s25
  $region7: #{dense_block_pallas.1} parent=0 // loop_footer_branch
    %24 = sbr.rel target = $region3
  $region8: #{dense_block_pallas.1} parent=0 // loop_exit
    _

</llo_original>
